<compile_context>
chip_gen: v6e
topology: v6e:2x2x1
jax: 0.10.0
libtpu: 0.0.40
codegen_flags: <defaults>
</compile_context>

<pallas_src>
import functools

import jax
import jax.numpy as jnp
from jax.experimental import pallas as pl
from jax.experimental.pallas import tpu as pltpu

_VMEM_LIMIT = 48 * 1024 * 1024  # explicit scoped-VMEM headroom (fits v7x's 64 MiB)


def _round_up(x, m):
    return (x + m - 1) // m * m


def _pick_tile(dim, max_tile, align):
    """Largest multiple of `align` <= max_tile that divides `dim`, else `dim`.

    Falling back to the full dim keeps the BlockSpec legal (block == full array
    dim) and the grid exact, so no partial / masked blocks are ever generated.
    """
    t = (max_tile // align) * align
    while t >= align:
        if dim % t == 0:
            return t
        t -= align
    return dim


# ----------------------------------------------------------------------------
# Conv-as-matmul kernel: bf16 operands, f32 accumulator, fused bias + activation
# ----------------------------------------------------------------------------
def _matmul_kernel(a_ref, b_ref, bias_ref, o_ref, acc_ref, *, act):
    k = pl.program_id(2)

    @pl.when(k == 0)
    def _init():
        acc_ref[...] = jnp.zeros_like(acc_ref)

    acc_ref[...] += jnp.dot(a_ref[...], b_ref[...],
                            preferred_element_type=jnp.float32)

    @pl.when(k == pl.num_programs(2) - 1)
    def _epilogue():
        y = acc_ref[...] + bias_ref[...]          # bias added exactly once
        if act == "relu":
            y = jnp.maximum(y, 0.0)
        elif act == "tanh":
            y = jnp.tanh(y)                       # EUP slot; free under the MXU
        o_ref[...] = y.astype(o_ref.dtype)


def matmul_bias_act(a, b, bias, act="none"):
    """a: (M, K) bf16, b: (K, Np) bf16 (Np % 128 == 0), bias: (1, Np) f32.

    Returns (M, Np) bf16.  M/N/K tiled; K is the innermost ("arbitrary") axis.
    """
    M, K = a.shape
    _, Np = b.shape
    tm = _pick_tile(M, 256, 16)
    tn = _pick_tile(Np, 256, 128)
    tk = _pick_tile(K, 512, 128)
    grid = (M // tm, Np // tn, K // tk)
    return pl.pallas_call(
        functools.partial(_matmul_kernel, act=act),
        out_shape=jax.ShapeDtypeStruct((M, Np), jnp.bfloat16),
        grid=grid,
        in_specs=[
            pl.BlockSpec((tm, tk), lambda i, j, k: (i, k)),
            pl.BlockSpec((tk, tn), lambda i, j, k: (k, j)),
            pl.BlockSpec((1, tn), lambda i, j, k: (0, j)),
        ],
        out_specs=pl.BlockSpec((tm, tn), lambda i, j, k: (i, j)),
        scratch_shapes=[pltpu.VMEM((tm, tn), jnp.float32)],
        compiler_params=pltpu.CompilerParams(
            dimension_semantics=("parallel", "parallel", "arbitrary"),
            vmem_limit_bytes=_VMEM_LIMIT,
        ),
    )(a, b, bias)


# ----------------------------------------------------------------------------
# Instance norm (affine=False): two-pass tiled kernels, fused ReLU / residual add
# ----------------------------------------------------------------------------
def _in_stats_kernel(x_ref, sum_ref, sq_ref):
    @pl.when(pl.program_id(1) == 0)
    def _init():
        sum_ref[...] = jnp.zeros_like(sum_ref)
        sq_ref[...] = jnp.zeros_like(sq_ref)

    x = x_ref[0].astype(jnp.float32)                       # (tr, Cp)
    sum_ref[0] += jnp.sum(x, axis=0, keepdims=True)
    sq_ref[0] += jnp.sum(x * x, axis=0, keepdims=True)


def _in_apply_kernel(x_ref, sum_ref, sq_ref, *rest,
                     inv_hw, relu, eps, has_residual):
    if has_residual:
        res_ref, o_ref = rest
    else:
        (o_ref,) = rest
    x = x_ref[0].astype(jnp.float32)                       # (tr, Cp)
    mean = sum_ref[0] * inv_hw                             # (1, Cp)
    var = jnp.maximum(sq_ref[0] * inv_hw - mean * mean, 0.0)  # biased, like PyTorch
    y = (x - mean) * jax.lax.rsqrt(var + eps)
    if relu:
        y = jnp.maximum(y, 0.0)
    if has_residual:
        y = y + res_ref[0].astype(jnp.float32)
    o_ref[0] = y.astype(o_ref.dtype)


def instance_norm(x, relu=False, residual=None, eps=1e-5):
    """InstanceNorm2d(affine=False) on NHWC x; optional fused ReLU / residual add."""
    N, H, W, Cp = x.shape
    HW = H * W
    x2 = x.reshape(N, HW, Cp)
    tr = _pick_tile(HW, 512, 16)
    rt = HW // tr

    row_spec = pl.BlockSpec((1, tr, Cp), lambda n, r: (n, r, 0))
    stats_spec = pl.BlockSpec((1, 1, Cp), lambda n, r: (n, 0, 0))

    # pass 1: per-(n, c) sum and sum-of-squares over spatial tiles
    s, ss = pl.pallas_call(
        _in_stats_kernel,
        out_shape=(jax.ShapeDtypeStruct((N, 1, Cp), jnp.float32),
                   jax.ShapeDtypeStruct((N, 1, Cp), jnp.float32)),
        grid=(N, rt),
        in_specs=[row_spec],
        out_specs=(stats_spec, stats_spec),
        compiler_params=pltpu.CompilerParams(
            dimension_semantics=("parallel", "arbitrary"),
            vmem_limit_bytes=_VMEM_LIMIT,
        ),
    )(x2)

    # pass 2: normalize (+ ReLU, + residual add)
    inputs = [x2, s, ss]
    in_specs = [row_spec, stats_spec, stats_spec]
    if residual is not None:
        inputs.append(residual.reshape(N, HW, Cp))
        in_specs.append(row_spec)

    y = pl.pallas_call(
        functools.partial(_in_apply_kernel, inv_hw=1.0 / HW, relu=relu,
                          eps=eps, has_residual=residual is not None),
        out_shape=jax.ShapeDtypeStruct((N, HW, Cp), x.dtype),
        grid=(N, rt),
        in_specs=in_specs,
        out_specs=row_spec,
        compiler_params=pltpu.CompilerParams(
            dimension_semantics=("parallel", "parallel"),
            vmem_limit_bytes=_VMEM_LIMIT,
        ),
    )(*inputs)
    return y.reshape(N, H, W, Cp)


# ----------------------------------------------------------------------------
# Conv glue (NHWC im2col / dilation in JAX; matmul + epilogues in Pallas)
# ----------------------------------------------------------------------------
def _im2col_nhwc(x, kh, kw, stride):
    """(N,Hp,Wp,C) padded NHWC -> (N*Ho*Wo, C*kh*kw); columns ordered (c, ky, kx)."""
    # TODO(synk): drop this HBM-materialized im2col (9x-49x inflation) by
    # accumulating the kh*kw taps inside the matmul kernel with pl.ds-shifted
    # loads of the padded NHWC input into the f32 VMEM accumulator.
    N, Hp, Wp, C = x.shape
    Ho = (Hp - kh) // stride + 1
    Wo = (Wp - kw) // stride + 1
    taps = []
    for ky in range(kh):
        for kx in range(kw):
            taps.append(x[:, ky:ky + (Ho - 1) * stride + 1:stride,
                          kx:kx + (Wo - 1) * stride + 1:stride, :])
    p = jnp.stack(taps, axis=-1)                  # (N, Ho, Wo, C, kh*kw)
    return p.reshape(N * Ho * Wo, C * kh * kw), Ho, Wo


def conv2d(x, w, b, stride=1, padding=0, pad_mode="zero", act="none"):
    """PyTorch-semantics Conv2d on NHWC activations.

    x: (N,H,W,Cp_in) bf16 where Cp_in >= Cin (extra channels are zero).
    w: (Cout, Cin, kh, kw) f32.  b: (Cout,) f32.
    Returns (N,Ho,Wo,Cp_out) bf16 with Cp_out = round_up(Cout, 128) (pad chans 0).
    """
    Cout, Cin, kh, kw = w.shape
    if padding > 0:
        x = jnp.pad(x, ((0, 0), (padding, padding), (padding, padding), (0, 0)),
                    mode="reflect" if pad_mode == "reflect" else "constant")
    N = x.shape[0]
    Cp_in = x.shape[3]
    cols, Ho, Wo = _im2col_nhwc(x, kh, kw, stride)

    Cp_out = _round_up(Cout, 128)                           # lane-dense output
    wm = jnp.zeros((Cp_in, kh, kw, Cout), jnp.float32)
    wm = wm.at[:Cin].set(jnp.transpose(w, (1, 2, 3, 0)))    # (ci, ky, kx, co)
    wm = wm.reshape(Cp_in * kh * kw, Cout)
    wm = jnp.pad(wm, ((0, 0), (0, Cp_out - Cout)))
    bias = jnp.pad(b, (0, Cp_out - Cout)).reshape(1, Cp_out).astype(jnp.float32)

    out = matmul_bias_act(cols.astype(jnp.bfloat16),
                          wm.astype(jnp.bfloat16), bias, act=act)
    return out.reshape(N, Ho, Wo, Cp_out)


def conv_transpose2d(x, w, b, stride=2, padding=1, output_padding=1, act="none"):
    """PyTorch-semantics ConvTranspose2d on NHWC. w: (Cin, Cout, kh, kw)."""
    Cin, Cout, kh, kw = w.shape
    N, H, W, Cp_in = x.shape
    # TODO(synk): replace the zero-dilated input with a stride^2 pixel-shuffle
    # sub-kernel decomposition (75% of MACs below multiply zeros).
    xd = jnp.zeros((N, (H - 1) * stride + 1, (W - 1) * stride + 1, Cp_in), x.dtype)
    xd = xd.at[:, ::stride, ::stride, :].set(x)
    pad_lo = kh - 1 - padding
    pad_hi = kh - 1 - padding + output_padding
    xd = jnp.pad(xd, ((0, 0), (pad_lo, pad_hi), (pad_lo, pad_hi), (0, 0)))
    # equivalent forward conv: flip kernel spatially, swap in/out channels
    w_conv = jnp.flip(w, axis=(2, 3)).transpose(1, 0, 2, 3)  # (Cout, Cin, kh, kw)
    return conv2d(xd, w_conv, b, stride=1, padding=0, act=act)


# ----------------------------------------------------------------------------
# Generator (HD branch): reflection pad + InstanceNorm(affine=False) + ReLU
# ----------------------------------------------------------------------------
def init_params(key, input_ch, n_gf, n_downsample, n_residual, output_ch):
    keys = iter(jax.random.split(key, 64))

    def conv_p(k, cout, cin, ksz):
        w = jax.random.normal(k, (cout, cin, ksz, ksz), jnp.float32) * 0.02
        return (w, jnp.zeros((cout,), jnp.float32))

    p = {}
    p["head"] = conv_p(next(keys), n_gf, input_ch, 7)
    ch = n_gf
    p["down"] = []
    for _ in range(n_downsample):
        p["down"].append(conv_p(next(keys), 2 * ch, ch, 3))
        ch *= 2
    p["res"] = []
    for _ in range(n_residual):
        p["res"].append((conv_p(next(keys), ch, ch, 3), conv_p(next(keys), ch, ch, 3)))
    p["up"] = []
    for _ in range(n_downsample):
        # ConvTranspose2d weight layout: (in_ch, out_ch, kh, kw)
        w = jax.random.normal(next(keys), (ch, ch // 2, 3, 3), jnp.float32) * 0.02
        p["up"].append((w, jnp.zeros((ch // 2,), jnp.float32)))
        ch //= 2
    p["tail"] = conv_p(next(keys), output_ch, ch, 7)
    return p


def generator_forward(params, x_nchw):
    # single NCHW -> NHWC transpose at the input; bf16 activations end-to-end
    x = jnp.transpose(x_nchw, (0, 2, 3, 1)).astype(jnp.bfloat16)

    # head: ReflectionPad(3) + Conv7x7 + InstanceNorm + ReLU
    w, b = params["head"]
    h = conv2d(x, w, b, stride=1, padding=3, pad_mode="reflect")
    h = instance_norm(h, relu=True)

    # downsampling: Conv3x3 stride 2 (zero pad 1) + InstanceNorm + ReLU
    for (w, b) in params["down"]:
        h = conv2d(h, w, b, stride=2, padding=1, pad_mode="zero")
        h = instance_norm(h, relu=True)

    # residual blocks: [pad(1)+conv3x3+IN+ReLU+pad(1)+conv3x3+IN] + skip (fused add)
    for ((w1, b1), (w2, b2)) in params["res"]:
        r = conv2d(h, w1, b1, stride=1, padding=1, pad_mode="reflect")
        r = instance_norm(r, relu=True)
        r = conv2d(r, w2, b2, stride=1, padding=1, pad_mode="reflect")
        h = instance_norm(r, relu=False, residual=h)   # residual add fused in-kernel

    # upsampling: ConvTranspose3x3 s2 p1 op1 + InstanceNorm + ReLU
    for (w, b) in params["up"]:
        h = conv_transpose2d(h, w, b, stride=2, padding=1, output_padding=1)
        h = instance_norm(h, relu=True)

    # tail: ReflectionPad(3) + Conv7x7 + Tanh (tanh fused into the matmul epilogue)
    w, b = params["tail"]
    h = conv2d(h, w, b, stride=1, padding=3, pad_mode="reflect", act="tanh")

    out_ch = w.shape[0]
    y = h[..., :out_ch].astype(jnp.float32)
    return jnp.transpose(y, (0, 3, 1, 2))               # back to NCHW once


if __name__ == "__main__":
    # small, HD-branch-consistent config
    input_ch, output_ch = 4, 3
    n_gf, n_downsample, n_residual = 8, 2, 2
    N, H, W = 2, 16, 16

    key = jax.random.PRNGKey(0)
    k_x, k_p = jax.random.split(key)
    x = jax.random.normal(k_x, (N, input_ch, H, W), jnp.float32)
    params = init_params(k_p, input_ch, n_gf, n_downsample, n_residual, output_ch)

    fwd = jax.jit(generator_forward)
    y = jax.block_until_ready(fwd(params, x))

    assert y.shape == (N, output_ch, H, W), y.shape
    assert bool(jnp.all(jnp.isfinite(y)))
    assert bool(jnp.all(jnp.abs(y) <= 1.0 + 1e-6))  # tanh output range
    print("KERNEL_OK")
</pallas_src>

<mosaic_0001>
module attributes {stable_mosaic.version = 11 : i64} {
  func.func @_matmul_kernel(%arg0: i32, %arg1: i32, %arg2: i32, %arg3: memref<256x196xbf16, #tpu.memory_space<vmem>>, %arg4: memref<196x128xbf16, #tpu.memory_space<vmem>>, %arg5: memref<1x128xf32, #tpu.memory_space<vmem>>, %arg6: memref<256x128xbf16, #tpu.memory_space<vmem>>, %arg7: memref<256x128xf32, #tpu.memory_space<vmem>>) attributes {dimension_semantics = [#tpu.dimension_semantics<parallel>, #tpu.dimension_semantics<parallel>, #tpu.dimension_semantics<arbitrary>], iteration_bounds = array<i64: 2, 1, 1>, scalar_prefetch = 0 : i64, scratch_operands = 1 : i64, tpu.core_type = #tpu.core_type<tc>, window_params = [{transform_indices = @transform_0, window_bounds = array<i64: 256, 196>}, {transform_indices = @transform_1, window_bounds = array<i64: 196, 128>}, {transform_indices = @transform_2, window_bounds = array<i64: 1, 128>}, {transform_indices = @transform_3, window_bounds = array<i64: 256, 128>}]} {
    %c0_i32 = arith.constant 0 : i32
    %0 = arith.cmpi eq, %arg2, %c0_i32 : i32
    %1 = arith.extui %0 : i1 to i32
    %c0_i32_0 = arith.constant 0 : i32
    %2 = arith.cmpi ne, %1, %c0_i32_0 : i32
    scf.if %2 {
      %cst_10 = arith.constant 0.000000e+00 : f32
      %12 = vector.broadcast %cst_10 : f32 to vector<256x128xf32>
      %c0_11 = arith.constant 0 : index
      %c0_12 = arith.constant 0 : index
      %13 = vector.load %arg7[%c0_11, %c0_12] : memref<256x128xf32, #tpu.memory_space<vmem>>, vector<256x128xf32>
      tpu.vector_store %arg7[%c0_11, %c0_12], %12 {strides = array<i32>} : memref<256x128xf32, #tpu.memory_space<vmem>>, vector<256x128xf32>,
    } else {
    }
    %c0 = arith.constant 0 : index
    %c0_1 = arith.constant 0 : index
    %3 = vector.load %arg7[%c0, %c0_1] : memref<256x128xf32, #tpu.memory_space<vmem>>, vector<256x128xf32>
    %c0_2 = arith.constant 0 : index
    %c0_3 = arith.constant 0 : index
    %4 = vector.load %arg3[%c0_2, %c0_3] : memref<256x196xbf16, #tpu.memory_space<vmem>>, vector<256x196xbf16>
    %c0_4 = arith.constant 0 : index
    %c0_5 = arith.constant 0 : index
    %5 = vector.load %arg4[%c0_4, %c0_5] : memref<196x128xbf16, #tpu.memory_space<vmem>>, vector<196x128xbf16>
    %cst = arith.constant dense<0.000000e+00> : vector<256x128xf32>
    %6 = tpu.matmul %4, %5, %cst {dimension_numbers = #tpu.dot_dimension_numbers<[1], [0], [0], [1], [0, 0, 1, 1], [], []>} : vector<256x196xbf16>, vector<196x128xbf16>, vector<256x128xf32> -> vector<256x128xf32>
    %7 = arith.addf %3, %6 : vector<256x128xf32>
    %c0_6 = arith.constant 0 : index
    %c0_7 = arith.constant 0 : index
    %8 = vector.load %arg7[%c0_6, %c0_7] : memref<256x128xf32, #tpu.memory_space<vmem>>, vector<256x128xf32>
    tpu.vector_store %arg7[%c0_6, %c0_7], %7 {strides = array<i32>} : memref<256x128xf32, #tpu.memory_space<vmem>>, vector<256x128xf32>,
    %c0_i32_8 = arith.constant 0 : i32
    %9 = arith.cmpi eq, %arg2, %c0_i32_8 : i32
    %10 = arith.extui %9 : i1 to i32
    %c0_i32_9 = arith.constant 0 : i32
    %11 = arith.cmpi ne, %10, %c0_i32_9 : i32
    scf.if %11 {
      %c0_10 = arith.constant 0 : index
      %c0_11 = arith.constant 0 : index
      %12 = vector.load %arg7[%c0_10, %c0_11] : memref<256x128xf32, #tpu.memory_space<vmem>>, vector<256x128xf32>
      %c0_12 = arith.constant 0 : index
      %c0_13 = arith.constant 0 : index
      %13 = vector.load %arg5[%c0_12, %c0_13] : memref<1x128xf32, #tpu.memory_space<vmem>>, vector<1x128xf32>
      %14 = vector.broadcast %13 : vector<1x128xf32> to vector<256x128xf32>
      %15 = arith.addf %12, %14 : vector<256x128xf32>
      %16 = arith.truncf %15 : vector<256x128xf32> to vector<256x128xbf16>
      %c0_14 = arith.constant 0 : index
      %c0_15 = arith.constant 0 : index
      %17 = vector.load %arg6[%c0_14, %c0_15] : memref<256x128xbf16, #tpu.memory_space<vmem>>, vector<256x128xbf16>
      tpu.vector_store %arg6[%c0_14, %c0_15], %16 {strides = array<i32>} : memref<256x128xbf16, #tpu.memory_space<vmem>>, vector<256x128xbf16>,
    } else {
    }
    return
  }
  func.func @transform_0(%arg0: i32, %arg1: i32, %arg2: i32) -> (i32, i32) {
    %c0_i32 = arith.constant 0 : i32
    return %arg0, %arg2 : i32, i32
  }
  func.func @transform_1(%arg0: i32, %arg1: i32, %arg2: i32) -> (i32, i32) {
    %c0_i32 = arith.constant 0 : i32
    return %arg2, %arg1 : i32, i32
  }
  func.func @transform_2(%arg0: i32, %arg1: i32, %arg2: i32) -> (i32, i32) {
    %c0_i32 = arith.constant 0 : i32
    %c0_i32_0 = arith.constant 0 : i32
    return %c0_i32, %arg1 : i32, i32
  }
  func.func @transform_3(%arg0: i32, %arg1: i32, %arg2: i32) -> (i32, i32) {
    %c0_i32 = arith.constant 0 : i32
    return %arg0, %arg1 : i32, i32
  }
}

module attributes {stable_mosaic.version = 11 : i64} {
  func.func @_in_stats_kernel(%arg0: i32, %arg1: i32, %arg2: memref<1x256x128xbf16, #tpu.memory_space<vmem>>, %arg3: memref<1x1x128xf32, #tpu.memory_space<vmem>>, %arg4: memref<1x1x128xf32, #tpu.memory_space<vmem>>) attributes {dimension_semantics = [#tpu.dimension_semantics<parallel>, #tpu.dimension_semantics<arbitrary>], iteration_bounds = array<i64: 2, 1>, scalar_prefetch = 0 : i64, scratch_operands = 0 : i64, tpu.core_type = #tpu.core_type<tc>, window_params = [{transform_indices = @transform_0, window_bounds = array<i64: 1, 256, 128>}, {transform_indices = @transform_1, window_bounds = array<i64: 1, 1, 128>}, {transform_indices = @transform_2, window_bounds = array<i64: 1, 1, 128>}]} {
    %c0_i32 = arith.constant 0 : i32
    %0 = arith.cmpi eq, %arg1, %c0_i32 : i32
    %1 = arith.extui %0 : i1 to i32
    %c0_i32_0 = arith.constant 0 : i32
    %2 = arith.cmpi ne, %1, %c0_i32_0 : i32
    scf.if %2 {
      %cst_16 = arith.constant 0.000000e+00 : f32
      %23 = vector.broadcast %cst_16 : f32 to vector<1x1x128xf32>
      %c0_17 = arith.constant 0 : index
      %c0_18 = arith.constant 0 : index
      %c0_19 = arith.constant 0 : index
      %24 = vector.load %arg3[%c0_17, %c0_18, %c0_19] : memref<1x1x128xf32, #tpu.memory_space<vmem>>, vector<1x1x128xf32>
      tpu.vector_store %arg3[%c0_17, %c0_18, %c0_19], %23 {strides = array<i32>} : memref<1x1x128xf32, #tpu.memory_space<vmem>>, vector<1x1x128xf32>,
      %cst_20 = arith.constant 0.000000e+00 : f32
      %25 = vector.broadcast %cst_20 : f32 to vector<1x1x128xf32>
      %c0_21 = arith.constant 0 : index
      %c0_22 = arith.constant 0 : index
      %c0_23 = arith.constant 0 : index
      %26 = vector.load %arg4[%c0_21, %c0_22, %c0_23] : memref<1x1x128xf32, #tpu.memory_space<vmem>>, vector<1x1x128xf32>
      tpu.vector_store %arg4[%c0_21, %c0_22, %c0_23], %25 {strides = array<i32>} : memref<1x1x128xf32, #tpu.memory_space<vmem>>, vector<1x1x128xf32>,
    } else {
    }
    %c0 = arith.constant 0 : index
    %c0_1 = arith.constant 0 : index
    %c0_2 = arith.constant 0 : index
    %3 = vector.load %arg2[%c0, %c0_1, %c0_2] : memref<1x256x128xbf16, #tpu.memory_space<vmem>>, vector<1x256x128xbf16>
    %4 = vector.shape_cast %3 : vector<1x256x128xbf16> to vector<256x128xbf16>
    %5 = arith.extf %4 : vector<256x128xbf16> to vector<256x128xf32>
    %c0_3 = arith.constant 0 : index
    %c0_4 = arith.constant 0 : index
    %c0_5 = arith.constant 0 : index
    %6 = vector.load %arg3[%c0_3, %c0_4, %c0_5] : memref<1x1x128xf32, #tpu.memory_space<vmem>>, vector<1x1x128xf32>
    %7 = vector.shape_cast %6 : vector<1x1x128xf32> to vector<1x128xf32>
    %cst = arith.constant dense<0.000000e+00> : vector<128xf32>
    %8 = vector.multi_reduction <add>, %5, %cst [0] : vector<256x128xf32> to vector<128xf32>
    %9 = vector.shape_cast %8 : vector<128xf32> to vector<1x128xf32>
    %10 = arith.addf %7, %9 : vector<1x128xf32>
    %c0_6 = arith.constant 0 : index
    %c0_7 = arith.constant 0 : index
    %c0_8 = arith.constant 0 : index
    %11 = vector.load %arg3[%c0_6, %c0_7, %c0_8] : memref<1x1x128xf32, #tpu.memory_space<vmem>>, vector<1x1x128xf32>
    %12 = vector.shape_cast %11 : vector<1x1x128xf32> to vector<1x128xf32>
    %13 = vector.shape_cast %10 : vector<1x128xf32> to vector<1x1x128xf32>
    tpu.vector_store %arg3[%c0_6, %c0_7, %c0_8], %13 {strides = array<i32>} : memref<1x1x128xf32, #tpu.memory_space<vmem>>, vector<1x1x128xf32>,
    %c0_9 = arith.constant 0 : index
    %c0_10 = arith.constant 0 : index
    %c0_11 = arith.constant 0 : index
    %14 = vector.load %arg4[%c0_9, %c0_10, %c0_11] : memref<1x1x128xf32, #tpu.memory_space<vmem>>, vector<1x1x128xf32>
    %15 = vector.shape_cast %14 : vector<1x1x128xf32> to vector<1x128xf32>
    %16 = arith.mulf %5, %5 : vector<256x128xf32>
    %cst_12 = arith.constant dense<0.000000e+00> : vector<128xf32>
    %17 = vector.multi_reduction <add>, %16, %cst_12 [0] : vector<256x128xf32> to vector<128xf32>
    %18 = vector.shape_cast %17 : vector<128xf32> to vector<1x128xf32>
    %19 = arith.addf %15, %18 : vector<1x128xf32>
    %c0_13 = arith.constant 0 : index
    %c0_14 = arith.constant 0 : index
    %c0_15 = arith.constant 0 : index
    %20 = vector.load %arg4[%c0_13, %c0_14, %c0_15] : memref<1x1x128xf32, #tpu.memory_space<vmem>>, vector<1x1x128xf32>
    %21 = vector.shape_cast %20 : vector<1x1x128xf32> to vector<1x128xf32>
    %22 = vector.shape_cast %19 : vector<1x128xf32> to vector<1x1x128xf32>
    tpu.vector_store %arg4[%c0_13, %c0_14, %c0_15], %22 {strides = array<i32>} : memref<1x1x128xf32, #tpu.memory_space<vmem>>, vector<1x1x128xf32>,
    return
  }
  func.func @transform_0(%arg0: i32, %arg1: i32) -> (i32, i32, i32) {
    %c0_i32 = arith.constant 0 : i32
    %c0_i32_0 = arith.constant 0 : i32
    return %arg0, %arg1, %c0_i32 : i32, i32, i32
  }
  func.func @transform_1(%arg0: i32, %arg1: i32) -> (i32, i32, i32) {
    %c0_i32 = arith.constant 0 : i32
    %c0_i32_0 = arith.constant 0 : i32
    %c0_i32_1 = arith.constant 0 : i32
    return %arg0, %c0_i32, %c0_i32_0 : i32, i32, i32
  }
  func.func @transform_2(%arg0: i32, %arg1: i32) -> (i32, i32, i32) {
    %c0_i32 = arith.constant 0 : i32
    %c0_i32_0 = arith.constant 0 : i32
    %c0_i32_1 = arith.constant 0 : i32
    return %arg0, %c0_i32, %c0_i32_0 : i32, i32, i32
  }
}

module attributes {stable_mosaic.version = 11 : i64} {
  func.func @_in_apply_kernel(%arg0: i32, %arg1: i32, %arg2: memref<1x256x128xbf16, #tpu.memory_space<vmem>>, %arg3: memref<1x1x128xf32, #tpu.memory_space<vmem>>, %arg4: memref<1x1x128xf32, #tpu.memory_space<vmem>>, %arg5: memref<1x256x128xbf16, #tpu.memory_space<vmem>>) attributes {dimension_semantics = [#tpu.dimension_semantics<parallel>, #tpu.dimension_semantics<parallel>], iteration_bounds = array<i64: 2, 1>, scalar_prefetch = 0 : i64, scratch_operands = 0 : i64, tpu.core_type = #tpu.core_type<tc>, window_params = [{transform_indices = @transform_0, window_bounds = array<i64: 1, 256, 128>}, {transform_indices = @transform_1, window_bounds = array<i64: 1, 1, 128>}, {transform_indices = @transform_2, window_bounds = array<i64: 1, 1, 128>}, {transform_indices = @transform_3, window_bounds = array<i64: 1, 256, 128>}]} {
    %c0 = arith.constant 0 : index
    %c0_0 = arith.constant 0 : index
    %c0_1 = arith.constant 0 : index
    %0 = vector.load %arg2[%c0, %c0_0, %c0_1] : memref<1x256x128xbf16, #tpu.memory_space<vmem>>, vector<1x256x128xbf16>
    %1 = vector.shape_cast %0 : vector<1x256x128xbf16> to vector<256x128xbf16>
    %2 = arith.extf %1 : vector<256x128xbf16> to vector<256x128xf32>
    %c0_2 = arith.constant 0 : index
    %c0_3 = arith.constant 0 : index
    %c0_4 = arith.constant 0 : index
    %3 = vector.load %arg3[%c0_2, %c0_3, %c0_4] : memref<1x1x128xf32, #tpu.memory_space<vmem>>, vector<1x1x128xf32>
    %4 = vector.shape_cast %3 : vector<1x1x128xf32> to vector<1x128xf32>
    %cst = arith.constant 3.906250e-03 : f32
    %5 = vector.broadcast %cst : f32 to vector<1x128xf32>
    %6 = arith.mulf %4, %5 : vector<1x128xf32>
    %c0_5 = arith.constant 0 : index
    %c0_6 = arith.constant 0 : index
    %c0_7 = arith.constant 0 : index
    %7 = vector.load %arg4[%c0_5, %c0_6, %c0_7] : memref<1x1x128xf32, #tpu.memory_space<vmem>>, vector<1x1x128xf32>
    %8 = vector.shape_cast %7 : vector<1x1x128xf32> to vector<1x128xf32>
    %cst_8 = arith.constant 3.906250e-03 : f32
    %9 = vector.broadcast %cst_8 : f32 to vector<1x128xf32>
    %10 = arith.mulf %8, %9 : vector<1x128xf32>
    %11 = arith.mulf %6, %6 : vector<1x128xf32>
    %12 = arith.subf %10, %11 : vector<1x128xf32>
    %cst_9 = arith.constant 0.000000e+00 : f32
    %13 = vector.broadcast %cst_9 : f32 to vector<1x128xf32>
    %14 = arith.maximumf %12, %13 : vector<1x128xf32>
    %15 = vector.broadcast %6 : vector<1x128xf32> to vector<256x128xf32>
    %16 = arith.subf %2, %15 : vector<256x128xf32>
    %cst_10 = arith.constant 9.99999974E-6 : f32
    %17 = vector.broadcast %cst_10 : f32 to vector<1x128xf32>
    %18 = arith.addf %14, %17 : vector<1x128xf32>
    %19 = math.rsqrt %18 : vector<1x128xf32>
    %20 = vector.broadcast %19 : vector<1x128xf32> to vector<256x128xf32>
    %21 = arith.mulf %16, %20 : vector<256x128xf32>
    %cst_11 = arith.constant 0.000000e+00 : f32
    %22 = vector.broadcast %cst_11 : f32 to vector<256x128xf32>
    %23 = arith.maximumf %21, %22 : vector<256x128xf32>
    %24 = arith.truncf %23 : vector<256x128xf32> to vector<256x128xbf16>
    %c0_12 = arith.constant 0 : index
    %c0_13 = arith.constant 0 : index
    %c0_14 = arith.constant 0 : index
    %25 = vector.load %arg5[%c0_12, %c0_13, %c0_14] : memref<1x256x128xbf16, #tpu.memory_space<vmem>>, vector<1x256x128xbf16>
    %26 = vector.shape_cast %25 : vector<1x256x128xbf16> to vector<256x128xbf16>
    %27 = vector.shape_cast %24 : vector<256x128xbf16> to vector<1x256x128xbf16>
    tpu.vector_store %arg5[%c0_12, %c0_13, %c0_14], %27 {strides = array<i32>} : memref<1x256x128xbf16, #tpu.memory_space<vmem>>, vector<1x256x128xbf16>,
    return
  }
  func.func @transform_0(%arg0: i32, %arg1: i32) -> (i32, i32, i32) {
    %c0_i32 = arith.constant 0 : i32
    %c0_i32_0 = arith.constant 0 : i32
    return %arg0, %arg1, %c0_i32 : i32, i32, i32
  }
  func.func @transform_1(%arg0: i32, %arg1: i32) -> (i32, i32, i32) {
    %c0_i32 = arith.constant 0 : i32
    %c0_i32_0 = arith.constant 0 : i32
    %c0_i32_1 = arith.constant 0 : i32
    return %arg0, %c0_i32, %c0_i32_0 : i32, i32, i32
  }
  func.func @transform_2(%arg0: i32, %arg1: i32) -> (i32, i32, i32) {
    %c0_i32 = arith.constant 0 : i32
    %c0_i32_0 = arith.constant 0 : i32
    %c0_i32_1 = arith.constant 0 : i32
    return %arg0, %c0_i32, %c0_i32_0 : i32, i32, i32
  }
  func.func @transform_3(%arg0: i32, %arg1: i32) -> (i32, i32, i32) {
    %c0_i32 = arith.constant 0 : i32
    %c0_i32_0 = arith.constant 0 : i32
    return %arg0, %arg1, %c0_i32 : i32, i32, i32
  }
}

module attributes {stable_mosaic.version = 11 : i64} {
  func.func @_matmul_kernel(%arg0: i32, %arg1: i32, %arg2: i32, %arg3: memref<128x384xbf16, #tpu.memory_space<vmem>>, %arg4: memref<384x128xbf16, #tpu.memory_space<vmem>>, %arg5: memref<1x128xf32, #tpu.memory_space<vmem>>, %arg6: memref<128x128xbf16, #tpu.memory_space<vmem>>, %arg7: memref<128x128xf32, #tpu.memory_space<vmem>>) attributes {dimension_semantics = [#tpu.dimension_semantics<parallel>, #tpu.dimension_semantics<parallel>, #tpu.dimension_semantics<arbitrary>], iteration_bounds = array<i64: 1, 1, 3>, scalar_prefetch = 0 : i64, scratch_operands = 1 : i64, tpu.core_type = #tpu.core_type<tc>, window_params = [{transform_indices = @transform_0, window_bounds = array<i64: 128, 384>}, {transform_indices = @transform_1, window_bounds = array<i64: 384, 128>}, {transform_indices = @transform_2, window_bounds = array<i64: 1, 128>}, {transform_indices = @transform_3, window_bounds = array<i64: 128, 128>}]} {
    %c0_i32 = arith.constant 0 : i32
    %0 = arith.cmpi eq, %arg2, %c0_i32 : i32
    %1 = arith.extui %0 : i1 to i32
    %c0_i32_0 = arith.constant 0 : i32
    %2 = arith.cmpi ne, %1, %c0_i32_0 : i32
    scf.if %2 {
      %cst_9 = arith.constant 0.000000e+00 : f32
      %12 = vector.broadcast %cst_9 : f32 to vector<128x128xf32>
      %c0_10 = arith.constant 0 : index
      %c0_11 = arith.constant 0 : index
      %13 = vector.load %arg7[%c0_10, %c0_11] : memref<128x128xf32, #tpu.memory_space<vmem>>, vector<128x128xf32>
      tpu.vector_store %arg7[%c0_10, %c0_11], %12 {strides = array<i32>} : memref<128x128xf32, #tpu.memory_space<vmem>>, vector<128x128xf32>,
    } else {
    }
    %c0 = arith.constant 0 : index
    %c0_1 = arith.constant 0 : index
    %3 = vector.load %arg7[%c0, %c0_1] : memref<128x128xf32, #tpu.memory_space<vmem>>, vector<128x128xf32>
    %c0_2 = arith.constant 0 : index
    %c0_3 = arith.constant 0 : index
    %4 = vector.load %arg3[%c0_2, %c0_3] : memref<128x384xbf16, #tpu.memory_space<vmem>>, vector<128x384xbf16>
    %c0_4 = arith.constant 0 : index
    %c0_5 = arith.constant 0 : index
    %5 = vector.load %arg4[%c0_4, %c0_5] : memref<384x128xbf16, #tpu.memory_space<vmem>>, vector<384x128xbf16>
    %cst = arith.constant dense<0.000000e+00> : vector<128x128xf32>
    %6 = tpu.matmul %4, %5, %cst {dimension_numbers = #tpu.dot_dimension_numbers<[1], [0], [0], [1], [0, 0, 1, 1], [], []>} : vector<128x384xbf16>, vector<384x128xbf16>, vector<128x128xf32> -> vector<128x128xf32>
    %7 = arith.addf %3, %6 : vector<128x128xf32>
    %c0_6 = arith.constant 0 : index
    %c0_7 = arith.constant 0 : index
    %8 = vector.load %arg7[%c0_6, %c0_7] : memref<128x128xf32, #tpu.memory_space<vmem>>, vector<128x128xf32>
    tpu.vector_store %arg7[%c0_6, %c0_7], %7 {strides = array<i32>} : memref<128x128xf32, #tpu.memory_space<vmem>>, vector<128x128xf32>,
    %c2_i32 = arith.constant 2 : i32
    %9 = arith.cmpi eq, %arg2, %c2_i32 : i32
    %10 = arith.extui %9 : i1 to i32
    %c0_i32_8 = arith.constant 0 : i32
    %11 = arith.cmpi ne, %10, %c0_i32_8 : i32
    scf.if %11 {
      %c0_9 = arith.constant 0 : index
      %c0_10 = arith.constant 0 : index
      %12 = vector.load %arg7[%c0_9, %c0_10] : memref<128x128xf32, #tpu.memory_space<vmem>>, vector<128x128xf32>
      %c0_11 = arith.constant 0 : index
      %c0_12 = arith.constant 0 : index
      %13 = vector.load %arg5[%c0_11, %c0_12] : memref<1x128xf32, #tpu.memory_space<vmem>>, vector<1x128xf32>
      %14 = vector.broadcast %13 : vector<1x128xf32> to vector<128x128xf32>
      %15 = arith.addf %12, %14 : vector<128x128xf32>
      %16 = arith.truncf %15 : vector<128x128xf32> to vector<128x128xbf16>
      %c0_13 = arith.constant 0 : index
      %c0_14 = arith.constant 0 : index
      %17 = vector.load %arg6[%c0_13, %c0_14] : memref<128x128xbf16, #tpu.memory_space<vmem>>, vector<128x128xbf16>
      tpu.vector_store %arg6[%c0_13, %c0_14], %16 {strides = array<i32>} : memref<128x128xbf16, #tpu.memory_space<vmem>>, vector<128x128xbf16>,
    } else {
    }
    return
  }
  func.func @transform_0(%arg0: i32, %arg1: i32, %arg2: i32) -> (i32, i32) {
    %c0_i32 = arith.constant 0 : i32
    return %arg0, %arg2 : i32, i32
  }
  func.func @transform_1(%arg0: i32, %arg1: i32, %arg2: i32) -> (i32, i32) {
    %c0_i32 = arith.constant 0 : i32
    return %arg2, %arg1 : i32, i32
  }
  func.func @transform_2(%arg0: i32, %arg1: i32, %arg2: i32) -> (i32, i32) {
    %c0_i32 = arith.constant 0 : i32
    %c0_i32_0 = arith.constant 0 : i32
    return %c0_i32, %arg1 : i32, i32
  }
  func.func @transform_3(%arg0: i32, %arg1: i32, %arg2: i32) -> (i32, i32) {
    %c0_i32 = arith.constant 0 : i32
    return %arg0, %arg1 : i32, i32
  }
}

module attributes {stable_mosaic.version = 11 : i64} {
  func.func @_in_stats_kernel(%arg0: i32, %arg1: i32, %arg2: memref<1x64x128xbf16, #tpu.memory_space<vmem>>, %arg3: memref<1x1x128xf32, #tpu.memory_space<vmem>>, %arg4: memref<1x1x128xf32, #tpu.memory_space<vmem>>) attributes {dimension_semantics = [#tpu.dimension_semantics<parallel>, #tpu.dimension_semantics<arbitrary>], iteration_bounds = array<i64: 2, 1>, scalar_prefetch = 0 : i64, scratch_operands = 0 : i64, tpu.core_type = #tpu.core_type<tc>, window_params = [{transform_indices = @transform_0, window_bounds = array<i64: 1, 64, 128>}, {transform_indices = @transform_1, window_bounds = array<i64: 1, 1, 128>}, {transform_indices = @transform_2, window_bounds = array<i64: 1, 1, 128>}]} {
    %c0_i32 = arith.constant 0 : i32
    %0 = arith.cmpi eq, %arg1, %c0_i32 : i32
    %1 = arith.extui %0 : i1 to i32
    %c0_i32_0 = arith.constant 0 : i32
    %2 = arith.cmpi ne, %1, %c0_i32_0 : i32
    scf.if %2 {
      %cst_16 = arith.constant 0.000000e+00 : f32
      %23 = vector.broadcast %cst_16 : f32 to vector<1x1x128xf32>
      %c0_17 = arith.constant 0 : index
      %c0_18 = arith.constant 0 : index
      %c0_19 = arith.constant 0 : index
      %24 = vector.load %arg3[%c0_17, %c0_18, %c0_19] : memref<1x1x128xf32, #tpu.memory_space<vmem>>, vector<1x1x128xf32>
      tpu.vector_store %arg3[%c0_17, %c0_18, %c0_19], %23 {strides = array<i32>} : memref<1x1x128xf32, #tpu.memory_space<vmem>>, vector<1x1x128xf32>,
      %cst_20 = arith.constant 0.000000e+00 : f32
      %25 = vector.broadcast %cst_20 : f32 to vector<1x1x128xf32>
      %c0_21 = arith.constant 0 : index
      %c0_22 = arith.constant 0 : index
      %c0_23 = arith.constant 0 : index
      %26 = vector.load %arg4[%c0_21, %c0_22, %c0_23] : memref<1x1x128xf32, #tpu.memory_space<vmem>>, vector<1x1x128xf32>
      tpu.vector_store %arg4[%c0_21, %c0_22, %c0_23], %25 {strides = array<i32>} : memref<1x1x128xf32, #tpu.memory_space<vmem>>, vector<1x1x128xf32>,
    } else {
    }
    %c0 = arith.constant 0 : index
    %c0_1 = arith.constant 0 : index
    %c0_2 = arith.constant 0 : index
    %3 = vector.load %arg2[%c0, %c0_1, %c0_2] : memref<1x64x128xbf16, #tpu.memory_space<vmem>>, vector<1x64x128xbf16>
    %4 = vector.shape_cast %3 : vector<1x64x128xbf16> to vector<64x128xbf16>
    %5 = arith.extf %4 : vector<64x128xbf16> to vector<64x128xf32>
    %c0_3 = arith.constant 0 : index
    %c0_4 = arith.constant 0 : index
    %c0_5 = arith.constant 0 : index
    %6 = vector.load %arg3[%c0_3, %c0_4, %c0_5] : memref<1x1x128xf32, #tpu.memory_space<vmem>>, vector<1x1x128xf32>
    %7 = vector.shape_cast %6 : vector<1x1x128xf32> to vector<1x128xf32>
    %cst = arith.constant dense<0.000000e+00> : vector<128xf32>
    %8 = vector.multi_reduction <add>, %5, %cst [0] : vector<64x128xf32> to vector<128xf32>
    %9 = vector.shape_cast %8 : vector<128xf32> to vector<1x128xf32>
    %10 = arith.addf %7, %9 : vector<1x128xf32>
    %c0_6 = arith.constant 0 : index
    %c0_7 = arith.constant 0 : index
    %c0_8 = arith.constant 0 : index
    %11 = vector.load %arg3[%c0_6, %c0_7, %c0_8] : memref<1x1x128xf32, #tpu.memory_space<vmem>>, vector<1x1x128xf32>
    %12 = vector.shape_cast %11 : vector<1x1x128xf32> to vector<1x128xf32>
    %13 = vector.shape_cast %10 : vector<1x128xf32> to vector<1x1x128xf32>
    tpu.vector_store %arg3[%c0_6, %c0_7, %c0_8], %13 {strides = array<i32>} : memref<1x1x128xf32, #tpu.memory_space<vmem>>, vector<1x1x128xf32>,
    %c0_9 = arith.constant 0 : index
    %c0_10 = arith.constant 0 : index
    %c0_11 = arith.constant 0 : index
    %14 = vector.load %arg4[%c0_9, %c0_10, %c0_11] : memref<1x1x128xf32, #tpu.memory_space<vmem>>, vector<1x1x128xf32>
    %15 = vector.shape_cast %14 : vector<1x1x128xf32> to vector<1x128xf32>
    %16 = arith.mulf %5, %5 : vector<64x128xf32>
    %cst_12 = arith.constant dense<0.000000e+00> : vector<128xf32>
    %17 = vector.multi_reduction <add>, %16, %cst_12 [0] : vector<64x128xf32> to vector<128xf32>
    %18 = vector.shape_cast %17 : vector<128xf32> to vector<1x128xf32>
    %19 = arith.addf %15, %18 : vector<1x128xf32>
    %c0_13 = arith.constant 0 : index
    %c0_14 = arith.constant 0 : index
    %c0_15 = arith.constant 0 : index
    %20 = vector.load %arg4[%c0_13, %c0_14, %c0_15] : memref<1x1x128xf32, #tpu.memory_space<vmem>>, vector<1x1x128xf32>
    %21 = vector.shape_cast %20 : vector<1x1x128xf32> to vector<1x128xf32>
    %22 = vector.shape_cast %19 : vector<1x128xf32> to vector<1x1x128xf32>
    tpu.vector_store %arg4[%c0_13, %c0_14, %c0_15], %22 {strides = array<i32>} : memref<1x1x128xf32, #tpu.memory_space<vmem>>, vector<1x1x128xf32>,
    return
  }
  func.func @transform_0(%arg0: i32, %arg1: i32) -> (i32, i32, i32) {
    %c0_i32 = arith.constant 0 : i32
    %c0_i32_0 = arith.constant 0 : i32
    return %arg0, %arg1, %c0_i32 : i32, i32, i32
  }
  func.func @transform_1(%arg0: i32, %arg1: i32) -> (i32, i32, i32) {
    %c0_i32 = arith.constant 0 : i32
    %c0_i32_0 = arith.constant 0 : i32
    %c0_i32_1 = arith.constant 0 : i32
    return %arg0, %c0_i32, %c0_i32_0 : i32, i32, i32
  }
  func.func @transform_2(%arg0: i32, %arg1: i32) -> (i32, i32, i32) {
    %c0_i32 = arith.constant 0 : i32
    %c0_i32_0 = arith.constant 0 : i32
    %c0_i32_1 = arith.constant 0 : i32
    return %arg0, %c0_i32, %c0_i32_0 : i32, i32, i32
  }
}

module attributes {stable_mosaic.version = 11 : i64} {
  func.func @_in_apply_kernel(%arg0: i32, %arg1: i32, %arg2: memref<1x64x128xbf16, #tpu.memory_space<vmem>>, %arg3: memref<1x1x128xf32, #tpu.memory_space<vmem>>, %arg4: memref<1x1x128xf32, #tpu.memory_space<vmem>>, %arg5: memref<1x64x128xbf16, #tpu.memory_space<vmem>>) attributes {dimension_semantics = [#tpu.dimension_semantics<parallel>, #tpu.dimension_semantics<parallel>], iteration_bounds = array<i64: 2, 1>, scalar_prefetch = 0 : i64, scratch_operands = 0 : i64, tpu.core_type = #tpu.core_type<tc>, window_params = [{transform_indices = @transform_0, window_bounds = array<i64: 1, 64, 128>}, {transform_indices = @transform_1, window_bounds = array<i64: 1, 1, 128>}, {transform_indices = @transform_2, window_bounds = array<i64: 1, 1, 128>}, {transform_indices = @transform_3, window_bounds = array<i64: 1, 64, 128>}]} {
    %c0 = arith.constant 0 : index
    %c0_0 = arith.constant 0 : index
    %c0_1 = arith.constant 0 : index
    %0 = vector.load %arg2[%c0, %c0_0, %c0_1] : memref<1x64x128xbf16, #tpu.memory_space<vmem>>, vector<1x64x128xbf16>
    %1 = vector.shape_cast %0 : vector<1x64x128xbf16> to vector<64x128xbf16>
    %2 = arith.extf %1 : vector<64x128xbf16> to vector<64x128xf32>
    %c0_2 = arith.constant 0 : index
    %c0_3 = arith.constant 0 : index
    %c0_4 = arith.constant 0 : index
    %3 = vector.load %arg3[%c0_2, %c0_3, %c0_4] : memref<1x1x128xf32, #tpu.memory_space<vmem>>, vector<1x1x128xf32>
    %4 = vector.shape_cast %3 : vector<1x1x128xf32> to vector<1x128xf32>
    %cst = arith.constant 1.562500e-02 : f32
    %5 = vector.broadcast %cst : f32 to vector<1x128xf32>
    %6 = arith.mulf %4, %5 : vector<1x128xf32>
    %c0_5 = arith.constant 0 : index
    %c0_6 = arith.constant 0 : index
    %c0_7 = arith.constant 0 : index
    %7 = vector.load %arg4[%c0_5, %c0_6, %c0_7] : memref<1x1x128xf32, #tpu.memory_space<vmem>>, vector<1x1x128xf32>
    %8 = vector.shape_cast %7 : vector<1x1x128xf32> to vector<1x128xf32>
    %cst_8 = arith.constant 1.562500e-02 : f32
    %9 = vector.broadcast %cst_8 : f32 to vector<1x128xf32>
    %10 = arith.mulf %8, %9 : vector<1x128xf32>
    %11 = arith.mulf %6, %6 : vector<1x128xf32>
    %12 = arith.subf %10, %11 : vector<1x128xf32>
    %cst_9 = arith.constant 0.000000e+00 : f32
    %13 = vector.broadcast %cst_9 : f32 to vector<1x128xf32>
    %14 = arith.maximumf %12, %13 : vector<1x128xf32>
    %15 = vector.broadcast %6 : vector<1x128xf32> to vector<64x128xf32>
    %16 = arith.subf %2, %15 : vector<64x128xf32>
    %cst_10 = arith.constant 9.99999974E-6 : f32
    %17 = vector.broadcast %cst_10 : f32 to vector<1x128xf32>
    %18 = arith.addf %14, %17 : vector<1x128xf32>
    %19 = math.rsqrt %18 : vector<1x128xf32>
    %20 = vector.broadcast %19 : vector<1x128xf32> to vector<64x128xf32>
    %21 = arith.mulf %16, %20 : vector<64x128xf32>
    %cst_11 = arith.constant 0.000000e+00 : f32
    %22 = vector.broadcast %cst_11 : f32 to vector<64x128xf32>
    %23 = arith.maximumf %21, %22 : vector<64x128xf32>
    %24 = arith.truncf %23 : vector<64x128xf32> to vector<64x128xbf16>
    %c0_12 = arith.constant 0 : index
    %c0_13 = arith.constant 0 : index
    %c0_14 = arith.constant 0 : index
    %25 = vector.load %arg5[%c0_12, %c0_13, %c0_14] : memref<1x64x128xbf16, #tpu.memory_space<vmem>>, vector<1x64x128xbf16>
    %26 = vector.shape_cast %25 : vector<1x64x128xbf16> to vector<64x128xbf16>
    %27 = vector.shape_cast %24 : vector<64x128xbf16> to vector<1x64x128xbf16>
    tpu.vector_store %arg5[%c0_12, %c0_13, %c0_14], %27 {strides = array<i32>} : memref<1x64x128xbf16, #tpu.memory_space<vmem>>, vector<1x64x128xbf16>,
    return
  }
  func.func @transform_0(%arg0: i32, %arg1: i32) -> (i32, i32, i32) {
    %c0_i32 = arith.constant 0 : i32
    %c0_i32_0 = arith.constant 0 : i32
    return %arg0, %arg1, %c0_i32 : i32, i32, i32
  }
  func.func @transform_1(%arg0: i32, %arg1: i32) -> (i32, i32, i32) {
    %c0_i32 = arith.constant 0 : i32
    %c0_i32_0 = arith.constant 0 : i32
    %c0_i32_1 = arith.constant 0 : i32
    return %arg0, %c0_i32, %c0_i32_0 : i32, i32, i32
  }
  func.func @transform_2(%arg0: i32, %arg1: i32) -> (i32, i32, i32) {
    %c0_i32 = arith.constant 0 : i32
    %c0_i32_0 = arith.constant 0 : i32
    %c0_i32_1 = arith.constant 0 : i32
    return %arg0, %c0_i32, %c0_i32_0 : i32, i32, i32
  }
  func.func @transform_3(%arg0: i32, %arg1: i32) -> (i32, i32, i32) {
    %c0_i32 = arith.constant 0 : i32
    %c0_i32_0 = arith.constant 0 : i32
    return %arg0, %arg1, %c0_i32 : i32, i32, i32
  }
}

module attributes {stable_mosaic.version = 11 : i64} {
  func.func @_matmul_kernel(%arg0: i32, %arg1: i32, %arg2: i32, %arg3: memref<32x384xbf16, #tpu.memory_space<vmem>>, %arg4: memref<384x128xbf16, #tpu.memory_space<vmem>>, %arg5: memref<1x128xf32, #tpu.memory_space<vmem>>, %arg6: memref<32x128xbf16, #tpu.memory_space<vmem>>, %arg7: memref<32x128xf32, #tpu.memory_space<vmem>>) attributes {dimension_semantics = [#tpu.dimension_semantics<parallel>, #tpu.dimension_semantics<parallel>, #tpu.dimension_semantics<arbitrary>], iteration_bounds = array<i64: 1, 1, 3>, scalar_prefetch = 0 : i64, scratch_operands = 1 : i64, tpu.core_type = #tpu.core_type<tc>, window_params = [{transform_indices = @transform_0, window_bounds = array<i64: 32, 384>}, {transform_indices = @transform_1, window_bounds = array<i64: 384, 128>}, {transform_indices = @transform_2, window_bounds = array<i64: 1, 128>}, {transform_indices = @transform_3, window_bounds = array<i64: 32, 128>}]} {
    %c0_i32 = arith.constant 0 : i32
    %0 = arith.cmpi eq, %arg2, %c0_i32 : i32
    %1 = arith.extui %0 : i1 to i32
    %c0_i32_0 = arith.constant 0 : i32
    %2 = arith.cmpi ne, %1, %c0_i32_0 : i32
    scf.if %2 {
      %cst_9 = arith.constant 0.000000e+00 : f32
      %12 = vector.broadcast %cst_9 : f32 to vector<32x128xf32>
      %c0_10 = arith.constant 0 : index
      %c0_11 = arith.constant 0 : index
      %13 = vector.load %arg7[%c0_10, %c0_11] : memref<32x128xf32, #tpu.memory_space<vmem>>, vector<32x128xf32>
      tpu.vector_store %arg7[%c0_10, %c0_11], %12 {strides = array<i32>} : memref<32x128xf32, #tpu.memory_space<vmem>>, vector<32x128xf32>,
    } else {
    }
    %c0 = arith.constant 0 : index
    %c0_1 = arith.constant 0 : index
    %3 = vector.load %arg7[%c0, %c0_1] : memref<32x128xf32, #tpu.memory_space<vmem>>, vector<32x128xf32>
    %c0_2 = arith.constant 0 : index
    %c0_3 = arith.constant 0 : index
    %4 = vector.load %arg3[%c0_2, %c0_3] : memref<32x384xbf16, #tpu.memory_space<vmem>>, vector<32x384xbf16>
    %c0_4 = arith.constant 0 : index
    %c0_5 = arith.constant 0 : index
    %5 = vector.load %arg4[%c0_4, %c0_5] : memref<384x128xbf16, #tpu.memory_space<vmem>>, vector<384x128xbf16>
    %cst = arith.constant dense<0.000000e+00> : vector<32x128xf32>
    %6 = tpu.matmul %4, %5, %cst {dimension_numbers = #tpu.dot_dimension_numbers<[1], [0], [0], [1], [0, 0, 1, 1], [], []>} : vector<32x384xbf16>, vector<384x128xbf16>, vector<32x128xf32> -> vector<32x128xf32>
    %7 = arith.addf %3, %6 : vector<32x128xf32>
    %c0_6 = arith.constant 0 : index
    %c0_7 = arith.constant 0 : index
    %8 = vector.load %arg7[%c0_6, %c0_7] : memref<32x128xf32, #tpu.memory_space<vmem>>, vector<32x128xf32>
    tpu.vector_store %arg7[%c0_6, %c0_7], %7 {strides = array<i32>} : memref<32x128xf32, #tpu.memory_space<vmem>>, vector<32x128xf32>,
    %c2_i32 = arith.constant 2 : i32
    %9 = arith.cmpi eq, %arg2, %c2_i32 : i32
    %10 = arith.extui %9 : i1 to i32
    %c0_i32_8 = arith.constant 0 : i32
    %11 = arith.cmpi ne, %10, %c0_i32_8 : i32
    scf.if %11 {
      %c0_9 = arith.constant 0 : index
      %c0_10 = arith.constant 0 : index
      %12 = vector.load %arg7[%c0_9, %c0_10] : memref<32x128xf32, #tpu.memory_space<vmem>>, vector<32x128xf32>
      %c0_11 = arith.constant 0 : index
      %c0_12 = arith.constant 0 : index
      %13 = vector.load %arg5[%c0_11, %c0_12] : memref<1x128xf32, #tpu.memory_space<vmem>>, vector<1x128xf32>
      %14 = vector.broadcast %13 : vector<1x128xf32> to vector<32x128xf32>
      %15 = arith.addf %12, %14 : vector<32x128xf32>
      %16 = arith.truncf %15 : vector<32x128xf32> to vector<32x128xbf16>
      %c0_13 = arith.constant 0 : index
      %c0_14 = arith.constant 0 : index
      %17 = vector.load %arg6[%c0_13, %c0_14] : memref<32x128xbf16, #tpu.memory_space<vmem>>, vector<32x128xbf16>
      tpu.vector_store %arg6[%c0_13, %c0_14], %16 {strides = array<i32>} : memref<32x128xbf16, #tpu.memory_space<vmem>>, vector<32x128xbf16>,
    } else {
    }
    return
  }
  func.func @transform_0(%arg0: i32, %arg1: i32, %arg2: i32) -> (i32, i32) {
    %c0_i32 = arith.constant 0 : i32
    return %arg0, %arg2 : i32, i32
  }
  func.func @transform_1(%arg0: i32, %arg1: i32, %arg2: i32) -> (i32, i32) {
    %c0_i32 = arith.constant 0 : i32
    return %arg2, %arg1 : i32, i32
  }
  func.func @transform_2(%arg0: i32, %arg1: i32, %arg2: i32) -> (i32, i32) {
    %c0_i32 = arith.constant 0 : i32
    %c0_i32_0 = arith.constant 0 : i32
    return %c0_i32, %arg1 : i32, i32
  }
  func.func @transform_3(%arg0: i32, %arg1: i32, %arg2: i32) -> (i32, i32) {
    %c0_i32 = arith.constant 0 : i32
    return %arg0, %arg1 : i32, i32
  }
}

module attributes {stable_mosaic.version = 11 : i64} {
  func.func @_in_stats_kernel(%arg0: i32, %arg1: i32, %arg2: memref<1x16x128xbf16, #tpu.memory_space<vmem>>, %arg3: memref<1x1x128xf32, #tpu.memory_space<vmem>>, %arg4: memref<1x1x128xf32, #tpu.memory_space<vmem>>) attributes {dimension_semantics = [#tpu.dimension_semantics<parallel>, #tpu.dimension_semantics<arbitrary>], iteration_bounds = array<i64: 2, 1>, scalar_prefetch = 0 : i64, scratch_operands = 0 : i64, tpu.core_type = #tpu.core_type<tc>, window_params = [{transform_indices = @transform_0, window_bounds = array<i64: 1, 16, 128>}, {transform_indices = @transform_1, window_bounds = array<i64: 1, 1, 128>}, {transform_indices = @transform_2, window_bounds = array<i64: 1, 1, 128>}]} {
    %c0_i32 = arith.constant 0 : i32
    %0 = arith.cmpi eq, %arg1, %c0_i32 : i32
    %1 = arith.extui %0 : i1 to i32
    %c0_i32_0 = arith.constant 0 : i32
    %2 = arith.cmpi ne, %1, %c0_i32_0 : i32
    scf.if %2 {
      %cst_16 = arith.constant 0.000000e+00 : f32
      %23 = vector.broadcast %cst_16 : f32 to vector<1x1x128xf32>
      %c0_17 = arith.constant 0 : index
      %c0_18 = arith.constant 0 : index
      %c0_19 = arith.constant 0 : index
      %24 = vector.load %arg3[%c0_17, %c0_18, %c0_19] : memref<1x1x128xf32, #tpu.memory_space<vmem>>, vector<1x1x128xf32>
      tpu.vector_store %arg3[%c0_17, %c0_18, %c0_19], %23 {strides = array<i32>} : memref<1x1x128xf32, #tpu.memory_space<vmem>>, vector<1x1x128xf32>,
      %cst_20 = arith.constant 0.000000e+00 : f32
      %25 = vector.broadcast %cst_20 : f32 to vector<1x1x128xf32>
      %c0_21 = arith.constant 0 : index
      %c0_22 = arith.constant 0 : index
      %c0_23 = arith.constant 0 : index
      %26 = vector.load %arg4[%c0_21, %c0_22, %c0_23] : memref<1x1x128xf32, #tpu.memory_space<vmem>>, vector<1x1x128xf32>
      tpu.vector_store %arg4[%c0_21, %c0_22, %c0_23], %25 {strides = array<i32>} : memref<1x1x128xf32, #tpu.memory_space<vmem>>, vector<1x1x128xf32>,
    } else {
    }
    %c0 = arith.constant 0 : index
    %c0_1 = arith.constant 0 : index
    %c0_2 = arith.constant 0 : index
    %3 = vector.load %arg2[%c0, %c0_1, %c0_2] : memref<1x16x128xbf16, #tpu.memory_space<vmem>>, vector<1x16x128xbf16>
    %4 = vector.shape_cast %3 : vector<1x16x128xbf16> to vector<16x128xbf16>
    %5 = arith.extf %4 : vector<16x128xbf16> to vector<16x128xf32>
    %c0_3 = arith.constant 0 : index
    %c0_4 = arith.constant 0 : index
    %c0_5 = arith.constant 0 : index
    %6 = vector.load %arg3[%c0_3, %c0_4, %c0_5] : memref<1x1x128xf32, #tpu.memory_space<vmem>>, vector<1x1x128xf32>
    %7 = vector.shape_cast %6 : vector<1x1x128xf32> to vector<1x128xf32>
    %cst = arith.constant dense<0.000000e+00> : vector<128xf32>
    %8 = vector.multi_reduction <add>, %5, %cst [0] : vector<16x128xf32> to vector<128xf32>
    %9 = vector.shape_cast %8 : vector<128xf32> to vector<1x128xf32>
    %10 = arith.addf %7, %9 : vector<1x128xf32>
    %c0_6 = arith.constant 0 : index
    %c0_7 = arith.constant 0 : index
    %c0_8 = arith.constant 0 : index
    %11 = vector.load %arg3[%c0_6, %c0_7, %c0_8] : memref<1x1x128xf32, #tpu.memory_space<vmem>>, vector<1x1x128xf32>
    %12 = vector.shape_cast %11 : vector<1x1x128xf32> to vector<1x128xf32>
    %13 = vector.shape_cast %10 : vector<1x128xf32> to vector<1x1x128xf32>
    tpu.vector_store %arg3[%c0_6, %c0_7, %c0_8], %13 {strides = array<i32>} : memref<1x1x128xf32, #tpu.memory_space<vmem>>, vector<1x1x128xf32>,
    %c0_9 = arith.constant 0 : index
    %c0_10 = arith.constant 0 : index
    %c0_11 = arith.constant 0 : index
    %14 = vector.load %arg4[%c0_9, %c0_10, %c0_11] : memref<1x1x128xf32, #tpu.memory_space<vmem>>, vector<1x1x128xf32>
    %15 = vector.shape_cast %14 : vector<1x1x128xf32> to vector<1x128xf32>
    %16 = arith.mulf %5, %5 : vector<16x128xf32>
    %cst_12 = arith.constant dense<0.000000e+00> : vector<128xf32>
    %17 = vector.multi_reduction <add>, %16, %cst_12 [0] : vector<16x128xf32> to vector<128xf32>
    %18 = vector.shape_cast %17 : vector<128xf32> to vector<1x128xf32>
    %19 = arith.addf %15, %18 : vector<1x128xf32>
    %c0_13 = arith.constant 0 : index
    %c0_14 = arith.constant 0 : index
    %c0_15 = arith.constant 0 : index
    %20 = vector.load %arg4[%c0_13, %c0_14, %c0_15] : memref<1x1x128xf32, #tpu.memory_space<vmem>>, vector<1x1x128xf32>
    %21 = vector.shape_cast %20 : vector<1x1x128xf32> to vector<1x128xf32>
    %22 = vector.shape_cast %19 : vector<1x128xf32> to vector<1x1x128xf32>
    tpu.vector_store %arg4[%c0_13, %c0_14, %c0_15], %22 {strides = array<i32>} : memref<1x1x128xf32, #tpu.memory_space<vmem>>, vector<1x1x128xf32>,
    return
  }
  func.func @transform_0(%arg0: i32, %arg1: i32) -> (i32, i32, i32) {
    %c0_i32 = arith.constant 0 : i32
    %c0_i32_0 = arith.constant 0 : i32
    return %arg0, %arg1, %c0_i32 : i32, i32, i32
  }
  func.func @transform_1(%arg0: i32, %arg1: i32) -> (i32, i32, i32) {
    %c0_i32 = arith.constant 0 : i32
    %c0_i32_0 = arith.constant 0 : i32
    %c0_i32_1 = arith.constant 0 : i32
    return %arg0, %c0_i32, %c0_i32_0 : i32, i32, i32
  }
  func.func @transform_2(%arg0: i32, %arg1: i32) -> (i32, i32, i32) {
    %c0_i32 = arith.constant 0 : i32
    %c0_i32_0 = arith.constant 0 : i32
    %c0_i32_1 = arith.constant 0 : i32
    return %arg0, %c0_i32, %c0_i32_0 : i32, i32, i32
  }
}

module attributes {stable_mosaic.version = 11 : i64} {
  func.func @_in_apply_kernel(%arg0: i32, %arg1: i32, %arg2: memref<1x16x128xbf16, #tpu.memory_space<vmem>>, %arg3: memref<1x1x128xf32, #tpu.memory_space<vmem>>, %arg4: memref<1x1x128xf32, #tpu.memory_space<vmem>>, %arg5: memref<1x16x128xbf16, #tpu.memory_space<vmem>>) attributes {dimension_semantics = [#tpu.dimension_semantics<parallel>, #tpu.dimension_semantics<parallel>], iteration_bounds = array<i64: 2, 1>, scalar_prefetch = 0 : i64, scratch_operands = 0 : i64, tpu.core_type = #tpu.core_type<tc>, window_params = [{transform_indices = @transform_0, window_bounds = array<i64: 1, 16, 128>}, {transform_indices = @transform_1, window_bounds = array<i64: 1, 1, 128>}, {transform_indices = @transform_2, window_bounds = array<i64: 1, 1, 128>}, {transform_indices = @transform_3, window_bounds = array<i64: 1, 16, 128>}]} {
    %c0 = arith.constant 0 : index
    %c0_0 = arith.constant 0 : index
    %c0_1 = arith.constant 0 : index
    %0 = vector.load %arg2[%c0, %c0_0, %c0_1] : memref<1x16x128xbf16, #tpu.memory_space<vmem>>, vector<1x16x128xbf16>
    %1 = vector.shape_cast %0 : vector<1x16x128xbf16> to vector<16x128xbf16>
    %2 = arith.extf %1 : vector<16x128xbf16> to vector<16x128xf32>
    %c0_2 = arith.constant 0 : index
    %c0_3 = arith.constant 0 : index
    %c0_4 = arith.constant 0 : index
    %3 = vector.load %arg3[%c0_2, %c0_3, %c0_4] : memref<1x1x128xf32, #tpu.memory_space<vmem>>, vector<1x1x128xf32>
    %4 = vector.shape_cast %3 : vector<1x1x128xf32> to vector<1x128xf32>
    %cst = arith.constant 6.250000e-02 : f32
    %5 = vector.broadcast %cst : f32 to vector<1x128xf32>
    %6 = arith.mulf %4, %5 : vector<1x128xf32>
    %c0_5 = arith.constant 0 : index
    %c0_6 = arith.constant 0 : index
    %c0_7 = arith.constant 0 : index
    %7 = vector.load %arg4[%c0_5, %c0_6, %c0_7] : memref<1x1x128xf32, #tpu.memory_space<vmem>>, vector<1x1x128xf32>
    %8 = vector.shape_cast %7 : vector<1x1x128xf32> to vector<1x128xf32>
    %cst_8 = arith.constant 6.250000e-02 : f32
    %9 = vector.broadcast %cst_8 : f32 to vector<1x128xf32>
    %10 = arith.mulf %8, %9 : vector<1x128xf32>
    %11 = arith.mulf %6, %6 : vector<1x128xf32>
    %12 = arith.subf %10, %11 : vector<1x128xf32>
    %cst_9 = arith.constant 0.000000e+00 : f32
    %13 = vector.broadcast %cst_9 : f32 to vector<1x128xf32>
    %14 = arith.maximumf %12, %13 : vector<1x128xf32>
    %15 = vector.broadcast %6 : vector<1x128xf32> to vector<16x128xf32>
    %16 = arith.subf %2, %15 : vector<16x128xf32>
    %cst_10 = arith.constant 9.99999974E-6 : f32
    %17 = vector.broadcast %cst_10 : f32 to vector<1x128xf32>
    %18 = arith.addf %14, %17 : vector<1x128xf32>
    %19 = math.rsqrt %18 : vector<1x128xf32>
    %20 = vector.broadcast %19 : vector<1x128xf32> to vector<16x128xf32>
    %21 = arith.mulf %16, %20 : vector<16x128xf32>
    %cst_11 = arith.constant 0.000000e+00 : f32
    %22 = vector.broadcast %cst_11 : f32 to vector<16x128xf32>
    %23 = arith.maximumf %21, %22 : vector<16x128xf32>
    %24 = arith.truncf %23 : vector<16x128xf32> to vector<16x128xbf16>
    %c0_12 = arith.constant 0 : index
    %c0_13 = arith.constant 0 : index
    %c0_14 = arith.constant 0 : index
    %25 = vector.load %arg5[%c0_12, %c0_13, %c0_14] : memref<1x16x128xbf16, #tpu.memory_space<vmem>>, vector<1x16x128xbf16>
    %26 = vector.shape_cast %25 : vector<1x16x128xbf16> to vector<16x128xbf16>
    %27 = vector.shape_cast %24 : vector<16x128xbf16> to vector<1x16x128xbf16>
    tpu.vector_store %arg5[%c0_12, %c0_13, %c0_14], %27 {strides = array<i32>} : memref<1x16x128xbf16, #tpu.memory_space<vmem>>, vector<1x16x128xbf16>,
    return
  }
  func.func @transform_0(%arg0: i32, %arg1: i32) -> (i32, i32, i32) {
    %c0_i32 = arith.constant 0 : i32
    %c0_i32_0 = arith.constant 0 : i32
    return %arg0, %arg1, %c0_i32 : i32, i32, i32
  }
  func.func @transform_1(%arg0: i32, %arg1: i32) -> (i32, i32, i32) {
    %c0_i32 = arith.constant 0 : i32
    %c0_i32_0 = arith.constant 0 : i32
    %c0_i32_1 = arith.constant 0 : i32
    return %arg0, %c0_i32, %c0_i32_0 : i32, i32, i32
  }
  func.func @transform_2(%arg0: i32, %arg1: i32) -> (i32, i32, i32) {
    %c0_i32 = arith.constant 0 : i32
    %c0_i32_0 = arith.constant 0 : i32
    %c0_i32_1 = arith.constant 0 : i32
    return %arg0, %c0_i32, %c0_i32_0 : i32, i32, i32
  }
  func.func @transform_3(%arg0: i32, %arg1: i32) -> (i32, i32, i32) {
    %c0_i32 = arith.constant 0 : i32
    %c0_i32_0 = arith.constant 0 : i32
    return %arg0, %arg1, %c0_i32 : i32, i32, i32
  }
}

module attributes {stable_mosaic.version = 11 : i64} {
  func.func @_in_apply_kernel(%arg0: i32, %arg1: i32, %arg2: memref<1x16x128xbf16, #tpu.memory_space<vmem>>, %arg3: memref<1x1x128xf32, #tpu.memory_space<vmem>>, %arg4: memref<1x1x128xf32, #tpu.memory_space<vmem>>, %arg5: memref<1x16x128xbf16, #tpu.memory_space<vmem>>, %arg6: memref<1x16x128xbf16, #tpu.memory_space<vmem>>) attributes {dimension_semantics = [#tpu.dimension_semantics<parallel>, #tpu.dimension_semantics<parallel>], iteration_bounds = array<i64: 2, 1>, scalar_prefetch = 0 : i64, scratch_operands = 0 : i64, tpu.core_type = #tpu.core_type<tc>, window_params = [{transform_indices = @transform_0, window_bounds = array<i64: 1, 16, 128>}, {transform_indices = @transform_1, window_bounds = array<i64: 1, 1, 128>}, {transform_indices = @transform_2, window_bounds = array<i64: 1, 1, 128>}, {transform_indices = @transform_3, window_bounds = array<i64: 1, 16, 128>}, {transform_indices = @transform_4, window_bounds = array<i64: 1, 16, 128>}]} {
    %c0 = arith.constant 0 : index
    %c0_0 = arith.constant 0 : index
    %c0_1 = arith.constant 0 : index
    %0 = vector.load %arg2[%c0, %c0_0, %c0_1] : memref<1x16x128xbf16, #tpu.memory_space<vmem>>, vector<1x16x128xbf16>
    %1 = vector.shape_cast %0 : vector<1x16x128xbf16> to vector<16x128xbf16>
    %2 = arith.extf %1 : vector<16x128xbf16> to vector<16x128xf32>
    %c0_2 = arith.constant 0 : index
    %c0_3 = arith.constant 0 : index
    %c0_4 = arith.constant 0 : index
    %3 = vector.load %arg3[%c0_2, %c0_3, %c0_4] : memref<1x1x128xf32, #tpu.memory_space<vmem>>, vector<1x1x128xf32>
    %4 = vector.shape_cast %3 : vector<1x1x128xf32> to vector<1x128xf32>
    %cst = arith.constant 6.250000e-02 : f32
    %5 = vector.broadcast %cst : f32 to vector<1x128xf32>
    %6 = arith.mulf %4, %5 : vector<1x128xf32>
    %c0_5 = arith.constant 0 : index
    %c0_6 = arith.constant 0 : index
    %c0_7 = arith.constant 0 : index
    %7 = vector.load %arg4[%c0_5, %c0_6, %c0_7] : memref<1x1x128xf32, #tpu.memory_space<vmem>>, vector<1x1x128xf32>
    %8 = vector.shape_cast %7 : vector<1x1x128xf32> to vector<1x128xf32>
    %cst_8 = arith.constant 6.250000e-02 : f32
    %9 = vector.broadcast %cst_8 : f32 to vector<1x128xf32>
    %10 = arith.mulf %8, %9 : vector<1x128xf32>
    %11 = arith.mulf %6, %6 : vector<1x128xf32>
    %12 = arith.subf %10, %11 : vector<1x128xf32>
    %cst_9 = arith.constant 0.000000e+00 : f32
    %13 = vector.broadcast %cst_9 : f32 to vector<1x128xf32>
    %14 = arith.maximumf %12, %13 : vector<1x128xf32>
    %15 = vector.broadcast %6 : vector<1x128xf32> to vector<16x128xf32>
    %16 = arith.subf %2, %15 : vector<16x128xf32>
    %cst_10 = arith.constant 9.99999974E-6 : f32
    %17 = vector.broadcast %cst_10 : f32 to vector<1x128xf32>
    %18 = arith.addf %14, %17 : vector<1x128xf32>
    %19 = math.rsqrt %18 : vector<1x128xf32>
    %20 = vector.broadcast %19 : vector<1x128xf32> to vector<16x128xf32>
    %21 = arith.mulf %16, %20 : vector<16x128xf32>
    %c0_11 = arith.constant 0 : index
    %c0_12 = arith.constant 0 : index
    %c0_13 = arith.constant 0 : index
    %22 = vector.load %arg5[%c0_11, %c0_12, %c0_13] : memref<1x16x128xbf16, #tpu.memory_space<vmem>>, vector<1x16x128xbf16>
    %23 = vector.shape_cast %22 : vector<1x16x128xbf16> to vector<16x128xbf16>
    %24 = arith.extf %23 : vector<16x128xbf16> to vector<16x128xf32>
    %25 = arith.addf %21, %24 : vector<16x128xf32>
    %26 = arith.truncf %25 : vector<16x128xf32> to vector<16x128xbf16>
    %c0_14 = arith.constant 0 : index
    %c0_15 = arith.constant 0 : index
    %c0_16 = arith.constant 0 : index
    %27 = vector.load %arg6[%c0_14, %c0_15, %c0_16] : memref<1x16x128xbf16, #tpu.memory_space<vmem>>, vector<1x16x128xbf16>
    %28 = vector.shape_cast %27 : vector<1x16x128xbf16> to vector<16x128xbf16>
    %29 = vector.shape_cast %26 : vector<16x128xbf16> to vector<1x16x128xbf16>
    tpu.vector_store %arg6[%c0_14, %c0_15, %c0_16], %29 {strides = array<i32>} : memref<1x16x128xbf16, #tpu.memory_space<vmem>>, vector<1x16x128xbf16>,
    return
  }
  func.func @transform_0(%arg0: i32, %arg1: i32) -> (i32, i32, i32) {
    %c0_i32 = arith.constant 0 : i32
    %c0_i32_0 = arith.constant 0 : i32
    return %arg0, %arg1, %c0_i32 : i32, i32, i32
  }
  func.func @transform_1(%arg0: i32, %arg1: i32) -> (i32, i32, i32) {
    %c0_i32 = arith.constant 0 : i32
    %c0_i32_0 = arith.constant 0 : i32
    %c0_i32_1 = arith.constant 0 : i32
    return %arg0, %c0_i32, %c0_i32_0 : i32, i32, i32
  }
  func.func @transform_2(%arg0: i32, %arg1: i32) -> (i32, i32, i32) {
    %c0_i32 = arith.constant 0 : i32
    %c0_i32_0 = arith.constant 0 : i32
    %c0_i32_1 = arith.constant 0 : i32
    return %arg0, %c0_i32, %c0_i32_0 : i32, i32, i32
  }
  func.func @transform_3(%arg0: i32, %arg1: i32) -> (i32, i32, i32) {
    %c0_i32 = arith.constant 0 : i32
    %c0_i32_0 = arith.constant 0 : i32
    return %arg0, %arg1, %c0_i32 : i32, i32, i32
  }
  func.func @transform_4(%arg0: i32, %arg1: i32) -> (i32, i32, i32) {
    %c0_i32 = arith.constant 0 : i32
    %c0_i32_0 = arith.constant 0 : i32
    return %arg0, %arg1, %c0_i32 : i32, i32, i32
  }
}

module attributes {stable_mosaic.version = 11 : i64} {
  func.func @_matmul_kernel(%arg0: i32, %arg1: i32, %arg2: i32, %arg3: memref<256x384xbf16, #tpu.memory_space<vmem>>, %arg4: memref<384x128xbf16, #tpu.memory_space<vmem>>, %arg5: memref<1x128xf32, #tpu.memory_space<vmem>>, %arg6: memref<256x128xbf16, #tpu.memory_space<vmem>>, %arg7: memref<256x128xf32, #tpu.memory_space<vmem>>) attributes {dimension_semantics = [#tpu.dimension_semantics<parallel>, #tpu.dimension_semantics<parallel>, #tpu.dimension_semantics<arbitrary>], iteration_bounds = array<i64: 2, 1, 3>, scalar_prefetch = 0 : i64, scratch_operands = 1 : i64, tpu.core_type = #tpu.core_type<tc>, window_params = [{transform_indices = @transform_0, window_bounds = array<i64: 256, 384>}, {transform_indices = @transform_1, window_bounds = array<i64: 384, 128>}, {transform_indices = @transform_2, window_bounds = array<i64: 1, 128>}, {transform_indices = @transform_3, window_bounds = array<i64: 256, 128>}]} {
    %c0_i32 = arith.constant 0 : i32
    %0 = arith.cmpi eq, %arg2, %c0_i32 : i32
    %1 = arith.extui %0 : i1 to i32
    %c0_i32_0 = arith.constant 0 : i32
    %2 = arith.cmpi ne, %1, %c0_i32_0 : i32
    scf.if %2 {
      %cst_9 = arith.constant 0.000000e+00 : f32
      %12 = vector.broadcast %cst_9 : f32 to vector<256x128xf32>
      %c0_10 = arith.constant 0 : index
      %c0_11 = arith.constant 0 : index
      %13 = vector.load %arg7[%c0_10, %c0_11] : memref<256x128xf32, #tpu.memory_space<vmem>>, vector<256x128xf32>
      tpu.vector_store %arg7[%c0_10, %c0_11], %12 {strides = array<i32>} : memref<256x128xf32, #tpu.memory_space<vmem>>, vector<256x128xf32>,
    } else {
    }
    %c0 = arith.constant 0 : index
    %c0_1 = arith.constant 0 : index
    %3 = vector.load %arg7[%c0, %c0_1] : memref<256x128xf32, #tpu.memory_space<vmem>>, vector<256x128xf32>
    %c0_2 = arith.constant 0 : index
    %c0_3 = arith.constant 0 : index
    %4 = vector.load %arg3[%c0_2, %c0_3] : memref<256x384xbf16, #tpu.memory_space<vmem>>, vector<256x384xbf16>
    %c0_4 = arith.constant 0 : index
    %c0_5 = arith.constant 0 : index
    %5 = vector.load %arg4[%c0_4, %c0_5] : memref<384x128xbf16, #tpu.memory_space<vmem>>, vector<384x128xbf16>
    %cst = arith.constant dense<0.000000e+00> : vector<256x128xf32>
    %6 = tpu.matmul %4, %5, %cst {dimension_numbers = #tpu.dot_dimension_numbers<[1], [0], [0], [1], [0, 0, 1, 1], [], []>} : vector<256x384xbf16>, vector<384x128xbf16>, vector<256x128xf32> -> vector<256x128xf32>
    %7 = arith.addf %3, %6 : vector<256x128xf32>
    %c0_6 = arith.constant 0 : index
    %c0_7 = arith.constant 0 : index
    %8 = vector.load %arg7[%c0_6, %c0_7] : memref<256x128xf32, #tpu.memory_space<vmem>>, vector<256x128xf32>
    tpu.vector_store %arg7[%c0_6, %c0_7], %7 {strides = array<i32>} : memref<256x128xf32, #tpu.memory_space<vmem>>, vector<256x128xf32>,
    %c2_i32 = arith.constant 2 : i32
    %9 = arith.cmpi eq, %arg2, %c2_i32 : i32
    %10 = arith.extui %9 : i1 to i32
    %c0_i32_8 = arith.constant 0 : i32
    %11 = arith.cmpi ne, %10, %c0_i32_8 : i32
    scf.if %11 {
      %c0_9 = arith.constant 0 : index
      %c0_10 = arith.constant 0 : index
      %12 = vector.load %arg7[%c0_9, %c0_10] : memref<256x128xf32, #tpu.memory_space<vmem>>, vector<256x128xf32>
      %c0_11 = arith.constant 0 : index
      %c0_12 = arith.constant 0 : index
      %13 = vector.load %arg5[%c0_11, %c0_12] : memref<1x128xf32, #tpu.memory_space<vmem>>, vector<1x128xf32>
      %14 = vector.broadcast %13 : vector<1x128xf32> to vector<256x128xf32>
      %15 = arith.addf %12, %14 : vector<256x128xf32>
      %16 = arith.truncf %15 : vector<256x128xf32> to vector<256x128xbf16>
      %c0_13 = arith.constant 0 : index
      %c0_14 = arith.constant 0 : index
      %17 = vector.load %arg6[%c0_13, %c0_14] : memref<256x128xbf16, #tpu.memory_space<vmem>>, vector<256x128xbf16>
      tpu.vector_store %arg6[%c0_13, %c0_14], %16 {strides = array<i32>} : memref<256x128xbf16, #tpu.memory_space<vmem>>, vector<256x128xbf16>,
    } else {
    }
    return
  }
  func.func @transform_0(%arg0: i32, %arg1: i32, %arg2: i32) -> (i32, i32) {
    %c0_i32 = arith.constant 0 : i32
    return %arg0, %arg2 : i32, i32
  }
  func.func @transform_1(%arg0: i32, %arg1: i32, %arg2: i32) -> (i32, i32) {
    %c0_i32 = arith.constant 0 : i32
    return %arg2, %arg1 : i32, i32
  }
  func.func @transform_2(%arg0: i32, %arg1: i32, %arg2: i32) -> (i32, i32) {
    %c0_i32 = arith.constant 0 : i32
    %c0_i32_0 = arith.constant 0 : i32
    return %c0_i32, %arg1 : i32, i32
  }
  func.func @transform_3(%arg0: i32, %arg1: i32, %arg2: i32) -> (i32, i32) {
    %c0_i32 = arith.constant 0 : i32
    return %arg0, %arg1 : i32, i32
  }
}

module attributes {stable_mosaic.version = 11 : i64} {
  func.func @_matmul_kernel(%arg0: i32, %arg1: i32, %arg2: i32, %arg3: memref<256x128xbf16, #tpu.memory_space<vmem>>, %arg4: memref<128x128xbf16, #tpu.memory_space<vmem>>, %arg5: memref<1x128xf32, #tpu.memory_space<vmem>>, %arg6: memref<256x128xbf16, #tpu.memory_space<vmem>>, %arg7: memref<256x128xf32, #tpu.memory_space<vmem>>) attributes {dimension_semantics = [#tpu.dimension_semantics<parallel>, #tpu.dimension_semantics<parallel>, #tpu.dimension_semantics<arbitrary>], iteration_bounds = array<i64: 2, 1, 49>, scalar_prefetch = 0 : i64, scratch_operands = 1 : i64, tpu.core_type = #tpu.core_type<tc>, window_params = [{transform_indices = @transform_0, window_bounds = array<i64: 256, 128>}, {transform_indices = @transform_1, window_bounds = array<i64: 128, 128>}, {transform_indices = @transform_2, window_bounds = array<i64: 1, 128>}, {transform_indices = @transform_3, window_bounds = array<i64: 256, 128>}]} {
    %c0_i32 = arith.constant 0 : i32
    %0 = arith.cmpi eq, %arg2, %c0_i32 : i32
    %1 = arith.extui %0 : i1 to i32
    %c0_i32_0 = arith.constant 0 : i32
    %2 = arith.cmpi ne, %1, %c0_i32_0 : i32
    scf.if %2 {
      %cst_9 = arith.constant 0.000000e+00 : f32
      %12 = vector.broadcast %cst_9 : f32 to vector<256x128xf32>
      %c0_10 = arith.constant 0 : index
      %c0_11 = arith.constant 0 : index
      %13 = vector.load %arg7[%c0_10, %c0_11] : memref<256x128xf32, #tpu.memory_space<vmem>>, vector<256x128xf32>
      tpu.vector_store %arg7[%c0_10, %c0_11], %12 {strides = array<i32>} : memref<256x128xf32, #tpu.memory_space<vmem>>, vector<256x128xf32>,
    } else {
    }
    %c0 = arith.constant 0 : index
    %c0_1 = arith.constant 0 : index
    %3 = vector.load %arg7[%c0, %c0_1] : memref<256x128xf32, #tpu.memory_space<vmem>>, vector<256x128xf32>
    %c0_2 = arith.constant 0 : index
    %c0_3 = arith.constant 0 : index
    %4 = vector.load %arg3[%c0_2, %c0_3] : memref<256x128xbf16, #tpu.memory_space<vmem>>, vector<256x128xbf16>
    %c0_4 = arith.constant 0 : index
    %c0_5 = arith.constant 0 : index
    %5 = vector.load %arg4[%c0_4, %c0_5] : memref<128x128xbf16, #tpu.memory_space<vmem>>, vector<128x128xbf16>
    %cst = arith.constant dense<0.000000e+00> : vector<256x128xf32>
    %6 = tpu.matmul %4, %5, %cst {dimension_numbers = #tpu.dot_dimension_numbers<[1], [0], [0], [1], [0, 0, 1, 1], [], []>} : vector<256x128xbf16>, vector<128x128xbf16>, vector<256x128xf32> -> vector<256x128xf32>
    %7 = arith.addf %3, %6 : vector<256x128xf32>
    %c0_6 = arith.constant 0 : index
    %c0_7 = arith.constant 0 : index
    %8 = vector.load %arg7[%c0_6, %c0_7] : memref<256x128xf32, #tpu.memory_space<vmem>>, vector<256x128xf32>
    tpu.vector_store %arg7[%c0_6, %c0_7], %7 {strides = array<i32>} : memref<256x128xf32, #tpu.memory_space<vmem>>, vector<256x128xf32>,
    %c48_i32 = arith.constant 48 : i32
    %9 = arith.cmpi eq, %arg2, %c48_i32 : i32
    %10 = arith.extui %9 : i1 to i32
    %c0_i32_8 = arith.constant 0 : i32
    %11 = arith.cmpi ne, %10, %c0_i32_8 : i32
    scf.if %11 {
      %c0_9 = arith.constant 0 : index
      %c0_10 = arith.constant 0 : index
      %12 = vector.load %arg7[%c0_9, %c0_10] : memref<256x128xf32, #tpu.memory_space<vmem>>, vector<256x128xf32>
      %c0_11 = arith.constant 0 : index
      %c0_12 = arith.constant 0 : index
      %13 = vector.load %arg5[%c0_11, %c0_12] : memref<1x128xf32, #tpu.memory_space<vmem>>, vector<1x128xf32>
      %14 = vector.broadcast %13 : vector<1x128xf32> to vector<256x128xf32>
      %15 = arith.addf %12, %14 : vector<256x128xf32>
      %16 = math.tanh %15 : vector<256x128xf32>
      %17 = arith.truncf %16 : vector<256x128xf32> to vector<256x128xbf16>
      %c0_13 = arith.constant 0 : index
      %c0_14 = arith.constant 0 : index
      %18 = vector.load %arg6[%c0_13, %c0_14] : memref<256x128xbf16, #tpu.memory_space<vmem>>, vector<256x128xbf16>
      tpu.vector_store %arg6[%c0_13, %c0_14], %17 {strides = array<i32>} : memref<256x128xbf16, #tpu.memory_space<vmem>>, vector<256x128xbf16>,
    } else {
    }
    return
  }
  func.func @transform_0(%arg0: i32, %arg1: i32, %arg2: i32) -> (i32, i32) {
    %c0_i32 = arith.constant 0 : i32
    return %arg0, %arg2 : i32, i32
  }
  func.func @transform_1(%arg0: i32, %arg1: i32, %arg2: i32) -> (i32, i32) {
    %c0_i32 = arith.constant 0 : i32
    return %arg2, %arg1 : i32, i32
  }
  func.func @transform_2(%arg0: i32, %arg1: i32, %arg2: i32) -> (i32, i32) {
    %c0_i32 = arith.constant 0 : i32
    %c0_i32_0 = arith.constant 0 : i32
    return %c0_i32, %arg1 : i32, i32
  }
  func.func @transform_3(%arg0: i32, %arg1: i32, %arg2: i32) -> (i32, i32) {
    %c0_i32 = arith.constant 0 : i32
    return %arg0, %arg1 : i32, i32
  }
}

</mosaic_0001>

<llo_original>
// kernel: generator_forward.29
$region0: #{generator_forward.29}
  #allocation0 [shape = 'u32[]', space=smem, size = 0x4, offset = 0x4, fixed_abs, tag = 'smem constant byte address 0x4 - core index']
  #allocation1 [shape = 'u32[144,128]{1,0:T(1,128)}', space=vmem, size = 0x12000, scoped, tag = 'internal scratch']
  %s0 = inlined_call_operand.vmem [shape: bf16[2,256,128], index: 0, kind: input, shape index: {}]
  %s1 = inlined_call_operand.vmem [shape: f32[2,1,128], index: 1, kind: output, shape index: {0}]
  %s2 = inlined_call_operand.vmem [shape: f32[2,1,128], index: 2, kind: output, shape index: {1}]
  %3 = xla_tuple %s1, %s2
  %s4 = sld [smem:[#allocation0]]
  $region49: #{generator_forward.29} parent=0
    _
  %s6 = ssub.s32 1, %s4
  %s7 = scalar_select 0, %s6, %s4
  loop: start=0, step=1, limit=4
  $region2: #{generator_forward.29} parent=0 // loop_pre_header
    _
  $region3: #{generator_forward.29} parent=0 // loop_header
    %s9 = sphi 0, %s13
    %p10 = scmp.ge.s32.totalorder %s9, 4
    %s16 = sphi 0, %s28
    %s17 = sphi 0, %s24
    %s18 = sphi 0, %s16
    %s19 = sphi 0, %s17
    %s20 = sphi 0, %s18
    %s21 = sphi 0, %s19
    %s33 = sphi 0, %s35
    %s36 = sphi 0, %s33
    %s37 = sphi 0, %s36
    %s53 = sphi 0, %s37
    %s59 = sphi 0, %s61
    %s62 = sphi 0, %s59
    %s63 = sphi 0, %s62
    %s79 = sphi 0, %s63
    %s85 = sphi 0, %s87
    %s88 = sphi 0, %s85
    %s89 = sphi 0, %s88
    %s105 = sphi 0, %s89
  $region4: #{generator_forward.29} parent=0 // loop_header_branch
    %12 = sbr.rel (%p10) target = $region8
  $region5: #{generator_forward.29} parent=0 // loop_body
    %s14 = ssub.s32 %s9, 1
    %s15 = ssub.s32 %s9, 2
    %s22 = sadd.s32 1, %s17
    %p23 = scmp.ge.s32.totalorder %s22, 1
    %s24 = scalar_select %p23, 0, %s22
    %s25 = sadd.s32 1, %s16
    %s26 = scalar_select %p23, %s25, %s16
    %p27 = scmp.ge.s32.totalorder %s26, 2
    %s28 = scalar_select %p27, 0, %s26
    %s29 = ssub.s32 %s16, %s28
    %s30 = ssub.s32 %s17, %s24
    %s31 = sor.u32 %s29, %s30
    %p32 = scmp.eq.s32.totalorder %s31, 0
    %s34 = sadd.s32 %s33, 1
    %s35 = scalar_select %p32, %s33, %s34
    %p38 = pneg %p32
    %p39 = scmp.eq.s32.totalorder %s9, 1
    %p40 = por %p38, %p39
    %p41 = scmp.ne.s32.totalorder %s33, %s36
    %p42 = scmp.eq.s32.totalorder %s9, 0
    %p43 = por %p41, %p42
    %p44 = scmp.ne.s32.totalorder %s33, %s36
    %p45 = scmp.eq.s32.totalorder %s14, 1
    %p46 = por %p44, %p45
    %p47 = scmp.ne.s32.totalorder %s36, %s37
    %p48 = scmp.eq.s32.totalorder %s14, 0
    %p49 = por %p47, %p48
    %p50 = scmp.ne.s32.totalorder %s36, %s37
    %p51 = scmp.eq.s32.totalorder %s15, 1
    %p52 = por %p50, %p51
    %p54 = scmp.ne.s32.totalorder %s37, %s53
    %p55 = scmp.eq.s32.totalorder %s15, 0
    %p56 = por %p54, %p55
    %s57 = ssub.s32 %s16, %s28
    %p58 = scmp.eq.s32.totalorder %s57, 0
    %s60 = sadd.s32 %s59, 1
    %s61 = scalar_select %p58, %s59, %s60
    %p64 = pneg %p58
    %p65 = scmp.eq.s32.totalorder %s9, 1
    %p66 = por %p64, %p65
    %p67 = scmp.ne.s32.totalorder %s59, %s62
    %p68 = scmp.eq.s32.totalorder %s9, 0
    %p69 = por %p67, %p68
    %p70 = scmp.ne.s32.totalorder %s59, %s62
    %p71 = scmp.eq.s32.totalorder %s14, 1
    %p72 = por %p70, %p71
    %p73 = scmp.ne.s32.totalorder %s62, %s63
    %p74 = scmp.eq.s32.totalorder %s14, 0
    %p75 = por %p73, %p74
    %p76 = scmp.ne.s32.totalorder %s62, %s63
    %p77 = scmp.eq.s32.totalorder %s15, 1
    %p78 = por %p76, %p77
    %p80 = scmp.ne.s32.totalorder %s63, %s79
    %p81 = scmp.eq.s32.totalorder %s15, 0
    %p82 = por %p80, %p81
    %s83 = ssub.s32 %s16, %s28
    %p84 = scmp.eq.s32.totalorder %s83, 0
    %s86 = sadd.s32 %s85, 1
    %s87 = scalar_select %p84, %s85, %s86
    %p90 = pneg %p84
    %p91 = scmp.eq.s32.totalorder %s9, 1
    %p92 = por %p90, %p91
    %p93 = scmp.ne.s32.totalorder %s85, %s88
    %p94 = scmp.eq.s32.totalorder %s9, 0
    %p95 = por %p93, %p94
    %p96 = scmp.ne.s32.totalorder %s85, %s88
    %p97 = scmp.eq.s32.totalorder %s14, 1
    %p98 = por %p96, %p97
    %p99 = scmp.ne.s32.totalorder %s88, %s89
    %p100 = scmp.eq.s32.totalorder %s14, 0
    %p101 = por %p99, %p100
    %p102 = scmp.ne.s32.totalorder %s88, %s89
    %p103 = scmp.eq.s32.totalorder %s15, 1
    %p104 = por %p102, %p103
    %p106 = scmp.ne.s32.totalorder %s89, %s105
    %p107 = scmp.eq.s32.totalorder %s15, 0
    %p108 = por %p106, %p107
    %p109 = scmp.le.s32.totalorder 1, %s9
    %p110 = scmp.lt.s32.totalorder %s9, 3
    %p111 = pnand %p109, %p110
    %p112 = pneg %p111
    // Predicated region
    $region9: #{generator_forward.29} parent=5 // pred_check
      _
    $region10: #{generator_forward.29} parent=5 // pred_check_branch
      %114 = sbr.rel (%p111) target = $region12
    $region11: #{generator_forward.29} parent=5 // pred_region
      %s115 = ssub.s32 %s9, 1
    $region12: #{generator_forward.29} parent=5 // pred_fallthru
      _
    %p116 = scmp.lt.s32.totalorder %s9, 2
    // Predicated region
    $region13: #{generator_forward.29} parent=5 // pred_check
      %p117 = pneg %p116
    $region14: #{generator_forward.29} parent=5 // pred_check_branch
      %119 = sbr.rel (%p117) target = $region16
    $region15: #{generator_forward.29} parent=5 // pred_region
      // Predicated region
      $region17: #{generator_forward.29} parent=15 // pred_check
        %p120 = pneg %p43
      $region18: #{generator_forward.29} parent=15 // pred_check_branch
        %122 = sbr.rel (%p120) target = $region20
      $region19: #{generator_forward.29} parent=15 // pred_region
        %s123 = smul.u32 32, %s17
        %p124 = scmp.lt.s32.totalorder %s16, 1
        %s125 = scalar_select %p124, %s16, 1
        %p126 = scmp.lt.s32.totalorder %s123, 31
        %s127 = scalar_select %p126, %s123, 31
        %s128 = smul.addr %s125, 32
        %s129 = sadd.s32 %s127, %s128
        %s130 = smul.addr %s129, 4
        %s131 = scalar_lea.vmem %s0, %s130
        %s132 = smul.u32 32, %s17
      $region20: #{generator_forward.29} parent=15 // pred_fallthru
        _
    $region16: #{generator_forward.29} parent=5 // pred_fallthru
      _
    %p133 = scmp.le.s32.totalorder 1, %s9
    %p134 = scmp.lt.s32.totalorder %s9, 3
    %p135 = pnand %p133, %p134
    %p136 = pneg %p135
    // Predicated region
    $region21: #{generator_forward.29} parent=5 // pred_check
      _
    $region22: #{generator_forward.29} parent=5 // pred_check_branch
      %138 = sbr.rel (%p135) target = $region24
    $region23: #{generator_forward.29} parent=5 // pred_region
      %s139 = ssub.s32 %s9, 1
      %s140 = smul.u32 32, %s19
      %p141 = scmp.lt.s32.totalorder %s18, 1
      %s142 = scalar_select %p141, %s18, 1
      %p143 = scmp.lt.s32.totalorder %s140, 31
      %s144 = scalar_select %p143, %s140, 31
      %s145 = smul.addr %s142, 32
      %s146 = sadd.s32 %s144, %s145
      %s147 = smul.addr %s146, 4
      %s148 = scalar_lea.vmem %s0, %s147
      %p149 = pneg %p49
      %p150 = pneg %p46
      %p151 = pneg %p75
      %p152 = pneg %p72
      %p153 = scmp.lt.s32.totalorder %s18, 1
      %s154 = scalar_select %p153, %s18, 1
      %s155 = scalar_lea.vmem %s1, %s154
      %p156 = pneg %p101
      %p157 = pneg %p98
      %p158 = scmp.lt.s32.totalorder %s18, 1
      %s159 = scalar_select %p158, %s18, 1
      %s160 = scalar_lea.vmem %s2, %s159
      %s161 = smul.u32 32, %s19
      %p162 = scmp.lt.s32.totalorder %s18, 1
      %s163 = scalar_select %p162, %s18, 1
      %p164 = scmp.lt.s32.totalorder %s161, 31
      %s165 = scalar_select %p164, %s161, 31
      %s166 = smul.addr %s163, 32
      %s167 = sadd.s32 %s165, %s166
      %s168 = smul.addr %s167, 4
      %s169 = scalar_lea.vmem %s0, %s168
      %s170 = smul.u32 32, %s19
      %p171 = scmp.lt.s32.totalorder %s18, 1
      %s172 = scalar_select %p171, %s18, 1
      %s173 = scalar_lea.vmem %s1, %s172
      %p174 = scmp.lt.s32.totalorder %s18, 1
      %s175 = scalar_select %p174, %s18, 1
      %s176 = scalar_lea.vmem %s2, %s175
      %p177 = scmp.eq.s32.totalorder %s19, 0
      // Predicated region
      $region25: #{generator_forward.29} parent=23 // pred_check
        %p178 = pneg %p177
      $region26: #{generator_forward.29} parent=23 // pred_check_branch
        %180 = sbr.rel (%p178) target = $region28
      $region27: #{generator_forward.29} parent=23 // pred_region
        %181 = vst [vmem:[%s173] sm:$0x1] 0.0
        %182 = vst [vmem:[%s176] sm:$0x1] 0.0
      $region28: #{generator_forward.29} parent=23 // pred_fallthru
        _
      %v183 = vld [vmem:[%s169] sm:$0xf]
      %v184 = vld [vmem:[%s169 + $0x4] sm:$0xf]
      %v185 = vld [vmem:[%s169 + $0x8] sm:$0xf]
      %v186 = vld [vmem:[%s169 + $0xc] sm:$0xf]
      %v187 = vld [vmem:[%s169 + $0x10] sm:$0xf]
      %v188 = vld [vmem:[%s169 + $0x14] sm:$0xf]
      %v189 = vld [vmem:[%s169 + $0x18] sm:$0xf]
      %v190 = vld [vmem:[%s169 + $0x1c] sm:$0xf]
      %v191 = vld [vmem:[%s169 + $0x20] sm:$0xf]
      %v192 = vld [vmem:[%s169 + $0x24] sm:$0xf]
      %v193 = vld [vmem:[%s169 + $0x28] sm:$0xf]
      %v194 = vld [vmem:[%s169 + $0x2c] sm:$0xf]
      %v195 = vld [vmem:[%s169 + $0x30] sm:$0xf]
      %v196 = vld [vmem:[%s169 + $0x34] sm:$0xf]
      %v197 = vld [vmem:[%s169 + $0x38] sm:$0xf]
      %v198 = vld [vmem:[%s169 + $0x3c] sm:$0xf]
      %v199 = vld [vmem:[%s169 + $0x40] sm:$0xf]
      %v200 = vld [vmem:[%s169 + $0x44] sm:$0xf]
      %v201 = vld [vmem:[%s169 + $0x48] sm:$0xf]
      %v202 = vld [vmem:[%s169 + $0x4c] sm:$0xf]
      %v203 = vld [vmem:[%s169 + $0x50] sm:$0xf]
      %v204 = vld [vmem:[%s169 + $0x54] sm:$0xf]
      %v205 = vld [vmem:[%s169 + $0x58] sm:$0xf]
      %v206 = vld [vmem:[%s169 + $0x5c] sm:$0xf]
      %v207 = vld [vmem:[%s169 + $0x60] sm:$0xf]
      %v208 = vld [vmem:[%s169 + $0x64] sm:$0xf]
      %v209 = vld [vmem:[%s169 + $0x68] sm:$0xf]
      %v210 = vld [vmem:[%s169 + $0x6c] sm:$0xf]
      %v211 = vld [vmem:[%s169 + $0x70] sm:$0xf]
      %v212 = vld [vmem:[%s169 + $0x74] sm:$0xf]
      %v213 = vld [vmem:[%s169 + $0x78] sm:$0xf]
      %v214 = vld [vmem:[%s169 + $0x7c] sm:$0xf]
      %v215 = vunpack.c.l.bf16 %v183
      %v216 = vunpack.c.l.bf16 %v184
      %v217 = vunpack.c.l.bf16 %v185
      %v218 = vunpack.c.l.bf16 %v186
      %v219 = vunpack.c.l.bf16 %v187
      %v220 = vunpack.c.l.bf16 %v188
      %v221 = vunpack.c.l.bf16 %v189
      %v222 = vunpack.c.l.bf16 %v190
      %v223 = vunpack.c.l.bf16 %v191
      %v224 = vunpack.c.l.bf16 %v192
      %v225 = vunpack.c.l.bf16 %v193
      %v226 = vunpack.c.l.bf16 %v194
      %v227 = vunpack.c.l.bf16 %v195
      %v228 = vunpack.c.l.bf16 %v196
      %v229 = vunpack.c.l.bf16 %v197
      %v230 = vunpack.c.l.bf16 %v198
      %v231 = vunpack.c.l.bf16 %v199
      %v232 = vunpack.c.l.bf16 %v200
      %v233 = vunpack.c.l.bf16 %v201
      %v234 = vunpack.c.l.bf16 %v202
      %v235 = vunpack.c.l.bf16 %v203
      %v236 = vunpack.c.l.bf16 %v204
      %v237 = vunpack.c.l.bf16 %v205
      %v238 = vunpack.c.l.bf16 %v206
      %v239 = vunpack.c.l.bf16 %v207
      %v240 = vunpack.c.l.bf16 %v208
      %v241 = vunpack.c.l.bf16 %v209
      %v242 = vunpack.c.l.bf16 %v210
      %v243 = vunpack.c.l.bf16 %v211
      %v244 = vunpack.c.l.bf16 %v212
      %v245 = vunpack.c.l.bf16 %v213
      %v246 = vunpack.c.l.bf16 %v214
      %v247 = vld [vmem:[%s173] sm:$0x1]
      %v248 = vadd.f32 %v215, %v216
      %v249 = vadd.f32 %v248, %v217
      %v250 = vadd.f32 %v249, %v218
      %v251 = vadd.f32 %v250, %v219
      %v252 = vadd.f32 %v251, %v220
      %v253 = vadd.f32 %v252, %v221
      %v254 = vadd.f32 %v253, %v222
      %v255 = vadd.f32 %v254, %v223
      %v256 = vadd.f32 %v255, %v224
      %v257 = vadd.f32 %v256, %v225
      %v258 = vadd.f32 %v257, %v226
      %v259 = vadd.f32 %v258, %v227
      %v260 = vadd.f32 %v259, %v228
      %v261 = vadd.f32 %v260, %v229
      %v262 = vadd.f32 %v261, %v230
      %v263 = vadd.f32 %v262, %v231
      %v264 = vadd.f32 %v263, %v232
      %v265 = vadd.f32 %v264, %v233
      %v266 = vadd.f32 %v265, %v234
      %v267 = vadd.f32 %v266, %v235
      %v268 = vadd.f32 %v267, %v236
      %v269 = vadd.f32 %v268, %v237
      %v270 = vadd.f32 %v269, %v238
      %v271 = vadd.f32 %v270, %v239
      %v272 = vadd.f32 %v271, %v240
      %v273 = vadd.f32 %v272, %v241
      %v274 = vadd.f32 %v273, %v242
      %v275 = vadd.f32 %v274, %v243
      %v276 = vadd.f32 %v275, %v244
      %v277 = vadd.f32 %v276, %v245
      %v278 = vadd.f32 %v277, %v246
      %v279 = vrot.slane %v278, 4
      %v280 = vadd.f32 %v278, %v279
      %v281 = vrot.slane %v280, 2
      %v282 = vadd.f32 %v280, %v281
      %v283 = vrot.slane %v282, 1
      %v284 = vadd.f32 %v282, %v283
      %v285 = vadd.f32 %v247, %v284
      %286 = vst [vmem:[%s173] sm:$0x1] %v285
      %v287 = vld [vmem:[%s176] sm:$0x1]
      %v288 = vmul.f32 %v215, %v215
      %v289 = vmul.f32 %v216, %v216
      %v290 = vmul.f32 %v217, %v217
      %v291 = vmul.f32 %v218, %v218
      %v292 = vmul.f32 %v219, %v219
      %v293 = vmul.f32 %v220, %v220
      %v294 = vmul.f32 %v221, %v221
      %v295 = vmul.f32 %v222, %v222
      %v296 = vmul.f32 %v223, %v223
      %v297 = vmul.f32 %v224, %v224
      %v298 = vmul.f32 %v225, %v225
      %v299 = vmul.f32 %v226, %v226
      %v300 = vmul.f32 %v227, %v227
      %v301 = vmul.f32 %v228, %v228
      %v302 = vmul.f32 %v229, %v229
      %v303 = vmul.f32 %v230, %v230
      %v304 = vmul.f32 %v231, %v231
      %v305 = vmul.f32 %v232, %v232
      %v306 = vmul.f32 %v233, %v233
      %v307 = vmul.f32 %v234, %v234
      %v308 = vmul.f32 %v235, %v235
      %v309 = vmul.f32 %v236, %v236
      %v310 = vmul.f32 %v237, %v237
      %v311 = vmul.f32 %v238, %v238
      %v312 = vmul.f32 %v239, %v239
      %v313 = vmul.f32 %v240, %v240
      %v314 = vmul.f32 %v241, %v241
      %v315 = vmul.f32 %v242, %v242
      %v316 = vmul.f32 %v243, %v243
      %v317 = vmul.f32 %v244, %v244
      %v318 = vmul.f32 %v245, %v245
      %v319 = vmul.f32 %v246, %v246
      %v320 = vadd.f32 %v288, %v289
      %v321 = vadd.f32 %v320, %v290
      %v322 = vadd.f32 %v321, %v291
      %v323 = vadd.f32 %v322, %v292
      %v324 = vadd.f32 %v323, %v293
      %v325 = vadd.f32 %v324, %v294
      %v326 = vadd.f32 %v325, %v295
      %v327 = vadd.f32 %v326, %v296
      %v328 = vadd.f32 %v327, %v297
      %v329 = vadd.f32 %v328, %v298
      %v330 = vadd.f32 %v329, %v299
      %v331 = vadd.f32 %v330, %v300
      %v332 = vadd.f32 %v331, %v301
      %v333 = vadd.f32 %v332, %v302
      %v334 = vadd.f32 %v333, %v303
      %v335 = vadd.f32 %v334, %v304
      %v336 = vadd.f32 %v335, %v305
      %v337 = vadd.f32 %v336, %v306
      %v338 = vadd.f32 %v337, %v307
      %v339 = vadd.f32 %v338, %v308
      %v340 = vadd.f32 %v339, %v309
      %v341 = vadd.f32 %v340, %v310
      %v342 = vadd.f32 %v341, %v311
      %v343 = vadd.f32 %v342, %v312
      %v344 = vadd.f32 %v343, %v313
      %v345 = vadd.f32 %v344, %v314
      %v346 = vadd.f32 %v345, %v315
      %v347 = vadd.f32 %v346, %v316
      %v348 = vadd.f32 %v347, %v317
      %v349 = vadd.f32 %v348, %v318
      %v350 = vadd.f32 %v349, %v319
      %v351 = vrot.slane %v350, 4
      %v352 = vadd.f32 %v350, %v351
      %v353 = vrot.slane %v352, 2
      %v354 = vadd.f32 %v352, %v353
      %v355 = vrot.slane %v354, 1
      %v356 = vadd.f32 %v354, %v355
      %v357 = vadd.f32 %v287, %v356
      %358 = vst [vmem:[%s176] sm:$0x1] %v357
      %p359 = scmp.lt.s32.totalorder %s18, 1
      %s360 = scalar_select %p359, %s18, 1
      %s361 = scalar_lea.vmem %s1, %s360
      %p362 = scmp.lt.s32.totalorder %s18, 1
      %s363 = scalar_select %p362, %s18, 1
      %s364 = scalar_lea.vmem %s2, %s363
      // Predicated region
      $region29: #{generator_forward.29} parent=23 // pred_check
        %p365 = pneg %p72
      $region30: #{generator_forward.29} parent=23 // pred_check_branch
        %367 = sbr.rel (%p365) target = $region32
      $region31: #{generator_forward.29} parent=23 // pred_region
        _
      $region32: #{generator_forward.29} parent=23 // pred_fallthru
        _
      // Predicated region
      $region33: #{generator_forward.29} parent=23 // pred_check
        %p368 = pneg %p98
      $region34: #{generator_forward.29} parent=23 // pred_check_branch
        %370 = sbr.rel (%p368) target = $region36
      $region35: #{generator_forward.29} parent=23 // pred_region
        _
      $region36: #{generator_forward.29} parent=23 // pred_fallthru
        _
    $region24: #{generator_forward.29} parent=5 // pred_fallthru
      _
    %p371 = scmp.le.s32.totalorder 2, %s9
    // Predicated region
    $region37: #{generator_forward.29} parent=5 // pred_check
      %p372 = pneg %p371
    $region38: #{generator_forward.29} parent=5 // pred_check_branch
      %374 = sbr.rel (%p372) target = $region40
    $region39: #{generator_forward.29} parent=5 // pred_region
      %s375 = ssub.s32 %s9, 2
      // Predicated region
      $region41: #{generator_forward.29} parent=39 // pred_check
        %p376 = pneg %p78
      $region42: #{generator_forward.29} parent=39 // pred_check_branch
        %378 = sbr.rel (%p376) target = $region44
      $region43: #{generator_forward.29} parent=39 // pred_region
        %p379 = scmp.lt.s32.totalorder %s20, 1
        %s380 = scalar_select %p379, %s20, 1
        %s381 = scalar_lea.vmem %s1, %s380
      $region44: #{generator_forward.29} parent=39 // pred_fallthru
        _
      // Predicated region
      $region45: #{generator_forward.29} parent=39 // pred_check
        %p382 = pneg %p104
      $region46: #{generator_forward.29} parent=39 // pred_check_branch
        %384 = sbr.rel (%p382) target = $region48
      $region47: #{generator_forward.29} parent=39 // pred_region
        %p385 = scmp.lt.s32.totalorder %s20, 1
        %s386 = scalar_select %p385, %s20, 1
        %s387 = scalar_lea.vmem %s2, %s386
      $region48: #{generator_forward.29} parent=39 // pred_fallthru
        _
    $region40: #{generator_forward.29} parent=5 // pred_fallthru
      _
  $region6: #{generator_forward.29} parent=0 // loop_footer
    %s13 = sadd.s32 1, %s9
  $region7: #{generator_forward.29} parent=0 // loop_footer_branch
    %8 = sbr.rel target = $region3
  $region8: #{generator_forward.29} parent=0 // loop_exit
    _

// kernel: generator_forward.28
$region0: #{generator_forward.28}
  #allocation0 [shape = 'u32[]', space=smem, size = 0x4, offset = 0x4, fixed_abs, tag = 'smem constant byte address 0x4 - core index']
  #allocation1 [shape = 'u32[144,128]{1,0:T(1,128)}', space=vmem, size = 0x12000, scoped, tag = 'internal scratch']
  #allocation2 [shape = 'f32[256,128]{1,0:T(8,128)}', space=vmem, size = 0x20000, scoped, tag = 'scratch operand']
  %s0 = inlined_call_operand.vmem [shape: bf16[512,196], index: 0, kind: input, shape index: {}]
  %s1 = inlined_call_operand.vmem [shape: bf16[196,128], index: 1, kind: input, shape index: {}]
  %s2 = inlined_call_operand.vmem [shape: f32[1,128], index: 2, kind: input, shape index: {}]
  %s3 = inlined_call_operand.vmem [shape: bf16[512,128], index: 3, kind: output, shape index: {}]
  %s4 = sld [smem:[#allocation0]]
  $region53: #{generator_forward.28} parent=0
    _
  %s6 = ssub.s32 1, %s4
  %s7 = scalar_select 0, %s6, %s4
  loop: start=0, step=1, limit=4
  $region2: #{generator_forward.28} parent=0 // loop_pre_header
    _
  $region3: #{generator_forward.28} parent=0 // loop_header
    %s9 = sphi 0, %s13
    %p10 = scmp.ge.s32.totalorder %s9, 4
    %s16 = sphi 0, %s35
    %s17 = sphi 0, %s31
    %s18 = sphi 0, %s27
    %s19 = sphi 0, %s16
    %s20 = sphi 0, %s17
    %s21 = sphi 0, %s18
    %s22 = sphi 0, %s19
    %s23 = sphi 0, %s20
    %s24 = sphi 0, %s21
    %s40 = sphi 0, %s42
    %s43 = sphi 0, %s40
    %s44 = sphi 0, %s43
    %s60 = sphi 0, %s44
    %s68 = sphi 0, %s70
    %s71 = sphi 0, %s68
    %s72 = sphi 0, %s71
    %s88 = sphi 0, %s72
    %s94 = sphi 0, %s96
    %s97 = sphi 0, %s94
    %s98 = sphi 0, %s97
    %s114 = sphi 0, %s98
    %s122 = sphi 0, %s124
    %s125 = sphi 0, %s122
    %s126 = sphi 0, %s125
    %s142 = sphi 0, %s126
  $region4: #{generator_forward.28} parent=0 // loop_header_branch
    %12 = sbr.rel (%p10) target = $region8
  $region5: #{generator_forward.28} parent=0 // loop_body
    %s14 = ssub.s32 %s9, 1
    %s15 = ssub.s32 %s9, 2
    %s25 = sadd.s32 1, %s18
    %p26 = scmp.ge.s32.totalorder %s25, 1
    %s27 = scalar_select %p26, 0, %s25
    %s28 = sadd.s32 1, %s17
    %s29 = scalar_select %p26, %s28, %s17
    %p30 = scmp.ge.s32.totalorder %s29, 1
    %s31 = scalar_select %p30, 0, %s29
    %s32 = sadd.s32 1, %s16
    %s33 = scalar_select %p30, %s32, %s16
    %p34 = scmp.ge.s32.totalorder %s33, 2
    %s35 = scalar_select %p34, 0, %s33
    %s36 = ssub.s32 %s16, %s35
    %s37 = ssub.s32 %s18, %s27
    %s38 = sor.u32 %s36, %s37
    %p39 = scmp.eq.s32.totalorder %s38, 0
    %s41 = sadd.s32 %s40, 1
    %s42 = scalar_select %p39, %s40, %s41
    %p45 = pneg %p39
    %p46 = scmp.eq.s32.totalorder %s9, 1
    %p47 = por %p45, %p46
    %p48 = scmp.ne.s32.totalorder %s40, %s43
    %p49 = scmp.eq.s32.totalorder %s9, 0
    %p50 = por %p48, %p49
    %p51 = scmp.ne.s32.totalorder %s40, %s43
    %p52 = scmp.eq.s32.totalorder %s14, 1
    %p53 = por %p51, %p52
    %p54 = scmp.ne.s32.totalorder %s43, %s44
    %p55 = scmp.eq.s32.totalorder %s14, 0
    %p56 = por %p54, %p55
    %p57 = scmp.ne.s32.totalorder %s43, %s44
    %p58 = scmp.eq.s32.totalorder %s15, 1
    %p59 = por %p57, %p58
    %p61 = scmp.ne.s32.totalorder %s44, %s60
    %p62 = scmp.eq.s32.totalorder %s15, 0
    %p63 = por %p61, %p62
    %s64 = ssub.s32 %s18, %s27
    %s65 = ssub.s32 %s17, %s31
    %s66 = sor.u32 %s64, %s65
    %p67 = scmp.eq.s32.totalorder %s66, 0
    %s69 = sadd.s32 %s68, 1
    %s70 = scalar_select %p67, %s68, %s69
    %p73 = pneg %p67
    %p74 = scmp.eq.s32.totalorder %s9, 1
    %p75 = por %p73, %p74
    %p76 = scmp.ne.s32.totalorder %s68, %s71
    %p77 = scmp.eq.s32.totalorder %s9, 0
    %p78 = por %p76, %p77
    %p79 = scmp.ne.s32.totalorder %s68, %s71
    %p80 = scmp.eq.s32.totalorder %s14, 1
    %p81 = por %p79, %p80
    %p82 = scmp.ne.s32.totalorder %s71, %s72
    %p83 = scmp.eq.s32.totalorder %s14, 0
    %p84 = por %p82, %p83
    %p85 = scmp.ne.s32.totalorder %s71, %s72
    %p86 = scmp.eq.s32.totalorder %s15, 1
    %p87 = por %p85, %p86
    %p89 = scmp.ne.s32.totalorder %s72, %s88
    %p90 = scmp.eq.s32.totalorder %s15, 0
    %p91 = por %p89, %p90
    %s92 = ssub.s32 %s17, %s31
    %p93 = scmp.eq.s32.totalorder %s92, 0
    %s95 = sadd.s32 %s94, 1
    %s96 = scalar_select %p93, %s94, %s95
    %p99 = pneg %p93
    %p100 = scmp.eq.s32.totalorder %s9, 1
    %p101 = por %p99, %p100
    %p102 = scmp.ne.s32.totalorder %s94, %s97
    %p103 = scmp.eq.s32.totalorder %s9, 0
    %p104 = por %p102, %p103
    %p105 = scmp.ne.s32.totalorder %s94, %s97
    %p106 = scmp.eq.s32.totalorder %s14, 1
    %p107 = por %p105, %p106
    %p108 = scmp.ne.s32.totalorder %s97, %s98
    %p109 = scmp.eq.s32.totalorder %s14, 0
    %p110 = por %p108, %p109
    %p111 = scmp.ne.s32.totalorder %s97, %s98
    %p112 = scmp.eq.s32.totalorder %s15, 1
    %p113 = por %p111, %p112
    %p115 = scmp.ne.s32.totalorder %s98, %s114
    %p116 = scmp.eq.s32.totalorder %s15, 0
    %p117 = por %p115, %p116
    %s118 = ssub.s32 %s16, %s35
    %s119 = ssub.s32 %s17, %s31
    %s120 = sor.u32 %s118, %s119
    %p121 = scmp.eq.s32.totalorder %s120, 0
    %s123 = sadd.s32 %s122, 1
    %s124 = scalar_select %p121, %s122, %s123
    %p127 = pneg %p121
    %p128 = scmp.eq.s32.totalorder %s9, 1
    %p129 = por %p127, %p128
    %p130 = scmp.ne.s32.totalorder %s122, %s125
    %p131 = scmp.eq.s32.totalorder %s9, 0
    %p132 = por %p130, %p131
    %p133 = scmp.ne.s32.totalorder %s122, %s125
    %p134 = scmp.eq.s32.totalorder %s14, 1
    %p135 = por %p133, %p134
    %p136 = scmp.ne.s32.totalorder %s125, %s126
    %p137 = scmp.eq.s32.totalorder %s14, 0
    %p138 = por %p136, %p137
    %p139 = scmp.ne.s32.totalorder %s125, %s126
    %p140 = scmp.eq.s32.totalorder %s15, 1
    %p141 = por %p139, %p140
    %p143 = scmp.ne.s32.totalorder %s126, %s142
    %p144 = scmp.eq.s32.totalorder %s15, 0
    %p145 = por %p143, %p144
    %p146 = scmp.le.s32.totalorder 1, %s9
    %p147 = scmp.lt.s32.totalorder %s9, 3
    %p148 = pnand %p146, %p147
    %p149 = pneg %p148
    // Predicated region
    $region9: #{generator_forward.28} parent=5 // pred_check
      _
    $region10: #{generator_forward.28} parent=5 // pred_check_branch
      %151 = sbr.rel (%p148) target = $region12
    $region11: #{generator_forward.28} parent=5 // pred_region
      %s152 = ssub.s32 %s9, 1
      // Predicated region
      $region13: #{generator_forward.28} parent=11 // pred_check
        %p153 = pneg %p84
      $region14: #{generator_forward.28} parent=11 // pred_check_branch
        %155 = sbr.rel (%p153) target = $region16
      $region15: #{generator_forward.28} parent=11 // pred_region
        %s156 = smul.u32 25, %s21
        %p157 = scmp.lt.s32.totalorder %s156, 24
        %s158 = scalar_select %p157, %s156, 24
        %p159 = scmp.lt.s32.totalorder %s20, 0
        %s160 = scalar_select %p159, %s20, 0
        %s161 = sadd.s32 %s160, %s158
        %s162 = smul.addr %s161, 4
        %s163 = scalar_lea.vmem %s1, %s162
        %s164 = smul.u32 25, %s21
      $region16: #{generator_forward.28} parent=11 // pred_fallthru
        _
      // Predicated region
      $region17: #{generator_forward.28} parent=11 // pred_check
        %p165 = pneg %p110
      $region18: #{generator_forward.28} parent=11 // pred_check_branch
        %167 = sbr.rel (%p165) target = $region20
      $region19: #{generator_forward.28} parent=11 // pred_region
        %p168 = scmp.lt.s32.totalorder %s20, 0
        %s169 = scalar_select %p168, %s20, 0
        %s170 = scalar_lea.vmem %s2, %s169
      $region20: #{generator_forward.28} parent=11 // pred_fallthru
        _
    $region12: #{generator_forward.28} parent=5 // pred_fallthru
      _
    %p171 = scmp.lt.s32.totalorder %s9, 2
    // Predicated region
    $region21: #{generator_forward.28} parent=5 // pred_check
      %p172 = pneg %p171
    $region22: #{generator_forward.28} parent=5 // pred_check_branch
      %174 = sbr.rel (%p172) target = $region24
    $region23: #{generator_forward.28} parent=5 // pred_region
      // Predicated region
      $region25: #{generator_forward.28} parent=23 // pred_check
        %p175 = pneg %p50
      $region26: #{generator_forward.28} parent=23 // pred_check_branch
        %177 = sbr.rel (%p175) target = $region28
      $region27: #{generator_forward.28} parent=23 // pred_region
        %s178 = smul.u32 32, %s16
        %s179 = smul.u32 2, %s18
        %p180 = scmp.lt.s32.totalorder %s178, 63
        %s181 = scalar_select %p180, %s178, 63
        %p182 = scmp.lt.s32.totalorder %s179, 1
        %s183 = scalar_select %p182, %s179, 1
        %s184 = smul.addr %s181, 2
        %s185 = sadd.s32 %s183, %s184
        %s186 = smul.addr %s185, 4
        %s187 = scalar_lea.vmem %s0, %s186
        %s188 = smul.u32 32, %s16
        %s189 = smul.u32 2, %s18
      $region28: #{generator_forward.28} parent=23 // pred_fallthru
        _
    $region24: #{generator_forward.28} parent=5 // pred_fallthru
      _
    %p190 = scmp.le.s32.totalorder 1, %s9
    %p191 = scmp.lt.s32.totalorder %s9, 3
    %p192 = pnand %p190, %p191
    %p193 = pneg %p192
    // Predicated region
    $region29: #{generator_forward.28} parent=5 // pred_check
      _
    $region30: #{generator_forward.28} parent=5 // pred_check_branch
      %195 = sbr.rel (%p192) target = $region32
    $region31: #{generator_forward.28} parent=5 // pred_region
      %s196 = ssub.s32 %s9, 1
      %s197 = smul.u32 32, %s19
      %s198 = smul.u32 2, %s21
      %p199 = scmp.lt.s32.totalorder %s197, 63
      %s200 = scalar_select %p199, %s197, 63
      %p201 = scmp.lt.s32.totalorder %s198, 1
      %s202 = scalar_select %p201, %s198, 1
      %s203 = smul.addr %s200, 2
      %s204 = sadd.s32 %s202, %s203
      %s205 = smul.addr %s204, 4
      %s206 = scalar_lea.vmem %s0, %s205
      %p207 = pneg %p56
      %p208 = pneg %p53
      %s209 = smul.u32 25, %s21
      %p210 = scmp.lt.s32.totalorder %s209, 24
      %s211 = scalar_select %p210, %s209, 24
      %p212 = scmp.lt.s32.totalorder %s20, 0
      %s213 = scalar_select %p212, %s20, 0
      %s214 = sadd.s32 %s213, %s211
      %s215 = smul.addr %s214, 4
      %s216 = scalar_lea.vmem %s1, %s215
      %p217 = pneg %p84
      %p218 = pneg %p81
      %p219 = scmp.lt.s32.totalorder %s20, 0
      %s220 = scalar_select %p219, %s20, 0
      %s221 = scalar_lea.vmem %s2, %s220
      %p222 = pneg %p110
      %p223 = pneg %p107
      %p224 = pneg %p138
      %p225 = pneg %p135
      %s226 = smul.u32 32, %s19
      %p227 = scmp.lt.s32.totalorder %s226, 63
      %s228 = scalar_select %p227, %s226, 63
      %p229 = scmp.lt.s32.totalorder %s20, 0
      %s230 = scalar_select %p229, %s20, 0
      %s231 = sadd.s32 %s230, %s228
      %s232 = smul.addr %s231, 4
      %s233 = scalar_lea.vmem %s3, %s232
      %s234 = smul.u32 32, %s19
      %s235 = smul.u32 2, %s21
      %p236 = scmp.lt.s32.totalorder %s234, 63
      %s237 = scalar_select %p236, %s234, 63
      %p238 = scmp.lt.s32.totalorder %s235, 1
      %s239 = scalar_select %p238, %s235, 1
      %s240 = smul.addr %s237, 2
      %s241 = sadd.s32 %s239, %s240
      %s242 = smul.addr %s241, 4
      %s243 = scalar_lea.vmem %s0, %s242
      %s244 = smul.u32 32, %s19
      %s245 = smul.u32 2, %s21
      %s246 = smul.u32 25, %s21
      %p247 = scmp.lt.s32.totalorder %s246, 24
      %s248 = scalar_select %p247, %s246, 24
      %p249 = scmp.lt.s32.totalorder %s20, 0
      %s250 = scalar_select %p249, %s20, 0
      %s251 = sadd.s32 %s250, %s248
      %s252 = smul.addr %s251, 4
      %s253 = scalar_lea.vmem %s1, %s252
      %s254 = smul.u32 25, %s21
      %p255 = scmp.lt.s32.totalorder %s20, 0
      %s256 = scalar_select %p255, %s20, 0
      %s257 = scalar_lea.vmem %s2, %s256
      %s258 = smul.u32 32, %s19
      %p259 = scmp.lt.s32.totalorder %s258, 63
      %s260 = scalar_select %p259, %s258, 63
      %p261 = scmp.lt.s32.totalorder %s20, 0
      %s262 = scalar_select %p261, %s20, 0
      %s263 = sadd.s32 %s262, %s260
      %s264 = smul.addr %s263, 4
      %s265 = scalar_lea.vmem %s3, %s264
      %s266 = smul.u32 32, %s19
      %p268 = scmp.eq.s32.totalorder %s21, 0
      // Predicated region
      $region33: #{generator_forward.28} parent=31 // pred_check
        %p269 = pneg %p268
      $region34: #{generator_forward.28} parent=31 // pred_check_branch
        %271 = sbr.rel (%p269) target = $region36
      $region35: #{generator_forward.28} parent=31 // pred_region
        %272 = vst [vmem:[#allocation2] sm:$0xff] 0.0
        %273 = vst [vmem:[#allocation2 + $0x8] sm:$0xff] 0.0
        %274 = vst [vmem:[#allocation2 + $0x10] sm:$0xff] 0.0
        %275 = vst [vmem:[#allocation2 + $0x18] sm:$0xff] 0.0
        %276 = vst [vmem:[#allocation2 + $0x20] sm:$0xff] 0.0
        %277 = vst [vmem:[#allocation2 + $0x28] sm:$0xff] 0.0
        %278 = vst [vmem:[#allocation2 + $0x30] sm:$0xff] 0.0
        %279 = vst [vmem:[#allocation2 + $0x38] sm:$0xff] 0.0
        %280 = vst [vmem:[#allocation2 + $0x40] sm:$0xff] 0.0
        %281 = vst [vmem:[#allocation2 + $0x48] sm:$0xff] 0.0
        %282 = vst [vmem:[#allocation2 + $0x50] sm:$0xff] 0.0
        %283 = vst [vmem:[#allocation2 + $0x58] sm:$0xff] 0.0
        %284 = vst [vmem:[#allocation2 + $0x60] sm:$0xff] 0.0
        %285 = vst [vmem:[#allocation2 + $0x68] sm:$0xff] 0.0
        %286 = vst [vmem:[#allocation2 + $0x70] sm:$0xff] 0.0
        %287 = vst [vmem:[#allocation2 + $0x78] sm:$0xff] 0.0
        %288 = vst [vmem:[#allocation2 + $0x80] sm:$0xff] 0.0
        %289 = vst [vmem:[#allocation2 + $0x88] sm:$0xff] 0.0
        %290 = vst [vmem:[#allocation2 + $0x90] sm:$0xff] 0.0
        %291 = vst [vmem:[#allocation2 + $0x98] sm:$0xff] 0.0
        %292 = vst [vmem:[#allocation2 + $0xa0] sm:$0xff] 0.0
        %293 = vst [vmem:[#allocation2 + $0xa8] sm:$0xff] 0.0
        %294 = vst [vmem:[#allocation2 + $0xb0] sm:$0xff] 0.0
        %295 = vst [vmem:[#allocation2 + $0xb8] sm:$0xff] 0.0
        %296 = vst [vmem:[#allocation2 + $0xc0] sm:$0xff] 0.0
        %297 = vst [vmem:[#allocation2 + $0xc8] sm:$0xff] 0.0
        %298 = vst [vmem:[#allocation2 + $0xd0] sm:$0xff] 0.0
        %299 = vst [vmem:[#allocation2 + $0xd8] sm:$0xff] 0.0
        %300 = vst [vmem:[#allocation2 + $0xe0] sm:$0xff] 0.0
        %301 = vst [vmem:[#allocation2 + $0xe8] sm:$0xff] 0.0
        %302 = vst [vmem:[#allocation2 + $0xf0] sm:$0xff] 0.0
        %303 = vst [vmem:[#allocation2 + $0xf8] sm:$0xff] 0.0
      $region36: #{generator_forward.28} parent=31 // pred_fallthru
        _
      %v304 = vld [vmem:[#allocation2] sm:$0xff]
      %v305 = vld [vmem:[#allocation2 + $0x8] sm:$0xff]
      %v306 = vld [vmem:[#allocation2 + $0x10] sm:$0xff]
      %v307 = vld [vmem:[#allocation2 + $0x18] sm:$0xff]
      %v308 = vld [vmem:[#allocation2 + $0x20] sm:$0xff]
      %v309 = vld [vmem:[#allocation2 + $0x28] sm:$0xff]
      %v310 = vld [vmem:[#allocation2 + $0x30] sm:$0xff]
      %v311 = vld [vmem:[#allocation2 + $0x38] sm:$0xff]
      %v312 = vld [vmem:[#allocation2 + $0x40] sm:$0xff]
      %v313 = vld [vmem:[#allocation2 + $0x48] sm:$0xff]
      %v314 = vld [vmem:[#allocation2 + $0x50] sm:$0xff]
      %v315 = vld [vmem:[#allocation2 + $0x58] sm:$0xff]
      %v316 = vld [vmem:[#allocation2 + $0x60] sm:$0xff]
      %v317 = vld [vmem:[#allocation2 + $0x68] sm:$0xff]
      %v318 = vld [vmem:[#allocation2 + $0x70] sm:$0xff]
      %v319 = vld [vmem:[#allocation2 + $0x78] sm:$0xff]
      %v320 = vld [vmem:[#allocation2 + $0x80] sm:$0xff]
      %v321 = vld [vmem:[#allocation2 + $0x88] sm:$0xff]
      %v322 = vld [vmem:[#allocation2 + $0x90] sm:$0xff]
      %v323 = vld [vmem:[#allocation2 + $0x98] sm:$0xff]
      %v324 = vld [vmem:[#allocation2 + $0xa0] sm:$0xff]
      %v325 = vld [vmem:[#allocation2 + $0xa8] sm:$0xff]
      %v326 = vld [vmem:[#allocation2 + $0xb0] sm:$0xff]
      %v327 = vld [vmem:[#allocation2 + $0xb8] sm:$0xff]
      %v328 = vld [vmem:[#allocation2 + $0xc0] sm:$0xff]
      %v329 = vld [vmem:[#allocation2 + $0xc8] sm:$0xff]
      %v330 = vld [vmem:[#allocation2 + $0xd0] sm:$0xff]
      %v331 = vld [vmem:[#allocation2 + $0xd8] sm:$0xff]
      %v332 = vld [vmem:[#allocation2 + $0xe0] sm:$0xff]
      %v333 = vld [vmem:[#allocation2 + $0xe8] sm:$0xff]
      %v334 = vld [vmem:[#allocation2 + $0xf0] sm:$0xff]
      %v335 = vld [vmem:[#allocation2 + $0xf8] sm:$0xff]
      %v336 = vld [vmem:[%s243] sm:$0xff]
      %v337 = vld [vmem:[%s243 + $0x8] sm:$0xff]
      %v338 = vld [vmem:[%s243 + $0x10] sm:$0xff]
      %v339 = vld [vmem:[%s243 + $0x18] sm:$0xff]
      %v340 = vld [vmem:[%s243 + $0x20] sm:$0xff]
      %v341 = vld [vmem:[%s243 + $0x28] sm:$0xff]
      %v342 = vld [vmem:[%s243 + $0x30] sm:$0xff]
      %v343 = vld [vmem:[%s243 + $0x38] sm:$0xff]
      %v344 = vld [vmem:[%s243 + $0x40] sm:$0xff]
      %v345 = vld [vmem:[%s243 + $0x48] sm:$0xff]
      %v346 = vld [vmem:[%s243 + $0x50] sm:$0xff]
      %v347 = vld [vmem:[%s243 + $0x58] sm:$0xff]
      %v348 = vld [vmem:[%s243 + $0x60] sm:$0xff]
      %v349 = vld [vmem:[%s243 + $0x68] sm:$0xff]
      %v350 = vld [vmem:[%s243 + $0x70] sm:$0xff]
      %v351 = vld [vmem:[%s243 + $0x78] sm:$0xff]
      %v352 = vld [vmem:[%s243 + $0x80] sm:$0xff]
      %v353 = vld [vmem:[%s243 + $0x88] sm:$0xff]
      %v354 = vld [vmem:[%s243 + $0x90] sm:$0xff]
      %v355 = vld [vmem:[%s243 + $0x98] sm:$0xff]
      %v356 = vld [vmem:[%s243 + $0xa0] sm:$0xff]
      %v357 = vld [vmem:[%s243 + $0xa8] sm:$0xff]
      %v358 = vld [vmem:[%s243 + $0xb0] sm:$0xff]
      %v359 = vld [vmem:[%s243 + $0xb8] sm:$0xff]
      %v360 = vld [vmem:[%s243 + $0xc0] sm:$0xff]
      %v361 = vld [vmem:[%s243 + $0xc8] sm:$0xff]
      %v362 = vld [vmem:[%s243 + $0xd0] sm:$0xff]
      %v363 = vld [vmem:[%s243 + $0xd8] sm:$0xff]
      %v364 = vld [vmem:[%s243 + $0xe0] sm:$0xff]
      %v365 = vld [vmem:[%s243 + $0xe8] sm:$0xff]
      %v366 = vld [vmem:[%s243 + $0xf0] sm:$0xff]
      %v367 = vld [vmem:[%s243 + $0xf8] sm:$0xff]
      %v368 = vld [vmem:[%s253] sm:$0xf]
      %v369 = vld [vmem:[%s253 + $0x4] sm:$0xf]
      %v370 = vld [vmem:[%s253 + $0x8] sm:$0xf]
      %v371 = vld [vmem:[%s253 + $0xc] sm:$0xf]
      %v372 = vld [vmem:[%s253 + $0x10] sm:$0xf]
      %v373 = vld [vmem:[%s253 + $0x14] sm:$0xf]
      %v374 = vld [vmem:[%s253 + $0x18] sm:$0xf]
      %v375 = vld [vmem:[%s253 + $0x1c] sm:$0xf]
      %v376 = vld [vmem:[%s253 + $0x20] sm:$0xf]
      %v377 = vld [vmem:[%s253 + $0x24] sm:$0xf]
      %v378 = vld [vmem:[%s253 + $0x28] sm:$0xf]
      %v379 = vld [vmem:[%s253 + $0x2c] sm:$0xf]
      %v380 = vld [vmem:[%s253 + $0x30] sm:$0xf]
      %v381 = vld [vmem:[%s253 + $0x34] sm:$0xf]
      %v382 = vld [vmem:[%s253 + $0x38] sm:$0xf]
      %v383 = vld [vmem:[%s253 + $0x3c] sm:$0xf]
      %v384 = vld [vmem:[%s253 + $0x40] sm:$0xf]
      %v385 = vld [vmem:[%s253 + $0x44] sm:$0xf]
      %v386 = vld [vmem:[%s253 + $0x48] sm:$0xf]
      %v387 = vld [vmem:[%s253 + $0x4c] sm:$0xf]
      %v388 = vld [vmem:[%s253 + $0x50] sm:$0xf]
      %v389 = vld [vmem:[%s253 + $0x54] sm:$0xf]
      %v390 = vld [vmem:[%s253 + $0x58] sm:$0xf]
      %v391 = vld [vmem:[%s253 + $0x5c] sm:$0xf]
      %v392 = vld [vmem:[%s253 + $0x60] sm:$0x3]
      %v425 = vunpack.c.l.b16 %v336
      %v426 = vunpack.c.h.b16 %v336
      %v427 = vunpack.c.l.b16 %v337
      %v428 = vunpack.c.h.b16 %v337
      %v429 = vunpack.c.l.b16 %v338
      %v430 = vunpack.c.h.b16 %v338
      %v431 = vunpack.c.l.b16 %v339
      %v432 = vunpack.c.h.b16 %v339
      %v433 = vunpack.c.l.b16 %v340
      %v434 = vunpack.c.h.b16 %v340
      %v435 = vunpack.c.l.b16 %v341
      %v436 = vunpack.c.h.b16 %v341
      %v437 = vunpack.c.l.b16 %v342
      %v438 = vunpack.c.h.b16 %v342
      %v439 = vunpack.c.l.b16 %v343
      %v440 = vunpack.c.h.b16 %v343
      %v441 = vunpack.c.l.b16 %v344
      %v442 = vunpack.c.h.b16 %v344
      %v443 = vunpack.c.l.b16 %v345
      %v444 = vunpack.c.h.b16 %v345
      %v445 = vunpack.c.l.b16 %v346
      %v446 = vunpack.c.h.b16 %v346
      %v447 = vunpack.c.l.b16 %v347
      %v448 = vunpack.c.h.b16 %v347
      %v449 = vunpack.c.l.b16 %v348
      %v450 = vunpack.c.h.b16 %v348
      %v451 = vunpack.c.l.b16 %v349
      %v452 = vunpack.c.h.b16 %v349
      %v453 = vunpack.c.l.b16 %v350
      %v454 = vunpack.c.h.b16 %v350
      %v455 = vunpack.c.l.b16 %v351
      %v456 = vunpack.c.h.b16 %v351
      %v457 = vunpack.c.l.b16 %v352
      %v458 = vunpack.c.h.b16 %v352
      %v459 = vunpack.c.l.b16 %v353
      %v460 = vunpack.c.h.b16 %v353
      %v461 = vunpack.c.l.b16 %v354
      %v462 = vunpack.c.h.b16 %v354
      %v463 = vunpack.c.l.b16 %v355
      %v464 = vunpack.c.h.b16 %v355
      %v465 = vunpack.c.l.b16 %v356
      %v466 = vunpack.c.h.b16 %v356
      %v467 = vunpack.c.l.b16 %v357
      %v468 = vunpack.c.h.b16 %v357
      %v469 = vunpack.c.l.b16 %v358
      %v470 = vunpack.c.h.b16 %v358
      %v471 = vunpack.c.l.b16 %v359
      %v472 = vunpack.c.h.b16 %v359
      %v473 = vunpack.c.l.b16 %v360
      %v474 = vunpack.c.h.b16 %v360
      %v475 = vunpack.c.l.b16 %v361
      %v476 = vunpack.c.h.b16 %v361
      %v477 = vunpack.c.l.b16 %v362
      %v478 = vunpack.c.h.b16 %v362
      %v479 = vunpack.c.l.b16 %v363
      %v480 = vunpack.c.h.b16 %v363
      %v481 = vunpack.c.l.b16 %v364
      %v482 = vunpack.c.h.b16 %v364
      %v483 = vunpack.c.l.b16 %v365
      %v484 = vunpack.c.h.b16 %v365
      %v485 = vunpack.c.l.b16 %v366
      %v486 = vunpack.c.h.b16 %v366
      %v487 = vunpack.c.l.b16 %v367
      %v488 = vunpack.c.h.b16 %v367
      %v489 = vpack.c.b16 %v427, %v425
      %v490 = vpack.c.b16 %v428, %v426
      %v491 = vpack.c.b16 %v431, %v429
      %v492 = vpack.c.b16 %v432, %v430
      %v493 = vpack.c.b16 %v435, %v433
      %v494 = vpack.c.b16 %v436, %v434
      %v495 = vpack.c.b16 %v439, %v437
      %v496 = vpack.c.b16 %v440, %v438
      %v497 = vpack.c.b16 %v443, %v441
      %v498 = vpack.c.b16 %v444, %v442
      %v499 = vpack.c.b16 %v447, %v445
      %v500 = vpack.c.b16 %v448, %v446
      %v501 = vpack.c.b16 %v451, %v449
      %v502 = vpack.c.b16 %v452, %v450
      %v503 = vpack.c.b16 %v455, %v453
      %v504 = vpack.c.b16 %v456, %v454
      %v505 = vpack.c.b16 %v459, %v457
      %v506 = vpack.c.b16 %v460, %v458
      %v507 = vpack.c.b16 %v463, %v461
      %v508 = vpack.c.b16 %v464, %v462
      %v509 = vpack.c.b16 %v467, %v465
      %v510 = vpack.c.b16 %v468, %v466
      %v511 = vpack.c.b16 %v471, %v469
      %v512 = vpack.c.b16 %v472, %v470
      %v513 = vpack.c.b16 %v475, %v473
      %v514 = vpack.c.b16 %v476, %v474
      %v515 = vpack.c.b16 %v479, %v477
      %v516 = vpack.c.b16 %v480, %v478
      %v517 = vpack.c.b16 %v483, %v481
      %v518 = vpack.c.b16 %v484, %v482
      %v519 = vpack.c.b16 %v487, %v485
      %v520 = vpack.c.b16 %v488, %v486
      %v562 = vunpack.c.l.b16 %v368
      %v563 = vunpack.c.l.b16 %v369
      %v564 = vunpack.c.l.b16 %v370
      %v565 = vunpack.c.l.b16 %v371
      %v566 = vunpack.c.l.b16 %v372
      %v567 = vunpack.c.l.b16 %v373
      %v568 = vunpack.c.l.b16 %v374
      %v569 = vunpack.c.l.b16 %v375
      %v570 = vunpack.c.l.b16 %v376
      %v571 = vunpack.c.l.b16 %v377
      %v572 = vunpack.c.l.b16 %v378
      %v573 = vunpack.c.l.b16 %v379
      %v574 = vunpack.c.l.b16 %v380
      %v575 = vunpack.c.l.b16 %v381
      %v576 = vunpack.c.l.b16 %v382
      %v577 = vunpack.c.l.b16 %v383
      %v578 = vunpack.c.l.b16 %v384
      %v579 = vunpack.c.l.b16 %v385
      %v580 = vunpack.c.l.b16 %v386
      %v581 = vunpack.c.l.b16 %v387
      %v582 = vunpack.c.l.b16 %v388
      %v583 = vunpack.c.l.b16 %v389
      %v584 = vunpack.c.l.b16 %v390
      %v585 = vunpack.c.l.b16 %v391
      %v586 = vunpack.c.l.b16 %v392
      %v587 = vpack.c.b16 %v563, %v562
      %v588 = vpack.c.b16 %v565, %v564
      %v589 = vpack.c.b16 %v567, %v566
      %v590 = vpack.c.b16 %v569, %v568
      %v591 = vpack.c.b16 %v571, %v570
      %v592 = vpack.c.b16 %v573, %v572
      %v593 = vpack.c.b16 %v575, %v574
      %v594 = vpack.c.b16 %v577, %v576
      %v595 = vpack.c.b16 %v579, %v578
      %v596 = vpack.c.b16 %v581, %v580
      %v597 = vpack.c.b16 %v583, %v582
      %v598 = vpack.c.b16 %v585, %v584
      %v599 = vpack.c.b16 %v586, %v586
      %vm612 = vcmask 556032
      %v614 = vsel %vm612, %v490, 0
      %v617 = vsel %vm612, %v492, 0
      %v620 = vsel %vm612, %v494, 0
      %v623 = vsel %vm612, %v496, 0
      %v626 = vsel %vm612, %v498, 0
      %v629 = vsel %vm612, %v500, 0
      %v632 = vsel %vm612, %v502, 0
      %v635 = vsel %vm612, %v504, 0
      %v638 = vsel %vm612, %v506, 0
      %v641 = vsel %vm612, %v508, 0
      %v644 = vsel %vm612, %v510, 0
      %v647 = vsel %vm612, %v512, 0
      %v650 = vsel %vm612, %v514, 0
      %v653 = vsel %vm612, %v516, 0
      %v656 = vsel %vm612, %v518, 0
      %v659 = vsel %vm612, %v520, 0
      %vm661 = vcmask 1041408
      %v663 = vsel %vm661, %v599, 0
      %665 = vmatprep.subr.bf16.mxu0 0
      %666 = vmatpush1.bf16.msra.mxu0 %v594
      %667 = vmatprep.subr.bf16.mxu0 0
      %668 = vmatpush1.bf16.msra.mxu0 %v593
      %669 = vmatprep.subr.bf16.mxu0 0
      %670 = vmatpush1.bf16.msra.mxu0 %v592
      %671 = vmatprep.subr.bf16.mxu0 0
      %672 = vmatpush1.bf16.msra.mxu0 %v591
      %673 = vmatprep.subr.bf16.mxu0 0
      %674 = vmatpush1.bf16.msra.mxu0 %v590
      %675 = vmatprep.subr.bf16.mxu0 0
      %676 = vmatpush1.bf16.msra.mxu0 %v589
      %677 = vmatprep.subr.bf16.mxu0 0
      %678 = vmatpush1.bf16.msra.mxu0 %v588
      %679 = vmatprep.subr.bf16.mxu0 0
      %680 = vmatpush1.bf16.msra.mxu0 %v587
      %681 = vmatprep.subr.bf16.mxu0 0
      %682 = vmatpush2.bf16.msra.mxu0 0
      %683 = vmatprep.subr.bf16.mxu0 0
      %684 = vmatpush2.bf16.msra.mxu0 0
      %685 = vmatprep.subr.bf16.mxu0 0
      %686 = vmatpush2.bf16.msra.mxu0 0
      %687 = vmatprep.subr.bf16.mxu0 0
      %688 = vmatpush2.bf16.msra.mxu0 %v663
      %689 = vmatprep.subr.bf16.mxu0 0
      %690 = vmatpush2.bf16.msra.mxu0 %v598
      %691 = vmatprep.subr.bf16.mxu0 0
      %692 = vmatpush2.bf16.msra.mxu0 %v597
      %693 = vmatprep.subr.bf16.mxu0 0
      %694 = vmatpush2.bf16.msra.mxu0 %v596
      %695 = vmatprep.subr.bf16.mxu0 0
      %696 = vmatpush2.bf16.msra.mxu0 %v595
      %697 = vmatprep.mubr.bf16.mxu0 %v614
      %698 = vmatmul.mubr.bf16.gmra.mxu0 %v489
      %v699 = vpop.f32.mrf.mxu0
      %v700 = vadd.f32 0.0, %v699
      %v701 = vpop.f32.mrf.mxu0
      %v702 = vpop.f32.mrf.mxu0
      %v703 = vadd.f32 0.0, %v702
      %v704 = vpop.f32.mrf.mxu0
      %705 = vmatprep.mubr.bf16.mxu0 %v617
      %706 = vmatmul.mubr.bf16.gmra.mxu0 %v491
      %v707 = vpop.f32.mrf.mxu0
      %v708 = vadd.f32 0.0, %v707
      %v709 = vpop.f32.mrf.mxu0
      %v710 = vpop.f32.mrf.mxu0
      %v711 = vadd.f32 0.0, %v710
      %v712 = vpop.f32.mrf.mxu0
      %713 = vmatprep.mubr.bf16.mxu0 %v620
      %714 = vmatmul.mubr.bf16.gmra.mxu0 %v493
      %v715 = vpop.f32.mrf.mxu0
      %v716 = vadd.f32 0.0, %v715
      %v717 = vpop.f32.mrf.mxu0
      %v718 = vpop.f32.mrf.mxu0
      %v719 = vadd.f32 0.0, %v718
      %v720 = vpop.f32.mrf.mxu0
      %721 = vmatprep.mubr.bf16.mxu0 %v623
      %722 = vmatmul.mubr.bf16.gmra.mxu0 %v495
      %v723 = vpop.f32.mrf.mxu0
      %v724 = vadd.f32 0.0, %v723
      %v725 = vpop.f32.mrf.mxu0
      %v726 = vpop.f32.mrf.mxu0
      %v727 = vadd.f32 0.0, %v726
      %v728 = vpop.f32.mrf.mxu0
      %729 = vmatprep.mubr.bf16.mxu0 %v626
      %730 = vmatmul.mubr.bf16.gmra.mxu0 %v497
      %v731 = vpop.f32.mrf.mxu0
      %v732 = vadd.f32 0.0, %v731
      %v733 = vpop.f32.mrf.mxu0
      %v734 = vpop.f32.mrf.mxu0
      %v735 = vadd.f32 0.0, %v734
      %v736 = vpop.f32.mrf.mxu0
      %737 = vmatprep.mubr.bf16.mxu0 %v629
      %738 = vmatmul.mubr.bf16.gmra.mxu0 %v499
      %v739 = vpop.f32.mrf.mxu0
      %v740 = vadd.f32 0.0, %v739
      %v741 = vpop.f32.mrf.mxu0
      %v742 = vpop.f32.mrf.mxu0
      %v743 = vadd.f32 0.0, %v742
      %v744 = vpop.f32.mrf.mxu0
      %745 = vmatprep.mubr.bf16.mxu0 %v632
      %746 = vmatmul.mubr.bf16.gmra.mxu0 %v501
      %v747 = vpop.f32.mrf.mxu0
      %v748 = vadd.f32 0.0, %v747
      %v749 = vpop.f32.mrf.mxu0
      %v750 = vpop.f32.mrf.mxu0
      %v751 = vadd.f32 0.0, %v750
      %v752 = vpop.f32.mrf.mxu0
      %753 = vmatprep.mubr.bf16.mxu0 %v635
      %754 = vmatmul.mubr.bf16.gmra.mxu0 %v503
      %v755 = vpop.f32.mrf.mxu0
      %v756 = vadd.f32 0.0, %v755
      %v757 = vpop.f32.mrf.mxu0
      %v758 = vpop.f32.mrf.mxu0
      %v759 = vadd.f32 0.0, %v758
      %v760 = vpop.f32.mrf.mxu0
      %761 = vmatprep.mubr.bf16.mxu0 %v638
      %762 = vmatmul.mubr.bf16.gmra.mxu0 %v505
      %v763 = vpop.f32.mrf.mxu0
      %v764 = vadd.f32 0.0, %v763
      %v765 = vpop.f32.mrf.mxu0
      %v766 = vpop.f32.mrf.mxu0
      %v767 = vadd.f32 0.0, %v766
      %v768 = vpop.f32.mrf.mxu0
      %769 = vmatprep.mubr.bf16.mxu0 %v641
      %770 = vmatmul.mubr.bf16.gmra.mxu0 %v507
      %v771 = vpop.f32.mrf.mxu0
      %v772 = vadd.f32 0.0, %v771
      %v773 = vpop.f32.mrf.mxu0
      %v774 = vpop.f32.mrf.mxu0
      %v775 = vadd.f32 0.0, %v774
      %v776 = vpop.f32.mrf.mxu0
      %777 = vmatprep.mubr.bf16.mxu0 %v644
      %778 = vmatmul.mubr.bf16.gmra.mxu0 %v509
      %v779 = vpop.f32.mrf.mxu0
      %v780 = vadd.f32 0.0, %v779
      %v781 = vpop.f32.mrf.mxu0
      %v782 = vpop.f32.mrf.mxu0
      %v783 = vadd.f32 0.0, %v782
      %v784 = vpop.f32.mrf.mxu0
      %785 = vmatprep.mubr.bf16.mxu0 %v647
      %786 = vmatmul.mubr.bf16.gmra.mxu0 %v511
      %v787 = vpop.f32.mrf.mxu0
      %v788 = vadd.f32 0.0, %v787
      %v789 = vpop.f32.mrf.mxu0
      %v790 = vpop.f32.mrf.mxu0
      %v791 = vadd.f32 0.0, %v790
      %v792 = vpop.f32.mrf.mxu0
      %793 = vmatprep.mubr.bf16.mxu0 %v650
      %794 = vmatmul.mubr.bf16.gmra.mxu0 %v513
      %v795 = vpop.f32.mrf.mxu0
      %v796 = vadd.f32 0.0, %v795
      %v797 = vpop.f32.mrf.mxu0
      %v798 = vpop.f32.mrf.mxu0
      %v799 = vadd.f32 0.0, %v798
      %v800 = vpop.f32.mrf.mxu0
      %801 = vmatprep.mubr.bf16.mxu0 %v653
      %802 = vmatmul.mubr.bf16.gmra.mxu0 %v515
      %v803 = vpop.f32.mrf.mxu0
      %v804 = vadd.f32 0.0, %v803
      %v805 = vpop.f32.mrf.mxu0
      %v806 = vpop.f32.mrf.mxu0
      %v807 = vadd.f32 0.0, %v806
      %v808 = vpop.f32.mrf.mxu0
      %809 = vmatprep.mubr.bf16.mxu0 %v656
      %810 = vmatmul.mubr.bf16.gmra.mxu0 %v517
      %v811 = vpop.f32.mrf.mxu0
      %v812 = vadd.f32 0.0, %v811
      %v813 = vpop.f32.mrf.mxu0
      %v814 = vpop.f32.mrf.mxu0
      %v815 = vadd.f32 0.0, %v814
      %v816 = vpop.f32.mrf.mxu0
      %817 = vmatprep.mubr.bf16.mxu0 %v659
      %818 = vmatmul.mubr.bf16.gmra.mxu0 %v519
      %v819 = vpop.f32.mrf.mxu0
      %v820 = vadd.f32 0.0, %v819
      %v821 = vpop.f32.mrf.mxu0
      %v822 = vpop.f32.mrf.mxu0
      %v823 = vadd.f32 0.0, %v822
      %v824 = vpop.f32.mrf.mxu0
      %825 = vdwg.mxu0
      %v826 = vadd.f32 %v304, %v700
      %v827 = vadd.f32 %v305, %v703
      %v828 = vadd.f32 %v306, %v708
      %v829 = vadd.f32 %v307, %v711
      %v830 = vadd.f32 %v308, %v716
      %v831 = vadd.f32 %v309, %v719
      %v832 = vadd.f32 %v310, %v724
      %v833 = vadd.f32 %v311, %v727
      %v834 = vadd.f32 %v312, %v732
      %v835 = vadd.f32 %v313, %v735
      %v836 = vadd.f32 %v314, %v740
      %v837 = vadd.f32 %v315, %v743
      %v838 = vadd.f32 %v316, %v748
      %v839 = vadd.f32 %v317, %v751
      %v840 = vadd.f32 %v318, %v756
      %v841 = vadd.f32 %v319, %v759
      %v842 = vadd.f32 %v320, %v764
      %v843 = vadd.f32 %v321, %v767
      %v844 = vadd.f32 %v322, %v772
      %v845 = vadd.f32 %v323, %v775
      %v846 = vadd.f32 %v324, %v780
      %v847 = vadd.f32 %v325, %v783
      %v848 = vadd.f32 %v326, %v788
      %v849 = vadd.f32 %v327, %v791
      %v850 = vadd.f32 %v328, %v796
      %v851 = vadd.f32 %v329, %v799
      %v852 = vadd.f32 %v330, %v804
      %v853 = vadd.f32 %v331, %v807
      %v854 = vadd.f32 %v332, %v812
      %v855 = vadd.f32 %v333, %v815
      %v856 = vadd.f32 %v334, %v820
      %v857 = vadd.f32 %v335, %v823
      %858 = vst [vmem:[#allocation2] sm:$0xff] %v826
      %859 = vst [vmem:[#allocation2 + $0x8] sm:$0xff] %v827
      %860 = vst [vmem:[#allocation2 + $0x10] sm:$0xff] %v828
      %861 = vst [vmem:[#allocation2 + $0x18] sm:$0xff] %v829
      %862 = vst [vmem:[#allocation2 + $0x20] sm:$0xff] %v830
      %863 = vst [vmem:[#allocation2 + $0x28] sm:$0xff] %v831
      %864 = vst [vmem:[#allocation2 + $0x30] sm:$0xff] %v832
      %865 = vst [vmem:[#allocation2 + $0x38] sm:$0xff] %v833
      %866 = vst [vmem:[#allocation2 + $0x40] sm:$0xff] %v834
      %867 = vst [vmem:[#allocation2 + $0x48] sm:$0xff] %v835
      %868 = vst [vmem:[#allocation2 + $0x50] sm:$0xff] %v836
      %869 = vst [vmem:[#allocation2 + $0x58] sm:$0xff] %v837
      %870 = vst [vmem:[#allocation2 + $0x60] sm:$0xff] %v838
      %871 = vst [vmem:[#allocation2 + $0x68] sm:$0xff] %v839
      %872 = vst [vmem:[#allocation2 + $0x70] sm:$0xff] %v840
      %873 = vst [vmem:[#allocation2 + $0x78] sm:$0xff] %v841
      %874 = vst [vmem:[#allocation2 + $0x80] sm:$0xff] %v842
      %875 = vst [vmem:[#allocation2 + $0x88] sm:$0xff] %v843
      %876 = vst [vmem:[#allocation2 + $0x90] sm:$0xff] %v844
      %877 = vst [vmem:[#allocation2 + $0x98] sm:$0xff] %v845
      %878 = vst [vmem:[#allocation2 + $0xa0] sm:$0xff] %v846
      %879 = vst [vmem:[#allocation2 + $0xa8] sm:$0xff] %v847
      %880 = vst [vmem:[#allocation2 + $0xb0] sm:$0xff] %v848
      %881 = vst [vmem:[#allocation2 + $0xb8] sm:$0xff] %v849
      %882 = vst [vmem:[#allocation2 + $0xc0] sm:$0xff] %v850
      %883 = vst [vmem:[#allocation2 + $0xc8] sm:$0xff] %v851
      %884 = vst [vmem:[#allocation2 + $0xd0] sm:$0xff] %v852
      %885 = vst [vmem:[#allocation2 + $0xd8] sm:$0xff] %v853
      %886 = vst [vmem:[#allocation2 + $0xe0] sm:$0xff] %v854
      %887 = vst [vmem:[#allocation2 + $0xe8] sm:$0xff] %v855
      %888 = vst [vmem:[#allocation2 + $0xf0] sm:$0xff] %v856
      %889 = vst [vmem:[#allocation2 + $0xf8] sm:$0xff] %v857
      // Predicated region
      $region37: #{generator_forward.28} parent=31 // pred_check
        %p890 = pneg %p268
      $region38: #{generator_forward.28} parent=31 // pred_check_branch
        %892 = sbr.rel (%p890) target = $region40
      $region39: #{generator_forward.28} parent=31 // pred_region
        %v893 = vld [vmem:[#allocation2] sm:$0xff]
        %v894 = vld [vmem:[#allocation2 + $0x8] sm:$0xff]
        %v895 = vld [vmem:[#allocation2 + $0x10] sm:$0xff]
        %v896 = vld [vmem:[#allocation2 + $0x18] sm:$0xff]
        %v897 = vld [vmem:[#allocation2 + $0x20] sm:$0xff]
        %v898 = vld [vmem:[#allocation2 + $0x28] sm:$0xff]
        %v899 = vld [vmem:[#allocation2 + $0x30] sm:$0xff]
        %v900 = vld [vmem:[#allocation2 + $0x38] sm:$0xff]
        %v901 = vld [vmem:[#allocation2 + $0x40] sm:$0xff]
        %v902 = vld [vmem:[#allocation2 + $0x48] sm:$0xff]
        %v903 = vld [vmem:[#allocation2 + $0x50] sm:$0xff]
        %v904 = vld [vmem:[#allocation2 + $0x58] sm:$0xff]
        %v905 = vld [vmem:[#allocation2 + $0x60] sm:$0xff]
        %v906 = vld [vmem:[#allocation2 + $0x68] sm:$0xff]
        %v907 = vld [vmem:[#allocation2 + $0x70] sm:$0xff]
        %v908 = vld [vmem:[#allocation2 + $0x78] sm:$0xff]
        %v909 = vld [vmem:[#allocation2 + $0x80] sm:$0xff]
        %v910 = vld [vmem:[#allocation2 + $0x88] sm:$0xff]
        %v911 = vld [vmem:[#allocation2 + $0x90] sm:$0xff]
        %v912 = vld [vmem:[#allocation2 + $0x98] sm:$0xff]
        %v913 = vld [vmem:[#allocation2 + $0xa0] sm:$0xff]
        %v914 = vld [vmem:[#allocation2 + $0xa8] sm:$0xff]
        %v915 = vld [vmem:[#allocation2 + $0xb0] sm:$0xff]
        %v916 = vld [vmem:[#allocation2 + $0xb8] sm:$0xff]
        %v917 = vld [vmem:[#allocation2 + $0xc0] sm:$0xff]
        %v918 = vld [vmem:[#allocation2 + $0xc8] sm:$0xff]
        %v919 = vld [vmem:[#allocation2 + $0xd0] sm:$0xff]
        %v920 = vld [vmem:[#allocation2 + $0xd8] sm:$0xff]
        %v921 = vld [vmem:[#allocation2 + $0xe0] sm:$0xff]
        %v922 = vld [vmem:[#allocation2 + $0xe8] sm:$0xff]
        %v923 = vld [vmem:[#allocation2 + $0xf0] sm:$0xff]
        %v924 = vld [vmem:[#allocation2 + $0xf8] sm:$0xff]
        %v925 = vld [vmem:[%s257] sm:$0x1]
        %v927 = vlaneseq
        %v928 = vshrl.u32 %v927, 7
        %v929 = vsub.s32 0, %v928
        %v930 = vrot.slane %v925, %v929
        %v932 = vadd.f32 %v893, %v930
        %v933 = vadd.f32 %v894, %v930
        %v934 = vadd.f32 %v895, %v930
        %v935 = vadd.f32 %v896, %v930
        %v936 = vadd.f32 %v897, %v930
        %v937 = vadd.f32 %v898, %v930
        %v938 = vadd.f32 %v899, %v930
        %v939 = vadd.f32 %v900, %v930
        %v940 = vadd.f32 %v901, %v930
        %v941 = vadd.f32 %v902, %v930
        %v942 = vadd.f32 %v903, %v930
        %v943 = vadd.f32 %v904, %v930
        %v944 = vadd.f32 %v905, %v930
        %v945 = vadd.f32 %v906, %v930
        %v946 = vadd.f32 %v907, %v930
        %v947 = vadd.f32 %v908, %v930
        %v948 = vadd.f32 %v909, %v930
        %v949 = vadd.f32 %v910, %v930
        %v950 = vadd.f32 %v911, %v930
        %v951 = vadd.f32 %v912, %v930
        %v952 = vadd.f32 %v913, %v930
        %v953 = vadd.f32 %v914, %v930
        %v954 = vadd.f32 %v915, %v930
        %v955 = vadd.f32 %v916, %v930
        %v956 = vadd.f32 %v917, %v930
        %v957 = vadd.f32 %v918, %v930
        %v958 = vadd.f32 %v919, %v930
        %v959 = vadd.f32 %v920, %v930
        %v960 = vadd.f32 %v921, %v930
        %v961 = vadd.f32 %v922, %v930
        %v962 = vadd.f32 %v923, %v930
        %v963 = vadd.f32 %v924, %v930
        %v964 = vpack.c.bf16 %v933, %v932
        %v965 = vpack.c.bf16 %v935, %v934
        %v966 = vpack.c.bf16 %v937, %v936
        %v967 = vpack.c.bf16 %v939, %v938
        %v968 = vpack.c.bf16 %v941, %v940
        %v969 = vpack.c.bf16 %v943, %v942
        %v970 = vpack.c.bf16 %v945, %v944
        %v971 = vpack.c.bf16 %v947, %v946
        %v972 = vpack.c.bf16 %v949, %v948
        %v973 = vpack.c.bf16 %v951, %v950
        %v974 = vpack.c.bf16 %v953, %v952
        %v975 = vpack.c.bf16 %v955, %v954
        %v976 = vpack.c.bf16 %v957, %v956
        %v977 = vpack.c.bf16 %v959, %v958
        %v978 = vpack.c.bf16 %v961, %v960
        %v979 = vpack.c.bf16 %v963, %v962
        %v996 = vunpack.c.l.b16 %v964
        %v997 = vunpack.c.h.b16 %v964
        %v998 = vunpack.c.l.b16 %v965
        %v999 = vunpack.c.h.b16 %v965
        %v1000 = vunpack.c.l.b16 %v966
        %v1001 = vunpack.c.h.b16 %v966
        %v1002 = vunpack.c.l.b16 %v967
        %v1003 = vunpack.c.h.b16 %v967
        %v1004 = vunpack.c.l.b16 %v968
        %v1005 = vunpack.c.h.b16 %v968
        %v1006 = vunpack.c.l.b16 %v969
        %v1007 = vunpack.c.h.b16 %v969
        %v1008 = vunpack.c.l.b16 %v970
        %v1009 = vunpack.c.h.b16 %v970
        %v1010 = vunpack.c.l.b16 %v971
        %v1011 = vunpack.c.h.b16 %v971
        %v1012 = vunpack.c.l.b16 %v972
        %v1013 = vunpack.c.h.b16 %v972
        %v1014 = vunpack.c.l.b16 %v973
        %v1015 = vunpack.c.h.b16 %v973
        %v1016 = vunpack.c.l.b16 %v974
        %v1017 = vunpack.c.h.b16 %v974
        %v1018 = vunpack.c.l.b16 %v975
        %v1019 = vunpack.c.h.b16 %v975
        %v1020 = vunpack.c.l.b16 %v976
        %v1021 = vunpack.c.h.b16 %v976
        %v1022 = vunpack.c.l.b16 %v977
        %v1023 = vunpack.c.h.b16 %v977
        %v1024 = vunpack.c.l.b16 %v978
        %v1025 = vunpack.c.h.b16 %v978
        %v1026 = vunpack.c.l.b16 %v979
        %v1027 = vunpack.c.h.b16 %v979
        %v1028 = vpack.c.b16 %v996, %v996
        %v1029 = vpack.c.b16 %v997, %v997
        %v1030 = vpack.c.b16 %v998, %v998
        %v1031 = vpack.c.b16 %v999, %v999
        %v1032 = vpack.c.b16 %v1000, %v1000
        %v1033 = vpack.c.b16 %v1001, %v1001
        %v1034 = vpack.c.b16 %v1002, %v1002
        %v1035 = vpack.c.b16 %v1003, %v1003
        %v1036 = vpack.c.b16 %v1004, %v1004
        %v1037 = vpack.c.b16 %v1005, %v1005
        %v1038 = vpack.c.b16 %v1006, %v1006
        %v1039 = vpack.c.b16 %v1007, %v1007
        %v1040 = vpack.c.b16 %v1008, %v1008
        %v1041 = vpack.c.b16 %v1009, %v1009
        %v1042 = vpack.c.b16 %v1010, %v1010
        %v1043 = vpack.c.b16 %v1011, %v1011
        %v1044 = vpack.c.b16 %v1012, %v1012
        %v1045 = vpack.c.b16 %v1013, %v1013
        %v1046 = vpack.c.b16 %v1014, %v1014
        %v1047 = vpack.c.b16 %v1015, %v1015
        %v1048 = vpack.c.b16 %v1016, %v1016
        %v1049 = vpack.c.b16 %v1017, %v1017
        %v1050 = vpack.c.b16 %v1018, %v1018
        %v1051 = vpack.c.b16 %v1019, %v1019
        %v1052 = vpack.c.b16 %v1020, %v1020
        %v1053 = vpack.c.b16 %v1021, %v1021
        %v1054 = vpack.c.b16 %v1022, %v1022
        %v1055 = vpack.c.b16 %v1023, %v1023
        %v1056 = vpack.c.b16 %v1024, %v1024
        %v1057 = vpack.c.b16 %v1025, %v1025
        %v1058 = vpack.c.b16 %v1026, %v1026
        %v1059 = vpack.c.b16 %v1027, %v1027
        %1092 = vst [vmem:[%s265] sm:$0xf] %v1028
        %1093 = vst [vmem:[%s265 + $0x4] sm:$0xf] %v1029
        %1094 = vst [vmem:[%s265 + $0x8] sm:$0xf] %v1030
        %1095 = vst [vmem:[%s265 + $0xc] sm:$0xf] %v1031
        %1096 = vst [vmem:[%s265 + $0x10] sm:$0xf] %v1032
        %1097 = vst [vmem:[%s265 + $0x14] sm:$0xf] %v1033
        %1098 = vst [vmem:[%s265 + $0x18] sm:$0xf] %v1034
        %1099 = vst [vmem:[%s265 + $0x1c] sm:$0xf] %v1035
        %1100 = vst [vmem:[%s265 + $0x20] sm:$0xf] %v1036
        %1101 = vst [vmem:[%s265 + $0x24] sm:$0xf] %v1037
        %1102 = vst [vmem:[%s265 + $0x28] sm:$0xf] %v1038
        %1103 = vst [vmem:[%s265 + $0x2c] sm:$0xf] %v1039
        %1104 = vst [vmem:[%s265 + $0x30] sm:$0xf] %v1040
        %1105 = vst [vmem:[%s265 + $0x34] sm:$0xf] %v1041
        %1106 = vst [vmem:[%s265 + $0x38] sm:$0xf] %v1042
        %1107 = vst [vmem:[%s265 + $0x3c] sm:$0xf] %v1043
        %1108 = vst [vmem:[%s265 + $0x40] sm:$0xf] %v1044
        %1109 = vst [vmem:[%s265 + $0x44] sm:$0xf] %v1045
        %1110 = vst [vmem:[%s265 + $0x48] sm:$0xf] %v1046
        %1111 = vst [vmem:[%s265 + $0x4c] sm:$0xf] %v1047
        %1112 = vst [vmem:[%s265 + $0x50] sm:$0xf] %v1048
        %1113 = vst [vmem:[%s265 + $0x54] sm:$0xf] %v1049
        %1114 = vst [vmem:[%s265 + $0x58] sm:$0xf] %v1050
        %1115 = vst [vmem:[%s265 + $0x5c] sm:$0xf] %v1051
        %1116 = vst [vmem:[%s265 + $0x60] sm:$0xf] %v1052
        %1117 = vst [vmem:[%s265 + $0x64] sm:$0xf] %v1053
        %1118 = vst [vmem:[%s265 + $0x68] sm:$0xf] %v1054
        %1119 = vst [vmem:[%s265 + $0x6c] sm:$0xf] %v1055
        %1120 = vst [vmem:[%s265 + $0x70] sm:$0xf] %v1056
        %1121 = vst [vmem:[%s265 + $0x74] sm:$0xf] %v1057
        %1122 = vst [vmem:[%s265 + $0x78] sm:$0xf] %v1058
        %1123 = vst [vmem:[%s265 + $0x7c] sm:$0xf] %v1059
      $region40: #{generator_forward.28} parent=31 // pred_fallthru
        _
      %s1124 = smul.u32 32, %s19
      %p1125 = scmp.lt.s32.totalorder %s1124, 63
      %s1126 = scalar_select %p1125, %s1124, 63
      %p1127 = scmp.lt.s32.totalorder %s20, 0
      %s1128 = scalar_select %p1127, %s20, 0
      %s1129 = sadd.s32 %s1128, %s1126
      %s1130 = smul.addr %s1129, 4
      %s1131 = scalar_lea.vmem %s3, %s1130
      // Predicated region
      $region41: #{generator_forward.28} parent=31 // pred_check
        %p1132 = pneg %p135
      $region42: #{generator_forward.28} parent=31 // pred_check_branch
        %1134 = sbr.rel (%p1132) target = $region44
      $region43: #{generator_forward.28} parent=31 // pred_region
        %s1135 = smul.u32 32, %s19
      $region44: #{generator_forward.28} parent=31 // pred_fallthru
        _
    $region32: #{generator_forward.28} parent=5 // pred_fallthru
      _
    %p1136 = scmp.le.s32.totalorder 2, %s9
    // Predicated region
    $region45: #{generator_forward.28} parent=5 // pred_check
      %p1137 = pneg %p1136
    $region46: #{generator_forward.28} parent=5 // pred_check_branch
      %1139 = sbr.rel (%p1137) target = $region48
    $region47: #{generator_forward.28} parent=5 // pred_region
      %s1140 = ssub.s32 %s9, 2
      // Predicated region
      $region49: #{generator_forward.28} parent=47 // pred_check
        %p1141 = pneg %p141
      $region50: #{generator_forward.28} parent=47 // pred_check_branch
        %1143 = sbr.rel (%p1141) target = $region52
      $region51: #{generator_forward.28} parent=47 // pred_region
        %s1144 = smul.u32 32, %s22
        %p1145 = scmp.lt.s32.totalorder %s1144, 63
        %s1146 = scalar_select %p1145, %s1144, 63
        %p1147 = scmp.lt.s32.totalorder %s23, 0
        %s1148 = scalar_select %p1147, %s23, 0
        %s1149 = sadd.s32 %s1148, %s1146
        %s1150 = smul.addr %s1149, 4
        %s1151 = scalar_lea.vmem %s3, %s1150
      $region52: #{generator_forward.28} parent=47 // pred_fallthru
        _
    $region48: #{generator_forward.28} parent=5 // pred_fallthru
      _
  $region6: #{generator_forward.28} parent=0 // loop_footer
    %s13 = sadd.s32 1, %s9
  $region7: #{generator_forward.28} parent=0 // loop_footer_branch
    %8 = sbr.rel target = $region3
  $region8: #{generator_forward.28} parent=0 // loop_exit
    _

// kernel: generator_forward.30
$region0: #{generator_forward.30}
  #allocation0 [shape = 'u32[]', space=smem, size = 0x4, offset = 0x4, fixed_abs, tag = 'smem constant byte address 0x4 - core index']
  #allocation1 [shape = 'u32[144,128]{1,0:T(1,128)}', space=vmem, size = 0x12000, scoped, tag = 'internal scratch']
  %s0 = inlined_call_operand.vmem [shape: bf16[2,256,128], index: 0, kind: input, shape index: {}]
  %s1 = inlined_call_operand.vmem [shape: f32[2,1,128], index: 1, kind: input, shape index: {}]
  %s2 = inlined_call_operand.vmem [shape: f32[2,1,128], index: 2, kind: input, shape index: {}]
  %s3 = inlined_call_operand.vmem [shape: bf16[2,256,128], index: 3, kind: output, shape index: {}]
  %s4 = sld [smem:[#allocation0]]
  $region45: #{generator_forward.30} parent=0
    _
  %s6 = ssub.s32 1, %s4
  %s7 = scalar_select 0, %s6, %s4
  loop: start=0, step=1, limit=4
  $region2: #{generator_forward.30} parent=0 // loop_pre_header
    _
  $region3: #{generator_forward.30} parent=0 // loop_header
    %s9 = sphi 0, %s13
    %p10 = scmp.ge.s32.totalorder %s9, 4
    %s16 = sphi 0, %s28
    %s17 = sphi 0, %s24
    %s18 = sphi 0, %s16
    %s19 = sphi 0, %s17
    %s20 = sphi 0, %s18
    %s21 = sphi 0, %s19
    %s33 = sphi 0, %s35
    %s36 = sphi 0, %s33
    %s37 = sphi 0, %s36
    %s53 = sphi 0, %s37
    %s59 = sphi 0, %s61
    %s62 = sphi 0, %s59
    %s63 = sphi 0, %s62
    %s79 = sphi 0, %s63
    %s85 = sphi 0, %s87
    %s88 = sphi 0, %s85
    %s89 = sphi 0, %s88
    %s105 = sphi 0, %s89
    %s113 = sphi 0, %s115
    %s116 = sphi 0, %s113
    %s117 = sphi 0, %s116
    %s133 = sphi 0, %s117
  $region4: #{generator_forward.30} parent=0 // loop_header_branch
    %12 = sbr.rel (%p10) target = $region8
  $region5: #{generator_forward.30} parent=0 // loop_body
    %s14 = ssub.s32 %s9, 1
    %s15 = ssub.s32 %s9, 2
    %s22 = sadd.s32 1, %s17
    %p23 = scmp.ge.s32.totalorder %s22, 1
    %s24 = scalar_select %p23, 0, %s22
    %s25 = sadd.s32 1, %s16
    %s26 = scalar_select %p23, %s25, %s16
    %p27 = scmp.ge.s32.totalorder %s26, 2
    %s28 = scalar_select %p27, 0, %s26
    %s29 = ssub.s32 %s16, %s28
    %s30 = ssub.s32 %s17, %s24
    %s31 = sor.u32 %s29, %s30
    %p32 = scmp.eq.s32.totalorder %s31, 0
    %s34 = sadd.s32 %s33, 1
    %s35 = scalar_select %p32, %s33, %s34
    %p38 = pneg %p32
    %p39 = scmp.eq.s32.totalorder %s9, 1
    %p40 = por %p38, %p39
    %p41 = scmp.ne.s32.totalorder %s33, %s36
    %p42 = scmp.eq.s32.totalorder %s9, 0
    %p43 = por %p41, %p42
    %p44 = scmp.ne.s32.totalorder %s33, %s36
    %p45 = scmp.eq.s32.totalorder %s14, 1
    %p46 = por %p44, %p45
    %p47 = scmp.ne.s32.totalorder %s36, %s37
    %p48 = scmp.eq.s32.totalorder %s14, 0
    %p49 = por %p47, %p48
    %p50 = scmp.ne.s32.totalorder %s36, %s37
    %p51 = scmp.eq.s32.totalorder %s15, 1
    %p52 = por %p50, %p51
    %p54 = scmp.ne.s32.totalorder %s37, %s53
    %p55 = scmp.eq.s32.totalorder %s15, 0
    %p56 = por %p54, %p55
    %s57 = ssub.s32 %s16, %s28
    %p58 = scmp.eq.s32.totalorder %s57, 0
    %s60 = sadd.s32 %s59, 1
    %s61 = scalar_select %p58, %s59, %s60
    %p64 = pneg %p58
    %p65 = scmp.eq.s32.totalorder %s9, 1
    %p66 = por %p64, %p65
    %p67 = scmp.ne.s32.totalorder %s59, %s62
    %p68 = scmp.eq.s32.totalorder %s9, 0
    %p69 = por %p67, %p68
    %p70 = scmp.ne.s32.totalorder %s59, %s62
    %p71 = scmp.eq.s32.totalorder %s14, 1
    %p72 = por %p70, %p71
    %p73 = scmp.ne.s32.totalorder %s62, %s63
    %p74 = scmp.eq.s32.totalorder %s14, 0
    %p75 = por %p73, %p74
    %p76 = scmp.ne.s32.totalorder %s62, %s63
    %p77 = scmp.eq.s32.totalorder %s15, 1
    %p78 = por %p76, %p77
    %p80 = scmp.ne.s32.totalorder %s63, %s79
    %p81 = scmp.eq.s32.totalorder %s15, 0
    %p82 = por %p80, %p81
    %s83 = ssub.s32 %s16, %s28
    %p84 = scmp.eq.s32.totalorder %s83, 0
    %s86 = sadd.s32 %s85, 1
    %s87 = scalar_select %p84, %s85, %s86
    %p90 = pneg %p84
    %p91 = scmp.eq.s32.totalorder %s9, 1
    %p92 = por %p90, %p91
    %p93 = scmp.ne.s32.totalorder %s85, %s88
    %p94 = scmp.eq.s32.totalorder %s9, 0
    %p95 = por %p93, %p94
    %p96 = scmp.ne.s32.totalorder %s85, %s88
    %p97 = scmp.eq.s32.totalorder %s14, 1
    %p98 = por %p96, %p97
    %p99 = scmp.ne.s32.totalorder %s88, %s89
    %p100 = scmp.eq.s32.totalorder %s14, 0
    %p101 = por %p99, %p100
    %p102 = scmp.ne.s32.totalorder %s88, %s89
    %p103 = scmp.eq.s32.totalorder %s15, 1
    %p104 = por %p102, %p103
    %p106 = scmp.ne.s32.totalorder %s89, %s105
    %p107 = scmp.eq.s32.totalorder %s15, 0
    %p108 = por %p106, %p107
    %s109 = ssub.s32 %s16, %s28
    %s110 = ssub.s32 %s17, %s24
    %s111 = sor.u32 %s109, %s110
    %p112 = scmp.eq.s32.totalorder %s111, 0
    %s114 = sadd.s32 %s113, 1
    %s115 = scalar_select %p112, %s113, %s114
    %p118 = pneg %p112
    %p119 = scmp.eq.s32.totalorder %s9, 1
    %p120 = por %p118, %p119
    %p121 = scmp.ne.s32.totalorder %s113, %s116
    %p122 = scmp.eq.s32.totalorder %s9, 0
    %p123 = por %p121, %p122
    %p124 = scmp.ne.s32.totalorder %s113, %s116
    %p125 = scmp.eq.s32.totalorder %s14, 1
    %p126 = por %p124, %p125
    %p127 = scmp.ne.s32.totalorder %s116, %s117
    %p128 = scmp.eq.s32.totalorder %s14, 0
    %p129 = por %p127, %p128
    %p130 = scmp.ne.s32.totalorder %s116, %s117
    %p131 = scmp.eq.s32.totalorder %s15, 1
    %p132 = por %p130, %p131
    %p134 = scmp.ne.s32.totalorder %s117, %s133
    %p135 = scmp.eq.s32.totalorder %s15, 0
    %p136 = por %p134, %p135
    %p137 = scmp.le.s32.totalorder 1, %s9
    %p138 = scmp.lt.s32.totalorder %s9, 3
    %p139 = pnand %p137, %p138
    %p140 = pneg %p139
    // Predicated region
    $region9: #{generator_forward.30} parent=5 // pred_check
      _
    $region10: #{generator_forward.30} parent=5 // pred_check_branch
      %142 = sbr.rel (%p139) target = $region12
    $region11: #{generator_forward.30} parent=5 // pred_region
      %s143 = ssub.s32 %s9, 1
    $region12: #{generator_forward.30} parent=5 // pred_fallthru
      _
    %p144 = scmp.lt.s32.totalorder %s9, 2
    // Predicated region
    $region13: #{generator_forward.30} parent=5 // pred_check
      %p145 = pneg %p144
    $region14: #{generator_forward.30} parent=5 // pred_check_branch
      %147 = sbr.rel (%p145) target = $region16
    $region15: #{generator_forward.30} parent=5 // pred_region
      // Predicated region
      $region17: #{generator_forward.30} parent=15 // pred_check
        %p148 = pneg %p43
      $region18: #{generator_forward.30} parent=15 // pred_check_branch
        %150 = sbr.rel (%p148) target = $region20
      $region19: #{generator_forward.30} parent=15 // pred_region
        %s151 = smul.u32 32, %s17
        %p152 = scmp.lt.s32.totalorder %s16, 1
        %s153 = scalar_select %p152, %s16, 1
        %p154 = scmp.lt.s32.totalorder %s151, 31
        %s155 = scalar_select %p154, %s151, 31
        %s156 = smul.addr %s153, 32
        %s157 = sadd.s32 %s155, %s156
        %s158 = smul.addr %s157, 4
        %s159 = scalar_lea.vmem %s0, %s158
        %s160 = smul.u32 32, %s17
      $region20: #{generator_forward.30} parent=15 // pred_fallthru
        _
      // Predicated region
      $region21: #{generator_forward.30} parent=15 // pred_check
        %p161 = pneg %p69
      $region22: #{generator_forward.30} parent=15 // pred_check_branch
        %163 = sbr.rel (%p161) target = $region24
      $region23: #{generator_forward.30} parent=15 // pred_region
        %p164 = scmp.lt.s32.totalorder %s16, 1
        %s165 = scalar_select %p164, %s16, 1
        %s166 = scalar_lea.vmem %s1, %s165
      $region24: #{generator_forward.30} parent=15 // pred_fallthru
        _
      // Predicated region
      $region25: #{generator_forward.30} parent=15 // pred_check
        %p167 = pneg %p95
      $region26: #{generator_forward.30} parent=15 // pred_check_branch
        %169 = sbr.rel (%p167) target = $region28
      $region27: #{generator_forward.30} parent=15 // pred_region
        %p170 = scmp.lt.s32.totalorder %s16, 1
        %s171 = scalar_select %p170, %s16, 1
        %s172 = scalar_lea.vmem %s2, %s171
      $region28: #{generator_forward.30} parent=15 // pred_fallthru
        _
    $region16: #{generator_forward.30} parent=5 // pred_fallthru
      _
    %p173 = scmp.le.s32.totalorder 1, %s9
    %p174 = scmp.lt.s32.totalorder %s9, 3
    %p175 = pnand %p173, %p174
    %p176 = pneg %p175
    // Predicated region
    $region29: #{generator_forward.30} parent=5 // pred_check
      _
    $region30: #{generator_forward.30} parent=5 // pred_check_branch
      %178 = sbr.rel (%p175) target = $region32
    $region31: #{generator_forward.30} parent=5 // pred_region
      %s179 = ssub.s32 %s9, 1
      %s180 = smul.u32 32, %s19
      %p181 = scmp.lt.s32.totalorder %s18, 1
      %s182 = scalar_select %p181, %s18, 1
      %p183 = scmp.lt.s32.totalorder %s180, 31
      %s184 = scalar_select %p183, %s180, 31
      %s185 = smul.addr %s182, 32
      %s186 = sadd.s32 %s184, %s185
      %s187 = smul.addr %s186, 4
      %s188 = scalar_lea.vmem %s0, %s187
      %p189 = pneg %p49
      %p190 = pneg %p46
      %p191 = scmp.lt.s32.totalorder %s18, 1
      %s192 = scalar_select %p191, %s18, 1
      %s193 = scalar_lea.vmem %s1, %s192
      %p194 = pneg %p75
      %p195 = pneg %p72
      %p196 = scmp.lt.s32.totalorder %s18, 1
      %s197 = scalar_select %p196, %s18, 1
      %s198 = scalar_lea.vmem %s2, %s197
      %p199 = pneg %p101
      %p200 = pneg %p98
      %p201 = pneg %p129
      %p202 = pneg %p126
      %s203 = smul.u32 32, %s19
      %p204 = scmp.lt.s32.totalorder %s18, 1
      %s205 = scalar_select %p204, %s18, 1
      %p206 = scmp.lt.s32.totalorder %s203, 31
      %s207 = scalar_select %p206, %s203, 31
      %s208 = smul.addr %s205, 32
      %s209 = sadd.s32 %s207, %s208
      %s210 = smul.addr %s209, 4
      %s211 = scalar_lea.vmem %s3, %s210
      %s212 = smul.u32 32, %s19
      %p213 = scmp.lt.s32.totalorder %s18, 1
      %s214 = scalar_select %p213, %s18, 1
      %p215 = scmp.lt.s32.totalorder %s212, 31
      %s216 = scalar_select %p215, %s212, 31
      %s217 = smul.addr %s214, 32
      %s218 = sadd.s32 %s216, %s217
      %s219 = smul.addr %s218, 4
      %s220 = scalar_lea.vmem %s0, %s219
      %s221 = smul.u32 32, %s19
      %p222 = scmp.lt.s32.totalorder %s18, 1
      %s223 = scalar_select %p222, %s18, 1
      %s224 = scalar_lea.vmem %s1, %s223
      %p225 = scmp.lt.s32.totalorder %s18, 1
      %s226 = scalar_select %p225, %s18, 1
      %s227 = scalar_lea.vmem %s2, %s226
      %s228 = smul.u32 32, %s19
      %p229 = scmp.lt.s32.totalorder %s18, 1
      %s230 = scalar_select %p229, %s18, 1
      %p231 = scmp.lt.s32.totalorder %s228, 31
      %s232 = scalar_select %p231, %s228, 31
      %s233 = smul.addr %s230, 32
      %s234 = sadd.s32 %s232, %s233
      %s235 = smul.addr %s234, 4
      %s236 = scalar_lea.vmem %s3, %s235
      %s237 = smul.u32 32, %s19
      %v238 = vld [vmem:[%s220] sm:$0xf]
      %v239 = vld [vmem:[%s220 + $0x4] sm:$0xf]
      %v240 = vld [vmem:[%s220 + $0x8] sm:$0xf]
      %v241 = vld [vmem:[%s220 + $0xc] sm:$0xf]
      %v242 = vld [vmem:[%s220 + $0x10] sm:$0xf]
      %v243 = vld [vmem:[%s220 + $0x14] sm:$0xf]
      %v244 = vld [vmem:[%s220 + $0x18] sm:$0xf]
      %v245 = vld [vmem:[%s220 + $0x1c] sm:$0xf]
      %v246 = vld [vmem:[%s220 + $0x20] sm:$0xf]
      %v247 = vld [vmem:[%s220 + $0x24] sm:$0xf]
      %v248 = vld [vmem:[%s220 + $0x28] sm:$0xf]
      %v249 = vld [vmem:[%s220 + $0x2c] sm:$0xf]
      %v250 = vld [vmem:[%s220 + $0x30] sm:$0xf]
      %v251 = vld [vmem:[%s220 + $0x34] sm:$0xf]
      %v252 = vld [vmem:[%s220 + $0x38] sm:$0xf]
      %v253 = vld [vmem:[%s220 + $0x3c] sm:$0xf]
      %v254 = vld [vmem:[%s220 + $0x40] sm:$0xf]
      %v255 = vld [vmem:[%s220 + $0x44] sm:$0xf]
      %v256 = vld [vmem:[%s220 + $0x48] sm:$0xf]
      %v257 = vld [vmem:[%s220 + $0x4c] sm:$0xf]
      %v258 = vld [vmem:[%s220 + $0x50] sm:$0xf]
      %v259 = vld [vmem:[%s220 + $0x54] sm:$0xf]
      %v260 = vld [vmem:[%s220 + $0x58] sm:$0xf]
      %v261 = vld [vmem:[%s220 + $0x5c] sm:$0xf]
      %v262 = vld [vmem:[%s220 + $0x60] sm:$0xf]
      %v263 = vld [vmem:[%s220 + $0x64] sm:$0xf]
      %v264 = vld [vmem:[%s220 + $0x68] sm:$0xf]
      %v265 = vld [vmem:[%s220 + $0x6c] sm:$0xf]
      %v266 = vld [vmem:[%s220 + $0x70] sm:$0xf]
      %v267 = vld [vmem:[%s220 + $0x74] sm:$0xf]
      %v268 = vld [vmem:[%s220 + $0x78] sm:$0xf]
      %v269 = vld [vmem:[%s220 + $0x7c] sm:$0xf]
      %v270 = vunpack.c.l.bf16 %v238
      %v271 = vunpack.c.l.bf16 %v239
      %v272 = vunpack.c.l.bf16 %v240
      %v273 = vunpack.c.l.bf16 %v241
      %v274 = vunpack.c.l.bf16 %v242
      %v275 = vunpack.c.l.bf16 %v243
      %v276 = vunpack.c.l.bf16 %v244
      %v277 = vunpack.c.l.bf16 %v245
      %v278 = vunpack.c.l.bf16 %v246
      %v279 = vunpack.c.l.bf16 %v247
      %v280 = vunpack.c.l.bf16 %v248
      %v281 = vunpack.c.l.bf16 %v249
      %v282 = vunpack.c.l.bf16 %v250
      %v283 = vunpack.c.l.bf16 %v251
      %v284 = vunpack.c.l.bf16 %v252
      %v285 = vunpack.c.l.bf16 %v253
      %v286 = vunpack.c.l.bf16 %v254
      %v287 = vunpack.c.l.bf16 %v255
      %v288 = vunpack.c.l.bf16 %v256
      %v289 = vunpack.c.l.bf16 %v257
      %v290 = vunpack.c.l.bf16 %v258
      %v291 = vunpack.c.l.bf16 %v259
      %v292 = vunpack.c.l.bf16 %v260
      %v293 = vunpack.c.l.bf16 %v261
      %v294 = vunpack.c.l.bf16 %v262
      %v295 = vunpack.c.l.bf16 %v263
      %v296 = vunpack.c.l.bf16 %v264
      %v297 = vunpack.c.l.bf16 %v265
      %v298 = vunpack.c.l.bf16 %v266
      %v299 = vunpack.c.l.bf16 %v267
      %v300 = vunpack.c.l.bf16 %v268
      %v301 = vunpack.c.l.bf16 %v269
      %v302 = vld [vmem:[%s224] sm:$0x1]
      %v303 = vmul.f32 %v302, 0.00390625
      %v304 = vld [vmem:[%s227] sm:$0x1]
      %v305 = vmul.f32 %v304, 0.00390625
      %v306 = vmul.f32 %v303, %v303
      %v307 = vsub.f32 %v305, %v306
      %v308 = vmax.f32 %v307, 0.0
      %v310 = vlaneseq
      %v311 = vshrl.u32 %v310, 7
      %v312 = vsub.s32 0, %v311
      %v313 = vrot.slane %v303, %v312
      %v315 = vsub.f32 %v270, %v313
      %v316 = vsub.f32 %v271, %v313
      %v317 = vsub.f32 %v272, %v313
      %v318 = vsub.f32 %v273, %v313
      %v319 = vsub.f32 %v274, %v313
      %v320 = vsub.f32 %v275, %v313
      %v321 = vsub.f32 %v276, %v313
      %v322 = vsub.f32 %v277, %v313
      %v323 = vsub.f32 %v278, %v313
      %v324 = vsub.f32 %v279, %v313
      %v325 = vsub.f32 %v280, %v313
      %v326 = vsub.f32 %v281, %v313
      %v327 = vsub.f32 %v282, %v313
      %v328 = vsub.f32 %v283, %v313
      %v329 = vsub.f32 %v284, %v313
      %v330 = vsub.f32 %v285, %v313
      %v331 = vsub.f32 %v286, %v313
      %v332 = vsub.f32 %v287, %v313
      %v333 = vsub.f32 %v288, %v313
      %v334 = vsub.f32 %v289, %v313
      %v335 = vsub.f32 %v290, %v313
      %v336 = vsub.f32 %v291, %v313
      %v337 = vsub.f32 %v292, %v313
      %v338 = vsub.f32 %v293, %v313
      %v339 = vsub.f32 %v294, %v313
      %v340 = vsub.f32 %v295, %v313
      %v341 = vsub.f32 %v296, %v313
      %v342 = vsub.f32 %v297, %v313
      %v343 = vsub.f32 %v298, %v313
      %v344 = vsub.f32 %v299, %v313
      %v345 = vsub.f32 %v300, %v313
      %v346 = vsub.f32 %v301, %v313
      %v347 = vadd.f32 %v308, 1e-05
      %v348 = vrsqrt.pop %v347
      %v350 = vlaneseq
      %v351 = vshrl.u32 %v350, 7
      %v352 = vsub.s32 0, %v351
      %v353 = vrot.slane %v348, %v352
      %v355 = vmul.f32 %v315, %v353
      %v356 = vmul.f32 %v316, %v353
      %v357 = vmul.f32 %v317, %v353
      %v358 = vmul.f32 %v318, %v353
      %v359 = vmul.f32 %v319, %v353
      %v360 = vmul.f32 %v320, %v353
      %v361 = vmul.f32 %v321, %v353
      %v362 = vmul.f32 %v322, %v353
      %v363 = vmul.f32 %v323, %v353
      %v364 = vmul.f32 %v324, %v353
      %v365 = vmul.f32 %v325, %v353
      %v366 = vmul.f32 %v326, %v353
      %v367 = vmul.f32 %v327, %v353
      %v368 = vmul.f32 %v328, %v353
      %v369 = vmul.f32 %v329, %v353
      %v370 = vmul.f32 %v330, %v353
      %v371 = vmul.f32 %v331, %v353
      %v372 = vmul.f32 %v332, %v353
      %v373 = vmul.f32 %v333, %v353
      %v374 = vmul.f32 %v334, %v353
      %v375 = vmul.f32 %v335, %v353
      %v376 = vmul.f32 %v336, %v353
      %v377 = vmul.f32 %v337, %v353
      %v378 = vmul.f32 %v338, %v353
      %v379 = vmul.f32 %v339, %v353
      %v380 = vmul.f32 %v340, %v353
      %v381 = vmul.f32 %v341, %v353
      %v382 = vmul.f32 %v342, %v353
      %v383 = vmul.f32 %v343, %v353
      %v384 = vmul.f32 %v344, %v353
      %v385 = vmul.f32 %v345, %v353
      %v386 = vmul.f32 %v346, %v353
      %v387 = vmax.f32 %v355, 0.0
      %v388 = vmax.f32 %v356, 0.0
      %v389 = vmax.f32 %v357, 0.0
      %v390 = vmax.f32 %v358, 0.0
      %v391 = vmax.f32 %v359, 0.0
      %v392 = vmax.f32 %v360, 0.0
      %v393 = vmax.f32 %v361, 0.0
      %v394 = vmax.f32 %v362, 0.0
      %v395 = vmax.f32 %v363, 0.0
      %v396 = vmax.f32 %v364, 0.0
      %v397 = vmax.f32 %v365, 0.0
      %v398 = vmax.f32 %v366, 0.0
      %v399 = vmax.f32 %v367, 0.0
      %v400 = vmax.f32 %v368, 0.0
      %v401 = vmax.f32 %v369, 0.0
      %v402 = vmax.f32 %v370, 0.0
      %v403 = vmax.f32 %v371, 0.0
      %v404 = vmax.f32 %v372, 0.0
      %v405 = vmax.f32 %v373, 0.0
      %v406 = vmax.f32 %v374, 0.0
      %v407 = vmax.f32 %v375, 0.0
      %v408 = vmax.f32 %v376, 0.0
      %v409 = vmax.f32 %v377, 0.0
      %v410 = vmax.f32 %v378, 0.0
      %v411 = vmax.f32 %v379, 0.0
      %v412 = vmax.f32 %v380, 0.0
      %v413 = vmax.f32 %v381, 0.0
      %v414 = vmax.f32 %v382, 0.0
      %v415 = vmax.f32 %v383, 0.0
      %v416 = vmax.f32 %v384, 0.0
      %v417 = vmax.f32 %v385, 0.0
      %v418 = vmax.f32 %v386, 0.0
      %v419 = vpack.c.bf16 %v388, %v387
      %v420 = vpack.c.bf16 %v390, %v389
      %v421 = vpack.c.bf16 %v392, %v391
      %v422 = vpack.c.bf16 %v394, %v393
      %v423 = vpack.c.bf16 %v396, %v395
      %v424 = vpack.c.bf16 %v398, %v397
      %v425 = vpack.c.bf16 %v400, %v399
      %v426 = vpack.c.bf16 %v402, %v401
      %v427 = vpack.c.bf16 %v404, %v403
      %v428 = vpack.c.bf16 %v406, %v405
      %v429 = vpack.c.bf16 %v408, %v407
      %v430 = vpack.c.bf16 %v410, %v409
      %v431 = vpack.c.bf16 %v412, %v411
      %v432 = vpack.c.bf16 %v414, %v413
      %v433 = vpack.c.bf16 %v416, %v415
      %v434 = vpack.c.bf16 %v418, %v417
      %v451 = vunpack.c.l.b16 %v419
      %v452 = vunpack.c.h.b16 %v419
      %v453 = vunpack.c.l.b16 %v420
      %v454 = vunpack.c.h.b16 %v420
      %v455 = vunpack.c.l.b16 %v421
      %v456 = vunpack.c.h.b16 %v421
      %v457 = vunpack.c.l.b16 %v422
      %v458 = vunpack.c.h.b16 %v422
      %v459 = vunpack.c.l.b16 %v423
      %v460 = vunpack.c.h.b16 %v423
      %v461 = vunpack.c.l.b16 %v424
      %v462 = vunpack.c.h.b16 %v424
      %v463 = vunpack.c.l.b16 %v425
      %v464 = vunpack.c.h.b16 %v425
      %v465 = vunpack.c.l.b16 %v426
      %v466 = vunpack.c.h.b16 %v426
      %v467 = vunpack.c.l.b16 %v427
      %v468 = vunpack.c.h.b16 %v427
      %v469 = vunpack.c.l.b16 %v428
      %v470 = vunpack.c.h.b16 %v428
      %v471 = vunpack.c.l.b16 %v429
      %v472 = vunpack.c.h.b16 %v429
      %v473 = vunpack.c.l.b16 %v430
      %v474 = vunpack.c.h.b16 %v430
      %v475 = vunpack.c.l.b16 %v431
      %v476 = vunpack.c.h.b16 %v431
      %v477 = vunpack.c.l.b16 %v432
      %v478 = vunpack.c.h.b16 %v432
      %v479 = vunpack.c.l.b16 %v433
      %v480 = vunpack.c.h.b16 %v433
      %v481 = vunpack.c.l.b16 %v434
      %v482 = vunpack.c.h.b16 %v434
      %v483 = vpack.c.b16 %v451, %v451
      %v484 = vpack.c.b16 %v452, %v452
      %v485 = vpack.c.b16 %v453, %v453
      %v486 = vpack.c.b16 %v454, %v454
      %v487 = vpack.c.b16 %v455, %v455
      %v488 = vpack.c.b16 %v456, %v456
      %v489 = vpack.c.b16 %v457, %v457
      %v490 = vpack.c.b16 %v458, %v458
      %v491 = vpack.c.b16 %v459, %v459
      %v492 = vpack.c.b16 %v460, %v460
      %v493 = vpack.c.b16 %v461, %v461
      %v494 = vpack.c.b16 %v462, %v462
      %v495 = vpack.c.b16 %v463, %v463
      %v496 = vpack.c.b16 %v464, %v464
      %v497 = vpack.c.b16 %v465, %v465
      %v498 = vpack.c.b16 %v466, %v466
      %v499 = vpack.c.b16 %v467, %v467
      %v500 = vpack.c.b16 %v468, %v468
      %v501 = vpack.c.b16 %v469, %v469
      %v502 = vpack.c.b16 %v470, %v470
      %v503 = vpack.c.b16 %v471, %v471
      %v504 = vpack.c.b16 %v472, %v472
      %v505 = vpack.c.b16 %v473, %v473
      %v506 = vpack.c.b16 %v474, %v474
      %v507 = vpack.c.b16 %v475, %v475
      %v508 = vpack.c.b16 %v476, %v476
      %v509 = vpack.c.b16 %v477, %v477
      %v510 = vpack.c.b16 %v478, %v478
      %v511 = vpack.c.b16 %v479, %v479
      %v512 = vpack.c.b16 %v480, %v480
      %v513 = vpack.c.b16 %v481, %v481
      %v514 = vpack.c.b16 %v482, %v482
      %547 = vst [vmem:[%s236] sm:$0xf] %v483
      %548 = vst [vmem:[%s236 + $0x4] sm:$0xf] %v484
      %549 = vst [vmem:[%s236 + $0x8] sm:$0xf] %v485
      %550 = vst [vmem:[%s236 + $0xc] sm:$0xf] %v486
      %551 = vst [vmem:[%s236 + $0x10] sm:$0xf] %v487
      %552 = vst [vmem:[%s236 + $0x14] sm:$0xf] %v488
      %553 = vst [vmem:[%s236 + $0x18] sm:$0xf] %v489
      %554 = vst [vmem:[%s236 + $0x1c] sm:$0xf] %v490
      %555 = vst [vmem:[%s236 + $0x20] sm:$0xf] %v491
      %556 = vst [vmem:[%s236 + $0x24] sm:$0xf] %v492
      %557 = vst [vmem:[%s236 + $0x28] sm:$0xf] %v493
      %558 = vst [vmem:[%s236 + $0x2c] sm:$0xf] %v494
      %559 = vst [vmem:[%s236 + $0x30] sm:$0xf] %v495
      %560 = vst [vmem:[%s236 + $0x34] sm:$0xf] %v496
      %561 = vst [vmem:[%s236 + $0x38] sm:$0xf] %v497
      %562 = vst [vmem:[%s236 + $0x3c] sm:$0xf] %v498
      %563 = vst [vmem:[%s236 + $0x40] sm:$0xf] %v499
      %564 = vst [vmem:[%s236 + $0x44] sm:$0xf] %v500
      %565 = vst [vmem:[%s236 + $0x48] sm:$0xf] %v501
      %566 = vst [vmem:[%s236 + $0x4c] sm:$0xf] %v502
      %567 = vst [vmem:[%s236 + $0x50] sm:$0xf] %v503
      %568 = vst [vmem:[%s236 + $0x54] sm:$0xf] %v504
      %569 = vst [vmem:[%s236 + $0x58] sm:$0xf] %v505
      %570 = vst [vmem:[%s236 + $0x5c] sm:$0xf] %v506
      %571 = vst [vmem:[%s236 + $0x60] sm:$0xf] %v507
      %572 = vst [vmem:[%s236 + $0x64] sm:$0xf] %v508
      %573 = vst [vmem:[%s236 + $0x68] sm:$0xf] %v509
      %574 = vst [vmem:[%s236 + $0x6c] sm:$0xf] %v510
      %575 = vst [vmem:[%s236 + $0x70] sm:$0xf] %v511
      %576 = vst [vmem:[%s236 + $0x74] sm:$0xf] %v512
      %577 = vst [vmem:[%s236 + $0x78] sm:$0xf] %v513
      %578 = vst [vmem:[%s236 + $0x7c] sm:$0xf] %v514
      %s579 = smul.u32 32, %s19
      %p580 = scmp.lt.s32.totalorder %s18, 1
      %s581 = scalar_select %p580, %s18, 1
      %p582 = scmp.lt.s32.totalorder %s579, 31
      %s583 = scalar_select %p582, %s579, 31
      %s584 = smul.addr %s581, 32
      %s585 = sadd.s32 %s583, %s584
      %s586 = smul.addr %s585, 4
      %s587 = scalar_lea.vmem %s3, %s586
      // Predicated region
      $region33: #{generator_forward.30} parent=31 // pred_check
        %p588 = pneg %p126
      $region34: #{generator_forward.30} parent=31 // pred_check_branch
        %590 = sbr.rel (%p588) target = $region36
      $region35: #{generator_forward.30} parent=31 // pred_region
        %s591 = smul.u32 32, %s19
      $region36: #{generator_forward.30} parent=31 // pred_fallthru
        _
    $region32: #{generator_forward.30} parent=5 // pred_fallthru
      _
    %p592 = scmp.le.s32.totalorder 2, %s9
    // Predicated region
    $region37: #{generator_forward.30} parent=5 // pred_check
      %p593 = pneg %p592
    $region38: #{generator_forward.30} parent=5 // pred_check_branch
      %595 = sbr.rel (%p593) target = $region40
    $region39: #{generator_forward.30} parent=5 // pred_region
      %s596 = ssub.s32 %s9, 2
      // Predicated region
      $region41: #{generator_forward.30} parent=39 // pred_check
        %p597 = pneg %p132
      $region42: #{generator_forward.30} parent=39 // pred_check_branch
        %599 = sbr.rel (%p597) target = $region44
      $region43: #{generator_forward.30} parent=39 // pred_region
        %s600 = smul.u32 32, %s21
        %p601 = scmp.lt.s32.totalorder %s20, 1
        %s602 = scalar_select %p601, %s20, 1
        %p603 = scmp.lt.s32.totalorder %s600, 31
        %s604 = scalar_select %p603, %s600, 31
        %s605 = smul.addr %s602, 32
        %s606 = sadd.s32 %s604, %s605
        %s607 = smul.addr %s606, 4
        %s608 = scalar_lea.vmem %s3, %s607
      $region44: #{generator_forward.30} parent=39 // pred_fallthru
        _
    $region40: #{generator_forward.30} parent=5 // pred_fallthru
      _
  $region6: #{generator_forward.30} parent=0 // loop_footer
    %s13 = sadd.s32 1, %s9
  $region7: #{generator_forward.30} parent=0 // loop_footer_branch
    %8 = sbr.rel target = $region3
  $region8: #{generator_forward.30} parent=0 // loop_exit
    _

// kernel: generator_forward.31
$region0: #{generator_forward.31}
  #allocation0 [shape = 'u32[]', space=smem, size = 0x4, offset = 0x4, fixed_abs, tag = 'smem constant byte address 0x4 - core index']
  #allocation1 [shape = 'u32[144,128]{1,0:T(1,128)}', space=vmem, size = 0x12000, scoped, tag = 'internal scratch']
  #allocation2 [shape = 'f32[128,128]{1,0:T(8,128)}', space=vmem, size = 0x10000, scoped, tag = 'scratch operand']
  %s0 = inlined_call_operand.vmem [shape: bf16[128,1152], index: 0, kind: input, shape index: {}]
  %s1 = inlined_call_operand.vmem [shape: bf16[1152,128], index: 1, kind: input, shape index: {}]
  %s2 = inlined_call_operand.vmem [shape: f32[1,128], index: 2, kind: input, shape index: {}]
  %s3 = inlined_call_operand.vmem [shape: bf16[128,128], index: 3, kind: output, shape index: {}]
  %s4 = sld [smem:[#allocation0]]
  $region79: #{generator_forward.31} parent=0
    _
  %s6 = ssub.s32 1, %s4
  %s7 = scalar_select 0, %s6, %s4
  $region1: #{generator_forward.31} parent=0
    #allocation3 [shape = 'u8[196608]{0}', space=vmem, size = 0x30000, scoped, tag = 'input window, operand 0']
    loop: start=0, step=1, limit=5
    $region2: #{generator_forward.31} parent=1 // loop_pre_header
      _
    $region3: #{generator_forward.31} parent=1 // loop_header
      %s9 = sphi 0, %s13
      %p10 = scmp.ge.s32.totalorder %s9, 5
      %s16 = sphi 0, %s35
      %s17 = sphi 0, %s31
      %s18 = sphi 0, %s27
      %s19 = sphi 0, %s16
      %s20 = sphi 0, %s17
      %s21 = sphi 0, %s18
      %s22 = sphi 0, %s19
      %s23 = sphi 0, %s20
      %s24 = sphi 0, %s21
      %s40 = sphi 0, %s42
      %s43 = sphi 0, %s40
      %s44 = sphi 0, %s43
      %s60 = sphi 0, %s44
      %s68 = sphi 0, %s70
      %s71 = sphi 0, %s68
      %s72 = sphi 0, %s71
      %s88 = sphi 0, %s72
      %s94 = sphi 0, %s96
      %s97 = sphi 0, %s94
      %s98 = sphi 0, %s97
      %s114 = sphi 0, %s98
      %s122 = sphi 0, %s124
      %s125 = sphi 0, %s122
      %s126 = sphi 0, %s125
      %s142 = sphi 0, %s126
    $region4: #{generator_forward.31} parent=1 // loop_header_branch
      %12 = sbr.rel (%p10) target = $region8
    $region5: #{generator_forward.31} parent=1 // loop_body
      %s14 = ssub.s32 %s9, 1
      %s15 = ssub.s32 %s9, 2
      %s25 = sadd.s32 1, %s18
      %p26 = scmp.ge.s32.totalorder %s25, 3
      %s27 = scalar_select %p26, 0, %s25
      %s28 = sadd.s32 1, %s17
      %s29 = scalar_select %p26, %s28, %s17
      %p30 = scmp.ge.s32.totalorder %s29, 1
      %s31 = scalar_select %p30, 0, %s29
      %s32 = sadd.s32 1, %s16
      %s33 = scalar_select %p30, %s32, %s16
      %p34 = scmp.ge.s32.totalorder %s33, 1
      %s35 = scalar_select %p34, 0, %s33
      %s36 = ssub.s32 %s16, %s35
      %s37 = ssub.s32 %s18, %s27
      %s38 = sor.u32 %s36, %s37
      %p39 = scmp.eq.s32.totalorder %s38, 0
      %s41 = sadd.s32 %s40, 1
      %s42 = scalar_select %p39, %s40, %s41
      %p45 = pneg %p39
      %p46 = scmp.eq.s32.totalorder %s9, 2
      %p47 = por %p45, %p46
      %p48 = scmp.ne.s32.totalorder %s40, %s43
      %p49 = scmp.eq.s32.totalorder %s9, 0
      %p50 = por %p48, %p49
      %p51 = scmp.ne.s32.totalorder %s40, %s43
      %p52 = scmp.eq.s32.totalorder %s14, 2
      %p53 = por %p51, %p52
      %p54 = scmp.ne.s32.totalorder %s43, %s44
      %p55 = scmp.eq.s32.totalorder %s14, 0
      %p56 = por %p54, %p55
      %p57 = scmp.ne.s32.totalorder %s43, %s44
      %p58 = scmp.eq.s32.totalorder %s15, 2
      %p59 = por %p57, %p58
      %p61 = scmp.ne.s32.totalorder %s44, %s60
      %p62 = scmp.eq.s32.totalorder %s15, 0
      %p63 = por %p61, %p62
      %s64 = ssub.s32 %s18, %s27
      %s65 = ssub.s32 %s17, %s31
      %s66 = sor.u32 %s64, %s65
      %p67 = scmp.eq.s32.totalorder %s66, 0
      %s69 = sadd.s32 %s68, 1
      %s70 = scalar_select %p67, %s68, %s69
      %p73 = pneg %p67
      %p74 = scmp.eq.s32.totalorder %s9, 2
      %p75 = por %p73, %p74
      %p76 = scmp.ne.s32.totalorder %s68, %s71
      %p77 = scmp.eq.s32.totalorder %s9, 0
      %p78 = por %p76, %p77
      %p79 = scmp.ne.s32.totalorder %s68, %s71
      %p80 = scmp.eq.s32.totalorder %s14, 2
      %p81 = por %p79, %p80
      %p82 = scmp.ne.s32.totalorder %s71, %s72
      %p83 = scmp.eq.s32.totalorder %s14, 0
      %p84 = por %p82, %p83
      %p85 = scmp.ne.s32.totalorder %s71, %s72
      %p86 = scmp.eq.s32.totalorder %s15, 2
      %p87 = por %p85, %p86
      %p89 = scmp.ne.s32.totalorder %s72, %s88
      %p90 = scmp.eq.s32.totalorder %s15, 0
      %p91 = por %p89, %p90
      %s92 = ssub.s32 %s17, %s31
      %p93 = scmp.eq.s32.totalorder %s92, 0
      %s95 = sadd.s32 %s94, 1
      %s96 = scalar_select %p93, %s94, %s95
      %p99 = pneg %p93
      %p100 = scmp.eq.s32.totalorder %s9, 2
      %p101 = por %p99, %p100
      %p102 = scmp.ne.s32.totalorder %s94, %s97
      %p103 = scmp.eq.s32.totalorder %s9, 0
      %p104 = por %p102, %p103
      %p105 = scmp.ne.s32.totalorder %s94, %s97
      %p106 = scmp.eq.s32.totalorder %s14, 2
      %p107 = por %p105, %p106
      %p108 = scmp.ne.s32.totalorder %s97, %s98
      %p109 = scmp.eq.s32.totalorder %s14, 0
      %p110 = por %p108, %p109
      %p111 = scmp.ne.s32.totalorder %s97, %s98
      %p112 = scmp.eq.s32.totalorder %s15, 2
      %p113 = por %p111, %p112
      %p115 = scmp.ne.s32.totalorder %s98, %s114
      %p116 = scmp.eq.s32.totalorder %s15, 0
      %p117 = por %p115, %p116
      %s118 = ssub.s32 %s16, %s35
      %s119 = ssub.s32 %s17, %s31
      %s120 = sor.u32 %s118, %s119
      %p121 = scmp.eq.s32.totalorder %s120, 0
      %s123 = sadd.s32 %s122, 1
      %s124 = scalar_select %p121, %s122, %s123
      %p127 = pneg %p121
      %p128 = scmp.eq.s32.totalorder %s9, 2
      %p129 = por %p127, %p128
      %p130 = scmp.ne.s32.totalorder %s122, %s125
      %p131 = scmp.eq.s32.totalorder %s9, 0
      %p132 = por %p130, %p131
      %p133 = scmp.ne.s32.totalorder %s122, %s125
      %p134 = scmp.eq.s32.totalorder %s14, 2
      %p135 = por %p133, %p134
      %p136 = scmp.ne.s32.totalorder %s125, %s126
      %p137 = scmp.eq.s32.totalorder %s14, 0
      %p138 = por %p136, %p137
      %p139 = scmp.ne.s32.totalorder %s125, %s126
      %p140 = scmp.eq.s32.totalorder %s15, 2
      %p141 = por %p139, %p140
      %p143 = scmp.ne.s32.totalorder %s126, %s142
      %p144 = scmp.eq.s32.totalorder %s15, 0
      %p145 = por %p143, %p144
      %p146 = scmp.le.s32.totalorder 1, %s9
      %p147 = scmp.lt.s32.totalorder %s9, 4
      %p148 = pnand %p146, %p147
      %p149 = pneg %p148
      // Predicated region
      $region9: #{generator_forward.31} parent=5 // pred_check
        _
      $region10: #{generator_forward.31} parent=5 // pred_check_branch
        %151 = sbr.rel (%p148) target = $region12
      $region11: #{generator_forward.31} parent=5 // pred_region
        %s152 = ssub.s32 %s9, 1
        // Predicated region
        $region13: #{generator_forward.31} parent=11 // pred_check
          %p153 = pneg %p110
        $region14: #{generator_forward.31} parent=11 // pred_check_branch
          %155 = sbr.rel (%p153) target = $region16
        $region15: #{generator_forward.31} parent=11 // pred_region
          %p156 = scmp.lt.s32.totalorder %s20, 0
          %s157 = scalar_select %p156, %s20, 0
          %s158 = scalar_lea.vmem %s2, %s157
        $region16: #{generator_forward.31} parent=11 // pred_fallthru
          _
      $region12: #{generator_forward.31} parent=5 // pred_fallthru
        _
      %p159 = scmp.lt.s32.totalorder %s9, 3
      // Predicated region
      $region17: #{generator_forward.31} parent=5 // pred_check
        %p160 = pneg %p159
      $region18: #{generator_forward.31} parent=5 // pred_check_branch
        %162 = sbr.rel (%p160) target = $region20
      $region19: #{generator_forward.31} parent=5 // pred_region
        // Predicated region
        $region21: #{generator_forward.31} parent=19 // pred_check
          %p163 = pneg %p50
        $region22: #{generator_forward.31} parent=19 // pred_check_branch
          %165 = sbr.rel (%p163) target = $region24
        $region23: #{generator_forward.31} parent=19 // pred_region
          %s166 = sand.u32 %s40, 1
          %s167 = sand.u32 %s40, 1
          %s168 = smul.addr %s167, 192
          %s169 = scalar_lea.vmem [#allocation3], %s168
          %s170 = smul.u32 16, %s16
          %s171 = smul.u32 3, %s18
          %s172 = smul.addr %s170, 9
          %s173 = sadd.s32 %s171, %s172
          %s174 = smul.addr %s173, 4
          %s175 = scalar_lea.vmem %s0, %s174
          // Predicated region
          $region25: #{generator_forward.31} parent=23 // pred_check
            _
          $region26: #{generator_forward.31} parent=23 // pred_check_branch
            %177 = sbr.rel (0) target = $region28
          $region27: #{generator_forward.31} parent=23 // pred_region
            // Predicated region
            $region29: #{generator_forward.31} parent=27 // pred_check
              _
            $region30: #{generator_forward.31} parent=27 // pred_check_branch
              %179 = sbr.rel (0) target = $region32
            $region31: #{generator_forward.31} parent=27 // pred_region
              %s180 = scalar_lea.vmem %s175, 8
              %s181 = scalar_lea.vmem %s169, 8 [#allocation3]
              loop: start=0, step=1, limit=1
              $region33: #{generator_forward.31} parent=31 // loop_pre_header
                _
              $region34: #{generator_forward.31} parent=31 // loop_header
                %s183 = sphi 0, %s187
                %p184 = scmp.ge.s32.totalorder %s183, 1
                %s188 = sphi %s175, %s175
                %s189 = sphi %s169, %s169
              $region35: #{generator_forward.31} parent=31 // loop_header_branch
                %186 = sbr.rel (%p184) target = $region39
              $region36: #{generator_forward.31} parent=31 // loop_body
                %v190 = vld [vmem:[%s188] sm:$0xff]
                %191 = vst [vmem:[%s189] sm:$0xff] %v190
                %v192 = vld [vmem:[%s188 + $0x24] sm:$0xff]
                %193 = vst [vmem:[%s189 + $0xc] sm:$0xff] %v192
                %v194 = vld [vmem:[%s188 + $0x48] sm:$0xff]
                %195 = vst [vmem:[%s189 + $0x18] sm:$0xff] %v194
                %v196 = vld [vmem:[%s188 + $0x6c] sm:$0xff]
                %197 = vst [vmem:[%s189 + $0x24] sm:$0xff] %v196
                %v198 = vld [vmem:[%s188 + $0x90] sm:$0xff]
                %199 = vst [vmem:[%s189 + $0x30] sm:$0xff] %v198
                %v200 = vld [vmem:[%s188 + $0xb4] sm:$0xff]
                %201 = vst [vmem:[%s189 + $0x3c] sm:$0xff] %v200
                %v202 = vld [vmem:[%s188 + $0xd8] sm:$0xff]
                %203 = vst [vmem:[%s189 + $0x48] sm:$0xff] %v202
                %v204 = vld [vmem:[%s188 + $0xfc] sm:$0xff]
                %205 = vst [vmem:[%s189 + $0x54] sm:$0xff] %v204
                %v206 = vld [vmem:[%s188 + $0x120] sm:$0xff]
                %207 = vst [vmem:[%s189 + $0x60] sm:$0xff] %v206
                %v208 = vld [vmem:[%s188 + $0x144] sm:$0xff]
                %209 = vst [vmem:[%s189 + $0x6c] sm:$0xff] %v208
                %v210 = vld [vmem:[%s188 + $0x168] sm:$0xff]
                %211 = vst [vmem:[%s189 + $0x78] sm:$0xff] %v210
                %v212 = vld [vmem:[%s188 + $0x18c] sm:$0xff]
                %213 = vst [vmem:[%s189 + $0x84] sm:$0xff] %v212
                %v214 = vld [vmem:[%s188 + $0x1b0] sm:$0xff]
                %215 = vst [vmem:[%s189 + $0x90] sm:$0xff] %v214
                %v216 = vld [vmem:[%s188 + $0x1d4] sm:$0xff]
                %217 = vst [vmem:[%s189 + $0x9c] sm:$0xff] %v216
                %v218 = vld [vmem:[%s188 + $0x1f8] sm:$0xff]
                %219 = vst [vmem:[%s189 + $0xa8] sm:$0xff] %v218
                %v220 = vld [vmem:[%s188 + $0x21c] sm:$0xff]
                %221 = vst [vmem:[%s189 + $0xb4] sm:$0xff] %v220
              $region37: #{generator_forward.31} parent=31 // loop_footer
                %s187 = sadd.s32 1, %s183
              $region38: #{generator_forward.31} parent=31 // loop_footer_branch
                %182 = sbr.rel target = $region34
              $region39: #{generator_forward.31} parent=31 // loop_exit
                _
              %s223 = ssub.s32 16, 1
              loop: start=0, step=1, limit=1
              $region40: #{generator_forward.31} parent=31 // loop_pre_header
                _
              $region41: #{generator_forward.31} parent=31 // loop_header
                %s225 = sphi 0, %s229
                %p226 = scmp.ge.s32.totalorder %s225, 1
                %s230 = sphi %s180, %s180
                %s231 = sphi %s181, %s181
              $region42: #{generator_forward.31} parent=31 // loop_header_branch
                %228 = sbr.rel (%p226) target = $region46
              $region43: #{generator_forward.31} parent=31 // loop_body
                %v232 = vld [vmem:[%s230] sm:%s223]
                %233 = vst [vmem:[%s231] sm:%s223] %v232
                %v234 = vld [vmem:[%s230 + $0x24] sm:%s223]
                %235 = vst [vmem:[%s231 + $0xc] sm:%s223] %v234
                %v236 = vld [vmem:[%s230 + $0x48] sm:%s223]
                %237 = vst [vmem:[%s231 + $0x18] sm:%s223] %v236
                %v238 = vld [vmem:[%s230 + $0x6c] sm:%s223]
                %239 = vst [vmem:[%s231 + $0x24] sm:%s223] %v238
                %v240 = vld [vmem:[%s230 + $0x90] sm:%s223]
                %241 = vst [vmem:[%s231 + $0x30] sm:%s223] %v240
                %v242 = vld [vmem:[%s230 + $0xb4] sm:%s223]
                %243 = vst [vmem:[%s231 + $0x3c] sm:%s223] %v242
                %v244 = vld [vmem:[%s230 + $0xd8] sm:%s223]
                %245 = vst [vmem:[%s231 + $0x48] sm:%s223] %v244
                %v246 = vld [vmem:[%s230 + $0xfc] sm:%s223]
                %247 = vst [vmem:[%s231 + $0x54] sm:%s223] %v246
                %v248 = vld [vmem:[%s230 + $0x120] sm:%s223]
                %249 = vst [vmem:[%s231 + $0x60] sm:%s223] %v248
                %v250 = vld [vmem:[%s230 + $0x144] sm:%s223]
                %251 = vst [vmem:[%s231 + $0x6c] sm:%s223] %v250
                %v252 = vld [vmem:[%s230 + $0x168] sm:%s223]
                %253 = vst [vmem:[%s231 + $0x78] sm:%s223] %v252
                %v254 = vld [vmem:[%s230 + $0x18c] sm:%s223]
                %255 = vst [vmem:[%s231 + $0x84] sm:%s223] %v254
                %v256 = vld [vmem:[%s230 + $0x1b0] sm:%s223]
                %257 = vst [vmem:[%s231 + $0x90] sm:%s223] %v256
                %v258 = vld [vmem:[%s230 + $0x1d4] sm:%s223]
                %259 = vst [vmem:[%s231 + $0x9c] sm:%s223] %v258
                %v260 = vld [vmem:[%s230 + $0x1f8] sm:%s223]
                %261 = vst [vmem:[%s231 + $0xa8] sm:%s223] %v260
                %v262 = vld [vmem:[%s230 + $0x21c] sm:%s223]
                %263 = vst [vmem:[%s231 + $0xb4] sm:%s223] %v262
              $region44: #{generator_forward.31} parent=31 // loop_footer
                %s229 = sadd.s32 1, %s225
              $region45: #{generator_forward.31} parent=31 // loop_footer_branch
                %224 = sbr.rel target = $region41
              $region46: #{generator_forward.31} parent=31 // loop_exit
                _
            $region32: #{generator_forward.31} parent=27 // pred_fallthru
              _
          $region28: #{generator_forward.31} parent=23 // pred_fallthru
            _
          %264 = vnop
        $region24: #{generator_forward.31} parent=19 // pred_fallthru
          _
        // Predicated region
        $region47: #{generator_forward.31} parent=19 // pred_check
          %p265 = pneg %p78
        $region48: #{generator_forward.31} parent=19 // pred_check_branch
          %267 = sbr.rel (%p265) target = $region50
        $region49: #{generator_forward.31} parent=19 // pred_region
          %s268 = smul.u32 48, %s18
          %p269 = scmp.lt.s32.totalorder %s268, 143
          %s270 = scalar_select %p269, %s268, 143
          %p271 = scmp.lt.s32.totalorder %s17, 0
          %s272 = scalar_select %p271, %s17, 0
          %s273 = sadd.s32 %s272, %s270
          %s274 = smul.addr %s273, 4
          %s275 = scalar_lea.vmem %s1, %s274
          %s276 = smul.u32 48, %s18
        $region50: #{generator_forward.31} parent=19 // pred_fallthru
          _
      $region20: #{generator_forward.31} parent=5 // pred_fallthru
        _
      %p277 = scmp.le.s32.totalorder 1, %s9
      %p278 = scmp.lt.s32.totalorder %s9, 4
      %p279 = pnand %p277, %p278
      %p280 = pneg %p279
      // Predicated region
      $region51: #{generator_forward.31} parent=5 // pred_check
        _
      $region52: #{generator_forward.31} parent=5 // pred_check_branch
        %282 = sbr.rel (%p279) target = $region54
      $region53: #{generator_forward.31} parent=5 // pred_region
        %s283 = ssub.s32 %s9, 1
        %s284 = sand.u32 %s43, 1
        %s285 = sand.u32 %s43, 1
        %s286 = smul.addr %s285, 192
        %s287 = scalar_lea.vmem [#allocation3], %s286
        // Predicated region
        $region55: #{generator_forward.31} parent=53 // pred_check
          %p288 = pneg %p56
        $region56: #{generator_forward.31} parent=53 // pred_check_branch
          %290 = sbr.rel (%p288) target = $region58
        $region57: #{generator_forward.31} parent=53 // pred_region
          _
        $region58: #{generator_forward.31} parent=53 // pred_fallthru
          _
        %s291 = sand.u32 %s43, 1
        %s292 = sand.u32 %s43, 1
        %s293 = smul.addr %s292, 192
        %s294 = scalar_lea.vmem [#allocation3], %s293
        %p295 = pneg %p56
        %p296 = pneg %p53
        %s297 = smul.u32 48, %s21
        %p298 = scmp.lt.s32.totalorder %s297, 143
        %s299 = scalar_select %p298, %s297, 143
        %p300 = scmp.lt.s32.totalorder %s20, 0
        %s301 = scalar_select %p300, %s20, 0
        %s302 = sadd.s32 %s301, %s299
        %s303 = smul.addr %s302, 4
        %s304 = scalar_lea.vmem %s1, %s303
        %p305 = pneg %p84
        %p306 = pneg %p81
        %p307 = scmp.lt.s32.totalorder %s20, 0
        %s308 = scalar_select %p307, %s20, 0
        %s309 = scalar_lea.vmem %s2, %s308
        %p310 = pneg %p110
        %p311 = pneg %p107
        %p312 = pneg %p138
        %p313 = pneg %p135
        %s314 = smul.u32 16, %s19
        %p315 = scmp.lt.s32.totalorder %s314, 15
        %s316 = scalar_select %p315, %s314, 15
        %p317 = scmp.lt.s32.totalorder %s20, 0
        %s318 = scalar_select %p317, %s20, 0
        %s319 = sadd.s32 %s318, %s316
        %s320 = smul.addr %s319, 4
        %s321 = scalar_lea.vmem %s3, %s320
        %s322 = smul.u32 16, %s19
        %s323 = smul.u32 3, %s21
        %s324 = smul.u32 48, %s21
        %p325 = scmp.lt.s32.totalorder %s324, 143
        %s326 = scalar_select %p325, %s324, 143
        %p327 = scmp.lt.s32.totalorder %s20, 0
        %s328 = scalar_select %p327, %s20, 0
        %s329 = sadd.s32 %s328, %s326
        %s330 = smul.addr %s329, 4
        %s331 = scalar_lea.vmem %s1, %s330
        %s332 = smul.u32 48, %s21
        %p333 = scmp.lt.s32.totalorder %s20, 0
        %s334 = scalar_select %p333, %s20, 0
        %s335 = scalar_lea.vmem %s2, %s334
        %s336 = smul.u32 16, %s19
        %p337 = scmp.lt.s32.totalorder %s336, 15
        %s338 = scalar_select %p337, %s336, 15
        %p339 = scmp.lt.s32.totalorder %s20, 0
        %s340 = scalar_select %p339, %s20, 0
        %s341 = sadd.s32 %s340, %s338
        %s342 = smul.addr %s341, 4
        %s343 = scalar_lea.vmem %s3, %s342
        %s344 = smul.u32 16, %s19
        %p346 = scmp.eq.s32.totalorder %s21, 0
        // Predicated region
        $region59: #{generator_forward.31} parent=53 // pred_check
          %p347 = pneg %p346
        $region60: #{generator_forward.31} parent=53 // pred_check_branch
          %349 = sbr.rel (%p347) target = $region62
        $region61: #{generator_forward.31} parent=53 // pred_region
          %350 = vst [vmem:[#allocation2] sm:$0xff] 0.0
          %351 = vst [vmem:[#allocation2 + $0x8] sm:$0xff] 0.0
          %352 = vst [vmem:[#allocation2 + $0x10] sm:$0xff] 0.0
          %353 = vst [vmem:[#allocation2 + $0x18] sm:$0xff] 0.0
          %354 = vst [vmem:[#allocation2 + $0x20] sm:$0xff] 0.0
          %355 = vst [vmem:[#allocation2 + $0x28] sm:$0xff] 0.0
          %356 = vst [vmem:[#allocation2 + $0x30] sm:$0xff] 0.0
          %357 = vst [vmem:[#allocation2 + $0x38] sm:$0xff] 0.0
          %358 = vst [vmem:[#allocation2 + $0x40] sm:$0xff] 0.0
          %359 = vst [vmem:[#allocation2 + $0x48] sm:$0xff] 0.0
          %360 = vst [vmem:[#allocation2 + $0x50] sm:$0xff] 0.0
          %361 = vst [vmem:[#allocation2 + $0x58] sm:$0xff] 0.0
          %362 = vst [vmem:[#allocation2 + $0x60] sm:$0xff] 0.0
          %363 = vst [vmem:[#allocation2 + $0x68] sm:$0xff] 0.0
          %364 = vst [vmem:[#allocation2 + $0x70] sm:$0xff] 0.0
          %365 = vst [vmem:[#allocation2 + $0x78] sm:$0xff] 0.0
        $region62: #{generator_forward.31} parent=53 // pred_fallthru
          _
        %v366 = vld [vmem:[#allocation2] sm:$0xff]
        %v367 = vld [vmem:[#allocation2 + $0x8] sm:$0xff]
        %v368 = vld [vmem:[#allocation2 + $0x10] sm:$0xff]
        %v369 = vld [vmem:[#allocation2 + $0x18] sm:$0xff]
        %v370 = vld [vmem:[#allocation2 + $0x20] sm:$0xff]
        %v371 = vld [vmem:[#allocation2 + $0x28] sm:$0xff]
        %v372 = vld [vmem:[#allocation2 + $0x30] sm:$0xff]
        %v373 = vld [vmem:[#allocation2 + $0x38] sm:$0xff]
        %v374 = vld [vmem:[#allocation2 + $0x40] sm:$0xff]
        %v375 = vld [vmem:[#allocation2 + $0x48] sm:$0xff]
        %v376 = vld [vmem:[#allocation2 + $0x50] sm:$0xff]
        %v377 = vld [vmem:[#allocation2 + $0x58] sm:$0xff]
        %v378 = vld [vmem:[#allocation2 + $0x60] sm:$0xff]
        %v379 = vld [vmem:[#allocation2 + $0x68] sm:$0xff]
        %v380 = vld [vmem:[#allocation2 + $0x70] sm:$0xff]
        %v381 = vld [vmem:[#allocation2 + $0x78] sm:$0xff]
        %v382 = vld [vmem:[%s287] sm:$0xff]
        %v383 = vld [vmem:[%s287 + $0x8] sm:$0xf]
        %v384 = vld [vmem:[%s287 + $0xc] sm:$0xff]
        %v385 = vld [vmem:[%s287 + $0x14] sm:$0xf]
        %v386 = vld [vmem:[%s287 + $0x18] sm:$0xff]
        %v387 = vld [vmem:[%s287 + $0x20] sm:$0xf]
        %v388 = vld [vmem:[%s287 + $0x24] sm:$0xff]
        %v389 = vld [vmem:[%s287 + $0x2c] sm:$0xf]
        %v390 = vld [vmem:[%s287 + $0x30] sm:$0xff]
        %v391 = vld [vmem:[%s287 + $0x38] sm:$0xf]
        %v392 = vld [vmem:[%s287 + $0x3c] sm:$0xff]
        %v393 = vld [vmem:[%s287 + $0x44] sm:$0xf]
        %v394 = vld [vmem:[%s287 + $0x48] sm:$0xff]
        %v395 = vld [vmem:[%s287 + $0x50] sm:$0xf]
        %v396 = vld [vmem:[%s287 + $0x54] sm:$0xff]
        %v397 = vld [vmem:[%s287 + $0x5c] sm:$0xf]
        %v398 = vld [vmem:[%s287 + $0x60] sm:$0xff]
        %v399 = vld [vmem:[%s287 + $0x68] sm:$0xf]
        %v400 = vld [vmem:[%s287 + $0x6c] sm:$0xff]
        %v401 = vld [vmem:[%s287 + $0x74] sm:$0xf]
        %v402 = vld [vmem:[%s287 + $0x78] sm:$0xff]
        %v403 = vld [vmem:[%s287 + $0x80] sm:$0xf]
        %v404 = vld [vmem:[%s287 + $0x84] sm:$0xff]
        %v405 = vld [vmem:[%s287 + $0x8c] sm:$0xf]
        %v406 = vld [vmem:[%s287 + $0x90] sm:$0xff]
        %v407 = vld [vmem:[%s287 + $0x98] sm:$0xf]
        %v408 = vld [vmem:[%s287 + $0x9c] sm:$0xff]
        %v409 = vld [vmem:[%s287 + $0xa4] sm:$0xf]
        %v410 = vld [vmem:[%s287 + $0xa8] sm:$0xff]
        %v411 = vld [vmem:[%s287 + $0xb0] sm:$0xf]
        %v412 = vld [vmem:[%s287 + $0xb4] sm:$0xff]
        %v413 = vld [vmem:[%s287 + $0xbc] sm:$0xf]
        %v414 = vld [vmem:[%s331] sm:$0xf]
        %v415 = vld [vmem:[%s331 + $0x4] sm:$0xf]
        %v416 = vld [vmem:[%s331 + $0x8] sm:$0xf]
        %v417 = vld [vmem:[%s331 + $0xc] sm:$0xf]
        %v418 = vld [vmem:[%s331 + $0x10] sm:$0xf]
        %v419 = vld [vmem:[%s331 + $0x14] sm:$0xf]
        %v420 = vld [vmem:[%s331 + $0x18] sm:$0xf]
        %v421 = vld [vmem:[%s331 + $0x1c] sm:$0xf]
        %v422 = vld [vmem:[%s331 + $0x20] sm:$0xf]
        %v423 = vld [vmem:[%s331 + $0x24] sm:$0xf]
        %v424 = vld [vmem:[%s331 + $0x28] sm:$0xf]
        %v425 = vld [vmem:[%s331 + $0x2c] sm:$0xf]
        %v426 = vld [vmem:[%s331 + $0x30] sm:$0xf]
        %v427 = vld [vmem:[%s331 + $0x34] sm:$0xf]
        %v428 = vld [vmem:[%s331 + $0x38] sm:$0xf]
        %v429 = vld [vmem:[%s331 + $0x3c] sm:$0xf]
        %v430 = vld [vmem:[%s331 + $0x40] sm:$0xf]
        %v431 = vld [vmem:[%s331 + $0x44] sm:$0xf]
        %v432 = vld [vmem:[%s331 + $0x48] sm:$0xf]
        %v433 = vld [vmem:[%s331 + $0x4c] sm:$0xf]
        %v434 = vld [vmem:[%s331 + $0x50] sm:$0xf]
        %v435 = vld [vmem:[%s331 + $0x54] sm:$0xf]
        %v436 = vld [vmem:[%s331 + $0x58] sm:$0xf]
        %v437 = vld [vmem:[%s331 + $0x5c] sm:$0xf]
        %v438 = vld [vmem:[%s331 + $0x60] sm:$0xf]
        %v439 = vld [vmem:[%s331 + $0x64] sm:$0xf]
        %v440 = vld [vmem:[%s331 + $0x68] sm:$0xf]
        %v441 = vld [vmem:[%s331 + $0x6c] sm:$0xf]
        %v442 = vld [vmem:[%s331 + $0x70] sm:$0xf]
        %v443 = vld [vmem:[%s331 + $0x74] sm:$0xf]
        %v444 = vld [vmem:[%s331 + $0x78] sm:$0xf]
        %v445 = vld [vmem:[%s331 + $0x7c] sm:$0xf]
        %v446 = vld [vmem:[%s331 + $0x80] sm:$0xf]
        %v447 = vld [vmem:[%s331 + $0x84] sm:$0xf]
        %v448 = vld [vmem:[%s331 + $0x88] sm:$0xf]
        %v449 = vld [vmem:[%s331 + $0x8c] sm:$0xf]
        %v450 = vld [vmem:[%s331 + $0x90] sm:$0xf]
        %v451 = vld [vmem:[%s331 + $0x94] sm:$0xf]
        %v452 = vld [vmem:[%s331 + $0x98] sm:$0xf]
        %v453 = vld [vmem:[%s331 + $0x9c] sm:$0xf]
        %v454 = vld [vmem:[%s331 + $0xa0] sm:$0xf]
        %v455 = vld [vmem:[%s331 + $0xa4] sm:$0xf]
        %v456 = vld [vmem:[%s331 + $0xa8] sm:$0xf]
        %v457 = vld [vmem:[%s331 + $0xac] sm:$0xf]
        %v458 = vld [vmem:[%s331 + $0xb0] sm:$0xf]
        %v459 = vld [vmem:[%s331 + $0xb4] sm:$0xf]
        %v460 = vld [vmem:[%s331 + $0xb8] sm:$0xf]
        %v461 = vld [vmem:[%s331 + $0xbc] sm:$0xf]
        %v494 = vunpack.c.l.b16 %v382
        %v495 = vunpack.c.h.b16 %v382
        %v496 = vunpack.c.l.b16 %v383
        %v497 = vunpack.c.l.b16 %v384
        %v498 = vunpack.c.h.b16 %v384
        %v499 = vunpack.c.l.b16 %v385
        %v500 = vunpack.c.l.b16 %v386
        %v501 = vunpack.c.h.b16 %v386
        %v502 = vunpack.c.l.b16 %v387
        %v503 = vunpack.c.l.b16 %v388
        %v504 = vunpack.c.h.b16 %v388
        %v505 = vunpack.c.l.b16 %v389
        %v506 = vunpack.c.l.b16 %v390
        %v507 = vunpack.c.h.b16 %v390
        %v508 = vunpack.c.l.b16 %v391
        %v509 = vunpack.c.l.b16 %v392
        %v510 = vunpack.c.h.b16 %v392
        %v511 = vunpack.c.l.b16 %v393
        %v512 = vunpack.c.l.b16 %v394
        %v513 = vunpack.c.h.b16 %v394
        %v514 = vunpack.c.l.b16 %v395
        %v515 = vunpack.c.l.b16 %v396
        %v516 = vunpack.c.h.b16 %v396
        %v517 = vunpack.c.l.b16 %v397
        %v518 = vunpack.c.l.b16 %v398
        %v519 = vunpack.c.h.b16 %v398
        %v520 = vunpack.c.l.b16 %v399
        %v521 = vunpack.c.l.b16 %v400
        %v522 = vunpack.c.h.b16 %v400
        %v523 = vunpack.c.l.b16 %v401
        %v524 = vunpack.c.l.b16 %v402
        %v525 = vunpack.c.h.b16 %v402
        %v526 = vunpack.c.l.b16 %v403
        %v527 = vunpack.c.l.b16 %v404
        %v528 = vunpack.c.h.b16 %v404
        %v529 = vunpack.c.l.b16 %v405
        %v530 = vunpack.c.l.b16 %v406
        %v531 = vunpack.c.h.b16 %v406
        %v532 = vunpack.c.l.b16 %v407
        %v533 = vunpack.c.l.b16 %v408
        %v534 = vunpack.c.h.b16 %v408
        %v535 = vunpack.c.l.b16 %v409
        %v536 = vunpack.c.l.b16 %v410
        %v537 = vunpack.c.h.b16 %v410
        %v538 = vunpack.c.l.b16 %v411
        %v539 = vunpack.c.l.b16 %v412
        %v540 = vunpack.c.h.b16 %v412
        %v541 = vunpack.c.l.b16 %v413
        %v542 = vpack.c.b16 %v497, %v494
        %v543 = vpack.c.b16 %v498, %v495
        %v544 = vpack.c.b16 %v499, %v496
        %v545 = vpack.c.b16 %v503, %v500
        %v546 = vpack.c.b16 %v504, %v501
        %v547 = vpack.c.b16 %v505, %v502
        %v548 = vpack.c.b16 %v509, %v506
        %v549 = vpack.c.b16 %v510, %v507
        %v550 = vpack.c.b16 %v511, %v508
        %v551 = vpack.c.b16 %v515, %v512
        %v552 = vpack.c.b16 %v516, %v513
        %v553 = vpack.c.b16 %v517, %v514
        %v554 = vpack.c.b16 %v521, %v518
        %v555 = vpack.c.b16 %v522, %v519
        %v556 = vpack.c.b16 %v523, %v520
        %v557 = vpack.c.b16 %v527, %v524
        %v558 = vpack.c.b16 %v528, %v525
        %v559 = vpack.c.b16 %v529, %v526
        %v560 = vpack.c.b16 %v533, %v530
        %v561 = vpack.c.b16 %v534, %v531
        %v562 = vpack.c.b16 %v535, %v532
        %v563 = vpack.c.b16 %v539, %v536
        %v564 = vpack.c.b16 %v540, %v537
        %v565 = vpack.c.b16 %v541, %v538
        %v638 = vunpack.c.l.b16 %v414
        %v639 = vunpack.c.l.b16 %v415
        %v640 = vunpack.c.l.b16 %v416
        %v641 = vunpack.c.l.b16 %v417
        %v642 = vunpack.c.l.b16 %v418
        %v643 = vunpack.c.l.b16 %v419
        %v644 = vunpack.c.l.b16 %v420
        %v645 = vunpack.c.l.b16 %v421
        %v646 = vunpack.c.l.b16 %v422
        %v647 = vunpack.c.l.b16 %v423
        %v648 = vunpack.c.l.b16 %v424
        %v649 = vunpack.c.l.b16 %v425
        %v650 = vunpack.c.l.b16 %v426
        %v651 = vunpack.c.l.b16 %v427
        %v652 = vunpack.c.l.b16 %v428
        %v653 = vunpack.c.l.b16 %v429
        %v654 = vunpack.c.l.b16 %v430
        %v655 = vunpack.c.l.b16 %v431
        %v656 = vunpack.c.l.b16 %v432
        %v657 = vunpack.c.l.b16 %v433
        %v658 = vunpack.c.l.b16 %v434
        %v659 = vunpack.c.l.b16 %v435
        %v660 = vunpack.c.l.b16 %v436
        %v661 = vunpack.c.l.b16 %v437
        %v662 = vunpack.c.l.b16 %v438
        %v663 = vunpack.c.l.b16 %v439
        %v664 = vunpack.c.l.b16 %v440
        %v665 = vunpack.c.l.b16 %v441
        %v666 = vunpack.c.l.b16 %v442
        %v667 = vunpack.c.l.b16 %v443
        %v668 = vunpack.c.l.b16 %v444
        %v669 = vunpack.c.l.b16 %v445
        %v670 = vunpack.c.l.b16 %v446
        %v671 = vunpack.c.l.b16 %v447
        %v672 = vunpack.c.l.b16 %v448
        %v673 = vunpack.c.l.b16 %v449
        %v674 = vunpack.c.l.b16 %v450
        %v675 = vunpack.c.l.b16 %v451
        %v676 = vunpack.c.l.b16 %v452
        %v677 = vunpack.c.l.b16 %v453
        %v678 = vunpack.c.l.b16 %v454
        %v679 = vunpack.c.l.b16 %v455
        %v680 = vunpack.c.l.b16 %v456
        %v681 = vunpack.c.l.b16 %v457
        %v682 = vunpack.c.l.b16 %v458
        %v683 = vunpack.c.l.b16 %v459
        %v684 = vunpack.c.l.b16 %v460
        %v685 = vunpack.c.l.b16 %v461
        %v686 = vpack.c.b16 %v639, %v638
        %v687 = vpack.c.b16 %v641, %v640
        %v688 = vpack.c.b16 %v643, %v642
        %v689 = vpack.c.b16 %v645, %v644
        %v690 = vpack.c.b16 %v647, %v646
        %v691 = vpack.c.b16 %v649, %v648
        %v692 = vpack.c.b16 %v651, %v650
        %v693 = vpack.c.b16 %v653, %v652
        %v694 = vpack.c.b16 %v655, %v654
        %v695 = vpack.c.b16 %v657, %v656
        %v696 = vpack.c.b16 %v659, %v658
        %v697 = vpack.c.b16 %v661, %v660
        %v698 = vpack.c.b16 %v663, %v662
        %v699 = vpack.c.b16 %v665, %v664
        %v700 = vpack.c.b16 %v667, %v666
        %v701 = vpack.c.b16 %v669, %v668
        %v702 = vpack.c.b16 %v671, %v670
        %v703 = vpack.c.b16 %v673, %v672
        %v704 = vpack.c.b16 %v675, %v674
        %v705 = vpack.c.b16 %v677, %v676
        %v706 = vpack.c.b16 %v679, %v678
        %v707 = vpack.c.b16 %v681, %v680
        %v708 = vpack.c.b16 %v683, %v682
        %v709 = vpack.c.b16 %v685, %v684
        %734 = vmatprep.subr.bf16.mxu0 0
        %735 = vmatpush1.bf16.msra.mxu0 %v693
        %736 = vmatprep.subr.bf16.mxu0 0
        %737 = vmatpush1.bf16.msra.mxu0 %v692
        %738 = vmatprep.subr.bf16.mxu0 0
        %739 = vmatpush1.bf16.msra.mxu0 %v691
        %740 = vmatprep.subr.bf16.mxu0 0
        %741 = vmatpush1.bf16.msra.mxu0 %v690
        %742 = vmatprep.subr.bf16.mxu0 0
        %743 = vmatpush1.bf16.msra.mxu0 %v689
        %744 = vmatprep.subr.bf16.mxu0 0
        %745 = vmatpush1.bf16.msra.mxu0 %v688
        %746 = vmatprep.subr.bf16.mxu0 0
        %747 = vmatpush1.bf16.msra.mxu0 %v687
        %748 = vmatprep.subr.bf16.mxu0 0
        %749 = vmatpush1.bf16.msra.mxu0 %v686
        %750 = vmatprep.subr.bf16.mxu0 0
        %751 = vmatpush2.bf16.msra.mxu0 %v701
        %752 = vmatprep.subr.bf16.mxu0 0
        %753 = vmatpush2.bf16.msra.mxu0 %v700
        %754 = vmatprep.subr.bf16.mxu0 0
        %755 = vmatpush2.bf16.msra.mxu0 %v699
        %756 = vmatprep.subr.bf16.mxu0 0
        %757 = vmatpush2.bf16.msra.mxu0 %v698
        %758 = vmatprep.subr.bf16.mxu0 0
        %759 = vmatpush2.bf16.msra.mxu0 %v697
        %760 = vmatprep.subr.bf16.mxu0 0
        %761 = vmatpush2.bf16.msra.mxu0 %v696
        %762 = vmatprep.subr.bf16.mxu0 0
        %763 = vmatpush2.bf16.msra.mxu0 %v695
        %764 = vmatprep.subr.bf16.mxu0 0
        %765 = vmatpush2.bf16.msra.mxu0 %v694
        %766 = vmatprep.mubr.bf16.mxu0 %v543
        %767 = vmatmul.mubr.bf16.gmra.mxu0 %v542
        %v768 = vpop.f32.mrf.mxu0
        %v769 = vadd.f32 0.0, %v768
        %v770 = vpop.f32.mrf.mxu0
        %v771 = vpop.f32.mrf.mxu0
        %v772 = vadd.f32 0.0, %v771
        %v773 = vpop.f32.mrf.mxu0
        %774 = vmatprep.mubr.bf16.mxu0 %v546
        %775 = vmatmul.mubr.bf16.gmra.mxu0 %v545
        %v776 = vpop.f32.mrf.mxu0
        %v777 = vadd.f32 0.0, %v776
        %v778 = vpop.f32.mrf.mxu0
        %v779 = vpop.f32.mrf.mxu0
        %v780 = vadd.f32 0.0, %v779
        %v781 = vpop.f32.mrf.mxu0
        %782 = vmatprep.mubr.bf16.mxu0 %v549
        %783 = vmatmul.mubr.bf16.gmra.mxu0 %v548
        %v784 = vpop.f32.mrf.mxu0
        %v785 = vadd.f32 0.0, %v784
        %v786 = vpop.f32.mrf.mxu0
        %v787 = vpop.f32.mrf.mxu0
        %v788 = vadd.f32 0.0, %v787
        %v789 = vpop.f32.mrf.mxu0
        %790 = vmatprep.mubr.bf16.mxu0 %v552
        %791 = vmatmul.mubr.bf16.gmra.mxu0 %v551
        %v792 = vpop.f32.mrf.mxu0
        %v793 = vadd.f32 0.0, %v792
        %v794 = vpop.f32.mrf.mxu0
        %v795 = vpop.f32.mrf.mxu0
        %v796 = vadd.f32 0.0, %v795
        %v797 = vpop.f32.mrf.mxu0
        %798 = vmatprep.mubr.bf16.mxu0 %v555
        %799 = vmatmul.mubr.bf16.gmra.mxu0 %v554
        %v800 = vpop.f32.mrf.mxu0
        %v801 = vadd.f32 0.0, %v800
        %v802 = vpop.f32.mrf.mxu0
        %v803 = vpop.f32.mrf.mxu0
        %v804 = vadd.f32 0.0, %v803
        %v805 = vpop.f32.mrf.mxu0
        %806 = vmatprep.mubr.bf16.mxu0 %v558
        %807 = vmatmul.mubr.bf16.gmra.mxu0 %v557
        %v808 = vpop.f32.mrf.mxu0
        %v809 = vadd.f32 0.0, %v808
        %v810 = vpop.f32.mrf.mxu0
        %v811 = vpop.f32.mrf.mxu0
        %v812 = vadd.f32 0.0, %v811
        %v813 = vpop.f32.mrf.mxu0
        %814 = vmatprep.mubr.bf16.mxu0 %v561
        %815 = vmatmul.mubr.bf16.gmra.mxu0 %v560
        %v816 = vpop.f32.mrf.mxu0
        %v817 = vadd.f32 0.0, %v816
        %v818 = vpop.f32.mrf.mxu0
        %v819 = vpop.f32.mrf.mxu0
        %v820 = vadd.f32 0.0, %v819
        %v821 = vpop.f32.mrf.mxu0
        %822 = vmatprep.mubr.bf16.mxu0 %v564
        %823 = vmatmul.mubr.bf16.gmra.mxu0 %v563
        %v824 = vpop.f32.mrf.mxu0
        %v825 = vadd.f32 0.0, %v824
        %v826 = vpop.f32.mrf.mxu0
        %v827 = vpop.f32.mrf.mxu0
        %v828 = vadd.f32 0.0, %v827
        %v829 = vpop.f32.mrf.mxu0
        %830 = vdwg.mxu0
        %831 = vmatprep.subr.bf16.mxu0 0
        %832 = vmatpush1.bf16.msra.mxu0 %v709
        %833 = vmatprep.subr.bf16.mxu0 0
        %834 = vmatpush1.bf16.msra.mxu0 %v708
        %835 = vmatprep.subr.bf16.mxu0 0
        %836 = vmatpush1.bf16.msra.mxu0 %v707
        %837 = vmatprep.subr.bf16.mxu0 0
        %838 = vmatpush1.bf16.msra.mxu0 %v706
        %839 = vmatprep.subr.bf16.mxu0 0
        %840 = vmatpush1.bf16.msra.mxu0 %v705
        %841 = vmatprep.subr.bf16.mxu0 0
        %842 = vmatpush1.bf16.msra.mxu0 %v704
        %843 = vmatprep.subr.bf16.mxu0 0
        %844 = vmatpush1.bf16.msra.mxu0 %v703
        %845 = vmatprep.subr.bf16.mxu0 0
        %846 = vmatpush1.bf16.msra.mxu0 %v702
        %847 = vmatprep.subr.bf16.mxu0 0
        %848 = vmatpush2.bf16.msra.mxu0 0
        %849 = vmatprep.subr.bf16.mxu0 0
        %850 = vmatpush2.bf16.msra.mxu0 0
        %851 = vmatprep.subr.bf16.mxu0 0
        %852 = vmatpush2.bf16.msra.mxu0 0
        %853 = vmatprep.subr.bf16.mxu0 0
        %854 = vmatpush2.bf16.msra.mxu0 0
        %855 = vmatprep.subr.bf16.mxu0 0
        %856 = vmatpush2.bf16.msra.mxu0 0
        %857 = vmatprep.subr.bf16.mxu0 0
        %858 = vmatpush2.bf16.msra.mxu0 0
        %859 = vmatprep.subr.bf16.mxu0 0
        %860 = vmatpush2.bf16.msra.mxu0 0
        %861 = vmatprep.subr.bf16.mxu0 0
        %862 = vmatpush2.bf16.msra.mxu0 0
        %863 = vmatprep.mubr.bf16.mxu0 0
        %864 = vmatmul.mubr.bf16.gmra.mxu0 %v544
        %v865 = vpop.f32.mrf.mxu0
        %v866 = vadd.f32 %v769, %v865
        %v867 = vpop.f32.mrf.mxu0
        %v868 = vpop.f32.mrf.mxu0
        %v869 = vadd.f32 %v772, %v868
        %v870 = vpop.f32.mrf.mxu0
        %871 = vmatprep.mubr.bf16.mxu0 0
        %872 = vmatmul.mubr.bf16.gmra.mxu0 %v547
        %v873 = vpop.f32.mrf.mxu0
        %v874 = vadd.f32 %v777, %v873
        %v875 = vpop.f32.mrf.mxu0
        %v876 = vpop.f32.mrf.mxu0
        %v877 = vadd.f32 %v780, %v876
        %v878 = vpop.f32.mrf.mxu0
        %879 = vmatprep.mubr.bf16.mxu0 0
        %880 = vmatmul.mubr.bf16.gmra.mxu0 %v550
        %v881 = vpop.f32.mrf.mxu0
        %v882 = vadd.f32 %v785, %v881
        %v883 = vpop.f32.mrf.mxu0
        %v884 = vpop.f32.mrf.mxu0
        %v885 = vadd.f32 %v788, %v884
        %v886 = vpop.f32.mrf.mxu0
        %887 = vmatprep.mubr.bf16.mxu0 0
        %888 = vmatmul.mubr.bf16.gmra.mxu0 %v553
        %v889 = vpop.f32.mrf.mxu0
        %v890 = vadd.f32 %v793, %v889
        %v891 = vpop.f32.mrf.mxu0
        %v892 = vpop.f32.mrf.mxu0
        %v893 = vadd.f32 %v796, %v892
        %v894 = vpop.f32.mrf.mxu0
        %895 = vmatprep.mubr.bf16.mxu0 0
        %896 = vmatmul.mubr.bf16.gmra.mxu0 %v556
        %v897 = vpop.f32.mrf.mxu0
        %v898 = vadd.f32 %v801, %v897
        %v899 = vpop.f32.mrf.mxu0
        %v900 = vpop.f32.mrf.mxu0
        %v901 = vadd.f32 %v804, %v900
        %v902 = vpop.f32.mrf.mxu0
        %903 = vmatprep.mubr.bf16.mxu0 0
        %904 = vmatmul.mubr.bf16.gmra.mxu0 %v559
        %v905 = vpop.f32.mrf.mxu0
        %v906 = vadd.f32 %v809, %v905
        %v907 = vpop.f32.mrf.mxu0
        %v908 = vpop.f32.mrf.mxu0
        %v909 = vadd.f32 %v812, %v908
        %v910 = vpop.f32.mrf.mxu0
        %911 = vmatprep.mubr.bf16.mxu0 0
        %912 = vmatmul.mubr.bf16.gmra.mxu0 %v562
        %v913 = vpop.f32.mrf.mxu0
        %v914 = vadd.f32 %v817, %v913
        %v915 = vpop.f32.mrf.mxu0
        %v916 = vpop.f32.mrf.mxu0
        %v917 = vadd.f32 %v820, %v916
        %v918 = vpop.f32.mrf.mxu0
        %919 = vmatprep.mubr.bf16.mxu0 0
        %920 = vmatmul.mubr.bf16.gmra.mxu0 %v565
        %v921 = vpop.f32.mrf.mxu0
        %v922 = vadd.f32 %v825, %v921
        %v923 = vpop.f32.mrf.mxu0
        %v924 = vpop.f32.mrf.mxu0
        %v925 = vadd.f32 %v828, %v924
        %v926 = vpop.f32.mrf.mxu0
        %927 = vdwg.mxu0
        %v928 = vadd.f32 %v366, %v866
        %v929 = vadd.f32 %v367, %v869
        %v930 = vadd.f32 %v368, %v874
        %v931 = vadd.f32 %v369, %v877
        %v932 = vadd.f32 %v370, %v882
        %v933 = vadd.f32 %v371, %v885
        %v934 = vadd.f32 %v372, %v890
        %v935 = vadd.f32 %v373, %v893
        %v936 = vadd.f32 %v374, %v898
        %v937 = vadd.f32 %v375, %v901
        %v938 = vadd.f32 %v376, %v906
        %v939 = vadd.f32 %v377, %v909
        %v940 = vadd.f32 %v378, %v914
        %v941 = vadd.f32 %v379, %v917
        %v942 = vadd.f32 %v380, %v922
        %v943 = vadd.f32 %v381, %v925
        %944 = vst [vmem:[#allocation2] sm:$0xff] %v928
        %945 = vst [vmem:[#allocation2 + $0x8] sm:$0xff] %v929
        %946 = vst [vmem:[#allocation2 + $0x10] sm:$0xff] %v930
        %947 = vst [vmem:[#allocation2 + $0x18] sm:$0xff] %v931
        %948 = vst [vmem:[#allocation2 + $0x20] sm:$0xff] %v932
        %949 = vst [vmem:[#allocation2 + $0x28] sm:$0xff] %v933
        %950 = vst [vmem:[#allocation2 + $0x30] sm:$0xff] %v934
        %951 = vst [vmem:[#allocation2 + $0x38] sm:$0xff] %v935
        %952 = vst [vmem:[#allocation2 + $0x40] sm:$0xff] %v936
        %953 = vst [vmem:[#allocation2 + $0x48] sm:$0xff] %v937
        %954 = vst [vmem:[#allocation2 + $0x50] sm:$0xff] %v938
        %955 = vst [vmem:[#allocation2 + $0x58] sm:$0xff] %v939
        %956 = vst [vmem:[#allocation2 + $0x60] sm:$0xff] %v940
        %957 = vst [vmem:[#allocation2 + $0x68] sm:$0xff] %v941
        %958 = vst [vmem:[#allocation2 + $0x70] sm:$0xff] %v942
        %959 = vst [vmem:[#allocation2 + $0x78] sm:$0xff] %v943
        %p960 = scmp.eq.s32.totalorder %s21, 2
        // Predicated region
        $region63: #{generator_forward.31} parent=53 // pred_check
          %p961 = pneg %p960
        $region64: #{generator_forward.31} parent=53 // pred_check_branch
          %963 = sbr.rel (%p961) target = $region66
        $region65: #{generator_forward.31} parent=53 // pred_region
          %v964 = vld [vmem:[#allocation2] sm:$0xff]
          %v965 = vld [vmem:[#allocation2 + $0x8] sm:$0xff]
          %v966 = vld [vmem:[#allocation2 + $0x10] sm:$0xff]
          %v967 = vld [vmem:[#allocation2 + $0x18] sm:$0xff]
          %v968 = vld [vmem:[#allocation2 + $0x20] sm:$0xff]
          %v969 = vld [vmem:[#allocation2 + $0x28] sm:$0xff]
          %v970 = vld [vmem:[#allocation2 + $0x30] sm:$0xff]
          %v971 = vld [vmem:[#allocation2 + $0x38] sm:$0xff]
          %v972 = vld [vmem:[#allocation2 + $0x40] sm:$0xff]
          %v973 = vld [vmem:[#allocation2 + $0x48] sm:$0xff]
          %v974 = vld [vmem:[#allocation2 + $0x50] sm:$0xff]
          %v975 = vld [vmem:[#allocation2 + $0x58] sm:$0xff]
          %v976 = vld [vmem:[#allocation2 + $0x60] sm:$0xff]
          %v977 = vld [vmem:[#allocation2 + $0x68] sm:$0xff]
          %v978 = vld [vmem:[#allocation2 + $0x70] sm:$0xff]
          %v979 = vld [vmem:[#allocation2 + $0x78] sm:$0xff]
          %v980 = vld [vmem:[%s335] sm:$0x1]
          %v982 = vlaneseq
          %v983 = vshrl.u32 %v982, 7
          %v984 = vsub.s32 0, %v983
          %v985 = vrot.slane %v980, %v984
          %v987 = vadd.f32 %v964, %v985
          %v988 = vadd.f32 %v965, %v985
          %v989 = vadd.f32 %v966, %v985
          %v990 = vadd.f32 %v967, %v985
          %v991 = vadd.f32 %v968, %v985
          %v992 = vadd.f32 %v969, %v985
          %v993 = vadd.f32 %v970, %v985
          %v994 = vadd.f32 %v971, %v985
          %v995 = vadd.f32 %v972, %v985
          %v996 = vadd.f32 %v973, %v985
          %v997 = vadd.f32 %v974, %v985
          %v998 = vadd.f32 %v975, %v985
          %v999 = vadd.f32 %v976, %v985
          %v1000 = vadd.f32 %v977, %v985
          %v1001 = vadd.f32 %v978, %v985
          %v1002 = vadd.f32 %v979, %v985
          %v1003 = vpack.c.bf16 %v988, %v987
          %v1004 = vpack.c.bf16 %v990, %v989
          %v1005 = vpack.c.bf16 %v992, %v991
          %v1006 = vpack.c.bf16 %v994, %v993
          %v1007 = vpack.c.bf16 %v996, %v995
          %v1008 = vpack.c.bf16 %v998, %v997
          %v1009 = vpack.c.bf16 %v1000, %v999
          %v1010 = vpack.c.bf16 %v1002, %v1001
          %v1019 = vunpack.c.l.b16 %v1003
          %v1020 = vunpack.c.h.b16 %v1003
          %v1021 = vunpack.c.l.b16 %v1004
          %v1022 = vunpack.c.h.b16 %v1004
          %v1023 = vunpack.c.l.b16 %v1005
          %v1024 = vunpack.c.h.b16 %v1005
          %v1025 = vunpack.c.l.b16 %v1006
          %v1026 = vunpack.c.h.b16 %v1006
          %v1027 = vunpack.c.l.b16 %v1007
          %v1028 = vunpack.c.h.b16 %v1007
          %v1029 = vunpack.c.l.b16 %v1008
          %v1030 = vunpack.c.h.b16 %v1008
          %v1031 = vunpack.c.l.b16 %v1009
          %v1032 = vunpack.c.h.b16 %v1009
          %v1033 = vunpack.c.l.b16 %v1010
          %v1034 = vunpack.c.h.b16 %v1010
          %v1035 = vpack.c.b16 %v1019, %v1019
          %v1036 = vpack.c.b16 %v1020, %v1020
          %v1037 = vpack.c.b16 %v1021, %v1021
          %v1038 = vpack.c.b16 %v1022, %v1022
          %v1039 = vpack.c.b16 %v1023, %v1023
          %v1040 = vpack.c.b16 %v1024, %v1024
          %v1041 = vpack.c.b16 %v1025, %v1025
          %v1042 = vpack.c.b16 %v1026, %v1026
          %v1043 = vpack.c.b16 %v1027, %v1027
          %v1044 = vpack.c.b16 %v1028, %v1028
          %v1045 = vpack.c.b16 %v1029, %v1029
          %v1046 = vpack.c.b16 %v1030, %v1030
          %v1047 = vpack.c.b16 %v1031, %v1031
          %v1048 = vpack.c.b16 %v1032, %v1032
          %v1049 = vpack.c.b16 %v1033, %v1033
          %v1050 = vpack.c.b16 %v1034, %v1034
          %1067 = vst [vmem:[%s343] sm:$0xf] %v1035
          %1068 = vst [vmem:[%s343 + $0x4] sm:$0xf] %v1036
          %1069 = vst [vmem:[%s343 + $0x8] sm:$0xf] %v1037
          %1070 = vst [vmem:[%s343 + $0xc] sm:$0xf] %v1038
          %1071 = vst [vmem:[%s343 + $0x10] sm:$0xf] %v1039
          %1072 = vst [vmem:[%s343 + $0x14] sm:$0xf] %v1040
          %1073 = vst [vmem:[%s343 + $0x18] sm:$0xf] %v1041
          %1074 = vst [vmem:[%s343 + $0x1c] sm:$0xf] %v1042
          %1075 = vst [vmem:[%s343 + $0x20] sm:$0xf] %v1043
          %1076 = vst [vmem:[%s343 + $0x24] sm:$0xf] %v1044
          %1077 = vst [vmem:[%s343 + $0x28] sm:$0xf] %v1045
          %1078 = vst [vmem:[%s343 + $0x2c] sm:$0xf] %v1046
          %1079 = vst [vmem:[%s343 + $0x30] sm:$0xf] %v1047
          %1080 = vst [vmem:[%s343 + $0x34] sm:$0xf] %v1048
          %1081 = vst [vmem:[%s343 + $0x38] sm:$0xf] %v1049
          %1082 = vst [vmem:[%s343 + $0x3c] sm:$0xf] %v1050
        $region66: #{generator_forward.31} parent=53 // pred_fallthru
          _
        %s1083 = smul.u32 16, %s19
        %p1084 = scmp.lt.s32.totalorder %s1083, 15
        %s1085 = scalar_select %p1084, %s1083, 15
        %p1086 = scmp.lt.s32.totalorder %s20, 0
        %s1087 = scalar_select %p1086, %s20, 0
        %s1088 = sadd.s32 %s1087, %s1085
        %s1089 = smul.addr %s1088, 4
        %s1090 = scalar_lea.vmem %s3, %s1089
        // Predicated region
        $region67: #{generator_forward.31} parent=53 // pred_check
          %p1091 = pneg %p135
        $region68: #{generator_forward.31} parent=53 // pred_check_branch
          %1093 = sbr.rel (%p1091) target = $region70
        $region69: #{generator_forward.31} parent=53 // pred_region
          %s1094 = smul.u32 16, %s19
        $region70: #{generator_forward.31} parent=53 // pred_fallthru
          _
        // Predicated region
        $region71: #{generator_forward.31} parent=53 // pred_check
          %p1095 = pneg %p135
        $region72: #{generator_forward.31} parent=53 // pred_check_branch
          %1097 = sbr.rel (%p1095) target = $region74
        $region73: #{generator_forward.31} parent=53 // pred_region
          %s1098 = smul.u32 16, %s19
          %p1099 = scmp.lt.s32.totalorder %s1098, 15
          %s1100 = scalar_select %p1099, %s1098, 15
          %p1101 = scmp.lt.s32.totalorder %s20, 0
          %s1102 = scalar_select %p1101, %s20, 0
          %s1103 = sadd.s32 %s1102, %s1100
          %s1104 = smul.addr %s1103, 4
          %s1105 = scalar_lea.vmem %s3, %s1104
        $region74: #{generator_forward.31} parent=53 // pred_fallthru
          _
      $region54: #{generator_forward.31} parent=5 // pred_fallthru
        _
      %p1106 = scmp.le.s32.totalorder 2, %s9
      // Predicated region
      $region75: #{generator_forward.31} parent=5 // pred_check
        %p1107 = pneg %p1106
      $region76: #{generator_forward.31} parent=5 // pred_check_branch
        %1109 = sbr.rel (%p1107) target = $region78
      $region77: #{generator_forward.31} parent=5 // pred_region
        %s1110 = ssub.s32 %s9, 2
      $region78: #{generator_forward.31} parent=5 // pred_fallthru
        _
    $region6: #{generator_forward.31} parent=1 // loop_footer
      %s13 = sadd.s32 1, %s9
    $region7: #{generator_forward.31} parent=1 // loop_footer_branch
      %8 = sbr.rel target = $region3
    $region8: #{generator_forward.31} parent=1 // loop_exit
      _

// kernel: generator_forward.32
$region0: #{generator_forward.32}
  #allocation0 [shape = 'u32[]', space=smem, size = 0x4, offset = 0x4, fixed_abs, tag = 'smem constant byte address 0x4 - core index']
  #allocation1 [shape = 'u32[144,128]{1,0:T(1,128)}', space=vmem, size = 0x12000, scoped, tag = 'internal scratch']
  %s0 = inlined_call_operand.vmem [shape: bf16[2,64,128], index: 0, kind: input, shape index: {}]
  %s1 = inlined_call_operand.vmem [shape: f32[2,1,128], index: 1, kind: output, shape index: {0}]
  %s2 = inlined_call_operand.vmem [shape: f32[2,1,128], index: 2, kind: output, shape index: {1}]
  %3 = xla_tuple %s1, %s2
  %s4 = sld [smem:[#allocation0]]
  $region49: #{generator_forward.32} parent=0
    _
  %s6 = ssub.s32 1, %s4
  %s7 = scalar_select 0, %s6, %s4
  loop: start=0, step=1, limit=4
  $region2: #{generator_forward.32} parent=0 // loop_pre_header
    _
  $region3: #{generator_forward.32} parent=0 // loop_header
    %s9 = sphi 0, %s13
    %p10 = scmp.ge.s32.totalorder %s9, 4
    %s16 = sphi 0, %s28
    %s17 = sphi 0, %s24
    %s18 = sphi 0, %s16
    %s19 = sphi 0, %s17
    %s20 = sphi 0, %s18
    %s21 = sphi 0, %s19
    %s33 = sphi 0, %s35
    %s36 = sphi 0, %s33
    %s37 = sphi 0, %s36
    %s53 = sphi 0, %s37
    %s59 = sphi 0, %s61
    %s62 = sphi 0, %s59
    %s63 = sphi 0, %s62
    %s79 = sphi 0, %s63
    %s85 = sphi 0, %s87
    %s88 = sphi 0, %s85
    %s89 = sphi 0, %s88
    %s105 = sphi 0, %s89
  $region4: #{generator_forward.32} parent=0 // loop_header_branch
    %12 = sbr.rel (%p10) target = $region8
  $region5: #{generator_forward.32} parent=0 // loop_body
    %s14 = ssub.s32 %s9, 1
    %s15 = ssub.s32 %s9, 2
    %s22 = sadd.s32 1, %s17
    %p23 = scmp.ge.s32.totalorder %s22, 1
    %s24 = scalar_select %p23, 0, %s22
    %s25 = sadd.s32 1, %s16
    %s26 = scalar_select %p23, %s25, %s16
    %p27 = scmp.ge.s32.totalorder %s26, 2
    %s28 = scalar_select %p27, 0, %s26
    %s29 = ssub.s32 %s16, %s28
    %s30 = ssub.s32 %s17, %s24
    %s31 = sor.u32 %s29, %s30
    %p32 = scmp.eq.s32.totalorder %s31, 0
    %s34 = sadd.s32 %s33, 1
    %s35 = scalar_select %p32, %s33, %s34
    %p38 = pneg %p32
    %p39 = scmp.eq.s32.totalorder %s9, 1
    %p40 = por %p38, %p39
    %p41 = scmp.ne.s32.totalorder %s33, %s36
    %p42 = scmp.eq.s32.totalorder %s9, 0
    %p43 = por %p41, %p42
    %p44 = scmp.ne.s32.totalorder %s33, %s36
    %p45 = scmp.eq.s32.totalorder %s14, 1
    %p46 = por %p44, %p45
    %p47 = scmp.ne.s32.totalorder %s36, %s37
    %p48 = scmp.eq.s32.totalorder %s14, 0
    %p49 = por %p47, %p48
    %p50 = scmp.ne.s32.totalorder %s36, %s37
    %p51 = scmp.eq.s32.totalorder %s15, 1
    %p52 = por %p50, %p51
    %p54 = scmp.ne.s32.totalorder %s37, %s53
    %p55 = scmp.eq.s32.totalorder %s15, 0
    %p56 = por %p54, %p55
    %s57 = ssub.s32 %s16, %s28
    %p58 = scmp.eq.s32.totalorder %s57, 0
    %s60 = sadd.s32 %s59, 1
    %s61 = scalar_select %p58, %s59, %s60
    %p64 = pneg %p58
    %p65 = scmp.eq.s32.totalorder %s9, 1
    %p66 = por %p64, %p65
    %p67 = scmp.ne.s32.totalorder %s59, %s62
    %p68 = scmp.eq.s32.totalorder %s9, 0
    %p69 = por %p67, %p68
    %p70 = scmp.ne.s32.totalorder %s59, %s62
    %p71 = scmp.eq.s32.totalorder %s14, 1
    %p72 = por %p70, %p71
    %p73 = scmp.ne.s32.totalorder %s62, %s63
    %p74 = scmp.eq.s32.totalorder %s14, 0
    %p75 = por %p73, %p74
    %p76 = scmp.ne.s32.totalorder %s62, %s63
    %p77 = scmp.eq.s32.totalorder %s15, 1
    %p78 = por %p76, %p77
    %p80 = scmp.ne.s32.totalorder %s63, %s79
    %p81 = scmp.eq.s32.totalorder %s15, 0
    %p82 = por %p80, %p81
    %s83 = ssub.s32 %s16, %s28
    %p84 = scmp.eq.s32.totalorder %s83, 0
    %s86 = sadd.s32 %s85, 1
    %s87 = scalar_select %p84, %s85, %s86
    %p90 = pneg %p84
    %p91 = scmp.eq.s32.totalorder %s9, 1
    %p92 = por %p90, %p91
    %p93 = scmp.ne.s32.totalorder %s85, %s88
    %p94 = scmp.eq.s32.totalorder %s9, 0
    %p95 = por %p93, %p94
    %p96 = scmp.ne.s32.totalorder %s85, %s88
    %p97 = scmp.eq.s32.totalorder %s14, 1
    %p98 = por %p96, %p97
    %p99 = scmp.ne.s32.totalorder %s88, %s89
    %p100 = scmp.eq.s32.totalorder %s14, 0
    %p101 = por %p99, %p100
    %p102 = scmp.ne.s32.totalorder %s88, %s89
    %p103 = scmp.eq.s32.totalorder %s15, 1
    %p104 = por %p102, %p103
    %p106 = scmp.ne.s32.totalorder %s89, %s105
    %p107 = scmp.eq.s32.totalorder %s15, 0
    %p108 = por %p106, %p107
    %p109 = scmp.le.s32.totalorder 1, %s9
    %p110 = scmp.lt.s32.totalorder %s9, 3
    %p111 = pnand %p109, %p110
    %p112 = pneg %p111
    // Predicated region
    $region9: #{generator_forward.32} parent=5 // pred_check
      _
    $region10: #{generator_forward.32} parent=5 // pred_check_branch
      %114 = sbr.rel (%p111) target = $region12
    $region11: #{generator_forward.32} parent=5 // pred_region
      %s115 = ssub.s32 %s9, 1
    $region12: #{generator_forward.32} parent=5 // pred_fallthru
      _
    %p116 = scmp.lt.s32.totalorder %s9, 2
    // Predicated region
    $region13: #{generator_forward.32} parent=5 // pred_check
      %p117 = pneg %p116
    $region14: #{generator_forward.32} parent=5 // pred_check_branch
      %119 = sbr.rel (%p117) target = $region16
    $region15: #{generator_forward.32} parent=5 // pred_region
      // Predicated region
      $region17: #{generator_forward.32} parent=15 // pred_check
        %p120 = pneg %p43
      $region18: #{generator_forward.32} parent=15 // pred_check_branch
        %122 = sbr.rel (%p120) target = $region20
      $region19: #{generator_forward.32} parent=15 // pred_region
        %s123 = smul.u32 8, %s17
        %p124 = scmp.lt.s32.totalorder %s16, 1
        %s125 = scalar_select %p124, %s16, 1
        %p126 = scmp.lt.s32.totalorder %s123, 7
        %s127 = scalar_select %p126, %s123, 7
        %s128 = smul.addr %s125, 8
        %s129 = sadd.s32 %s127, %s128
        %s130 = smul.addr %s129, 4
        %s131 = scalar_lea.vmem %s0, %s130
        %s132 = smul.u32 8, %s17
      $region20: #{generator_forward.32} parent=15 // pred_fallthru
        _
    $region16: #{generator_forward.32} parent=5 // pred_fallthru
      _
    %p133 = scmp.le.s32.totalorder 1, %s9
    %p134 = scmp.lt.s32.totalorder %s9, 3
    %p135 = pnand %p133, %p134
    %p136 = pneg %p135
    // Predicated region
    $region21: #{generator_forward.32} parent=5 // pred_check
      _
    $region22: #{generator_forward.32} parent=5 // pred_check_branch
      %138 = sbr.rel (%p135) target = $region24
    $region23: #{generator_forward.32} parent=5 // pred_region
      %s139 = ssub.s32 %s9, 1
      %s140 = smul.u32 8, %s19
      %p141 = scmp.lt.s32.totalorder %s18, 1
      %s142 = scalar_select %p141, %s18, 1
      %p143 = scmp.lt.s32.totalorder %s140, 7
      %s144 = scalar_select %p143, %s140, 7
      %s145 = smul.addr %s142, 8
      %s146 = sadd.s32 %s144, %s145
      %s147 = smul.addr %s146, 4
      %s148 = scalar_lea.vmem %s0, %s147
      %p149 = pneg %p49
      %p150 = pneg %p46
      %p151 = pneg %p75
      %p152 = pneg %p72
      %p153 = scmp.lt.s32.totalorder %s18, 1
      %s154 = scalar_select %p153, %s18, 1
      %s155 = scalar_lea.vmem %s1, %s154
      %p156 = pneg %p101
      %p157 = pneg %p98
      %p158 = scmp.lt.s32.totalorder %s18, 1
      %s159 = scalar_select %p158, %s18, 1
      %s160 = scalar_lea.vmem %s2, %s159
      %s161 = smul.u32 8, %s19
      %p162 = scmp.lt.s32.totalorder %s18, 1
      %s163 = scalar_select %p162, %s18, 1
      %p164 = scmp.lt.s32.totalorder %s161, 7
      %s165 = scalar_select %p164, %s161, 7
      %s166 = smul.addr %s163, 8
      %s167 = sadd.s32 %s165, %s166
      %s168 = smul.addr %s167, 4
      %s169 = scalar_lea.vmem %s0, %s168
      %s170 = smul.u32 8, %s19
      %p171 = scmp.lt.s32.totalorder %s18, 1
      %s172 = scalar_select %p171, %s18, 1
      %s173 = scalar_lea.vmem %s1, %s172
      %p174 = scmp.lt.s32.totalorder %s18, 1
      %s175 = scalar_select %p174, %s18, 1
      %s176 = scalar_lea.vmem %s2, %s175
      %p177 = scmp.eq.s32.totalorder %s19, 0
      // Predicated region
      $region25: #{generator_forward.32} parent=23 // pred_check
        %p178 = pneg %p177
      $region26: #{generator_forward.32} parent=23 // pred_check_branch
        %180 = sbr.rel (%p178) target = $region28
      $region27: #{generator_forward.32} parent=23 // pred_region
        %181 = vst [vmem:[%s173] sm:$0x1] 0.0
        %182 = vst [vmem:[%s176] sm:$0x1] 0.0
      $region28: #{generator_forward.32} parent=23 // pred_fallthru
        _
      %v183 = vld [vmem:[%s169] sm:$0xf]
      %v184 = vld [vmem:[%s169 + $0x4] sm:$0xf]
      %v185 = vld [vmem:[%s169 + $0x8] sm:$0xf]
      %v186 = vld [vmem:[%s169 + $0xc] sm:$0xf]
      %v187 = vld [vmem:[%s169 + $0x10] sm:$0xf]
      %v188 = vld [vmem:[%s169 + $0x14] sm:$0xf]
      %v189 = vld [vmem:[%s169 + $0x18] sm:$0xf]
      %v190 = vld [vmem:[%s169 + $0x1c] sm:$0xf]
      %v191 = vunpack.c.l.bf16 %v183
      %v192 = vunpack.c.l.bf16 %v184
      %v193 = vunpack.c.l.bf16 %v185
      %v194 = vunpack.c.l.bf16 %v186
      %v195 = vunpack.c.l.bf16 %v187
      %v196 = vunpack.c.l.bf16 %v188
      %v197 = vunpack.c.l.bf16 %v189
      %v198 = vunpack.c.l.bf16 %v190
      %v199 = vld [vmem:[%s173] sm:$0x1]
      %v200 = vadd.f32 %v191, %v192
      %v201 = vadd.f32 %v200, %v193
      %v202 = vadd.f32 %v201, %v194
      %v203 = vadd.f32 %v202, %v195
      %v204 = vadd.f32 %v203, %v196
      %v205 = vadd.f32 %v204, %v197
      %v206 = vadd.f32 %v205, %v198
      %v207 = vrot.slane %v206, 4
      %v208 = vadd.f32 %v206, %v207
      %v209 = vrot.slane %v208, 2
      %v210 = vadd.f32 %v208, %v209
      %v211 = vrot.slane %v210, 1
      %v212 = vadd.f32 %v210, %v211
      %v213 = vadd.f32 %v199, %v212
      %214 = vst [vmem:[%s173] sm:$0x1] %v213
      %v215 = vld [vmem:[%s176] sm:$0x1]
      %v216 = vmul.f32 %v191, %v191
      %v217 = vmul.f32 %v192, %v192
      %v218 = vmul.f32 %v193, %v193
      %v219 = vmul.f32 %v194, %v194
      %v220 = vmul.f32 %v195, %v195
      %v221 = vmul.f32 %v196, %v196
      %v222 = vmul.f32 %v197, %v197
      %v223 = vmul.f32 %v198, %v198
      %v224 = vadd.f32 %v216, %v217
      %v225 = vadd.f32 %v224, %v218
      %v226 = vadd.f32 %v225, %v219
      %v227 = vadd.f32 %v226, %v220
      %v228 = vadd.f32 %v227, %v221
      %v229 = vadd.f32 %v228, %v222
      %v230 = vadd.f32 %v229, %v223
      %v231 = vrot.slane %v230, 4
      %v232 = vadd.f32 %v230, %v231
      %v233 = vrot.slane %v232, 2
      %v234 = vadd.f32 %v232, %v233
      %v235 = vrot.slane %v234, 1
      %v236 = vadd.f32 %v234, %v235
      %v237 = vadd.f32 %v215, %v236
      %238 = vst [vmem:[%s176] sm:$0x1] %v237
      %p239 = scmp.lt.s32.totalorder %s18, 1
      %s240 = scalar_select %p239, %s18, 1
      %s241 = scalar_lea.vmem %s1, %s240
      %p242 = scmp.lt.s32.totalorder %s18, 1
      %s243 = scalar_select %p242, %s18, 1
      %s244 = scalar_lea.vmem %s2, %s243
      // Predicated region
      $region29: #{generator_forward.32} parent=23 // pred_check
        %p245 = pneg %p72
      $region30: #{generator_forward.32} parent=23 // pred_check_branch
        %247 = sbr.rel (%p245) target = $region32
      $region31: #{generator_forward.32} parent=23 // pred_region
        _
      $region32: #{generator_forward.32} parent=23 // pred_fallthru
        _
      // Predicated region
      $region33: #{generator_forward.32} parent=23 // pred_check
        %p248 = pneg %p98
      $region34: #{generator_forward.32} parent=23 // pred_check_branch
        %250 = sbr.rel (%p248) target = $region36
      $region35: #{generator_forward.32} parent=23 // pred_region
        _
      $region36: #{generator_forward.32} parent=23 // pred_fallthru
        _
    $region24: #{generator_forward.32} parent=5 // pred_fallthru
      _
    %p251 = scmp.le.s32.totalorder 2, %s9
    // Predicated region
    $region37: #{generator_forward.32} parent=5 // pred_check
      %p252 = pneg %p251
    $region38: #{generator_forward.32} parent=5 // pred_check_branch
      %254 = sbr.rel (%p252) target = $region40
    $region39: #{generator_forward.32} parent=5 // pred_region
      %s255 = ssub.s32 %s9, 2
      // Predicated region
      $region41: #{generator_forward.32} parent=39 // pred_check
        %p256 = pneg %p78
      $region42: #{generator_forward.32} parent=39 // pred_check_branch
        %258 = sbr.rel (%p256) target = $region44
      $region43: #{generator_forward.32} parent=39 // pred_region
        %p259 = scmp.lt.s32.totalorder %s20, 1
        %s260 = scalar_select %p259, %s20, 1
        %s261 = scalar_lea.vmem %s1, %s260
      $region44: #{generator_forward.32} parent=39 // pred_fallthru
        _
      // Predicated region
      $region45: #{generator_forward.32} parent=39 // pred_check
        %p262 = pneg %p104
      $region46: #{generator_forward.32} parent=39 // pred_check_branch
        %264 = sbr.rel (%p262) target = $region48
      $region47: #{generator_forward.32} parent=39 // pred_region
        %p265 = scmp.lt.s32.totalorder %s20, 1
        %s266 = scalar_select %p265, %s20, 1
        %s267 = scalar_lea.vmem %s2, %s266
      $region48: #{generator_forward.32} parent=39 // pred_fallthru
        _
    $region40: #{generator_forward.32} parent=5 // pred_fallthru
      _
  $region6: #{generator_forward.32} parent=0 // loop_footer
    %s13 = sadd.s32 1, %s9
  $region7: #{generator_forward.32} parent=0 // loop_footer_branch
    %8 = sbr.rel target = $region3
  $region8: #{generator_forward.32} parent=0 // loop_exit
    _

// kernel: generator_forward.33
$region0: #{generator_forward.33}
  #allocation0 [shape = 'u32[]', space=smem, size = 0x4, offset = 0x4, fixed_abs, tag = 'smem constant byte address 0x4 - core index']
  #allocation1 [shape = 'u32[144,128]{1,0:T(1,128)}', space=vmem, size = 0x12000, scoped, tag = 'internal scratch']
  %s0 = inlined_call_operand.vmem [shape: bf16[2,64,128], index: 0, kind: input, shape index: {}]
  %s1 = inlined_call_operand.vmem [shape: f32[2,1,128], index: 1, kind: input, shape index: {}]
  %s2 = inlined_call_operand.vmem [shape: f32[2,1,128], index: 2, kind: input, shape index: {}]
  %s3 = inlined_call_operand.vmem [shape: bf16[2,64,128], index: 3, kind: output, shape index: {}]
  %s4 = sld [smem:[#allocation0]]
  $region45: #{generator_forward.33} parent=0
    _
  %s6 = ssub.s32 1, %s4
  %s7 = scalar_select 0, %s6, %s4
  loop: start=0, step=1, limit=4
  $region2: #{generator_forward.33} parent=0 // loop_pre_header
    _
  $region3: #{generator_forward.33} parent=0 // loop_header
    %s9 = sphi 0, %s13
    %p10 = scmp.ge.s32.totalorder %s9, 4
    %s16 = sphi 0, %s28
    %s17 = sphi 0, %s24
    %s18 = sphi 0, %s16
    %s19 = sphi 0, %s17
    %s20 = sphi 0, %s18
    %s21 = sphi 0, %s19
    %s33 = sphi 0, %s35
    %s36 = sphi 0, %s33
    %s37 = sphi 0, %s36
    %s53 = sphi 0, %s37
    %s59 = sphi 0, %s61
    %s62 = sphi 0, %s59
    %s63 = sphi 0, %s62
    %s79 = sphi 0, %s63
    %s85 = sphi 0, %s87
    %s88 = sphi 0, %s85
    %s89 = sphi 0, %s88
    %s105 = sphi 0, %s89
    %s113 = sphi 0, %s115
    %s116 = sphi 0, %s113
    %s117 = sphi 0, %s116
    %s133 = sphi 0, %s117
  $region4: #{generator_forward.33} parent=0 // loop_header_branch
    %12 = sbr.rel (%p10) target = $region8
  $region5: #{generator_forward.33} parent=0 // loop_body
    %s14 = ssub.s32 %s9, 1
    %s15 = ssub.s32 %s9, 2
    %s22 = sadd.s32 1, %s17
    %p23 = scmp.ge.s32.totalorder %s22, 1
    %s24 = scalar_select %p23, 0, %s22
    %s25 = sadd.s32 1, %s16
    %s26 = scalar_select %p23, %s25, %s16
    %p27 = scmp.ge.s32.totalorder %s26, 2
    %s28 = scalar_select %p27, 0, %s26
    %s29 = ssub.s32 %s16, %s28
    %s30 = ssub.s32 %s17, %s24
    %s31 = sor.u32 %s29, %s30
    %p32 = scmp.eq.s32.totalorder %s31, 0
    %s34 = sadd.s32 %s33, 1
    %s35 = scalar_select %p32, %s33, %s34
    %p38 = pneg %p32
    %p39 = scmp.eq.s32.totalorder %s9, 1
    %p40 = por %p38, %p39
    %p41 = scmp.ne.s32.totalorder %s33, %s36
    %p42 = scmp.eq.s32.totalorder %s9, 0
    %p43 = por %p41, %p42
    %p44 = scmp.ne.s32.totalorder %s33, %s36
    %p45 = scmp.eq.s32.totalorder %s14, 1
    %p46 = por %p44, %p45
    %p47 = scmp.ne.s32.totalorder %s36, %s37
    %p48 = scmp.eq.s32.totalorder %s14, 0
    %p49 = por %p47, %p48
    %p50 = scmp.ne.s32.totalorder %s36, %s37
    %p51 = scmp.eq.s32.totalorder %s15, 1
    %p52 = por %p50, %p51
    %p54 = scmp.ne.s32.totalorder %s37, %s53
    %p55 = scmp.eq.s32.totalorder %s15, 0
    %p56 = por %p54, %p55
    %s57 = ssub.s32 %s16, %s28
    %p58 = scmp.eq.s32.totalorder %s57, 0
    %s60 = sadd.s32 %s59, 1
    %s61 = scalar_select %p58, %s59, %s60
    %p64 = pneg %p58
    %p65 = scmp.eq.s32.totalorder %s9, 1
    %p66 = por %p64, %p65
    %p67 = scmp.ne.s32.totalorder %s59, %s62
    %p68 = scmp.eq.s32.totalorder %s9, 0
    %p69 = por %p67, %p68
    %p70 = scmp.ne.s32.totalorder %s59, %s62
    %p71 = scmp.eq.s32.totalorder %s14, 1
    %p72 = por %p70, %p71
    %p73 = scmp.ne.s32.totalorder %s62, %s63
    %p74 = scmp.eq.s32.totalorder %s14, 0
    %p75 = por %p73, %p74
    %p76 = scmp.ne.s32.totalorder %s62, %s63
    %p77 = scmp.eq.s32.totalorder %s15, 1
    %p78 = por %p76, %p77
    %p80 = scmp.ne.s32.totalorder %s63, %s79
    %p81 = scmp.eq.s32.totalorder %s15, 0
    %p82 = por %p80, %p81
    %s83 = ssub.s32 %s16, %s28
    %p84 = scmp.eq.s32.totalorder %s83, 0
    %s86 = sadd.s32 %s85, 1
    %s87 = scalar_select %p84, %s85, %s86
    %p90 = pneg %p84
    %p91 = scmp.eq.s32.totalorder %s9, 1
    %p92 = por %p90, %p91
    %p93 = scmp.ne.s32.totalorder %s85, %s88
    %p94 = scmp.eq.s32.totalorder %s9, 0
    %p95 = por %p93, %p94
    %p96 = scmp.ne.s32.totalorder %s85, %s88
    %p97 = scmp.eq.s32.totalorder %s14, 1
    %p98 = por %p96, %p97
    %p99 = scmp.ne.s32.totalorder %s88, %s89
    %p100 = scmp.eq.s32.totalorder %s14, 0
    %p101 = por %p99, %p100
    %p102 = scmp.ne.s32.totalorder %s88, %s89
    %p103 = scmp.eq.s32.totalorder %s15, 1
    %p104 = por %p102, %p103
    %p106 = scmp.ne.s32.totalorder %s89, %s105
    %p107 = scmp.eq.s32.totalorder %s15, 0
    %p108 = por %p106, %p107
    %s109 = ssub.s32 %s16, %s28
    %s110 = ssub.s32 %s17, %s24
    %s111 = sor.u32 %s109, %s110
    %p112 = scmp.eq.s32.totalorder %s111, 0
    %s114 = sadd.s32 %s113, 1
    %s115 = scalar_select %p112, %s113, %s114
    %p118 = pneg %p112
    %p119 = scmp.eq.s32.totalorder %s9, 1
    %p120 = por %p118, %p119
    %p121 = scmp.ne.s32.totalorder %s113, %s116
    %p122 = scmp.eq.s32.totalorder %s9, 0
    %p123 = por %p121, %p122
    %p124 = scmp.ne.s32.totalorder %s113, %s116
    %p125 = scmp.eq.s32.totalorder %s14, 1
    %p126 = por %p124, %p125
    %p127 = scmp.ne.s32.totalorder %s116, %s117
    %p128 = scmp.eq.s32.totalorder %s14, 0
    %p129 = por %p127, %p128
    %p130 = scmp.ne.s32.totalorder %s116, %s117
    %p131 = scmp.eq.s32.totalorder %s15, 1
    %p132 = por %p130, %p131
    %p134 = scmp.ne.s32.totalorder %s117, %s133
    %p135 = scmp.eq.s32.totalorder %s15, 0
    %p136 = por %p134, %p135
    %p137 = scmp.le.s32.totalorder 1, %s9
    %p138 = scmp.lt.s32.totalorder %s9, 3
    %p139 = pnand %p137, %p138
    %p140 = pneg %p139
    // Predicated region
    $region9: #{generator_forward.33} parent=5 // pred_check
      _
    $region10: #{generator_forward.33} parent=5 // pred_check_branch
      %142 = sbr.rel (%p139) target = $region12
    $region11: #{generator_forward.33} parent=5 // pred_region
      %s143 = ssub.s32 %s9, 1
    $region12: #{generator_forward.33} parent=5 // pred_fallthru
      _
    %p144 = scmp.lt.s32.totalorder %s9, 2
    // Predicated region
    $region13: #{generator_forward.33} parent=5 // pred_check
      %p145 = pneg %p144
    $region14: #{generator_forward.33} parent=5 // pred_check_branch
      %147 = sbr.rel (%p145) target = $region16
    $region15: #{generator_forward.33} parent=5 // pred_region
      // Predicated region
      $region17: #{generator_forward.33} parent=15 // pred_check
        %p148 = pneg %p43
      $region18: #{generator_forward.33} parent=15 // pred_check_branch
        %150 = sbr.rel (%p148) target = $region20
      $region19: #{generator_forward.33} parent=15 // pred_region
        %s151 = smul.u32 8, %s17
        %p152 = scmp.lt.s32.totalorder %s16, 1
        %s153 = scalar_select %p152, %s16, 1
        %p154 = scmp.lt.s32.totalorder %s151, 7
        %s155 = scalar_select %p154, %s151, 7
        %s156 = smul.addr %s153, 8
        %s157 = sadd.s32 %s155, %s156
        %s158 = smul.addr %s157, 4
        %s159 = scalar_lea.vmem %s0, %s158
        %s160 = smul.u32 8, %s17
      $region20: #{generator_forward.33} parent=15 // pred_fallthru
        _
      // Predicated region
      $region21: #{generator_forward.33} parent=15 // pred_check
        %p161 = pneg %p69
      $region22: #{generator_forward.33} parent=15 // pred_check_branch
        %163 = sbr.rel (%p161) target = $region24
      $region23: #{generator_forward.33} parent=15 // pred_region
        %p164 = scmp.lt.s32.totalorder %s16, 1
        %s165 = scalar_select %p164, %s16, 1
        %s166 = scalar_lea.vmem %s1, %s165
      $region24: #{generator_forward.33} parent=15 // pred_fallthru
        _
      // Predicated region
      $region25: #{generator_forward.33} parent=15 // pred_check
        %p167 = pneg %p95
      $region26: #{generator_forward.33} parent=15 // pred_check_branch
        %169 = sbr.rel (%p167) target = $region28
      $region27: #{generator_forward.33} parent=15 // pred_region
        %p170 = scmp.lt.s32.totalorder %s16, 1
        %s171 = scalar_select %p170, %s16, 1
        %s172 = scalar_lea.vmem %s2, %s171
      $region28: #{generator_forward.33} parent=15 // pred_fallthru
        _
    $region16: #{generator_forward.33} parent=5 // pred_fallthru
      _
    %p173 = scmp.le.s32.totalorder 1, %s9
    %p174 = scmp.lt.s32.totalorder %s9, 3
    %p175 = pnand %p173, %p174
    %p176 = pneg %p175
    // Predicated region
    $region29: #{generator_forward.33} parent=5 // pred_check
      _
    $region30: #{generator_forward.33} parent=5 // pred_check_branch
      %178 = sbr.rel (%p175) target = $region32
    $region31: #{generator_forward.33} parent=5 // pred_region
      %s179 = ssub.s32 %s9, 1
      %s180 = smul.u32 8, %s19
      %p181 = scmp.lt.s32.totalorder %s18, 1
      %s182 = scalar_select %p181, %s18, 1
      %p183 = scmp.lt.s32.totalorder %s180, 7
      %s184 = scalar_select %p183, %s180, 7
      %s185 = smul.addr %s182, 8
      %s186 = sadd.s32 %s184, %s185
      %s187 = smul.addr %s186, 4
      %s188 = scalar_lea.vmem %s0, %s187
      %p189 = pneg %p49
      %p190 = pneg %p46
      %p191 = scmp.lt.s32.totalorder %s18, 1
      %s192 = scalar_select %p191, %s18, 1
      %s193 = scalar_lea.vmem %s1, %s192
      %p194 = pneg %p75
      %p195 = pneg %p72
      %p196 = scmp.lt.s32.totalorder %s18, 1
      %s197 = scalar_select %p196, %s18, 1
      %s198 = scalar_lea.vmem %s2, %s197
      %p199 = pneg %p101
      %p200 = pneg %p98
      %p201 = pneg %p129
      %p202 = pneg %p126
      %s203 = smul.u32 8, %s19
      %p204 = scmp.lt.s32.totalorder %s18, 1
      %s205 = scalar_select %p204, %s18, 1
      %p206 = scmp.lt.s32.totalorder %s203, 7
      %s207 = scalar_select %p206, %s203, 7
      %s208 = smul.addr %s205, 8
      %s209 = sadd.s32 %s207, %s208
      %s210 = smul.addr %s209, 4
      %s211 = scalar_lea.vmem %s3, %s210
      %s212 = smul.u32 8, %s19
      %p213 = scmp.lt.s32.totalorder %s18, 1
      %s214 = scalar_select %p213, %s18, 1
      %p215 = scmp.lt.s32.totalorder %s212, 7
      %s216 = scalar_select %p215, %s212, 7
      %s217 = smul.addr %s214, 8
      %s218 = sadd.s32 %s216, %s217
      %s219 = smul.addr %s218, 4
      %s220 = scalar_lea.vmem %s0, %s219
      %s221 = smul.u32 8, %s19
      %p222 = scmp.lt.s32.totalorder %s18, 1
      %s223 = scalar_select %p222, %s18, 1
      %s224 = scalar_lea.vmem %s1, %s223
      %p225 = scmp.lt.s32.totalorder %s18, 1
      %s226 = scalar_select %p225, %s18, 1
      %s227 = scalar_lea.vmem %s2, %s226
      %s228 = smul.u32 8, %s19
      %p229 = scmp.lt.s32.totalorder %s18, 1
      %s230 = scalar_select %p229, %s18, 1
      %p231 = scmp.lt.s32.totalorder %s228, 7
      %s232 = scalar_select %p231, %s228, 7
      %s233 = smul.addr %s230, 8
      %s234 = sadd.s32 %s232, %s233
      %s235 = smul.addr %s234, 4
      %s236 = scalar_lea.vmem %s3, %s235
      %s237 = smul.u32 8, %s19
      %v238 = vld [vmem:[%s220] sm:$0xf]
      %v239 = vld [vmem:[%s220 + $0x4] sm:$0xf]
      %v240 = vld [vmem:[%s220 + $0x8] sm:$0xf]
      %v241 = vld [vmem:[%s220 + $0xc] sm:$0xf]
      %v242 = vld [vmem:[%s220 + $0x10] sm:$0xf]
      %v243 = vld [vmem:[%s220 + $0x14] sm:$0xf]
      %v244 = vld [vmem:[%s220 + $0x18] sm:$0xf]
      %v245 = vld [vmem:[%s220 + $0x1c] sm:$0xf]
      %v246 = vunpack.c.l.bf16 %v238
      %v247 = vunpack.c.l.bf16 %v239
      %v248 = vunpack.c.l.bf16 %v240
      %v249 = vunpack.c.l.bf16 %v241
      %v250 = vunpack.c.l.bf16 %v242
      %v251 = vunpack.c.l.bf16 %v243
      %v252 = vunpack.c.l.bf16 %v244
      %v253 = vunpack.c.l.bf16 %v245
      %v254 = vld [vmem:[%s224] sm:$0x1]
      %v255 = vmul.f32 %v254, 0.015625
      %v256 = vld [vmem:[%s227] sm:$0x1]
      %v257 = vmul.f32 %v256, 0.015625
      %v258 = vmul.f32 %v255, %v255
      %v259 = vsub.f32 %v257, %v258
      %v260 = vmax.f32 %v259, 0.0
      %v262 = vlaneseq
      %v263 = vshrl.u32 %v262, 7
      %v264 = vsub.s32 0, %v263
      %v265 = vrot.slane %v255, %v264
      %v267 = vsub.f32 %v246, %v265
      %v268 = vsub.f32 %v247, %v265
      %v269 = vsub.f32 %v248, %v265
      %v270 = vsub.f32 %v249, %v265
      %v271 = vsub.f32 %v250, %v265
      %v272 = vsub.f32 %v251, %v265
      %v273 = vsub.f32 %v252, %v265
      %v274 = vsub.f32 %v253, %v265
      %v275 = vadd.f32 %v260, 1e-05
      %v276 = vrsqrt.pop %v275
      %v278 = vlaneseq
      %v279 = vshrl.u32 %v278, 7
      %v280 = vsub.s32 0, %v279
      %v281 = vrot.slane %v276, %v280
      %v283 = vmul.f32 %v267, %v281
      %v284 = vmul.f32 %v268, %v281
      %v285 = vmul.f32 %v269, %v281
      %v286 = vmul.f32 %v270, %v281
      %v287 = vmul.f32 %v271, %v281
      %v288 = vmul.f32 %v272, %v281
      %v289 = vmul.f32 %v273, %v281
      %v290 = vmul.f32 %v274, %v281
      %v291 = vmax.f32 %v283, 0.0
      %v292 = vmax.f32 %v284, 0.0
      %v293 = vmax.f32 %v285, 0.0
      %v294 = vmax.f32 %v286, 0.0
      %v295 = vmax.f32 %v287, 0.0
      %v296 = vmax.f32 %v288, 0.0
      %v297 = vmax.f32 %v289, 0.0
      %v298 = vmax.f32 %v290, 0.0
      %v299 = vpack.c.bf16 %v292, %v291
      %v300 = vpack.c.bf16 %v294, %v293
      %v301 = vpack.c.bf16 %v296, %v295
      %v302 = vpack.c.bf16 %v298, %v297
      %v307 = vunpack.c.l.b16 %v299
      %v308 = vunpack.c.h.b16 %v299
      %v309 = vunpack.c.l.b16 %v300
      %v310 = vunpack.c.h.b16 %v300
      %v311 = vunpack.c.l.b16 %v301
      %v312 = vunpack.c.h.b16 %v301
      %v313 = vunpack.c.l.b16 %v302
      %v314 = vunpack.c.h.b16 %v302
      %v315 = vpack.c.b16 %v307, %v307
      %v316 = vpack.c.b16 %v308, %v308
      %v317 = vpack.c.b16 %v309, %v309
      %v318 = vpack.c.b16 %v310, %v310
      %v319 = vpack.c.b16 %v311, %v311
      %v320 = vpack.c.b16 %v312, %v312
      %v321 = vpack.c.b16 %v313, %v313
      %v322 = vpack.c.b16 %v314, %v314
      %331 = vst [vmem:[%s236] sm:$0xf] %v315
      %332 = vst [vmem:[%s236 + $0x4] sm:$0xf] %v316
      %333 = vst [vmem:[%s236 + $0x8] sm:$0xf] %v317
      %334 = vst [vmem:[%s236 + $0xc] sm:$0xf] %v318
      %335 = vst [vmem:[%s236 + $0x10] sm:$0xf] %v319
      %336 = vst [vmem:[%s236 + $0x14] sm:$0xf] %v320
      %337 = vst [vmem:[%s236 + $0x18] sm:$0xf] %v321
      %338 = vst [vmem:[%s236 + $0x1c] sm:$0xf] %v322
      %s339 = smul.u32 8, %s19
      %p340 = scmp.lt.s32.totalorder %s18, 1
      %s341 = scalar_select %p340, %s18, 1
      %p342 = scmp.lt.s32.totalorder %s339, 7
      %s343 = scalar_select %p342, %s339, 7
      %s344 = smul.addr %s341, 8
      %s345 = sadd.s32 %s343, %s344
      %s346 = smul.addr %s345, 4
      %s347 = scalar_lea.vmem %s3, %s346
      // Predicated region
      $region33: #{generator_forward.33} parent=31 // pred_check
        %p348 = pneg %p126
      $region34: #{generator_forward.33} parent=31 // pred_check_branch
        %350 = sbr.rel (%p348) target = $region36
      $region35: #{generator_forward.33} parent=31 // pred_region
        %s351 = smul.u32 8, %s19
      $region36: #{generator_forward.33} parent=31 // pred_fallthru
        _
    $region32: #{generator_forward.33} parent=5 // pred_fallthru
      _
    %p352 = scmp.le.s32.totalorder 2, %s9
    // Predicated region
    $region37: #{generator_forward.33} parent=5 // pred_check
      %p353 = pneg %p352
    $region38: #{generator_forward.33} parent=5 // pred_check_branch
      %355 = sbr.rel (%p353) target = $region40
    $region39: #{generator_forward.33} parent=5 // pred_region
      %s356 = ssub.s32 %s9, 2
      // Predicated region
      $region41: #{generator_forward.33} parent=39 // pred_check
        %p357 = pneg %p132
      $region42: #{generator_forward.33} parent=39 // pred_check_branch
        %359 = sbr.rel (%p357) target = $region44
      $region43: #{generator_forward.33} parent=39 // pred_region
        %s360 = smul.u32 8, %s21
        %p361 = scmp.lt.s32.totalorder %s20, 1
        %s362 = scalar_select %p361, %s20, 1
        %p363 = scmp.lt.s32.totalorder %s360, 7
        %s364 = scalar_select %p363, %s360, 7
        %s365 = smul.addr %s362, 8
        %s366 = sadd.s32 %s364, %s365
        %s367 = smul.addr %s366, 4
        %s368 = scalar_lea.vmem %s3, %s367
      $region44: #{generator_forward.33} parent=39 // pred_fallthru
        _
    $region40: #{generator_forward.33} parent=5 // pred_fallthru
      _
  $region6: #{generator_forward.33} parent=0 // loop_footer
    %s13 = sadd.s32 1, %s9
  $region7: #{generator_forward.33} parent=0 // loop_footer_branch
    %8 = sbr.rel target = $region3
  $region8: #{generator_forward.33} parent=0 // loop_exit
    _

// kernel: generator_forward.34
$region0: #{generator_forward.34}
  #allocation0 [shape = 'u32[]', space=smem, size = 0x4, offset = 0x4, fixed_abs, tag = 'smem constant byte address 0x4 - core index']
  #allocation1 [shape = 'u32[144,128]{1,0:T(1,128)}', space=vmem, size = 0x12000, scoped, tag = 'internal scratch']
  #allocation2 [shape = 'f32[32,128]{1,0:T(8,128)}', space=vmem, size = 0x4000, scoped, tag = 'scratch operand']
  %s0 = inlined_call_operand.vmem [shape: bf16[32,1152], index: 0, kind: input, shape index: {}]
  %s1 = inlined_call_operand.vmem [shape: bf16[1152,128], index: 1, kind: input, shape index: {}]
  %s2 = inlined_call_operand.vmem [shape: f32[1,128], index: 2, kind: input, shape index: {}]
  %s3 = inlined_call_operand.vmem [shape: bf16[32,128], index: 3, kind: output, shape index: {}]
  %s4 = sld [smem:[#allocation0]]
  $region79: #{generator_forward.34} parent=0
    _
  %s6 = ssub.s32 1, %s4
  %s7 = scalar_select 0, %s6, %s4
  $region1: #{generator_forward.34} parent=0
    #allocation3 [shape = 'u8[49152]{0}', space=vmem, size = 0xc000, scoped, tag = 'input window, operand 0']
    loop: start=0, step=1, limit=5
    $region2: #{generator_forward.34} parent=1 // loop_pre_header
      _
    $region3: #{generator_forward.34} parent=1 // loop_header
      %s9 = sphi 0, %s13
      %p10 = scmp.ge.s32.totalorder %s9, 5
      %s16 = sphi 0, %s35
      %s17 = sphi 0, %s31
      %s18 = sphi 0, %s27
      %s19 = sphi 0, %s16
      %s20 = sphi 0, %s17
      %s21 = sphi 0, %s18
      %s22 = sphi 0, %s19
      %s23 = sphi 0, %s20
      %s24 = sphi 0, %s21
      %s40 = sphi 0, %s42
      %s43 = sphi 0, %s40
      %s44 = sphi 0, %s43
      %s60 = sphi 0, %s44
      %s68 = sphi 0, %s70
      %s71 = sphi 0, %s68
      %s72 = sphi 0, %s71
      %s88 = sphi 0, %s72
      %s94 = sphi 0, %s96
      %s97 = sphi 0, %s94
      %s98 = sphi 0, %s97
      %s114 = sphi 0, %s98
      %s122 = sphi 0, %s124
      %s125 = sphi 0, %s122
      %s126 = sphi 0, %s125
      %s142 = sphi 0, %s126
    $region4: #{generator_forward.34} parent=1 // loop_header_branch
      %12 = sbr.rel (%p10) target = $region8
    $region5: #{generator_forward.34} parent=1 // loop_body
      %s14 = ssub.s32 %s9, 1
      %s15 = ssub.s32 %s9, 2
      %s25 = sadd.s32 1, %s18
      %p26 = scmp.ge.s32.totalorder %s25, 3
      %s27 = scalar_select %p26, 0, %s25
      %s28 = sadd.s32 1, %s17
      %s29 = scalar_select %p26, %s28, %s17
      %p30 = scmp.ge.s32.totalorder %s29, 1
      %s31 = scalar_select %p30, 0, %s29
      %s32 = sadd.s32 1, %s16
      %s33 = scalar_select %p30, %s32, %s16
      %p34 = scmp.ge.s32.totalorder %s33, 1
      %s35 = scalar_select %p34, 0, %s33
      %s36 = ssub.s32 %s16, %s35
      %s37 = ssub.s32 %s18, %s27
      %s38 = sor.u32 %s36, %s37
      %p39 = scmp.eq.s32.totalorder %s38, 0
      %s41 = sadd.s32 %s40, 1
      %s42 = scalar_select %p39, %s40, %s41
      %p45 = pneg %p39
      %p46 = scmp.eq.s32.totalorder %s9, 2
      %p47 = por %p45, %p46
      %p48 = scmp.ne.s32.totalorder %s40, %s43
      %p49 = scmp.eq.s32.totalorder %s9, 0
      %p50 = por %p48, %p49
      %p51 = scmp.ne.s32.totalorder %s40, %s43
      %p52 = scmp.eq.s32.totalorder %s14, 2
      %p53 = por %p51, %p52
      %p54 = scmp.ne.s32.totalorder %s43, %s44
      %p55 = scmp.eq.s32.totalorder %s14, 0
      %p56 = por %p54, %p55
      %p57 = scmp.ne.s32.totalorder %s43, %s44
      %p58 = scmp.eq.s32.totalorder %s15, 2
      %p59 = por %p57, %p58
      %p61 = scmp.ne.s32.totalorder %s44, %s60
      %p62 = scmp.eq.s32.totalorder %s15, 0
      %p63 = por %p61, %p62
      %s64 = ssub.s32 %s18, %s27
      %s65 = ssub.s32 %s17, %s31
      %s66 = sor.u32 %s64, %s65
      %p67 = scmp.eq.s32.totalorder %s66, 0
      %s69 = sadd.s32 %s68, 1
      %s70 = scalar_select %p67, %s68, %s69
      %p73 = pneg %p67
      %p74 = scmp.eq.s32.totalorder %s9, 2
      %p75 = por %p73, %p74
      %p76 = scmp.ne.s32.totalorder %s68, %s71
      %p77 = scmp.eq.s32.totalorder %s9, 0
      %p78 = por %p76, %p77
      %p79 = scmp.ne.s32.totalorder %s68, %s71
      %p80 = scmp.eq.s32.totalorder %s14, 2
      %p81 = por %p79, %p80
      %p82 = scmp.ne.s32.totalorder %s71, %s72
      %p83 = scmp.eq.s32.totalorder %s14, 0
      %p84 = por %p82, %p83
      %p85 = scmp.ne.s32.totalorder %s71, %s72
      %p86 = scmp.eq.s32.totalorder %s15, 2
      %p87 = por %p85, %p86
      %p89 = scmp.ne.s32.totalorder %s72, %s88
      %p90 = scmp.eq.s32.totalorder %s15, 0
      %p91 = por %p89, %p90
      %s92 = ssub.s32 %s17, %s31
      %p93 = scmp.eq.s32.totalorder %s92, 0
      %s95 = sadd.s32 %s94, 1
      %s96 = scalar_select %p93, %s94, %s95
      %p99 = pneg %p93
      %p100 = scmp.eq.s32.totalorder %s9, 2
      %p101 = por %p99, %p100
      %p102 = scmp.ne.s32.totalorder %s94, %s97
      %p103 = scmp.eq.s32.totalorder %s9, 0
      %p104 = por %p102, %p103
      %p105 = scmp.ne.s32.totalorder %s94, %s97
      %p106 = scmp.eq.s32.totalorder %s14, 2
      %p107 = por %p105, %p106
      %p108 = scmp.ne.s32.totalorder %s97, %s98
      %p109 = scmp.eq.s32.totalorder %s14, 0
      %p110 = por %p108, %p109
      %p111 = scmp.ne.s32.totalorder %s97, %s98
      %p112 = scmp.eq.s32.totalorder %s15, 2
      %p113 = por %p111, %p112
      %p115 = scmp.ne.s32.totalorder %s98, %s114
      %p116 = scmp.eq.s32.totalorder %s15, 0
      %p117 = por %p115, %p116
      %s118 = ssub.s32 %s16, %s35
      %s119 = ssub.s32 %s17, %s31
      %s120 = sor.u32 %s118, %s119
      %p121 = scmp.eq.s32.totalorder %s120, 0
      %s123 = sadd.s32 %s122, 1
      %s124 = scalar_select %p121, %s122, %s123
      %p127 = pneg %p121
      %p128 = scmp.eq.s32.totalorder %s9, 2
      %p129 = por %p127, %p128
      %p130 = scmp.ne.s32.totalorder %s122, %s125
      %p131 = scmp.eq.s32.totalorder %s9, 0
      %p132 = por %p130, %p131
      %p133 = scmp.ne.s32.totalorder %s122, %s125
      %p134 = scmp.eq.s32.totalorder %s14, 2
      %p135 = por %p133, %p134
      %p136 = scmp.ne.s32.totalorder %s125, %s126
      %p137 = scmp.eq.s32.totalorder %s14, 0
      %p138 = por %p136, %p137
      %p139 = scmp.ne.s32.totalorder %s125, %s126
      %p140 = scmp.eq.s32.totalorder %s15, 2
      %p141 = por %p139, %p140
      %p143 = scmp.ne.s32.totalorder %s126, %s142
      %p144 = scmp.eq.s32.totalorder %s15, 0
      %p145 = por %p143, %p144
      %p146 = scmp.le.s32.totalorder 1, %s9
      %p147 = scmp.lt.s32.totalorder %s9, 4
      %p148 = pnand %p146, %p147
      %p149 = pneg %p148
      // Predicated region
      $region9: #{generator_forward.34} parent=5 // pred_check
        _
      $region10: #{generator_forward.34} parent=5 // pred_check_branch
        %151 = sbr.rel (%p148) target = $region12
      $region11: #{generator_forward.34} parent=5 // pred_region
        %s152 = ssub.s32 %s9, 1
        // Predicated region
        $region13: #{generator_forward.34} parent=11 // pred_check
          %p153 = pneg %p110
        $region14: #{generator_forward.34} parent=11 // pred_check_branch
          %155 = sbr.rel (%p153) target = $region16
        $region15: #{generator_forward.34} parent=11 // pred_region
          %p156 = scmp.lt.s32.totalorder %s20, 0
          %s157 = scalar_select %p156, %s20, 0
          %s158 = scalar_lea.vmem %s2, %s157
        $region16: #{generator_forward.34} parent=11 // pred_fallthru
          _
      $region12: #{generator_forward.34} parent=5 // pred_fallthru
        _
      %p159 = scmp.lt.s32.totalorder %s9, 3
      // Predicated region
      $region17: #{generator_forward.34} parent=5 // pred_check
        %p160 = pneg %p159
      $region18: #{generator_forward.34} parent=5 // pred_check_branch
        %162 = sbr.rel (%p160) target = $region20
      $region19: #{generator_forward.34} parent=5 // pred_region
        // Predicated region
        $region21: #{generator_forward.34} parent=19 // pred_check
          %p163 = pneg %p50
        $region22: #{generator_forward.34} parent=19 // pred_check_branch
          %165 = sbr.rel (%p163) target = $region24
        $region23: #{generator_forward.34} parent=19 // pred_region
          %s166 = sand.u32 %s40, 1
          %s167 = sand.u32 %s40, 1
          %s168 = smul.addr %s167, 48
          %s169 = scalar_lea.vmem [#allocation3], %s168
          %s170 = smul.u32 4, %s16
          %s171 = smul.u32 3, %s18
          %s172 = smul.addr %s170, 9
          %s173 = sadd.s32 %s171, %s172
          %s174 = smul.addr %s173, 4
          %s175 = scalar_lea.vmem %s0, %s174
          // Predicated region
          $region25: #{generator_forward.34} parent=23 // pred_check
            _
          $region26: #{generator_forward.34} parent=23 // pred_check_branch
            %177 = sbr.rel (0) target = $region28
          $region27: #{generator_forward.34} parent=23 // pred_region
            // Predicated region
            $region29: #{generator_forward.34} parent=27 // pred_check
              _
            $region30: #{generator_forward.34} parent=27 // pred_check_branch
              %179 = sbr.rel (0) target = $region32
            $region31: #{generator_forward.34} parent=27 // pred_region
              %s180 = scalar_lea.vmem %s175, 8
              %s181 = scalar_lea.vmem %s169, 8 [#allocation3]
              loop: start=0, step=1, limit=1
              $region33: #{generator_forward.34} parent=31 // loop_pre_header
                _
              $region34: #{generator_forward.34} parent=31 // loop_header
                %s183 = sphi 0, %s187
                %p184 = scmp.ge.s32.totalorder %s183, 1
                %s188 = sphi %s175, %s175
                %s189 = sphi %s169, %s169
              $region35: #{generator_forward.34} parent=31 // loop_header_branch
                %186 = sbr.rel (%p184) target = $region39
              $region36: #{generator_forward.34} parent=31 // loop_body
                %v190 = vld [vmem:[%s188] sm:$0xff]
                %191 = vst [vmem:[%s189] sm:$0xff] %v190
                %v192 = vld [vmem:[%s188 + $0x24] sm:$0xff]
                %193 = vst [vmem:[%s189 + $0xc] sm:$0xff] %v192
                %v194 = vld [vmem:[%s188 + $0x48] sm:$0xff]
                %195 = vst [vmem:[%s189 + $0x18] sm:$0xff] %v194
                %v196 = vld [vmem:[%s188 + $0x6c] sm:$0xff]
                %197 = vst [vmem:[%s189 + $0x24] sm:$0xff] %v196
              $region37: #{generator_forward.34} parent=31 // loop_footer
                %s187 = sadd.s32 1, %s183
              $region38: #{generator_forward.34} parent=31 // loop_footer_branch
                %182 = sbr.rel target = $region34
              $region39: #{generator_forward.34} parent=31 // loop_exit
                _
              %s199 = ssub.s32 16, 1
              loop: start=0, step=1, limit=1
              $region40: #{generator_forward.34} parent=31 // loop_pre_header
                _
              $region41: #{generator_forward.34} parent=31 // loop_header
                %s201 = sphi 0, %s205
                %p202 = scmp.ge.s32.totalorder %s201, 1
                %s206 = sphi %s180, %s180
                %s207 = sphi %s181, %s181
              $region42: #{generator_forward.34} parent=31 // loop_header_branch
                %204 = sbr.rel (%p202) target = $region46
              $region43: #{generator_forward.34} parent=31 // loop_body
                %v208 = vld [vmem:[%s206] sm:%s199]
                %209 = vst [vmem:[%s207] sm:%s199] %v208
                %v210 = vld [vmem:[%s206 + $0x24] sm:%s199]
                %211 = vst [vmem:[%s207 + $0xc] sm:%s199] %v210
                %v212 = vld [vmem:[%s206 + $0x48] sm:%s199]
                %213 = vst [vmem:[%s207 + $0x18] sm:%s199] %v212
                %v214 = vld [vmem:[%s206 + $0x6c] sm:%s199]
                %215 = vst [vmem:[%s207 + $0x24] sm:%s199] %v214
              $region44: #{generator_forward.34} parent=31 // loop_footer
                %s205 = sadd.s32 1, %s201
              $region45: #{generator_forward.34} parent=31 // loop_footer_branch
                %200 = sbr.rel target = $region41
              $region46: #{generator_forward.34} parent=31 // loop_exit
                _
            $region32: #{generator_forward.34} parent=27 // pred_fallthru
              _
          $region28: #{generator_forward.34} parent=23 // pred_fallthru
            _
          %216 = vnop
        $region24: #{generator_forward.34} parent=19 // pred_fallthru
          _
        // Predicated region
        $region47: #{generator_forward.34} parent=19 // pred_check
          %p217 = pneg %p78
        $region48: #{generator_forward.34} parent=19 // pred_check_branch
          %219 = sbr.rel (%p217) target = $region50
        $region49: #{generator_forward.34} parent=19 // pred_region
          %s220 = smul.u32 48, %s18
          %p221 = scmp.lt.s32.totalorder %s220, 143
          %s222 = scalar_select %p221, %s220, 143
          %p223 = scmp.lt.s32.totalorder %s17, 0
          %s224 = scalar_select %p223, %s17, 0
          %s225 = sadd.s32 %s224, %s222
          %s226 = smul.addr %s225, 4
          %s227 = scalar_lea.vmem %s1, %s226
          %s228 = smul.u32 48, %s18
        $region50: #{generator_forward.34} parent=19 // pred_fallthru
          _
      $region20: #{generator_forward.34} parent=5 // pred_fallthru
        _
      %p229 = scmp.le.s32.totalorder 1, %s9
      %p230 = scmp.lt.s32.totalorder %s9, 4
      %p231 = pnand %p229, %p230
      %p232 = pneg %p231
      // Predicated region
      $region51: #{generator_forward.34} parent=5 // pred_check
        _
      $region52: #{generator_forward.34} parent=5 // pred_check_branch
        %234 = sbr.rel (%p231) target = $region54
      $region53: #{generator_forward.34} parent=5 // pred_region
        %s235 = ssub.s32 %s9, 1
        %s236 = sand.u32 %s43, 1
        %s237 = sand.u32 %s43, 1
        %s238 = smul.addr %s237, 48
        %s239 = scalar_lea.vmem [#allocation3], %s238
        // Predicated region
        $region55: #{generator_forward.34} parent=53 // pred_check
          %p240 = pneg %p56
        $region56: #{generator_forward.34} parent=53 // pred_check_branch
          %242 = sbr.rel (%p240) target = $region58
        $region57: #{generator_forward.34} parent=53 // pred_region
          _
        $region58: #{generator_forward.34} parent=53 // pred_fallthru
          _
        %s243 = sand.u32 %s43, 1
        %s244 = sand.u32 %s43, 1
        %s245 = smul.addr %s244, 48
        %s246 = scalar_lea.vmem [#allocation3], %s245
        %p247 = pneg %p56
        %p248 = pneg %p53
        %s249 = smul.u32 48, %s21
        %p250 = scmp.lt.s32.totalorder %s249, 143
        %s251 = scalar_select %p250, %s249, 143
        %p252 = scmp.lt.s32.totalorder %s20, 0
        %s253 = scalar_select %p252, %s20, 0
        %s254 = sadd.s32 %s253, %s251
        %s255 = smul.addr %s254, 4
        %s256 = scalar_lea.vmem %s1, %s255
        %p257 = pneg %p84
        %p258 = pneg %p81
        %p259 = scmp.lt.s32.totalorder %s20, 0
        %s260 = scalar_select %p259, %s20, 0
        %s261 = scalar_lea.vmem %s2, %s260
        %p262 = pneg %p110
        %p263 = pneg %p107
        %p264 = pneg %p138
        %p265 = pneg %p135
        %s266 = smul.u32 4, %s19
        %p267 = scmp.lt.s32.totalorder %s266, 3
        %s268 = scalar_select %p267, %s266, 3
        %p269 = scmp.lt.s32.totalorder %s20, 0
        %s270 = scalar_select %p269, %s20, 0
        %s271 = sadd.s32 %s270, %s268
        %s272 = smul.addr %s271, 4
        %s273 = scalar_lea.vmem %s3, %s272
        %s274 = smul.u32 4, %s19
        %s275 = smul.u32 3, %s21
        %s276 = smul.u32 48, %s21
        %p277 = scmp.lt.s32.totalorder %s276, 143
        %s278 = scalar_select %p277, %s276, 143
        %p279 = scmp.lt.s32.totalorder %s20, 0
        %s280 = scalar_select %p279, %s20, 0
        %s281 = sadd.s32 %s280, %s278
        %s282 = smul.addr %s281, 4
        %s283 = scalar_lea.vmem %s1, %s282
        %s284 = smul.u32 48, %s21
        %p285 = scmp.lt.s32.totalorder %s20, 0
        %s286 = scalar_select %p285, %s20, 0
        %s287 = scalar_lea.vmem %s2, %s286
        %s288 = smul.u32 4, %s19
        %p289 = scmp.lt.s32.totalorder %s288, 3
        %s290 = scalar_select %p289, %s288, 3
        %p291 = scmp.lt.s32.totalorder %s20, 0
        %s292 = scalar_select %p291, %s20, 0
        %s293 = sadd.s32 %s292, %s290
        %s294 = smul.addr %s293, 4
        %s295 = scalar_lea.vmem %s3, %s294
        %s296 = smul.u32 4, %s19
        %p298 = scmp.eq.s32.totalorder %s21, 0
        // Predicated region
        $region59: #{generator_forward.34} parent=53 // pred_check
          %p299 = pneg %p298
        $region60: #{generator_forward.34} parent=53 // pred_check_branch
          %301 = sbr.rel (%p299) target = $region62
        $region61: #{generator_forward.34} parent=53 // pred_region
          %302 = vst [vmem:[#allocation2] sm:$0xff] 0.0
          %303 = vst [vmem:[#allocation2 + $0x8] sm:$0xff] 0.0
          %304 = vst [vmem:[#allocation2 + $0x10] sm:$0xff] 0.0
          %305 = vst [vmem:[#allocation2 + $0x18] sm:$0xff] 0.0
        $region62: #{generator_forward.34} parent=53 // pred_fallthru
          _
        %v306 = vld [vmem:[#allocation2] sm:$0xff]
        %v307 = vld [vmem:[#allocation2 + $0x8] sm:$0xff]
        %v308 = vld [vmem:[#allocation2 + $0x10] sm:$0xff]
        %v309 = vld [vmem:[#allocation2 + $0x18] sm:$0xff]
        %v310 = vld [vmem:[%s239] sm:$0xff]
        %v311 = vld [vmem:[%s239 + $0x8] sm:$0xf]
        %v312 = vld [vmem:[%s239 + $0xc] sm:$0xff]
        %v313 = vld [vmem:[%s239 + $0x14] sm:$0xf]
        %v314 = vld [vmem:[%s239 + $0x18] sm:$0xff]
        %v315 = vld [vmem:[%s239 + $0x20] sm:$0xf]
        %v316 = vld [vmem:[%s239 + $0x24] sm:$0xff]
        %v317 = vld [vmem:[%s239 + $0x2c] sm:$0xf]
        %v318 = vld [vmem:[%s283] sm:$0xf]
        %v319 = vld [vmem:[%s283 + $0x4] sm:$0xf]
        %v320 = vld [vmem:[%s283 + $0x8] sm:$0xf]
        %v321 = vld [vmem:[%s283 + $0xc] sm:$0xf]
        %v322 = vld [vmem:[%s283 + $0x10] sm:$0xf]
        %v323 = vld [vmem:[%s283 + $0x14] sm:$0xf]
        %v324 = vld [vmem:[%s283 + $0x18] sm:$0xf]
        %v325 = vld [vmem:[%s283 + $0x1c] sm:$0xf]
        %v326 = vld [vmem:[%s283 + $0x20] sm:$0xf]
        %v327 = vld [vmem:[%s283 + $0x24] sm:$0xf]
        %v328 = vld [vmem:[%s283 + $0x28] sm:$0xf]
        %v329 = vld [vmem:[%s283 + $0x2c] sm:$0xf]
        %v330 = vld [vmem:[%s283 + $0x30] sm:$0xf]
        %v331 = vld [vmem:[%s283 + $0x34] sm:$0xf]
        %v332 = vld [vmem:[%s283 + $0x38] sm:$0xf]
        %v333 = vld [vmem:[%s283 + $0x3c] sm:$0xf]
        %v334 = vld [vmem:[%s283 + $0x40] sm:$0xf]
        %v335 = vld [vmem:[%s283 + $0x44] sm:$0xf]
        %v336 = vld [vmem:[%s283 + $0x48] sm:$0xf]
        %v337 = vld [vmem:[%s283 + $0x4c] sm:$0xf]
        %v338 = vld [vmem:[%s283 + $0x50] sm:$0xf]
        %v339 = vld [vmem:[%s283 + $0x54] sm:$0xf]
        %v340 = vld [vmem:[%s283 + $0x58] sm:$0xf]
        %v341 = vld [vmem:[%s283 + $0x5c] sm:$0xf]
        %v342 = vld [vmem:[%s283 + $0x60] sm:$0xf]
        %v343 = vld [vmem:[%s283 + $0x64] sm:$0xf]
        %v344 = vld [vmem:[%s283 + $0x68] sm:$0xf]
        %v345 = vld [vmem:[%s283 + $0x6c] sm:$0xf]
        %v346 = vld [vmem:[%s283 + $0x70] sm:$0xf]
        %v347 = vld [vmem:[%s283 + $0x74] sm:$0xf]
        %v348 = vld [vmem:[%s283 + $0x78] sm:$0xf]
        %v349 = vld [vmem:[%s283 + $0x7c] sm:$0xf]
        %v350 = vld [vmem:[%s283 + $0x80] sm:$0xf]
        %v351 = vld [vmem:[%s283 + $0x84] sm:$0xf]
        %v352 = vld [vmem:[%s283 + $0x88] sm:$0xf]
        %v353 = vld [vmem:[%s283 + $0x8c] sm:$0xf]
        %v354 = vld [vmem:[%s283 + $0x90] sm:$0xf]
        %v355 = vld [vmem:[%s283 + $0x94] sm:$0xf]
        %v356 = vld [vmem:[%s283 + $0x98] sm:$0xf]
        %v357 = vld [vmem:[%s283 + $0x9c] sm:$0xf]
        %v358 = vld [vmem:[%s283 + $0xa0] sm:$0xf]
        %v359 = vld [vmem:[%s283 + $0xa4] sm:$0xf]
        %v360 = vld [vmem:[%s283 + $0xa8] sm:$0xf]
        %v361 = vld [vmem:[%s283 + $0xac] sm:$0xf]
        %v362 = vld [vmem:[%s283 + $0xb0] sm:$0xf]
        %v363 = vld [vmem:[%s283 + $0xb4] sm:$0xf]
        %v364 = vld [vmem:[%s283 + $0xb8] sm:$0xf]
        %v365 = vld [vmem:[%s283 + $0xbc] sm:$0xf]
        %v374 = vunpack.c.l.b16 %v310
        %v375 = vunpack.c.h.b16 %v310
        %v376 = vunpack.c.l.b16 %v311
        %v377 = vunpack.c.l.b16 %v312
        %v378 = vunpack.c.h.b16 %v312
        %v379 = vunpack.c.l.b16 %v313
        %v380 = vunpack.c.l.b16 %v314
        %v381 = vunpack.c.h.b16 %v314
        %v382 = vunpack.c.l.b16 %v315
        %v383 = vunpack.c.l.b16 %v316
        %v384 = vunpack.c.h.b16 %v316
        %v385 = vunpack.c.l.b16 %v317
        %v386 = vpack.c.b16 %v377, %v374
        %v387 = vpack.c.b16 %v378, %v375
        %v388 = vpack.c.b16 %v379, %v376
        %v389 = vpack.c.b16 %v383, %v380
        %v390 = vpack.c.b16 %v384, %v381
        %v391 = vpack.c.b16 %v385, %v382
        %v446 = vunpack.c.l.b16 %v318
        %v447 = vunpack.c.l.b16 %v319
        %v448 = vunpack.c.l.b16 %v320
        %v449 = vunpack.c.l.b16 %v321
        %v450 = vunpack.c.l.b16 %v322
        %v451 = vunpack.c.l.b16 %v323
        %v452 = vunpack.c.l.b16 %v324
        %v453 = vunpack.c.l.b16 %v325
        %v454 = vunpack.c.l.b16 %v326
        %v455 = vunpack.c.l.b16 %v327
        %v456 = vunpack.c.l.b16 %v328
        %v457 = vunpack.c.l.b16 %v329
        %v458 = vunpack.c.l.b16 %v330
        %v459 = vunpack.c.l.b16 %v331
        %v460 = vunpack.c.l.b16 %v332
        %v461 = vunpack.c.l.b16 %v333
        %v462 = vunpack.c.l.b16 %v334
        %v463 = vunpack.c.l.b16 %v335
        %v464 = vunpack.c.l.b16 %v336
        %v465 = vunpack.c.l.b16 %v337
        %v466 = vunpack.c.l.b16 %v338
        %v467 = vunpack.c.l.b16 %v339
        %v468 = vunpack.c.l.b16 %v340
        %v469 = vunpack.c.l.b16 %v341
        %v470 = vunpack.c.l.b16 %v342
        %v471 = vunpack.c.l.b16 %v343
        %v472 = vunpack.c.l.b16 %v344
        %v473 = vunpack.c.l.b16 %v345
        %v474 = vunpack.c.l.b16 %v346
        %v475 = vunpack.c.l.b16 %v347
        %v476 = vunpack.c.l.b16 %v348
        %v477 = vunpack.c.l.b16 %v349
        %v478 = vunpack.c.l.b16 %v350
        %v479 = vunpack.c.l.b16 %v351
        %v480 = vunpack.c.l.b16 %v352
        %v481 = vunpack.c.l.b16 %v353
        %v482 = vunpack.c.l.b16 %v354
        %v483 = vunpack.c.l.b16 %v355
        %v484 = vunpack.c.l.b16 %v356
        %v485 = vunpack.c.l.b16 %v357
        %v486 = vunpack.c.l.b16 %v358
        %v487 = vunpack.c.l.b16 %v359
        %v488 = vunpack.c.l.b16 %v360
        %v489 = vunpack.c.l.b16 %v361
        %v490 = vunpack.c.l.b16 %v362
        %v491 = vunpack.c.l.b16 %v363
        %v492 = vunpack.c.l.b16 %v364
        %v493 = vunpack.c.l.b16 %v365
        %v494 = vpack.c.b16 %v447, %v446
        %v495 = vpack.c.b16 %v449, %v448
        %v496 = vpack.c.b16 %v451, %v450
        %v497 = vpack.c.b16 %v453, %v452
        %v498 = vpack.c.b16 %v455, %v454
        %v499 = vpack.c.b16 %v457, %v456
        %v500 = vpack.c.b16 %v459, %v458
        %v501 = vpack.c.b16 %v461, %v460
        %v502 = vpack.c.b16 %v463, %v462
        %v503 = vpack.c.b16 %v465, %v464
        %v504 = vpack.c.b16 %v467, %v466
        %v505 = vpack.c.b16 %v469, %v468
        %v506 = vpack.c.b16 %v471, %v470
        %v507 = vpack.c.b16 %v473, %v472
        %v508 = vpack.c.b16 %v475, %v474
        %v509 = vpack.c.b16 %v477, %v476
        %v510 = vpack.c.b16 %v479, %v478
        %v511 = vpack.c.b16 %v481, %v480
        %v512 = vpack.c.b16 %v483, %v482
        %v513 = vpack.c.b16 %v485, %v484
        %v514 = vpack.c.b16 %v487, %v486
        %v515 = vpack.c.b16 %v489, %v488
        %v516 = vpack.c.b16 %v491, %v490
        %v517 = vpack.c.b16 %v493, %v492
        %542 = vmatprep.subr.bf16.mxu0 0
        %543 = vmatpush1.bf16.msra.mxu0 %v501
        %544 = vmatprep.subr.bf16.mxu0 0
        %545 = vmatpush1.bf16.msra.mxu0 %v500
        %546 = vmatprep.subr.bf16.mxu0 0
        %547 = vmatpush1.bf16.msra.mxu0 %v499
        %548 = vmatprep.subr.bf16.mxu0 0
        %549 = vmatpush1.bf16.msra.mxu0 %v498
        %550 = vmatprep.subr.bf16.mxu0 0
        %551 = vmatpush1.bf16.msra.mxu0 %v497
        %552 = vmatprep.subr.bf16.mxu0 0
        %553 = vmatpush1.bf16.msra.mxu0 %v496
        %554 = vmatprep.subr.bf16.mxu0 0
        %555 = vmatpush1.bf16.msra.mxu0 %v495
        %556 = vmatprep.subr.bf16.mxu0 0
        %557 = vmatpush1.bf16.msra.mxu0 %v494
        %558 = vmatprep.subr.bf16.mxu0 0
        %559 = vmatpush2.bf16.msra.mxu0 %v509
        %560 = vmatprep.subr.bf16.mxu0 0
        %561 = vmatpush2.bf16.msra.mxu0 %v508
        %562 = vmatprep.subr.bf16.mxu0 0
        %563 = vmatpush2.bf16.msra.mxu0 %v507
        %564 = vmatprep.subr.bf16.mxu0 0
        %565 = vmatpush2.bf16.msra.mxu0 %v506
        %566 = vmatprep.subr.bf16.mxu0 0
        %567 = vmatpush2.bf16.msra.mxu0 %v505
        %568 = vmatprep.subr.bf16.mxu0 0
        %569 = vmatpush2.bf16.msra.mxu0 %v504
        %570 = vmatprep.subr.bf16.mxu0 0
        %571 = vmatpush2.bf16.msra.mxu0 %v503
        %572 = vmatprep.subr.bf16.mxu0 0
        %573 = vmatpush2.bf16.msra.mxu0 %v502
        %574 = vmatprep.mubr.bf16.mxu0 %v387
        %575 = vmatmul.mubr.bf16.gmra.mxu0 %v386
        %v576 = vpop.f32.mrf.mxu0
        %v577 = vadd.f32 0.0, %v576
        %v578 = vpop.f32.mrf.mxu0
        %v579 = vpop.f32.mrf.mxu0
        %v580 = vadd.f32 0.0, %v579
        %v581 = vpop.f32.mrf.mxu0
        %582 = vmatprep.mubr.bf16.mxu0 %v390
        %583 = vmatmul.mubr.bf16.gmra.mxu0 %v389
        %v584 = vpop.f32.mrf.mxu0
        %v585 = vadd.f32 0.0, %v584
        %v586 = vpop.f32.mrf.mxu0
        %v587 = vpop.f32.mrf.mxu0
        %v588 = vadd.f32 0.0, %v587
        %v589 = vpop.f32.mrf.mxu0
        %590 = vdwg.mxu0
        %591 = vmatprep.subr.bf16.mxu0 0
        %592 = vmatpush1.bf16.msra.mxu0 %v517
        %593 = vmatprep.subr.bf16.mxu0 0
        %594 = vmatpush1.bf16.msra.mxu0 %v516
        %595 = vmatprep.subr.bf16.mxu0 0
        %596 = vmatpush1.bf16.msra.mxu0 %v515
        %597 = vmatprep.subr.bf16.mxu0 0
        %598 = vmatpush1.bf16.msra.mxu0 %v514
        %599 = vmatprep.subr.bf16.mxu0 0
        %600 = vmatpush1.bf16.msra.mxu0 %v513
        %601 = vmatprep.subr.bf16.mxu0 0
        %602 = vmatpush1.bf16.msra.mxu0 %v512
        %603 = vmatprep.subr.bf16.mxu0 0
        %604 = vmatpush1.bf16.msra.mxu0 %v511
        %605 = vmatprep.subr.bf16.mxu0 0
        %606 = vmatpush1.bf16.msra.mxu0 %v510
        %607 = vmatprep.subr.bf16.mxu0 0
        %608 = vmatpush2.bf16.msra.mxu0 0
        %609 = vmatprep.subr.bf16.mxu0 0
        %610 = vmatpush2.bf16.msra.mxu0 0
        %611 = vmatprep.subr.bf16.mxu0 0
        %612 = vmatpush2.bf16.msra.mxu0 0
        %613 = vmatprep.subr.bf16.mxu0 0
        %614 = vmatpush2.bf16.msra.mxu0 0
        %615 = vmatprep.subr.bf16.mxu0 0
        %616 = vmatpush2.bf16.msra.mxu0 0
        %617 = vmatprep.subr.bf16.mxu0 0
        %618 = vmatpush2.bf16.msra.mxu0 0
        %619 = vmatprep.subr.bf16.mxu0 0
        %620 = vmatpush2.bf16.msra.mxu0 0
        %621 = vmatprep.subr.bf16.mxu0 0
        %622 = vmatpush2.bf16.msra.mxu0 0
        %623 = vmatprep.mubr.bf16.mxu0 0
        %624 = vmatmul.mubr.bf16.gmra.mxu0 %v388
        %v625 = vpop.f32.mrf.mxu0
        %v626 = vadd.f32 %v577, %v625
        %v627 = vpop.f32.mrf.mxu0
        %v628 = vpop.f32.mrf.mxu0
        %v629 = vadd.f32 %v580, %v628
        %v630 = vpop.f32.mrf.mxu0
        %631 = vmatprep.mubr.bf16.mxu0 0
        %632 = vmatmul.mubr.bf16.gmra.mxu0 %v391
        %v633 = vpop.f32.mrf.mxu0
        %v634 = vadd.f32 %v585, %v633
        %v635 = vpop.f32.mrf.mxu0
        %v636 = vpop.f32.mrf.mxu0
        %v637 = vadd.f32 %v588, %v636
        %v638 = vpop.f32.mrf.mxu0
        %639 = vdwg.mxu0
        %v640 = vadd.f32 %v306, %v626
        %v641 = vadd.f32 %v307, %v629
        %v642 = vadd.f32 %v308, %v634
        %v643 = vadd.f32 %v309, %v637
        %644 = vst [vmem:[#allocation2] sm:$0xff] %v640
        %645 = vst [vmem:[#allocation2 + $0x8] sm:$0xff] %v641
        %646 = vst [vmem:[#allocation2 + $0x10] sm:$0xff] %v642
        %647 = vst [vmem:[#allocation2 + $0x18] sm:$0xff] %v643
        %p648 = scmp.eq.s32.totalorder %s21, 2
        // Predicated region
        $region63: #{generator_forward.34} parent=53 // pred_check
          %p649 = pneg %p648
        $region64: #{generator_forward.34} parent=53 // pred_check_branch
          %651 = sbr.rel (%p649) target = $region66
        $region65: #{generator_forward.34} parent=53 // pred_region
          %v652 = vld [vmem:[#allocation2] sm:$0xff]
          %v653 = vld [vmem:[#allocation2 + $0x8] sm:$0xff]
          %v654 = vld [vmem:[#allocation2 + $0x10] sm:$0xff]
          %v655 = vld [vmem:[#allocation2 + $0x18] sm:$0xff]
          %v656 = vld [vmem:[%s287] sm:$0x1]
          %v658 = vlaneseq
          %v659 = vshrl.u32 %v658, 7
          %v660 = vsub.s32 0, %v659
          %v661 = vrot.slane %v656, %v660
          %v663 = vadd.f32 %v652, %v661
          %v664 = vadd.f32 %v653, %v661
          %v665 = vadd.f32 %v654, %v661
          %v666 = vadd.f32 %v655, %v661
          %v667 = vpack.c.bf16 %v664, %v663
          %v668 = vpack.c.bf16 %v666, %v665
          %v671 = vunpack.c.l.b16 %v667
          %v672 = vunpack.c.h.b16 %v667
          %v673 = vunpack.c.l.b16 %v668
          %v674 = vunpack.c.h.b16 %v668
          %v675 = vpack.c.b16 %v671, %v671
          %v676 = vpack.c.b16 %v672, %v672
          %v677 = vpack.c.b16 %v673, %v673
          %v678 = vpack.c.b16 %v674, %v674
          %683 = vst [vmem:[%s295] sm:$0xf] %v675
          %684 = vst [vmem:[%s295 + $0x4] sm:$0xf] %v676
          %685 = vst [vmem:[%s295 + $0x8] sm:$0xf] %v677
          %686 = vst [vmem:[%s295 + $0xc] sm:$0xf] %v678
        $region66: #{generator_forward.34} parent=53 // pred_fallthru
          _
        %s687 = smul.u32 4, %s19
        %p688 = scmp.lt.s32.totalorder %s687, 3
        %s689 = scalar_select %p688, %s687, 3
        %p690 = scmp.lt.s32.totalorder %s20, 0
        %s691 = scalar_select %p690, %s20, 0
        %s692 = sadd.s32 %s691, %s689
        %s693 = smul.addr %s692, 4
        %s694 = scalar_lea.vmem %s3, %s693
        // Predicated region
        $region67: #{generator_forward.34} parent=53 // pred_check
          %p695 = pneg %p135
        $region68: #{generator_forward.34} parent=53 // pred_check_branch
          %697 = sbr.rel (%p695) target = $region70
        $region69: #{generator_forward.34} parent=53 // pred_region
          %s698 = smul.u32 4, %s19
        $region70: #{generator_forward.34} parent=53 // pred_fallthru
          _
        // Predicated region
        $region71: #{generator_forward.34} parent=53 // pred_check
          %p699 = pneg %p135
        $region72: #{generator_forward.34} parent=53 // pred_check_branch
          %701 = sbr.rel (%p699) target = $region74
        $region73: #{generator_forward.34} parent=53 // pred_region
          %s702 = smul.u32 4, %s19
          %p703 = scmp.lt.s32.totalorder %s702, 3
          %s704 = scalar_select %p703, %s702, 3
          %p705 = scmp.lt.s32.totalorder %s20, 0
          %s706 = scalar_select %p705, %s20, 0
          %s707 = sadd.s32 %s706, %s704
          %s708 = smul.addr %s707, 4
          %s709 = scalar_lea.vmem %s3, %s708
        $region74: #{generator_forward.34} parent=53 // pred_fallthru
          _
      $region54: #{generator_forward.34} parent=5 // pred_fallthru
        _
      %p710 = scmp.le.s32.totalorder 2, %s9
      // Predicated region
      $region75: #{generator_forward.34} parent=5 // pred_check
        %p711 = pneg %p710
      $region76: #{generator_forward.34} parent=5 // pred_check_branch
        %713 = sbr.rel (%p711) target = $region78
      $region77: #{generator_forward.34} parent=5 // pred_region
        %s714 = ssub.s32 %s9, 2
      $region78: #{generator_forward.34} parent=5 // pred_fallthru
        _
    $region6: #{generator_forward.34} parent=1 // loop_footer
      %s13 = sadd.s32 1, %s9
    $region7: #{generator_forward.34} parent=1 // loop_footer_branch
      %8 = sbr.rel target = $region3
    $region8: #{generator_forward.34} parent=1 // loop_exit
      _

// kernel: generator_forward.35
$region0: #{generator_forward.35}
  #allocation0 [shape = 'u32[]', space=smem, size = 0x4, offset = 0x4, fixed_abs, tag = 'smem constant byte address 0x4 - core index']
  #allocation1 [shape = 'u32[144,128]{1,0:T(1,128)}', space=vmem, size = 0x12000, scoped, tag = 'internal scratch']
  %s0 = inlined_call_operand.vmem [shape: bf16[2,16,128], index: 0, kind: input, shape index: {}]
  %s1 = inlined_call_operand.vmem [shape: f32[2,1,128], index: 1, kind: output, shape index: {0}]
  %s2 = inlined_call_operand.vmem [shape: f32[2,1,128], index: 2, kind: output, shape index: {1}]
  %3 = xla_tuple %s1, %s2
  %s4 = sld [smem:[#allocation0]]
  $region49: #{generator_forward.35} parent=0
    _
  %s6 = ssub.s32 1, %s4
  %s7 = scalar_select 0, %s6, %s4
  loop: start=0, step=1, limit=4
  $region2: #{generator_forward.35} parent=0 // loop_pre_header
    _
  $region3: #{generator_forward.35} parent=0 // loop_header
    %s9 = sphi 0, %s13
    %p10 = scmp.ge.s32.totalorder %s9, 4
    %s16 = sphi 0, %s28
    %s17 = sphi 0, %s24
    %s18 = sphi 0, %s16
    %s19 = sphi 0, %s17
    %s20 = sphi 0, %s18
    %s21 = sphi 0, %s19
    %s33 = sphi 0, %s35
    %s36 = sphi 0, %s33
    %s37 = sphi 0, %s36
    %s53 = sphi 0, %s37
    %s59 = sphi 0, %s61
    %s62 = sphi 0, %s59
    %s63 = sphi 0, %s62
    %s79 = sphi 0, %s63
    %s85 = sphi 0, %s87
    %s88 = sphi 0, %s85
    %s89 = sphi 0, %s88
    %s105 = sphi 0, %s89
  $region4: #{generator_forward.35} parent=0 // loop_header_branch
    %12 = sbr.rel (%p10) target = $region8
  $region5: #{generator_forward.35} parent=0 // loop_body
    %s14 = ssub.s32 %s9, 1
    %s15 = ssub.s32 %s9, 2
    %s22 = sadd.s32 1, %s17
    %p23 = scmp.ge.s32.totalorder %s22, 1
    %s24 = scalar_select %p23, 0, %s22
    %s25 = sadd.s32 1, %s16
    %s26 = scalar_select %p23, %s25, %s16
    %p27 = scmp.ge.s32.totalorder %s26, 2
    %s28 = scalar_select %p27, 0, %s26
    %s29 = ssub.s32 %s16, %s28
    %s30 = ssub.s32 %s17, %s24
    %s31 = sor.u32 %s29, %s30
    %p32 = scmp.eq.s32.totalorder %s31, 0
    %s34 = sadd.s32 %s33, 1
    %s35 = scalar_select %p32, %s33, %s34
    %p38 = pneg %p32
    %p39 = scmp.eq.s32.totalorder %s9, 1
    %p40 = por %p38, %p39
    %p41 = scmp.ne.s32.totalorder %s33, %s36
    %p42 = scmp.eq.s32.totalorder %s9, 0
    %p43 = por %p41, %p42
    %p44 = scmp.ne.s32.totalorder %s33, %s36
    %p45 = scmp.eq.s32.totalorder %s14, 1
    %p46 = por %p44, %p45
    %p47 = scmp.ne.s32.totalorder %s36, %s37
    %p48 = scmp.eq.s32.totalorder %s14, 0
    %p49 = por %p47, %p48
    %p50 = scmp.ne.s32.totalorder %s36, %s37
    %p51 = scmp.eq.s32.totalorder %s15, 1
    %p52 = por %p50, %p51
    %p54 = scmp.ne.s32.totalorder %s37, %s53
    %p55 = scmp.eq.s32.totalorder %s15, 0
    %p56 = por %p54, %p55
    %s57 = ssub.s32 %s16, %s28
    %p58 = scmp.eq.s32.totalorder %s57, 0
    %s60 = sadd.s32 %s59, 1
    %s61 = scalar_select %p58, %s59, %s60
    %p64 = pneg %p58
    %p65 = scmp.eq.s32.totalorder %s9, 1
    %p66 = por %p64, %p65
    %p67 = scmp.ne.s32.totalorder %s59, %s62
    %p68 = scmp.eq.s32.totalorder %s9, 0
    %p69 = por %p67, %p68
    %p70 = scmp.ne.s32.totalorder %s59, %s62
    %p71 = scmp.eq.s32.totalorder %s14, 1
    %p72 = por %p70, %p71
    %p73 = scmp.ne.s32.totalorder %s62, %s63
    %p74 = scmp.eq.s32.totalorder %s14, 0
    %p75 = por %p73, %p74
    %p76 = scmp.ne.s32.totalorder %s62, %s63
    %p77 = scmp.eq.s32.totalorder %s15, 1
    %p78 = por %p76, %p77
    %p80 = scmp.ne.s32.totalorder %s63, %s79
    %p81 = scmp.eq.s32.totalorder %s15, 0
    %p82 = por %p80, %p81
    %s83 = ssub.s32 %s16, %s28
    %p84 = scmp.eq.s32.totalorder %s83, 0
    %s86 = sadd.s32 %s85, 1
    %s87 = scalar_select %p84, %s85, %s86
    %p90 = pneg %p84
    %p91 = scmp.eq.s32.totalorder %s9, 1
    %p92 = por %p90, %p91
    %p93 = scmp.ne.s32.totalorder %s85, %s88
    %p94 = scmp.eq.s32.totalorder %s9, 0
    %p95 = por %p93, %p94
    %p96 = scmp.ne.s32.totalorder %s85, %s88
    %p97 = scmp.eq.s32.totalorder %s14, 1
    %p98 = por %p96, %p97
    %p99 = scmp.ne.s32.totalorder %s88, %s89
    %p100 = scmp.eq.s32.totalorder %s14, 0
    %p101 = por %p99, %p100
    %p102 = scmp.ne.s32.totalorder %s88, %s89
    %p103 = scmp.eq.s32.totalorder %s15, 1
    %p104 = por %p102, %p103
    %p106 = scmp.ne.s32.totalorder %s89, %s105
    %p107 = scmp.eq.s32.totalorder %s15, 0
    %p108 = por %p106, %p107
    %p109 = scmp.le.s32.totalorder 1, %s9
    %p110 = scmp.lt.s32.totalorder %s9, 3
    %p111 = pnand %p109, %p110
    %p112 = pneg %p111
    // Predicated region
    $region9: #{generator_forward.35} parent=5 // pred_check
      _
    $region10: #{generator_forward.35} parent=5 // pred_check_branch
      %114 = sbr.rel (%p111) target = $region12
    $region11: #{generator_forward.35} parent=5 // pred_region
      %s115 = ssub.s32 %s9, 1
    $region12: #{generator_forward.35} parent=5 // pred_fallthru
      _
    %p116 = scmp.lt.s32.totalorder %s9, 2
    // Predicated region
    $region13: #{generator_forward.35} parent=5 // pred_check
      %p117 = pneg %p116
    $region14: #{generator_forward.35} parent=5 // pred_check_branch
      %119 = sbr.rel (%p117) target = $region16
    $region15: #{generator_forward.35} parent=5 // pred_region
      // Predicated region
      $region17: #{generator_forward.35} parent=15 // pred_check
        %p120 = pneg %p43
      $region18: #{generator_forward.35} parent=15 // pred_check_branch
        %122 = sbr.rel (%p120) target = $region20
      $region19: #{generator_forward.35} parent=15 // pred_region
        %s123 = smul.u32 2, %s17
        %p124 = scmp.lt.s32.totalorder %s16, 1
        %s125 = scalar_select %p124, %s16, 1
        %p126 = scmp.lt.s32.totalorder %s123, 1
        %s127 = scalar_select %p126, %s123, 1
        %s128 = smul.addr %s125, 2
        %s129 = sadd.s32 %s127, %s128
        %s130 = smul.addr %s129, 4
        %s131 = scalar_lea.vmem %s0, %s130
        %s132 = smul.u32 2, %s17
      $region20: #{generator_forward.35} parent=15 // pred_fallthru
        _
    $region16: #{generator_forward.35} parent=5 // pred_fallthru
      _
    %p133 = scmp.le.s32.totalorder 1, %s9
    %p134 = scmp.lt.s32.totalorder %s9, 3
    %p135 = pnand %p133, %p134
    %p136 = pneg %p135
    // Predicated region
    $region21: #{generator_forward.35} parent=5 // pred_check
      _
    $region22: #{generator_forward.35} parent=5 // pred_check_branch
      %138 = sbr.rel (%p135) target = $region24
    $region23: #{generator_forward.35} parent=5 // pred_region
      %s139 = ssub.s32 %s9, 1
      %s140 = smul.u32 2, %s19
      %p141 = scmp.lt.s32.totalorder %s18, 1
      %s142 = scalar_select %p141, %s18, 1
      %p143 = scmp.lt.s32.totalorder %s140, 1
      %s144 = scalar_select %p143, %s140, 1
      %s145 = smul.addr %s142, 2
      %s146 = sadd.s32 %s144, %s145
      %s147 = smul.addr %s146, 4
      %s148 = scalar_lea.vmem %s0, %s147
      %p149 = pneg %p49
      %p150 = pneg %p46
      %p151 = pneg %p75
      %p152 = pneg %p72
      %p153 = scmp.lt.s32.totalorder %s18, 1
      %s154 = scalar_select %p153, %s18, 1
      %s155 = scalar_lea.vmem %s1, %s154
      %p156 = pneg %p101
      %p157 = pneg %p98
      %p158 = scmp.lt.s32.totalorder %s18, 1
      %s159 = scalar_select %p158, %s18, 1
      %s160 = scalar_lea.vmem %s2, %s159
      %s161 = smul.u32 2, %s19
      %p162 = scmp.lt.s32.totalorder %s18, 1
      %s163 = scalar_select %p162, %s18, 1
      %p164 = scmp.lt.s32.totalorder %s161, 1
      %s165 = scalar_select %p164, %s161, 1
      %s166 = smul.addr %s163, 2
      %s167 = sadd.s32 %s165, %s166
      %s168 = smul.addr %s167, 4
      %s169 = scalar_lea.vmem %s0, %s168
      %s170 = smul.u32 2, %s19
      %p171 = scmp.lt.s32.totalorder %s18, 1
      %s172 = scalar_select %p171, %s18, 1
      %s173 = scalar_lea.vmem %s1, %s172
      %p174 = scmp.lt.s32.totalorder %s18, 1
      %s175 = scalar_select %p174, %s18, 1
      %s176 = scalar_lea.vmem %s2, %s175
      %p177 = scmp.eq.s32.totalorder %s19, 0
      // Predicated region
      $region25: #{generator_forward.35} parent=23 // pred_check
        %p178 = pneg %p177
      $region26: #{generator_forward.35} parent=23 // pred_check_branch
        %180 = sbr.rel (%p178) target = $region28
      $region27: #{generator_forward.35} parent=23 // pred_region
        %181 = vst [vmem:[%s173] sm:$0x1] 0.0
        %182 = vst [vmem:[%s176] sm:$0x1] 0.0
      $region28: #{generator_forward.35} parent=23 // pred_fallthru
        _
      %v183 = vld [vmem:[%s169] sm:$0xf]
      %v184 = vld [vmem:[%s169 + $0x4] sm:$0xf]
      %v185 = vunpack.c.l.bf16 %v183
      %v186 = vunpack.c.l.bf16 %v184
      %v187 = vld [vmem:[%s173] sm:$0x1]
      %v188 = vadd.f32 %v185, %v186
      %v189 = vrot.slane %v188, 4
      %v190 = vadd.f32 %v188, %v189
      %v191 = vrot.slane %v190, 2
      %v192 = vadd.f32 %v190, %v191
      %v193 = vrot.slane %v192, 1
      %v194 = vadd.f32 %v192, %v193
      %v195 = vadd.f32 %v187, %v194
      %196 = vst [vmem:[%s173] sm:$0x1] %v195
      %v197 = vld [vmem:[%s176] sm:$0x1]
      %v198 = vmul.f32 %v185, %v185
      %v199 = vmul.f32 %v186, %v186
      %v200 = vadd.f32 %v198, %v199
      %v201 = vrot.slane %v200, 4
      %v202 = vadd.f32 %v200, %v201
      %v203 = vrot.slane %v202, 2
      %v204 = vadd.f32 %v202, %v203
      %v205 = vrot.slane %v204, 1
      %v206 = vadd.f32 %v204, %v205
      %v207 = vadd.f32 %v197, %v206
      %208 = vst [vmem:[%s176] sm:$0x1] %v207
      %p209 = scmp.lt.s32.totalorder %s18, 1
      %s210 = scalar_select %p209, %s18, 1
      %s211 = scalar_lea.vmem %s1, %s210
      %p212 = scmp.lt.s32.totalorder %s18, 1
      %s213 = scalar_select %p212, %s18, 1
      %s214 = scalar_lea.vmem %s2, %s213
      // Predicated region
      $region29: #{generator_forward.35} parent=23 // pred_check
        %p215 = pneg %p72
      $region30: #{generator_forward.35} parent=23 // pred_check_branch
        %217 = sbr.rel (%p215) target = $region32
      $region31: #{generator_forward.35} parent=23 // pred_region
        _
      $region32: #{generator_forward.35} parent=23 // pred_fallthru
        _
      // Predicated region
      $region33: #{generator_forward.35} parent=23 // pred_check
        %p218 = pneg %p98
      $region34: #{generator_forward.35} parent=23 // pred_check_branch
        %220 = sbr.rel (%p218) target = $region36
      $region35: #{generator_forward.35} parent=23 // pred_region
        _
      $region36: #{generator_forward.35} parent=23 // pred_fallthru
        _
    $region24: #{generator_forward.35} parent=5 // pred_fallthru
      _
    %p221 = scmp.le.s32.totalorder 2, %s9
    // Predicated region
    $region37: #{generator_forward.35} parent=5 // pred_check
      %p222 = pneg %p221
    $region38: #{generator_forward.35} parent=5 // pred_check_branch
      %224 = sbr.rel (%p222) target = $region40
    $region39: #{generator_forward.35} parent=5 // pred_region
      %s225 = ssub.s32 %s9, 2
      // Predicated region
      $region41: #{generator_forward.35} parent=39 // pred_check
        %p226 = pneg %p78
      $region42: #{generator_forward.35} parent=39 // pred_check_branch
        %228 = sbr.rel (%p226) target = $region44
      $region43: #{generator_forward.35} parent=39 // pred_region
        %p229 = scmp.lt.s32.totalorder %s20, 1
        %s230 = scalar_select %p229, %s20, 1
        %s231 = scalar_lea.vmem %s1, %s230
      $region44: #{generator_forward.35} parent=39 // pred_fallthru
        _
      // Predicated region
      $region45: #{generator_forward.35} parent=39 // pred_check
        %p232 = pneg %p104
      $region46: #{generator_forward.35} parent=39 // pred_check_branch
        %234 = sbr.rel (%p232) target = $region48
      $region47: #{generator_forward.35} parent=39 // pred_region
        %p235 = scmp.lt.s32.totalorder %s20, 1
        %s236 = scalar_select %p235, %s20, 1
        %s237 = scalar_lea.vmem %s2, %s236
      $region48: #{generator_forward.35} parent=39 // pred_fallthru
        _
    $region40: #{generator_forward.35} parent=5 // pred_fallthru
      _
  $region6: #{generator_forward.35} parent=0 // loop_footer
    %s13 = sadd.s32 1, %s9
  $region7: #{generator_forward.35} parent=0 // loop_footer_branch
    %8 = sbr.rel target = $region3
  $region8: #{generator_forward.35} parent=0 // loop_exit
    _

// kernel: generator_forward.36
$region0: #{generator_forward.36}
  #allocation0 [shape = 'u32[]', space=smem, size = 0x4, offset = 0x4, fixed_abs, tag = 'smem constant byte address 0x4 - core index']
  #allocation1 [shape = 'u32[144,128]{1,0:T(1,128)}', space=vmem, size = 0x12000, scoped, tag = 'internal scratch']
  %s0 = inlined_call_operand.vmem [shape: bf16[2,16,128], index: 0, kind: input, shape index: {}]
  %s1 = inlined_call_operand.vmem [shape: f32[2,1,128], index: 1, kind: input, shape index: {}]
  %s2 = inlined_call_operand.vmem [shape: f32[2,1,128], index: 2, kind: input, shape index: {}]
  %s3 = inlined_call_operand.vmem [shape: bf16[2,16,128], index: 3, kind: output, shape index: {}]
  %s4 = sld [smem:[#allocation0]]
  $region45: #{generator_forward.36} parent=0
    _
  %s6 = ssub.s32 1, %s4
  %s7 = scalar_select 0, %s6, %s4
  loop: start=0, step=1, limit=4
  $region2: #{generator_forward.36} parent=0 // loop_pre_header
    _
  $region3: #{generator_forward.36} parent=0 // loop_header
    %s9 = sphi 0, %s13
    %p10 = scmp.ge.s32.totalorder %s9, 4
    %s16 = sphi 0, %s28
    %s17 = sphi 0, %s24
    %s18 = sphi 0, %s16
    %s19 = sphi 0, %s17
    %s20 = sphi 0, %s18
    %s21 = sphi 0, %s19
    %s33 = sphi 0, %s35
    %s36 = sphi 0, %s33
    %s37 = sphi 0, %s36
    %s53 = sphi 0, %s37
    %s59 = sphi 0, %s61
    %s62 = sphi 0, %s59
    %s63 = sphi 0, %s62
    %s79 = sphi 0, %s63
    %s85 = sphi 0, %s87
    %s88 = sphi 0, %s85
    %s89 = sphi 0, %s88
    %s105 = sphi 0, %s89
    %s113 = sphi 0, %s115
    %s116 = sphi 0, %s113
    %s117 = sphi 0, %s116
    %s133 = sphi 0, %s117
  $region4: #{generator_forward.36} parent=0 // loop_header_branch
    %12 = sbr.rel (%p10) target = $region8
  $region5: #{generator_forward.36} parent=0 // loop_body
    %s14 = ssub.s32 %s9, 1
    %s15 = ssub.s32 %s9, 2
    %s22 = sadd.s32 1, %s17
    %p23 = scmp.ge.s32.totalorder %s22, 1
    %s24 = scalar_select %p23, 0, %s22
    %s25 = sadd.s32 1, %s16
    %s26 = scalar_select %p23, %s25, %s16
    %p27 = scmp.ge.s32.totalorder %s26, 2
    %s28 = scalar_select %p27, 0, %s26
    %s29 = ssub.s32 %s16, %s28
    %s30 = ssub.s32 %s17, %s24
    %s31 = sor.u32 %s29, %s30
    %p32 = scmp.eq.s32.totalorder %s31, 0
    %s34 = sadd.s32 %s33, 1
    %s35 = scalar_select %p32, %s33, %s34
    %p38 = pneg %p32
    %p39 = scmp.eq.s32.totalorder %s9, 1
    %p40 = por %p38, %p39
    %p41 = scmp.ne.s32.totalorder %s33, %s36
    %p42 = scmp.eq.s32.totalorder %s9, 0
    %p43 = por %p41, %p42
    %p44 = scmp.ne.s32.totalorder %s33, %s36
    %p45 = scmp.eq.s32.totalorder %s14, 1
    %p46 = por %p44, %p45
    %p47 = scmp.ne.s32.totalorder %s36, %s37
    %p48 = scmp.eq.s32.totalorder %s14, 0
    %p49 = por %p47, %p48
    %p50 = scmp.ne.s32.totalorder %s36, %s37
    %p51 = scmp.eq.s32.totalorder %s15, 1
    %p52 = por %p50, %p51
    %p54 = scmp.ne.s32.totalorder %s37, %s53
    %p55 = scmp.eq.s32.totalorder %s15, 0
    %p56 = por %p54, %p55
    %s57 = ssub.s32 %s16, %s28
    %p58 = scmp.eq.s32.totalorder %s57, 0
    %s60 = sadd.s32 %s59, 1
    %s61 = scalar_select %p58, %s59, %s60
    %p64 = pneg %p58
    %p65 = scmp.eq.s32.totalorder %s9, 1
    %p66 = por %p64, %p65
    %p67 = scmp.ne.s32.totalorder %s59, %s62
    %p68 = scmp.eq.s32.totalorder %s9, 0
    %p69 = por %p67, %p68
    %p70 = scmp.ne.s32.totalorder %s59, %s62
    %p71 = scmp.eq.s32.totalorder %s14, 1
    %p72 = por %p70, %p71
    %p73 = scmp.ne.s32.totalorder %s62, %s63
    %p74 = scmp.eq.s32.totalorder %s14, 0
    %p75 = por %p73, %p74
    %p76 = scmp.ne.s32.totalorder %s62, %s63
    %p77 = scmp.eq.s32.totalorder %s15, 1
    %p78 = por %p76, %p77
    %p80 = scmp.ne.s32.totalorder %s63, %s79
    %p81 = scmp.eq.s32.totalorder %s15, 0
    %p82 = por %p80, %p81
    %s83 = ssub.s32 %s16, %s28
    %p84 = scmp.eq.s32.totalorder %s83, 0
    %s86 = sadd.s32 %s85, 1
    %s87 = scalar_select %p84, %s85, %s86
    %p90 = pneg %p84
    %p91 = scmp.eq.s32.totalorder %s9, 1
    %p92 = por %p90, %p91
    %p93 = scmp.ne.s32.totalorder %s85, %s88
    %p94 = scmp.eq.s32.totalorder %s9, 0
    %p95 = por %p93, %p94
    %p96 = scmp.ne.s32.totalorder %s85, %s88
    %p97 = scmp.eq.s32.totalorder %s14, 1
    %p98 = por %p96, %p97
    %p99 = scmp.ne.s32.totalorder %s88, %s89
    %p100 = scmp.eq.s32.totalorder %s14, 0
    %p101 = por %p99, %p100
    %p102 = scmp.ne.s32.totalorder %s88, %s89
    %p103 = scmp.eq.s32.totalorder %s15, 1
    %p104 = por %p102, %p103
    %p106 = scmp.ne.s32.totalorder %s89, %s105
    %p107 = scmp.eq.s32.totalorder %s15, 0
    %p108 = por %p106, %p107
    %s109 = ssub.s32 %s16, %s28
    %s110 = ssub.s32 %s17, %s24
    %s111 = sor.u32 %s109, %s110
    %p112 = scmp.eq.s32.totalorder %s111, 0
    %s114 = sadd.s32 %s113, 1
    %s115 = scalar_select %p112, %s113, %s114
    %p118 = pneg %p112
    %p119 = scmp.eq.s32.totalorder %s9, 1
    %p120 = por %p118, %p119
    %p121 = scmp.ne.s32.totalorder %s113, %s116
    %p122 = scmp.eq.s32.totalorder %s9, 0
    %p123 = por %p121, %p122
    %p124 = scmp.ne.s32.totalorder %s113, %s116
    %p125 = scmp.eq.s32.totalorder %s14, 1
    %p126 = por %p124, %p125
    %p127 = scmp.ne.s32.totalorder %s116, %s117
    %p128 = scmp.eq.s32.totalorder %s14, 0
    %p129 = por %p127, %p128
    %p130 = scmp.ne.s32.totalorder %s116, %s117
    %p131 = scmp.eq.s32.totalorder %s15, 1
    %p132 = por %p130, %p131
    %p134 = scmp.ne.s32.totalorder %s117, %s133
    %p135 = scmp.eq.s32.totalorder %s15, 0
    %p136 = por %p134, %p135
    %p137 = scmp.le.s32.totalorder 1, %s9
    %p138 = scmp.lt.s32.totalorder %s9, 3
    %p139 = pnand %p137, %p138
    %p140 = pneg %p139
    // Predicated region
    $region9: #{generator_forward.36} parent=5 // pred_check
      _
    $region10: #{generator_forward.36} parent=5 // pred_check_branch
      %142 = sbr.rel (%p139) target = $region12
    $region11: #{generator_forward.36} parent=5 // pred_region
      %s143 = ssub.s32 %s9, 1
    $region12: #{generator_forward.36} parent=5 // pred_fallthru
      _
    %p144 = scmp.lt.s32.totalorder %s9, 2
    // Predicated region
    $region13: #{generator_forward.36} parent=5 // pred_check
      %p145 = pneg %p144
    $region14: #{generator_forward.36} parent=5 // pred_check_branch
      %147 = sbr.rel (%p145) target = $region16
    $region15: #{generator_forward.36} parent=5 // pred_region
      // Predicated region
      $region17: #{generator_forward.36} parent=15 // pred_check
        %p148 = pneg %p43
      $region18: #{generator_forward.36} parent=15 // pred_check_branch
        %150 = sbr.rel (%p148) target = $region20
      $region19: #{generator_forward.36} parent=15 // pred_region
        %s151 = smul.u32 2, %s17
        %p152 = scmp.lt.s32.totalorder %s16, 1
        %s153 = scalar_select %p152, %s16, 1
        %p154 = scmp.lt.s32.totalorder %s151, 1
        %s155 = scalar_select %p154, %s151, 1
        %s156 = smul.addr %s153, 2
        %s157 = sadd.s32 %s155, %s156
        %s158 = smul.addr %s157, 4
        %s159 = scalar_lea.vmem %s0, %s158
        %s160 = smul.u32 2, %s17
      $region20: #{generator_forward.36} parent=15 // pred_fallthru
        _
      // Predicated region
      $region21: #{generator_forward.36} parent=15 // pred_check
        %p161 = pneg %p69
      $region22: #{generator_forward.36} parent=15 // pred_check_branch
        %163 = sbr.rel (%p161) target = $region24
      $region23: #{generator_forward.36} parent=15 // pred_region
        %p164 = scmp.lt.s32.totalorder %s16, 1
        %s165 = scalar_select %p164, %s16, 1
        %s166 = scalar_lea.vmem %s1, %s165
      $region24: #{generator_forward.36} parent=15 // pred_fallthru
        _
      // Predicated region
      $region25: #{generator_forward.36} parent=15 // pred_check
        %p167 = pneg %p95
      $region26: #{generator_forward.36} parent=15 // pred_check_branch
        %169 = sbr.rel (%p167) target = $region28
      $region27: #{generator_forward.36} parent=15 // pred_region
        %p170 = scmp.lt.s32.totalorder %s16, 1
        %s171 = scalar_select %p170, %s16, 1
        %s172 = scalar_lea.vmem %s2, %s171
      $region28: #{generator_forward.36} parent=15 // pred_fallthru
        _
    $region16: #{generator_forward.36} parent=5 // pred_fallthru
      _
    %p173 = scmp.le.s32.totalorder 1, %s9
    %p174 = scmp.lt.s32.totalorder %s9, 3
    %p175 = pnand %p173, %p174
    %p176 = pneg %p175
    // Predicated region
    $region29: #{generator_forward.36} parent=5 // pred_check
      _
    $region30: #{generator_forward.36} parent=5 // pred_check_branch
      %178 = sbr.rel (%p175) target = $region32
    $region31: #{generator_forward.36} parent=5 // pred_region
      %s179 = ssub.s32 %s9, 1
      %s180 = smul.u32 2, %s19
      %p181 = scmp.lt.s32.totalorder %s18, 1
      %s182 = scalar_select %p181, %s18, 1
      %p183 = scmp.lt.s32.totalorder %s180, 1
      %s184 = scalar_select %p183, %s180, 1
      %s185 = smul.addr %s182, 2
      %s186 = sadd.s32 %s184, %s185
      %s187 = smul.addr %s186, 4
      %s188 = scalar_lea.vmem %s0, %s187
      %p189 = pneg %p49
      %p190 = pneg %p46
      %p191 = scmp.lt.s32.totalorder %s18, 1
      %s192 = scalar_select %p191, %s18, 1
      %s193 = scalar_lea.vmem %s1, %s192
      %p194 = pneg %p75
      %p195 = pneg %p72
      %p196 = scmp.lt.s32.totalorder %s18, 1
      %s197 = scalar_select %p196, %s18, 1
      %s198 = scalar_lea.vmem %s2, %s197
      %p199 = pneg %p101
      %p200 = pneg %p98
      %p201 = pneg %p129
      %p202 = pneg %p126
      %s203 = smul.u32 2, %s19
      %p204 = scmp.lt.s32.totalorder %s18, 1
      %s205 = scalar_select %p204, %s18, 1
      %p206 = scmp.lt.s32.totalorder %s203, 1
      %s207 = scalar_select %p206, %s203, 1
      %s208 = smul.addr %s205, 2
      %s209 = sadd.s32 %s207, %s208
      %s210 = smul.addr %s209, 4
      %s211 = scalar_lea.vmem %s3, %s210
      %s212 = smul.u32 2, %s19
      %p213 = scmp.lt.s32.totalorder %s18, 1
      %s214 = scalar_select %p213, %s18, 1
      %p215 = scmp.lt.s32.totalorder %s212, 1
      %s216 = scalar_select %p215, %s212, 1
      %s217 = smul.addr %s214, 2
      %s218 = sadd.s32 %s216, %s217
      %s219 = smul.addr %s218, 4
      %s220 = scalar_lea.vmem %s0, %s219
      %s221 = smul.u32 2, %s19
      %p222 = scmp.lt.s32.totalorder %s18, 1
      %s223 = scalar_select %p222, %s18, 1
      %s224 = scalar_lea.vmem %s1, %s223
      %p225 = scmp.lt.s32.totalorder %s18, 1
      %s226 = scalar_select %p225, %s18, 1
      %s227 = scalar_lea.vmem %s2, %s226
      %s228 = smul.u32 2, %s19
      %p229 = scmp.lt.s32.totalorder %s18, 1
      %s230 = scalar_select %p229, %s18, 1
      %p231 = scmp.lt.s32.totalorder %s228, 1
      %s232 = scalar_select %p231, %s228, 1
      %s233 = smul.addr %s230, 2
      %s234 = sadd.s32 %s232, %s233
      %s235 = smul.addr %s234, 4
      %s236 = scalar_lea.vmem %s3, %s235
      %s237 = smul.u32 2, %s19
      %v238 = vld [vmem:[%s220] sm:$0xf]
      %v239 = vld [vmem:[%s220 + $0x4] sm:$0xf]
      %v240 = vunpack.c.l.bf16 %v238
      %v241 = vunpack.c.l.bf16 %v239
      %v242 = vld [vmem:[%s224] sm:$0x1]
      %v243 = vmul.f32 %v242, 0.0625
      %v244 = vld [vmem:[%s227] sm:$0x1]
      %v245 = vmul.f32 %v244, 0.0625
      %v246 = vmul.f32 %v243, %v243
      %v247 = vsub.f32 %v245, %v246
      %v248 = vmax.f32 %v247, 0.0
      %v250 = vlaneseq
      %v251 = vshrl.u32 %v250, 7
      %v252 = vsub.s32 0, %v251
      %v253 = vrot.slane %v243, %v252
      %v255 = vsub.f32 %v240, %v253
      %v256 = vsub.f32 %v241, %v253
      %v257 = vadd.f32 %v248, 1e-05
      %v258 = vrsqrt.pop %v257
      %v260 = vlaneseq
      %v261 = vshrl.u32 %v260, 7
      %v262 = vsub.s32 0, %v261
      %v263 = vrot.slane %v258, %v262
      %v265 = vmul.f32 %v255, %v263
      %v266 = vmul.f32 %v256, %v263
      %v267 = vmax.f32 %v265, 0.0
      %v268 = vmax.f32 %v266, 0.0
      %v269 = vpack.c.bf16 %v268, %v267
      %v271 = vunpack.c.l.b16 %v269
      %v272 = vunpack.c.h.b16 %v269
      %v273 = vpack.c.b16 %v271, %v271
      %v274 = vpack.c.b16 %v272, %v272
      %277 = vst [vmem:[%s236] sm:$0xf] %v273
      %278 = vst [vmem:[%s236 + $0x4] sm:$0xf] %v274
      %s279 = smul.u32 2, %s19
      %p280 = scmp.lt.s32.totalorder %s18, 1
      %s281 = scalar_select %p280, %s18, 1
      %p282 = scmp.lt.s32.totalorder %s279, 1
      %s283 = scalar_select %p282, %s279, 1
      %s284 = smul.addr %s281, 2
      %s285 = sadd.s32 %s283, %s284
      %s286 = smul.addr %s285, 4
      %s287 = scalar_lea.vmem %s3, %s286
      // Predicated region
      $region33: #{generator_forward.36} parent=31 // pred_check
        %p288 = pneg %p126
      $region34: #{generator_forward.36} parent=31 // pred_check_branch
        %290 = sbr.rel (%p288) target = $region36
      $region35: #{generator_forward.36} parent=31 // pred_region
        %s291 = smul.u32 2, %s19
      $region36: #{generator_forward.36} parent=31 // pred_fallthru
        _
    $region32: #{generator_forward.36} parent=5 // pred_fallthru
      _
    %p292 = scmp.le.s32.totalorder 2, %s9
    // Predicated region
    $region37: #{generator_forward.36} parent=5 // pred_check
      %p293 = pneg %p292
    $region38: #{generator_forward.36} parent=5 // pred_check_branch
      %295 = sbr.rel (%p293) target = $region40
    $region39: #{generator_forward.36} parent=5 // pred_region
      %s296 = ssub.s32 %s9, 2
      // Predicated region
      $region41: #{generator_forward.36} parent=39 // pred_check
        %p297 = pneg %p132
      $region42: #{generator_forward.36} parent=39 // pred_check_branch
        %299 = sbr.rel (%p297) target = $region44
      $region43: #{generator_forward.36} parent=39 // pred_region
        %s300 = smul.u32 2, %s21
        %p301 = scmp.lt.s32.totalorder %s20, 1
        %s302 = scalar_select %p301, %s20, 1
        %p303 = scmp.lt.s32.totalorder %s300, 1
        %s304 = scalar_select %p303, %s300, 1
        %s305 = smul.addr %s302, 2
        %s306 = sadd.s32 %s304, %s305
        %s307 = smul.addr %s306, 4
        %s308 = scalar_lea.vmem %s3, %s307
      $region44: #{generator_forward.36} parent=39 // pred_fallthru
        _
    $region40: #{generator_forward.36} parent=5 // pred_fallthru
      _
  $region6: #{generator_forward.36} parent=0 // loop_footer
    %s13 = sadd.s32 1, %s9
  $region7: #{generator_forward.36} parent=0 // loop_footer_branch
    %8 = sbr.rel target = $region3
  $region8: #{generator_forward.36} parent=0 // loop_exit
    _

// kernel: generator_forward.42
$region0: #{generator_forward.42}
  #allocation0 [shape = 'u32[]', space=smem, size = 0x4, offset = 0x4, fixed_abs, tag = 'smem constant byte address 0x4 - core index']
  #allocation1 [shape = 'u32[144,128]{1,0:T(1,128)}', space=vmem, size = 0x12000, scoped, tag = 'internal scratch']
  %s0 = inlined_call_operand.vmem [shape: bf16[2,16,128], index: 0, kind: input, shape index: {}]
  %s1 = inlined_call_operand.vmem [shape: f32[2,1,128], index: 1, kind: input, shape index: {}]
  %s2 = inlined_call_operand.vmem [shape: f32[2,1,128], index: 2, kind: input, shape index: {}]
  %s3 = inlined_call_operand.vmem [shape: bf16[2,16,128], index: 3, kind: input, shape index: {}]
  %s4 = inlined_call_operand.vmem [shape: bf16[2,16,128], index: 4, kind: output, shape index: {}]
  %s5 = sld [smem:[#allocation0]]
  $region49: #{generator_forward.42} parent=0
    _
  %s7 = ssub.s32 1, %s5
  %s8 = scalar_select 0, %s7, %s5
  loop: start=0, step=1, limit=4
  $region2: #{generator_forward.42} parent=0 // loop_pre_header
    _
  $region3: #{generator_forward.42} parent=0 // loop_header
    %s10 = sphi 0, %s14
    %p11 = scmp.ge.s32.totalorder %s10, 4
    %s17 = sphi 0, %s29
    %s18 = sphi 0, %s25
    %s19 = sphi 0, %s17
    %s20 = sphi 0, %s18
    %s21 = sphi 0, %s19
    %s22 = sphi 0, %s20
    %s34 = sphi 0, %s36
    %s37 = sphi 0, %s34
    %s38 = sphi 0, %s37
    %s54 = sphi 0, %s38
    %s60 = sphi 0, %s62
    %s63 = sphi 0, %s60
    %s64 = sphi 0, %s63
    %s80 = sphi 0, %s64
    %s86 = sphi 0, %s88
    %s89 = sphi 0, %s86
    %s90 = sphi 0, %s89
    %s106 = sphi 0, %s90
    %s114 = sphi 0, %s116
    %s117 = sphi 0, %s114
    %s118 = sphi 0, %s117
    %s134 = sphi 0, %s118
    %s142 = sphi 0, %s144
    %s145 = sphi 0, %s142
    %s146 = sphi 0, %s145
    %s162 = sphi 0, %s146
  $region4: #{generator_forward.42} parent=0 // loop_header_branch
    %13 = sbr.rel (%p11) target = $region8
  $region5: #{generator_forward.42} parent=0 // loop_body
    %s15 = ssub.s32 %s10, 1
    %s16 = ssub.s32 %s10, 2
    %s23 = sadd.s32 1, %s18
    %p24 = scmp.ge.s32.totalorder %s23, 1
    %s25 = scalar_select %p24, 0, %s23
    %s26 = sadd.s32 1, %s17
    %s27 = scalar_select %p24, %s26, %s17
    %p28 = scmp.ge.s32.totalorder %s27, 2
    %s29 = scalar_select %p28, 0, %s27
    %s30 = ssub.s32 %s17, %s29
    %s31 = ssub.s32 %s18, %s25
    %s32 = sor.u32 %s30, %s31
    %p33 = scmp.eq.s32.totalorder %s32, 0
    %s35 = sadd.s32 %s34, 1
    %s36 = scalar_select %p33, %s34, %s35
    %p39 = pneg %p33
    %p40 = scmp.eq.s32.totalorder %s10, 1
    %p41 = por %p39, %p40
    %p42 = scmp.ne.s32.totalorder %s34, %s37
    %p43 = scmp.eq.s32.totalorder %s10, 0
    %p44 = por %p42, %p43
    %p45 = scmp.ne.s32.totalorder %s34, %s37
    %p46 = scmp.eq.s32.totalorder %s15, 1
    %p47 = por %p45, %p46
    %p48 = scmp.ne.s32.totalorder %s37, %s38
    %p49 = scmp.eq.s32.totalorder %s15, 0
    %p50 = por %p48, %p49
    %p51 = scmp.ne.s32.totalorder %s37, %s38
    %p52 = scmp.eq.s32.totalorder %s16, 1
    %p53 = por %p51, %p52
    %p55 = scmp.ne.s32.totalorder %s38, %s54
    %p56 = scmp.eq.s32.totalorder %s16, 0
    %p57 = por %p55, %p56
    %s58 = ssub.s32 %s17, %s29
    %p59 = scmp.eq.s32.totalorder %s58, 0
    %s61 = sadd.s32 %s60, 1
    %s62 = scalar_select %p59, %s60, %s61
    %p65 = pneg %p59
    %p66 = scmp.eq.s32.totalorder %s10, 1
    %p67 = por %p65, %p66
    %p68 = scmp.ne.s32.totalorder %s60, %s63
    %p69 = scmp.eq.s32.totalorder %s10, 0
    %p70 = por %p68, %p69
    %p71 = scmp.ne.s32.totalorder %s60, %s63
    %p72 = scmp.eq.s32.totalorder %s15, 1
    %p73 = por %p71, %p72
    %p74 = scmp.ne.s32.totalorder %s63, %s64
    %p75 = scmp.eq.s32.totalorder %s15, 0
    %p76 = por %p74, %p75
    %p77 = scmp.ne.s32.totalorder %s63, %s64
    %p78 = scmp.eq.s32.totalorder %s16, 1
    %p79 = por %p77, %p78
    %p81 = scmp.ne.s32.totalorder %s64, %s80
    %p82 = scmp.eq.s32.totalorder %s16, 0
    %p83 = por %p81, %p82
    %s84 = ssub.s32 %s17, %s29
    %p85 = scmp.eq.s32.totalorder %s84, 0
    %s87 = sadd.s32 %s86, 1
    %s88 = scalar_select %p85, %s86, %s87
    %p91 = pneg %p85
    %p92 = scmp.eq.s32.totalorder %s10, 1
    %p93 = por %p91, %p92
    %p94 = scmp.ne.s32.totalorder %s86, %s89
    %p95 = scmp.eq.s32.totalorder %s10, 0
    %p96 = por %p94, %p95
    %p97 = scmp.ne.s32.totalorder %s86, %s89
    %p98 = scmp.eq.s32.totalorder %s15, 1
    %p99 = por %p97, %p98
    %p100 = scmp.ne.s32.totalorder %s89, %s90
    %p101 = scmp.eq.s32.totalorder %s15, 0
    %p102 = por %p100, %p101
    %p103 = scmp.ne.s32.totalorder %s89, %s90
    %p104 = scmp.eq.s32.totalorder %s16, 1
    %p105 = por %p103, %p104
    %p107 = scmp.ne.s32.totalorder %s90, %s106
    %p108 = scmp.eq.s32.totalorder %s16, 0
    %p109 = por %p107, %p108
    %s110 = ssub.s32 %s17, %s29
    %s111 = ssub.s32 %s18, %s25
    %s112 = sor.u32 %s110, %s111
    %p113 = scmp.eq.s32.totalorder %s112, 0
    %s115 = sadd.s32 %s114, 1
    %s116 = scalar_select %p113, %s114, %s115
    %p119 = pneg %p113
    %p120 = scmp.eq.s32.totalorder %s10, 1
    %p121 = por %p119, %p120
    %p122 = scmp.ne.s32.totalorder %s114, %s117
    %p123 = scmp.eq.s32.totalorder %s10, 0
    %p124 = por %p122, %p123
    %p125 = scmp.ne.s32.totalorder %s114, %s117
    %p126 = scmp.eq.s32.totalorder %s15, 1
    %p127 = por %p125, %p126
    %p128 = scmp.ne.s32.totalorder %s117, %s118
    %p129 = scmp.eq.s32.totalorder %s15, 0
    %p130 = por %p128, %p129
    %p131 = scmp.ne.s32.totalorder %s117, %s118
    %p132 = scmp.eq.s32.totalorder %s16, 1
    %p133 = por %p131, %p132
    %p135 = scmp.ne.s32.totalorder %s118, %s134
    %p136 = scmp.eq.s32.totalorder %s16, 0
    %p137 = por %p135, %p136
    %s138 = ssub.s32 %s17, %s29
    %s139 = ssub.s32 %s18, %s25
    %s140 = sor.u32 %s138, %s139
    %p141 = scmp.eq.s32.totalorder %s140, 0
    %s143 = sadd.s32 %s142, 1
    %s144 = scalar_select %p141, %s142, %s143
    %p147 = pneg %p141
    %p148 = scmp.eq.s32.totalorder %s10, 1
    %p149 = por %p147, %p148
    %p150 = scmp.ne.s32.totalorder %s142, %s145
    %p151 = scmp.eq.s32.totalorder %s10, 0
    %p152 = por %p150, %p151
    %p153 = scmp.ne.s32.totalorder %s142, %s145
    %p154 = scmp.eq.s32.totalorder %s15, 1
    %p155 = por %p153, %p154
    %p156 = scmp.ne.s32.totalorder %s145, %s146
    %p157 = scmp.eq.s32.totalorder %s15, 0
    %p158 = por %p156, %p157
    %p159 = scmp.ne.s32.totalorder %s145, %s146
    %p160 = scmp.eq.s32.totalorder %s16, 1
    %p161 = por %p159, %p160
    %p163 = scmp.ne.s32.totalorder %s146, %s162
    %p164 = scmp.eq.s32.totalorder %s16, 0
    %p165 = por %p163, %p164
    %p166 = scmp.le.s32.totalorder 1, %s10
    %p167 = scmp.lt.s32.totalorder %s10, 3
    %p168 = pnand %p166, %p167
    %p169 = pneg %p168
    // Predicated region
    $region9: #{generator_forward.42} parent=5 // pred_check
      _
    $region10: #{generator_forward.42} parent=5 // pred_check_branch
      %171 = sbr.rel (%p168) target = $region12
    $region11: #{generator_forward.42} parent=5 // pred_region
      %s172 = ssub.s32 %s10, 1
    $region12: #{generator_forward.42} parent=5 // pred_fallthru
      _
    %p173 = scmp.lt.s32.totalorder %s10, 2
    // Predicated region
    $region13: #{generator_forward.42} parent=5 // pred_check
      %p174 = pneg %p173
    $region14: #{generator_forward.42} parent=5 // pred_check_branch
      %176 = sbr.rel (%p174) target = $region16
    $region15: #{generator_forward.42} parent=5 // pred_region
      // Predicated region
      $region17: #{generator_forward.42} parent=15 // pred_check
        %p177 = pneg %p44
      $region18: #{generator_forward.42} parent=15 // pred_check_branch
        %179 = sbr.rel (%p177) target = $region20
      $region19: #{generator_forward.42} parent=15 // pred_region
        %s180 = smul.u32 2, %s18
        %p181 = scmp.lt.s32.totalorder %s17, 1
        %s182 = scalar_select %p181, %s17, 1
        %p183 = scmp.lt.s32.totalorder %s180, 1
        %s184 = scalar_select %p183, %s180, 1
        %s185 = smul.addr %s182, 2
        %s186 = sadd.s32 %s184, %s185
        %s187 = smul.addr %s186, 4
        %s188 = scalar_lea.vmem %s0, %s187
        %s189 = smul.u32 2, %s18
      $region20: #{generator_forward.42} parent=15 // pred_fallthru
        _
      // Predicated region
      $region21: #{generator_forward.42} parent=15 // pred_check
        %p190 = pneg %p70
      $region22: #{generator_forward.42} parent=15 // pred_check_branch
        %192 = sbr.rel (%p190) target = $region24
      $region23: #{generator_forward.42} parent=15 // pred_region
        %p193 = scmp.lt.s32.totalorder %s17, 1
        %s194 = scalar_select %p193, %s17, 1
        %s195 = scalar_lea.vmem %s1, %s194
      $region24: #{generator_forward.42} parent=15 // pred_fallthru
        _
      // Predicated region
      $region25: #{generator_forward.42} parent=15 // pred_check
        %p196 = pneg %p96
      $region26: #{generator_forward.42} parent=15 // pred_check_branch
        %198 = sbr.rel (%p196) target = $region28
      $region27: #{generator_forward.42} parent=15 // pred_region
        %p199 = scmp.lt.s32.totalorder %s17, 1
        %s200 = scalar_select %p199, %s17, 1
        %s201 = scalar_lea.vmem %s2, %s200
      $region28: #{generator_forward.42} parent=15 // pred_fallthru
        _
      // Predicated region
      $region29: #{generator_forward.42} parent=15 // pred_check
        %p202 = pneg %p124
      $region30: #{generator_forward.42} parent=15 // pred_check_branch
        %204 = sbr.rel (%p202) target = $region32
      $region31: #{generator_forward.42} parent=15 // pred_region
        %s205 = smul.u32 2, %s18
        %p206 = scmp.lt.s32.totalorder %s17, 1
        %s207 = scalar_select %p206, %s17, 1
        %p208 = scmp.lt.s32.totalorder %s205, 1
        %s209 = scalar_select %p208, %s205, 1
        %s210 = smul.addr %s207, 2
        %s211 = sadd.s32 %s209, %s210
        %s212 = smul.addr %s211, 4
        %s213 = scalar_lea.vmem %s3, %s212
        %s214 = smul.u32 2, %s18
      $region32: #{generator_forward.42} parent=15 // pred_fallthru
        _
    $region16: #{generator_forward.42} parent=5 // pred_fallthru
      _
    %p215 = scmp.le.s32.totalorder 1, %s10
    %p216 = scmp.lt.s32.totalorder %s10, 3
    %p217 = pnand %p215, %p216
    %p218 = pneg %p217
    // Predicated region
    $region33: #{generator_forward.42} parent=5 // pred_check
      _
    $region34: #{generator_forward.42} parent=5 // pred_check_branch
      %220 = sbr.rel (%p217) target = $region36
    $region35: #{generator_forward.42} parent=5 // pred_region
      %s221 = ssub.s32 %s10, 1
      %s222 = smul.u32 2, %s20
      %p223 = scmp.lt.s32.totalorder %s19, 1
      %s224 = scalar_select %p223, %s19, 1
      %p225 = scmp.lt.s32.totalorder %s222, 1
      %s226 = scalar_select %p225, %s222, 1
      %s227 = smul.addr %s224, 2
      %s228 = sadd.s32 %s226, %s227
      %s229 = smul.addr %s228, 4
      %s230 = scalar_lea.vmem %s0, %s229
      %p231 = pneg %p50
      %p232 = pneg %p47
      %p233 = scmp.lt.s32.totalorder %s19, 1
      %s234 = scalar_select %p233, %s19, 1
      %s235 = scalar_lea.vmem %s1, %s234
      %p236 = pneg %p76
      %p237 = pneg %p73
      %p238 = scmp.lt.s32.totalorder %s19, 1
      %s239 = scalar_select %p238, %s19, 1
      %s240 = scalar_lea.vmem %s2, %s239
      %p241 = pneg %p102
      %p242 = pneg %p99
      %s243 = smul.u32 2, %s20
      %p244 = scmp.lt.s32.totalorder %s19, 1
      %s245 = scalar_select %p244, %s19, 1
      %p246 = scmp.lt.s32.totalorder %s243, 1
      %s247 = scalar_select %p246, %s243, 1
      %s248 = smul.addr %s245, 2
      %s249 = sadd.s32 %s247, %s248
      %s250 = smul.addr %s249, 4
      %s251 = scalar_lea.vmem %s3, %s250
      %p252 = pneg %p130
      %p253 = pneg %p127
      %p254 = pneg %p158
      %p255 = pneg %p155
      %s256 = smul.u32 2, %s20
      %p257 = scmp.lt.s32.totalorder %s19, 1
      %s258 = scalar_select %p257, %s19, 1
      %p259 = scmp.lt.s32.totalorder %s256, 1
      %s260 = scalar_select %p259, %s256, 1
      %s261 = smul.addr %s258, 2
      %s262 = sadd.s32 %s260, %s261
      %s263 = smul.addr %s262, 4
      %s264 = scalar_lea.vmem %s4, %s263
      %s265 = smul.u32 2, %s20
      %p266 = scmp.lt.s32.totalorder %s19, 1
      %s267 = scalar_select %p266, %s19, 1
      %p268 = scmp.lt.s32.totalorder %s265, 1
      %s269 = scalar_select %p268, %s265, 1
      %s270 = smul.addr %s267, 2
      %s271 = sadd.s32 %s269, %s270
      %s272 = smul.addr %s271, 4
      %s273 = scalar_lea.vmem %s0, %s272
      %s274 = smul.u32 2, %s20
      %p275 = scmp.lt.s32.totalorder %s19, 1
      %s276 = scalar_select %p275, %s19, 1
      %s277 = scalar_lea.vmem %s1, %s276
      %p278 = scmp.lt.s32.totalorder %s19, 1
      %s279 = scalar_select %p278, %s19, 1
      %s280 = scalar_lea.vmem %s2, %s279
      %s281 = smul.u32 2, %s20
      %p282 = scmp.lt.s32.totalorder %s19, 1
      %s283 = scalar_select %p282, %s19, 1
      %p284 = scmp.lt.s32.totalorder %s281, 1
      %s285 = scalar_select %p284, %s281, 1
      %s286 = smul.addr %s283, 2
      %s287 = sadd.s32 %s285, %s286
      %s288 = smul.addr %s287, 4
      %s289 = scalar_lea.vmem %s3, %s288
      %s290 = smul.u32 2, %s20
      %s291 = smul.u32 2, %s20
      %p292 = scmp.lt.s32.totalorder %s19, 1
      %s293 = scalar_select %p292, %s19, 1
      %p294 = scmp.lt.s32.totalorder %s291, 1
      %s295 = scalar_select %p294, %s291, 1
      %s296 = smul.addr %s293, 2
      %s297 = sadd.s32 %s295, %s296
      %s298 = smul.addr %s297, 4
      %s299 = scalar_lea.vmem %s4, %s298
      %s300 = smul.u32 2, %s20
      %v301 = vld [vmem:[%s273] sm:$0xf]
      %v302 = vld [vmem:[%s273 + $0x4] sm:$0xf]
      %v303 = vunpack.c.l.bf16 %v301
      %v304 = vunpack.c.l.bf16 %v302
      %v305 = vld [vmem:[%s277] sm:$0x1]
      %v306 = vmul.f32 %v305, 0.0625
      %v307 = vld [vmem:[%s280] sm:$0x1]
      %v308 = vmul.f32 %v307, 0.0625
      %v309 = vmul.f32 %v306, %v306
      %v310 = vsub.f32 %v308, %v309
      %v311 = vmax.f32 %v310, 0.0
      %v313 = vlaneseq
      %v314 = vshrl.u32 %v313, 7
      %v315 = vsub.s32 0, %v314
      %v316 = vrot.slane %v306, %v315
      %v318 = vsub.f32 %v303, %v316
      %v319 = vsub.f32 %v304, %v316
      %v320 = vadd.f32 %v311, 1e-05
      %v321 = vrsqrt.pop %v320
      %v323 = vlaneseq
      %v324 = vshrl.u32 %v323, 7
      %v325 = vsub.s32 0, %v324
      %v326 = vrot.slane %v321, %v325
      %v328 = vmul.f32 %v318, %v326
      %v329 = vmul.f32 %v319, %v326
      %v330 = vld [vmem:[%s289] sm:$0xf]
      %v331 = vld [vmem:[%s289 + $0x4] sm:$0xf]
      %v332 = vunpack.c.l.bf16 %v330
      %v333 = vunpack.c.l.bf16 %v331
      %v334 = vadd.f32 %v328, %v332
      %v335 = vadd.f32 %v329, %v333
      %v336 = vpack.c.bf16 %v335, %v334
      %v338 = vunpack.c.l.b16 %v336
      %v339 = vunpack.c.h.b16 %v336
      %v340 = vpack.c.b16 %v338, %v338
      %v341 = vpack.c.b16 %v339, %v339
      %344 = vst [vmem:[%s299] sm:$0xf] %v340
      %345 = vst [vmem:[%s299 + $0x4] sm:$0xf] %v341
      %s346 = smul.u32 2, %s20
      %p347 = scmp.lt.s32.totalorder %s19, 1
      %s348 = scalar_select %p347, %s19, 1
      %p349 = scmp.lt.s32.totalorder %s346, 1
      %s350 = scalar_select %p349, %s346, 1
      %s351 = smul.addr %s348, 2
      %s352 = sadd.s32 %s350, %s351
      %s353 = smul.addr %s352, 4
      %s354 = scalar_lea.vmem %s4, %s353
      // Predicated region
      $region37: #{generator_forward.42} parent=35 // pred_check
        %p355 = pneg %p155
      $region38: #{generator_forward.42} parent=35 // pred_check_branch
        %357 = sbr.rel (%p355) target = $region40
      $region39: #{generator_forward.42} parent=35 // pred_region
        %s358 = smul.u32 2, %s20
      $region40: #{generator_forward.42} parent=35 // pred_fallthru
        _
    $region36: #{generator_forward.42} parent=5 // pred_fallthru
      _
    %p359 = scmp.le.s32.totalorder 2, %s10
    // Predicated region
    $region41: #{generator_forward.42} parent=5 // pred_check
      %p360 = pneg %p359
    $region42: #{generator_forward.42} parent=5 // pred_check_branch
      %362 = sbr.rel (%p360) target = $region44
    $region43: #{generator_forward.42} parent=5 // pred_region
      %s363 = ssub.s32 %s10, 2
      // Predicated region
      $region45: #{generator_forward.42} parent=43 // pred_check
        %p364 = pneg %p161
      $region46: #{generator_forward.42} parent=43 // pred_check_branch
        %366 = sbr.rel (%p364) target = $region48
      $region47: #{generator_forward.42} parent=43 // pred_region
        %s367 = smul.u32 2, %s22
        %p368 = scmp.lt.s32.totalorder %s21, 1
        %s369 = scalar_select %p368, %s21, 1
        %p370 = scmp.lt.s32.totalorder %s367, 1
        %s371 = scalar_select %p370, %s367, 1
        %s372 = smul.addr %s369, 2
        %s373 = sadd.s32 %s371, %s372
        %s374 = smul.addr %s373, 4
        %s375 = scalar_lea.vmem %s4, %s374
      $region48: #{generator_forward.42} parent=43 // pred_fallthru
        _
    $region44: #{generator_forward.42} parent=5 // pred_fallthru
      _
  $region6: #{generator_forward.42} parent=0 // loop_footer
    %s14 = sadd.s32 1, %s10
  $region7: #{generator_forward.42} parent=0 // loop_footer_branch
    %9 = sbr.rel target = $region3
  $region8: #{generator_forward.42} parent=0 // loop_exit
    _

// kernel: generator_forward.52
$region0: #{generator_forward.52}
  #allocation0 [shape = 'u32[]', space=smem, size = 0x4, offset = 0x4, fixed_abs, tag = 'smem constant byte address 0x4 - core index']
  #allocation1 [shape = 'u32[144,128]{1,0:T(1,128)}', space=vmem, size = 0x12000, scoped, tag = 'internal scratch']
  #allocation2 [shape = 'f32[256,128]{1,0:T(8,128)}', space=vmem, size = 0x20000, scoped, tag = 'scratch operand']
  %s0 = inlined_call_operand.vmem [shape: bf16[512,1152], index: 0, kind: input, shape index: {}]
  %s1 = inlined_call_operand.vmem [shape: bf16[1152,128], index: 1, kind: input, shape index: {}]
  %s2 = inlined_call_operand.vmem [shape: f32[1,128], index: 2, kind: input, shape index: {}]
  %s3 = inlined_call_operand.vmem [shape: bf16[512,128], index: 3, kind: output, shape index: {}]
  %s4 = sld [smem:[#allocation0]]
  $region79: #{generator_forward.52} parent=0
    _
  %s6 = ssub.s32 1, %s4
  %s7 = scalar_select 0, %s6, %s4
  $region1: #{generator_forward.52} parent=0
    #allocation3 [shape = 'u8[393216]{0}', space=vmem, size = 0x60000, scoped, tag = 'input window, operand 0']
    loop: start=0, step=1, limit=8
    $region2: #{generator_forward.52} parent=1 // loop_pre_header
      _
    $region3: #{generator_forward.52} parent=1 // loop_header
      %s9 = sphi 0, %s13
      %p10 = scmp.ge.s32.totalorder %s9, 8
      %s16 = sphi 0, %s35
      %s17 = sphi 0, %s31
      %s18 = sphi 0, %s27
      %s19 = sphi 0, %s16
      %s20 = sphi 0, %s17
      %s21 = sphi 0, %s18
      %s22 = sphi 0, %s19
      %s23 = sphi 0, %s20
      %s24 = sphi 0, %s21
      %s40 = sphi 0, %s42
      %s43 = sphi 0, %s40
      %s44 = sphi 0, %s43
      %s60 = sphi 0, %s44
      %s68 = sphi 0, %s70
      %s71 = sphi 0, %s68
      %s72 = sphi 0, %s71
      %s88 = sphi 0, %s72
      %s94 = sphi 0, %s96
      %s97 = sphi 0, %s94
      %s98 = sphi 0, %s97
      %s114 = sphi 0, %s98
      %s122 = sphi 0, %s124
      %s125 = sphi 0, %s122
      %s126 = sphi 0, %s125
      %s142 = sphi 0, %s126
    $region4: #{generator_forward.52} parent=1 // loop_header_branch
      %12 = sbr.rel (%p10) target = $region8
    $region5: #{generator_forward.52} parent=1 // loop_body
      %s14 = ssub.s32 %s9, 1
      %s15 = ssub.s32 %s9, 2
      %s25 = sadd.s32 1, %s18
      %p26 = scmp.ge.s32.totalorder %s25, 3
      %s27 = scalar_select %p26, 0, %s25
      %s28 = sadd.s32 1, %s17
      %s29 = scalar_select %p26, %s28, %s17
      %p30 = scmp.ge.s32.totalorder %s29, 1
      %s31 = scalar_select %p30, 0, %s29
      %s32 = sadd.s32 1, %s16
      %s33 = scalar_select %p30, %s32, %s16
      %p34 = scmp.ge.s32.totalorder %s33, 2
      %s35 = scalar_select %p34, 0, %s33
      %s36 = ssub.s32 %s16, %s35
      %s37 = ssub.s32 %s18, %s27
      %s38 = sor.u32 %s36, %s37
      %p39 = scmp.eq.s32.totalorder %s38, 0
      %s41 = sadd.s32 %s40, 1
      %s42 = scalar_select %p39, %s40, %s41
      %p45 = pneg %p39
      %p46 = scmp.eq.s32.totalorder %s9, 5
      %p47 = por %p45, %p46
      %p48 = scmp.ne.s32.totalorder %s40, %s43
      %p49 = scmp.eq.s32.totalorder %s9, 0
      %p50 = por %p48, %p49
      %p51 = scmp.ne.s32.totalorder %s40, %s43
      %p52 = scmp.eq.s32.totalorder %s14, 5
      %p53 = por %p51, %p52
      %p54 = scmp.ne.s32.totalorder %s43, %s44
      %p55 = scmp.eq.s32.totalorder %s14, 0
      %p56 = por %p54, %p55
      %p57 = scmp.ne.s32.totalorder %s43, %s44
      %p58 = scmp.eq.s32.totalorder %s15, 5
      %p59 = por %p57, %p58
      %p61 = scmp.ne.s32.totalorder %s44, %s60
      %p62 = scmp.eq.s32.totalorder %s15, 0
      %p63 = por %p61, %p62
      %s64 = ssub.s32 %s18, %s27
      %s65 = ssub.s32 %s17, %s31
      %s66 = sor.u32 %s64, %s65
      %p67 = scmp.eq.s32.totalorder %s66, 0
      %s69 = sadd.s32 %s68, 1
      %s70 = scalar_select %p67, %s68, %s69
      %p73 = pneg %p67
      %p74 = scmp.eq.s32.totalorder %s9, 5
      %p75 = por %p73, %p74
      %p76 = scmp.ne.s32.totalorder %s68, %s71
      %p77 = scmp.eq.s32.totalorder %s9, 0
      %p78 = por %p76, %p77
      %p79 = scmp.ne.s32.totalorder %s68, %s71
      %p80 = scmp.eq.s32.totalorder %s14, 5
      %p81 = por %p79, %p80
      %p82 = scmp.ne.s32.totalorder %s71, %s72
      %p83 = scmp.eq.s32.totalorder %s14, 0
      %p84 = por %p82, %p83
      %p85 = scmp.ne.s32.totalorder %s71, %s72
      %p86 = scmp.eq.s32.totalorder %s15, 5
      %p87 = por %p85, %p86
      %p89 = scmp.ne.s32.totalorder %s72, %s88
      %p90 = scmp.eq.s32.totalorder %s15, 0
      %p91 = por %p89, %p90
      %s92 = ssub.s32 %s17, %s31
      %p93 = scmp.eq.s32.totalorder %s92, 0
      %s95 = sadd.s32 %s94, 1
      %s96 = scalar_select %p93, %s94, %s95
      %p99 = pneg %p93
      %p100 = scmp.eq.s32.totalorder %s9, 5
      %p101 = por %p99, %p100
      %p102 = scmp.ne.s32.totalorder %s94, %s97
      %p103 = scmp.eq.s32.totalorder %s9, 0
      %p104 = por %p102, %p103
      %p105 = scmp.ne.s32.totalorder %s94, %s97
      %p106 = scmp.eq.s32.totalorder %s14, 5
      %p107 = por %p105, %p106
      %p108 = scmp.ne.s32.totalorder %s97, %s98
      %p109 = scmp.eq.s32.totalorder %s14, 0
      %p110 = por %p108, %p109
      %p111 = scmp.ne.s32.totalorder %s97, %s98
      %p112 = scmp.eq.s32.totalorder %s15, 5
      %p113 = por %p111, %p112
      %p115 = scmp.ne.s32.totalorder %s98, %s114
      %p116 = scmp.eq.s32.totalorder %s15, 0
      %p117 = por %p115, %p116
      %s118 = ssub.s32 %s16, %s35
      %s119 = ssub.s32 %s17, %s31
      %s120 = sor.u32 %s118, %s119
      %p121 = scmp.eq.s32.totalorder %s120, 0
      %s123 = sadd.s32 %s122, 1
      %s124 = scalar_select %p121, %s122, %s123
      %p127 = pneg %p121
      %p128 = scmp.eq.s32.totalorder %s9, 5
      %p129 = por %p127, %p128
      %p130 = scmp.ne.s32.totalorder %s122, %s125
      %p131 = scmp.eq.s32.totalorder %s9, 0
      %p132 = por %p130, %p131
      %p133 = scmp.ne.s32.totalorder %s122, %s125
      %p134 = scmp.eq.s32.totalorder %s14, 5
      %p135 = por %p133, %p134
      %p136 = scmp.ne.s32.totalorder %s125, %s126
      %p137 = scmp.eq.s32.totalorder %s14, 0
      %p138 = por %p136, %p137
      %p139 = scmp.ne.s32.totalorder %s125, %s126
      %p140 = scmp.eq.s32.totalorder %s15, 5
      %p141 = por %p139, %p140
      %p143 = scmp.ne.s32.totalorder %s126, %s142
      %p144 = scmp.eq.s32.totalorder %s15, 0
      %p145 = por %p143, %p144
      %p146 = scmp.le.s32.totalorder 1, %s9
      %p147 = scmp.lt.s32.totalorder %s9, 7
      %p148 = pnand %p146, %p147
      %p149 = pneg %p148
      // Predicated region
      $region9: #{generator_forward.52} parent=5 // pred_check
        _
      $region10: #{generator_forward.52} parent=5 // pred_check_branch
        %151 = sbr.rel (%p148) target = $region12
      $region11: #{generator_forward.52} parent=5 // pred_region
        %s152 = ssub.s32 %s9, 1
        // Predicated region
        $region13: #{generator_forward.52} parent=11 // pred_check
          %p153 = pneg %p110
        $region14: #{generator_forward.52} parent=11 // pred_check_branch
          %155 = sbr.rel (%p153) target = $region16
        $region15: #{generator_forward.52} parent=11 // pred_region
          %p156 = scmp.lt.s32.totalorder %s20, 0
          %s157 = scalar_select %p156, %s20, 0
          %s158 = scalar_lea.vmem %s2, %s157
        $region16: #{generator_forward.52} parent=11 // pred_fallthru
          _
      $region12: #{generator_forward.52} parent=5 // pred_fallthru
        _
      %p159 = scmp.lt.s32.totalorder %s9, 6
      // Predicated region
      $region17: #{generator_forward.52} parent=5 // pred_check
        %p160 = pneg %p159
      $region18: #{generator_forward.52} parent=5 // pred_check_branch
        %162 = sbr.rel (%p160) target = $region20
      $region19: #{generator_forward.52} parent=5 // pred_region
        // Predicated region
        $region21: #{generator_forward.52} parent=19 // pred_check
          %p163 = pneg %p50
        $region22: #{generator_forward.52} parent=19 // pred_check_branch
          %165 = sbr.rel (%p163) target = $region24
        $region23: #{generator_forward.52} parent=19 // pred_region
          %s166 = sand.u32 %s40, 1
          %s167 = sand.u32 %s40, 1
          %s168 = smul.addr %s167, 384
          %s169 = scalar_lea.vmem [#allocation3], %s168
          %s170 = smul.u32 32, %s16
          %s171 = smul.u32 3, %s18
          %s172 = smul.addr %s170, 9
          %s173 = sadd.s32 %s171, %s172
          %s174 = smul.addr %s173, 4
          %s175 = scalar_lea.vmem %s0, %s174
          // Predicated region
          $region25: #{generator_forward.52} parent=23 // pred_check
            _
          $region26: #{generator_forward.52} parent=23 // pred_check_branch
            %177 = sbr.rel (0) target = $region28
          $region27: #{generator_forward.52} parent=23 // pred_region
            // Predicated region
            $region29: #{generator_forward.52} parent=27 // pred_check
              _
            $region30: #{generator_forward.52} parent=27 // pred_check_branch
              %179 = sbr.rel (0) target = $region32
            $region31: #{generator_forward.52} parent=27 // pred_region
              %s180 = scalar_lea.vmem %s175, 8
              %s181 = scalar_lea.vmem %s169, 8 [#allocation3]
              loop: start=0, step=1, limit=1
              $region33: #{generator_forward.52} parent=31 // loop_pre_header
                _
              $region34: #{generator_forward.52} parent=31 // loop_header
                %s183 = sphi 0, %s187
                %p184 = scmp.ge.s32.totalorder %s183, 1
                %s188 = sphi %s175, %s175
                %s189 = sphi %s169, %s169
              $region35: #{generator_forward.52} parent=31 // loop_header_branch
                %186 = sbr.rel (%p184) target = $region39
              $region36: #{generator_forward.52} parent=31 // loop_body
                %v190 = vld [vmem:[%s188] sm:$0xff]
                %191 = vst [vmem:[%s189] sm:$0xff] %v190
                %v192 = vld [vmem:[%s188 + $0x24] sm:$0xff]
                %193 = vst [vmem:[%s189 + $0xc] sm:$0xff] %v192
                %v194 = vld [vmem:[%s188 + $0x48] sm:$0xff]
                %195 = vst [vmem:[%s189 + $0x18] sm:$0xff] %v194
                %v196 = vld [vmem:[%s188 + $0x6c] sm:$0xff]
                %197 = vst [vmem:[%s189 + $0x24] sm:$0xff] %v196
                %v198 = vld [vmem:[%s188 + $0x90] sm:$0xff]
                %199 = vst [vmem:[%s189 + $0x30] sm:$0xff] %v198
                %v200 = vld [vmem:[%s188 + $0xb4] sm:$0xff]
                %201 = vst [vmem:[%s189 + $0x3c] sm:$0xff] %v200
                %v202 = vld [vmem:[%s188 + $0xd8] sm:$0xff]
                %203 = vst [vmem:[%s189 + $0x48] sm:$0xff] %v202
                %v204 = vld [vmem:[%s188 + $0xfc] sm:$0xff]
                %205 = vst [vmem:[%s189 + $0x54] sm:$0xff] %v204
                %v206 = vld [vmem:[%s188 + $0x120] sm:$0xff]
                %207 = vst [vmem:[%s189 + $0x60] sm:$0xff] %v206
                %v208 = vld [vmem:[%s188 + $0x144] sm:$0xff]
                %209 = vst [vmem:[%s189 + $0x6c] sm:$0xff] %v208
                %v210 = vld [vmem:[%s188 + $0x168] sm:$0xff]
                %211 = vst [vmem:[%s189 + $0x78] sm:$0xff] %v210
                %v212 = vld [vmem:[%s188 + $0x18c] sm:$0xff]
                %213 = vst [vmem:[%s189 + $0x84] sm:$0xff] %v212
                %v214 = vld [vmem:[%s188 + $0x1b0] sm:$0xff]
                %215 = vst [vmem:[%s189 + $0x90] sm:$0xff] %v214
                %v216 = vld [vmem:[%s188 + $0x1d4] sm:$0xff]
                %217 = vst [vmem:[%s189 + $0x9c] sm:$0xff] %v216
                %v218 = vld [vmem:[%s188 + $0x1f8] sm:$0xff]
                %219 = vst [vmem:[%s189 + $0xa8] sm:$0xff] %v218
                %v220 = vld [vmem:[%s188 + $0x21c] sm:$0xff]
                %221 = vst [vmem:[%s189 + $0xb4] sm:$0xff] %v220
                %v222 = vld [vmem:[%s188 + $0x240] sm:$0xff]
                %223 = vst [vmem:[%s189 + $0xc0] sm:$0xff] %v222
                %v224 = vld [vmem:[%s188 + $0x264] sm:$0xff]
                %225 = vst [vmem:[%s189 + $0xcc] sm:$0xff] %v224
                %v226 = vld [vmem:[%s188 + $0x288] sm:$0xff]
                %227 = vst [vmem:[%s189 + $0xd8] sm:$0xff] %v226
                %v228 = vld [vmem:[%s188 + $0x2ac] sm:$0xff]
                %229 = vst [vmem:[%s189 + $0xe4] sm:$0xff] %v228
                %v230 = vld [vmem:[%s188 + $0x2d0] sm:$0xff]
                %231 = vst [vmem:[%s189 + $0xf0] sm:$0xff] %v230
                %v232 = vld [vmem:[%s188 + $0x2f4] sm:$0xff]
                %233 = vst [vmem:[%s189 + $0xfc] sm:$0xff] %v232
                %v234 = vld [vmem:[%s188 + $0x318] sm:$0xff]
                %235 = vst [vmem:[%s189 + $0x108] sm:$0xff] %v234
                %v236 = vld [vmem:[%s188 + $0x33c] sm:$0xff]
                %237 = vst [vmem:[%s189 + $0x114] sm:$0xff] %v236
                %v238 = vld [vmem:[%s188 + $0x360] sm:$0xff]
                %239 = vst [vmem:[%s189 + $0x120] sm:$0xff] %v238
                %v240 = vld [vmem:[%s188 + $0x384] sm:$0xff]
                %241 = vst [vmem:[%s189 + $0x12c] sm:$0xff] %v240
                %v242 = vld [vmem:[%s188 + $0x3a8] sm:$0xff]
                %243 = vst [vmem:[%s189 + $0x138] sm:$0xff] %v242
                %v244 = vld [vmem:[%s188 + $0x3cc] sm:$0xff]
                %245 = vst [vmem:[%s189 + $0x144] sm:$0xff] %v244
                %v246 = vld [vmem:[%s188 + $0x3f0] sm:$0xff]
                %247 = vst [vmem:[%s189 + $0x150] sm:$0xff] %v246
                %v248 = vld [vmem:[%s188 + $0x414] sm:$0xff]
                %249 = vst [vmem:[%s189 + $0x15c] sm:$0xff] %v248
                %v250 = vld [vmem:[%s188 + $0x438] sm:$0xff]
                %251 = vst [vmem:[%s189 + $0x168] sm:$0xff] %v250
                %v252 = vld [vmem:[%s188 + $0x45c] sm:$0xff]
                %253 = vst [vmem:[%s189 + $0x174] sm:$0xff] %v252
              $region37: #{generator_forward.52} parent=31 // loop_footer
                %s187 = sadd.s32 1, %s183
              $region38: #{generator_forward.52} parent=31 // loop_footer_branch
                %182 = sbr.rel target = $region34
              $region39: #{generator_forward.52} parent=31 // loop_exit
                _
              %s255 = ssub.s32 16, 1
              loop: start=0, step=1, limit=1
              $region40: #{generator_forward.52} parent=31 // loop_pre_header
                _
              $region41: #{generator_forward.52} parent=31 // loop_header
                %s257 = sphi 0, %s261
                %p258 = scmp.ge.s32.totalorder %s257, 1
                %s262 = sphi %s180, %s180
                %s263 = sphi %s181, %s181
              $region42: #{generator_forward.52} parent=31 // loop_header_branch
                %260 = sbr.rel (%p258) target = $region46
              $region43: #{generator_forward.52} parent=31 // loop_body
                %v264 = vld [vmem:[%s262] sm:%s255]
                %265 = vst [vmem:[%s263] sm:%s255] %v264
                %v266 = vld [vmem:[%s262 + $0x24] sm:%s255]
                %267 = vst [vmem:[%s263 + $0xc] sm:%s255] %v266
                %v268 = vld [vmem:[%s262 + $0x48] sm:%s255]
                %269 = vst [vmem:[%s263 + $0x18] sm:%s255] %v268
                %v270 = vld [vmem:[%s262 + $0x6c] sm:%s255]
                %271 = vst [vmem:[%s263 + $0x24] sm:%s255] %v270
                %v272 = vld [vmem:[%s262 + $0x90] sm:%s255]
                %273 = vst [vmem:[%s263 + $0x30] sm:%s255] %v272
                %v274 = vld [vmem:[%s262 + $0xb4] sm:%s255]
                %275 = vst [vmem:[%s263 + $0x3c] sm:%s255] %v274
                %v276 = vld [vmem:[%s262 + $0xd8] sm:%s255]
                %277 = vst [vmem:[%s263 + $0x48] sm:%s255] %v276
                %v278 = vld [vmem:[%s262 + $0xfc] sm:%s255]
                %279 = vst [vmem:[%s263 + $0x54] sm:%s255] %v278
                %v280 = vld [vmem:[%s262 + $0x120] sm:%s255]
                %281 = vst [vmem:[%s263 + $0x60] sm:%s255] %v280
                %v282 = vld [vmem:[%s262 + $0x144] sm:%s255]
                %283 = vst [vmem:[%s263 + $0x6c] sm:%s255] %v282
                %v284 = vld [vmem:[%s262 + $0x168] sm:%s255]
                %285 = vst [vmem:[%s263 + $0x78] sm:%s255] %v284
                %v286 = vld [vmem:[%s262 + $0x18c] sm:%s255]
                %287 = vst [vmem:[%s263 + $0x84] sm:%s255] %v286
                %v288 = vld [vmem:[%s262 + $0x1b0] sm:%s255]
                %289 = vst [vmem:[%s263 + $0x90] sm:%s255] %v288
                %v290 = vld [vmem:[%s262 + $0x1d4] sm:%s255]
                %291 = vst [vmem:[%s263 + $0x9c] sm:%s255] %v290
                %v292 = vld [vmem:[%s262 + $0x1f8] sm:%s255]
                %293 = vst [vmem:[%s263 + $0xa8] sm:%s255] %v292
                %v294 = vld [vmem:[%s262 + $0x21c] sm:%s255]
                %295 = vst [vmem:[%s263 + $0xb4] sm:%s255] %v294
                %v296 = vld [vmem:[%s262 + $0x240] sm:%s255]
                %297 = vst [vmem:[%s263 + $0xc0] sm:%s255] %v296
                %v298 = vld [vmem:[%s262 + $0x264] sm:%s255]
                %299 = vst [vmem:[%s263 + $0xcc] sm:%s255] %v298
                %v300 = vld [vmem:[%s262 + $0x288] sm:%s255]
                %301 = vst [vmem:[%s263 + $0xd8] sm:%s255] %v300
                %v302 = vld [vmem:[%s262 + $0x2ac] sm:%s255]
                %303 = vst [vmem:[%s263 + $0xe4] sm:%s255] %v302
                %v304 = vld [vmem:[%s262 + $0x2d0] sm:%s255]
                %305 = vst [vmem:[%s263 + $0xf0] sm:%s255] %v304
                %v306 = vld [vmem:[%s262 + $0x2f4] sm:%s255]
                %307 = vst [vmem:[%s263 + $0xfc] sm:%s255] %v306
                %v308 = vld [vmem:[%s262 + $0x318] sm:%s255]
                %309 = vst [vmem:[%s263 + $0x108] sm:%s255] %v308
                %v310 = vld [vmem:[%s262 + $0x33c] sm:%s255]
                %311 = vst [vmem:[%s263 + $0x114] sm:%s255] %v310
                %v312 = vld [vmem:[%s262 + $0x360] sm:%s255]
                %313 = vst [vmem:[%s263 + $0x120] sm:%s255] %v312
                %v314 = vld [vmem:[%s262 + $0x384] sm:%s255]
                %315 = vst [vmem:[%s263 + $0x12c] sm:%s255] %v314
                %v316 = vld [vmem:[%s262 + $0x3a8] sm:%s255]
                %317 = vst [vmem:[%s263 + $0x138] sm:%s255] %v316
                %v318 = vld [vmem:[%s262 + $0x3cc] sm:%s255]
                %319 = vst [vmem:[%s263 + $0x144] sm:%s255] %v318
                %v320 = vld [vmem:[%s262 + $0x3f0] sm:%s255]
                %321 = vst [vmem:[%s263 + $0x150] sm:%s255] %v320
                %v322 = vld [vmem:[%s262 + $0x414] sm:%s255]
                %323 = vst [vmem:[%s263 + $0x15c] sm:%s255] %v322
                %v324 = vld [vmem:[%s262 + $0x438] sm:%s255]
                %325 = vst [vmem:[%s263 + $0x168] sm:%s255] %v324
                %v326 = vld [vmem:[%s262 + $0x45c] sm:%s255]
                %327 = vst [vmem:[%s263 + $0x174] sm:%s255] %v326
              $region44: #{generator_forward.52} parent=31 // loop_footer
                %s261 = sadd.s32 1, %s257
              $region45: #{generator_forward.52} parent=31 // loop_footer_branch
                %256 = sbr.rel target = $region41
              $region46: #{generator_forward.52} parent=31 // loop_exit
                _
            $region32: #{generator_forward.52} parent=27 // pred_fallthru
              _
          $region28: #{generator_forward.52} parent=23 // pred_fallthru
            _
          %328 = vnop
        $region24: #{generator_forward.52} parent=19 // pred_fallthru
          _
        // Predicated region
        $region47: #{generator_forward.52} parent=19 // pred_check
          %p329 = pneg %p78
        $region48: #{generator_forward.52} parent=19 // pred_check_branch
          %331 = sbr.rel (%p329) target = $region50
        $region49: #{generator_forward.52} parent=19 // pred_region
          %s332 = smul.u32 48, %s18
          %p333 = scmp.lt.s32.totalorder %s332, 143
          %s334 = scalar_select %p333, %s332, 143
          %p335 = scmp.lt.s32.totalorder %s17, 0
          %s336 = scalar_select %p335, %s17, 0
          %s337 = sadd.s32 %s336, %s334
          %s338 = smul.addr %s337, 4
          %s339 = scalar_lea.vmem %s1, %s338
          %s340 = smul.u32 48, %s18
        $region50: #{generator_forward.52} parent=19 // pred_fallthru
          _
      $region20: #{generator_forward.52} parent=5 // pred_fallthru
        _
      %p341 = scmp.le.s32.totalorder 1, %s9
      %p342 = scmp.lt.s32.totalorder %s9, 7
      %p343 = pnand %p341, %p342
      %p344 = pneg %p343
      // Predicated region
      $region51: #{generator_forward.52} parent=5 // pred_check
        _
      $region52: #{generator_forward.52} parent=5 // pred_check_branch
        %346 = sbr.rel (%p343) target = $region54
      $region53: #{generator_forward.52} parent=5 // pred_region
        %s347 = ssub.s32 %s9, 1
        %s348 = sand.u32 %s43, 1
        %s349 = sand.u32 %s43, 1
        %s350 = smul.addr %s349, 384
        %s351 = scalar_lea.vmem [#allocation3], %s350
        // Predicated region
        $region55: #{generator_forward.52} parent=53 // pred_check
          %p352 = pneg %p56
        $region56: #{generator_forward.52} parent=53 // pred_check_branch
          %354 = sbr.rel (%p352) target = $region58
        $region57: #{generator_forward.52} parent=53 // pred_region
          _
        $region58: #{generator_forward.52} parent=53 // pred_fallthru
          _
        %s355 = sand.u32 %s43, 1
        %s356 = sand.u32 %s43, 1
        %s357 = smul.addr %s356, 384
        %s358 = scalar_lea.vmem [#allocation3], %s357
        %p359 = pneg %p56
        %p360 = pneg %p53
        %s361 = smul.u32 48, %s21
        %p362 = scmp.lt.s32.totalorder %s361, 143
        %s363 = scalar_select %p362, %s361, 143
        %p364 = scmp.lt.s32.totalorder %s20, 0
        %s365 = scalar_select %p364, %s20, 0
        %s366 = sadd.s32 %s365, %s363
        %s367 = smul.addr %s366, 4
        %s368 = scalar_lea.vmem %s1, %s367
        %p369 = pneg %p84
        %p370 = pneg %p81
        %p371 = scmp.lt.s32.totalorder %s20, 0
        %s372 = scalar_select %p371, %s20, 0
        %s373 = scalar_lea.vmem %s2, %s372
        %p374 = pneg %p110
        %p375 = pneg %p107
        %p376 = pneg %p138
        %p377 = pneg %p135
        %s378 = smul.u32 32, %s19
        %p379 = scmp.lt.s32.totalorder %s378, 63
        %s380 = scalar_select %p379, %s378, 63
        %p381 = scmp.lt.s32.totalorder %s20, 0
        %s382 = scalar_select %p381, %s20, 0
        %s383 = sadd.s32 %s382, %s380
        %s384 = smul.addr %s383, 4
        %s385 = scalar_lea.vmem %s3, %s384
        %s386 = smul.u32 32, %s19
        %s387 = smul.u32 3, %s21
        %s388 = smul.u32 48, %s21
        %p389 = scmp.lt.s32.totalorder %s388, 143
        %s390 = scalar_select %p389, %s388, 143
        %p391 = scmp.lt.s32.totalorder %s20, 0
        %s392 = scalar_select %p391, %s20, 0
        %s393 = sadd.s32 %s392, %s390
        %s394 = smul.addr %s393, 4
        %s395 = scalar_lea.vmem %s1, %s394
        %s396 = smul.u32 48, %s21
        %p397 = scmp.lt.s32.totalorder %s20, 0
        %s398 = scalar_select %p397, %s20, 0
        %s399 = scalar_lea.vmem %s2, %s398
        %s400 = smul.u32 32, %s19
        %p401 = scmp.lt.s32.totalorder %s400, 63
        %s402 = scalar_select %p401, %s400, 63
        %p403 = scmp.lt.s32.totalorder %s20, 0
        %s404 = scalar_select %p403, %s20, 0
        %s405 = sadd.s32 %s404, %s402
        %s406 = smul.addr %s405, 4
        %s407 = scalar_lea.vmem %s3, %s406
        %s408 = smul.u32 32, %s19
        %p410 = scmp.eq.s32.totalorder %s21, 0
        // Predicated region
        $region59: #{generator_forward.52} parent=53 // pred_check
          %p411 = pneg %p410
        $region60: #{generator_forward.52} parent=53 // pred_check_branch
          %413 = sbr.rel (%p411) target = $region62
        $region61: #{generator_forward.52} parent=53 // pred_region
          %414 = vst [vmem:[#allocation2] sm:$0xff] 0.0
          %415 = vst [vmem:[#allocation2 + $0x8] sm:$0xff] 0.0
          %416 = vst [vmem:[#allocation2 + $0x10] sm:$0xff] 0.0
          %417 = vst [vmem:[#allocation2 + $0x18] sm:$0xff] 0.0
          %418 = vst [vmem:[#allocation2 + $0x20] sm:$0xff] 0.0
          %419 = vst [vmem:[#allocation2 + $0x28] sm:$0xff] 0.0
          %420 = vst [vmem:[#allocation2 + $0x30] sm:$0xff] 0.0
          %421 = vst [vmem:[#allocation2 + $0x38] sm:$0xff] 0.0
          %422 = vst [vmem:[#allocation2 + $0x40] sm:$0xff] 0.0
          %423 = vst [vmem:[#allocation2 + $0x48] sm:$0xff] 0.0
          %424 = vst [vmem:[#allocation2 + $0x50] sm:$0xff] 0.0
          %425 = vst [vmem:[#allocation2 + $0x58] sm:$0xff] 0.0
          %426 = vst [vmem:[#allocation2 + $0x60] sm:$0xff] 0.0
          %427 = vst [vmem:[#allocation2 + $0x68] sm:$0xff] 0.0
          %428 = vst [vmem:[#allocation2 + $0x70] sm:$0xff] 0.0
          %429 = vst [vmem:[#allocation2 + $0x78] sm:$0xff] 0.0
          %430 = vst [vmem:[#allocation2 + $0x80] sm:$0xff] 0.0
          %431 = vst [vmem:[#allocation2 + $0x88] sm:$0xff] 0.0
          %432 = vst [vmem:[#allocation2 + $0x90] sm:$0xff] 0.0
          %433 = vst [vmem:[#allocation2 + $0x98] sm:$0xff] 0.0
          %434 = vst [vmem:[#allocation2 + $0xa0] sm:$0xff] 0.0
          %435 = vst [vmem:[#allocation2 + $0xa8] sm:$0xff] 0.0
          %436 = vst [vmem:[#allocation2 + $0xb0] sm:$0xff] 0.0
          %437 = vst [vmem:[#allocation2 + $0xb8] sm:$0xff] 0.0
          %438 = vst [vmem:[#allocation2 + $0xc0] sm:$0xff] 0.0
          %439 = vst [vmem:[#allocation2 + $0xc8] sm:$0xff] 0.0
          %440 = vst [vmem:[#allocation2 + $0xd0] sm:$0xff] 0.0
          %441 = vst [vmem:[#allocation2 + $0xd8] sm:$0xff] 0.0
          %442 = vst [vmem:[#allocation2 + $0xe0] sm:$0xff] 0.0
          %443 = vst [vmem:[#allocation2 + $0xe8] sm:$0xff] 0.0
          %444 = vst [vmem:[#allocation2 + $0xf0] sm:$0xff] 0.0
          %445 = vst [vmem:[#allocation2 + $0xf8] sm:$0xff] 0.0
        $region62: #{generator_forward.52} parent=53 // pred_fallthru
          _
        %v446 = vld [vmem:[#allocation2] sm:$0xff]
        %v447 = vld [vmem:[#allocation2 + $0x8] sm:$0xff]
        %v448 = vld [vmem:[#allocation2 + $0x10] sm:$0xff]
        %v449 = vld [vmem:[#allocation2 + $0x18] sm:$0xff]
        %v450 = vld [vmem:[#allocation2 + $0x20] sm:$0xff]
        %v451 = vld [vmem:[#allocation2 + $0x28] sm:$0xff]
        %v452 = vld [vmem:[#allocation2 + $0x30] sm:$0xff]
        %v453 = vld [vmem:[#allocation2 + $0x38] sm:$0xff]
        %v454 = vld [vmem:[#allocation2 + $0x40] sm:$0xff]
        %v455 = vld [vmem:[#allocation2 + $0x48] sm:$0xff]
        %v456 = vld [vmem:[#allocation2 + $0x50] sm:$0xff]
        %v457 = vld [vmem:[#allocation2 + $0x58] sm:$0xff]
        %v458 = vld [vmem:[#allocation2 + $0x60] sm:$0xff]
        %v459 = vld [vmem:[#allocation2 + $0x68] sm:$0xff]
        %v460 = vld [vmem:[#allocation2 + $0x70] sm:$0xff]
        %v461 = vld [vmem:[#allocation2 + $0x78] sm:$0xff]
        %v462 = vld [vmem:[#allocation2 + $0x80] sm:$0xff]
        %v463 = vld [vmem:[#allocation2 + $0x88] sm:$0xff]
        %v464 = vld [vmem:[#allocation2 + $0x90] sm:$0xff]
        %v465 = vld [vmem:[#allocation2 + $0x98] sm:$0xff]
        %v466 = vld [vmem:[#allocation2 + $0xa0] sm:$0xff]
        %v467 = vld [vmem:[#allocation2 + $0xa8] sm:$0xff]
        %v468 = vld [vmem:[#allocation2 + $0xb0] sm:$0xff]
        %v469 = vld [vmem:[#allocation2 + $0xb8] sm:$0xff]
        %v470 = vld [vmem:[#allocation2 + $0xc0] sm:$0xff]
        %v471 = vld [vmem:[#allocation2 + $0xc8] sm:$0xff]
        %v472 = vld [vmem:[#allocation2 + $0xd0] sm:$0xff]
        %v473 = vld [vmem:[#allocation2 + $0xd8] sm:$0xff]
        %v474 = vld [vmem:[#allocation2 + $0xe0] sm:$0xff]
        %v475 = vld [vmem:[#allocation2 + $0xe8] sm:$0xff]
        %v476 = vld [vmem:[#allocation2 + $0xf0] sm:$0xff]
        %v477 = vld [vmem:[#allocation2 + $0xf8] sm:$0xff]
        %v478 = vld [vmem:[%s351] sm:$0xff]
        %v479 = vld [vmem:[%s351 + $0x8] sm:$0xf]
        %v480 = vld [vmem:[%s351 + $0xc] sm:$0xff]
        %v481 = vld [vmem:[%s351 + $0x14] sm:$0xf]
        %v482 = vld [vmem:[%s351 + $0x18] sm:$0xff]
        %v483 = vld [vmem:[%s351 + $0x20] sm:$0xf]
        %v484 = vld [vmem:[%s351 + $0x24] sm:$0xff]
        %v485 = vld [vmem:[%s351 + $0x2c] sm:$0xf]
        %v486 = vld [vmem:[%s351 + $0x30] sm:$0xff]
        %v487 = vld [vmem:[%s351 + $0x38] sm:$0xf]
        %v488 = vld [vmem:[%s351 + $0x3c] sm:$0xff]
        %v489 = vld [vmem:[%s351 + $0x44] sm:$0xf]
        %v490 = vld [vmem:[%s351 + $0x48] sm:$0xff]
        %v491 = vld [vmem:[%s351 + $0x50] sm:$0xf]
        %v492 = vld [vmem:[%s351 + $0x54] sm:$0xff]
        %v493 = vld [vmem:[%s351 + $0x5c] sm:$0xf]
        %v494 = vld [vmem:[%s351 + $0x60] sm:$0xff]
        %v495 = vld [vmem:[%s351 + $0x68] sm:$0xf]
        %v496 = vld [vmem:[%s351 + $0x6c] sm:$0xff]
        %v497 = vld [vmem:[%s351 + $0x74] sm:$0xf]
        %v498 = vld [vmem:[%s351 + $0x78] sm:$0xff]
        %v499 = vld [vmem:[%s351 + $0x80] sm:$0xf]
        %v500 = vld [vmem:[%s351 + $0x84] sm:$0xff]
        %v501 = vld [vmem:[%s351 + $0x8c] sm:$0xf]
        %v502 = vld [vmem:[%s351 + $0x90] sm:$0xff]
        %v503 = vld [vmem:[%s351 + $0x98] sm:$0xf]
        %v504 = vld [vmem:[%s351 + $0x9c] sm:$0xff]
        %v505 = vld [vmem:[%s351 + $0xa4] sm:$0xf]
        %v506 = vld [vmem:[%s351 + $0xa8] sm:$0xff]
        %v507 = vld [vmem:[%s351 + $0xb0] sm:$0xf]
        %v508 = vld [vmem:[%s351 + $0xb4] sm:$0xff]
        %v509 = vld [vmem:[%s351 + $0xbc] sm:$0xf]
        %v510 = vld [vmem:[%s351 + $0xc0] sm:$0xff]
        %v511 = vld [vmem:[%s351 + $0xc8] sm:$0xf]
        %v512 = vld [vmem:[%s351 + $0xcc] sm:$0xff]
        %v513 = vld [vmem:[%s351 + $0xd4] sm:$0xf]
        %v514 = vld [vmem:[%s351 + $0xd8] sm:$0xff]
        %v515 = vld [vmem:[%s351 + $0xe0] sm:$0xf]
        %v516 = vld [vmem:[%s351 + $0xe4] sm:$0xff]
        %v517 = vld [vmem:[%s351 + $0xec] sm:$0xf]
        %v518 = vld [vmem:[%s351 + $0xf0] sm:$0xff]
        %v519 = vld [vmem:[%s351 + $0xf8] sm:$0xf]
        %v520 = vld [vmem:[%s351 + $0xfc] sm:$0xff]
        %v521 = vld [vmem:[%s351 + $0x104] sm:$0xf]
        %v522 = vld [vmem:[%s351 + $0x108] sm:$0xff]
        %v523 = vld [vmem:[%s351 + $0x110] sm:$0xf]
        %v524 = vld [vmem:[%s351 + $0x114] sm:$0xff]
        %v525 = vld [vmem:[%s351 + $0x11c] sm:$0xf]
        %v526 = vld [vmem:[%s351 + $0x120] sm:$0xff]
        %v527 = vld [vmem:[%s351 + $0x128] sm:$0xf]
        %v528 = vld [vmem:[%s351 + $0x12c] sm:$0xff]
        %v529 = vld [vmem:[%s351 + $0x134] sm:$0xf]
        %v530 = vld [vmem:[%s351 + $0x138] sm:$0xff]
        %v531 = vld [vmem:[%s351 + $0x140] sm:$0xf]
        %v532 = vld [vmem:[%s351 + $0x144] sm:$0xff]
        %v533 = vld [vmem:[%s351 + $0x14c] sm:$0xf]
        %v534 = vld [vmem:[%s351 + $0x150] sm:$0xff]
        %v535 = vld [vmem:[%s351 + $0x158] sm:$0xf]
        %v536 = vld [vmem:[%s351 + $0x15c] sm:$0xff]
        %v537 = vld [vmem:[%s351 + $0x164] sm:$0xf]
        %v538 = vld [vmem:[%s351 + $0x168] sm:$0xff]
        %v539 = vld [vmem:[%s351 + $0x170] sm:$0xf]
        %v540 = vld [vmem:[%s351 + $0x174] sm:$0xff]
        %v541 = vld [vmem:[%s351 + $0x17c] sm:$0xf]
        %v542 = vld [vmem:[%s395] sm:$0xf]
        %v543 = vld [vmem:[%s395 + $0x4] sm:$0xf]
        %v544 = vld [vmem:[%s395 + $0x8] sm:$0xf]
        %v545 = vld [vmem:[%s395 + $0xc] sm:$0xf]
        %v546 = vld [vmem:[%s395 + $0x10] sm:$0xf]
        %v547 = vld [vmem:[%s395 + $0x14] sm:$0xf]
        %v548 = vld [vmem:[%s395 + $0x18] sm:$0xf]
        %v549 = vld [vmem:[%s395 + $0x1c] sm:$0xf]
        %v550 = vld [vmem:[%s395 + $0x20] sm:$0xf]
        %v551 = vld [vmem:[%s395 + $0x24] sm:$0xf]
        %v552 = vld [vmem:[%s395 + $0x28] sm:$0xf]
        %v553 = vld [vmem:[%s395 + $0x2c] sm:$0xf]
        %v554 = vld [vmem:[%s395 + $0x30] sm:$0xf]
        %v555 = vld [vmem:[%s395 + $0x34] sm:$0xf]
        %v556 = vld [vmem:[%s395 + $0x38] sm:$0xf]
        %v557 = vld [vmem:[%s395 + $0x3c] sm:$0xf]
        %v558 = vld [vmem:[%s395 + $0x40] sm:$0xf]
        %v559 = vld [vmem:[%s395 + $0x44] sm:$0xf]
        %v560 = vld [vmem:[%s395 + $0x48] sm:$0xf]
        %v561 = vld [vmem:[%s395 + $0x4c] sm:$0xf]
        %v562 = vld [vmem:[%s395 + $0x50] sm:$0xf]
        %v563 = vld [vmem:[%s395 + $0x54] sm:$0xf]
        %v564 = vld [vmem:[%s395 + $0x58] sm:$0xf]
        %v565 = vld [vmem:[%s395 + $0x5c] sm:$0xf]
        %v566 = vld [vmem:[%s395 + $0x60] sm:$0xf]
        %v567 = vld [vmem:[%s395 + $0x64] sm:$0xf]
        %v568 = vld [vmem:[%s395 + $0x68] sm:$0xf]
        %v569 = vld [vmem:[%s395 + $0x6c] sm:$0xf]
        %v570 = vld [vmem:[%s395 + $0x70] sm:$0xf]
        %v571 = vld [vmem:[%s395 + $0x74] sm:$0xf]
        %v572 = vld [vmem:[%s395 + $0x78] sm:$0xf]
        %v573 = vld [vmem:[%s395 + $0x7c] sm:$0xf]
        %v574 = vld [vmem:[%s395 + $0x80] sm:$0xf]
        %v575 = vld [vmem:[%s395 + $0x84] sm:$0xf]
        %v576 = vld [vmem:[%s395 + $0x88] sm:$0xf]
        %v577 = vld [vmem:[%s395 + $0x8c] sm:$0xf]
        %v578 = vld [vmem:[%s395 + $0x90] sm:$0xf]
        %v579 = vld [vmem:[%s395 + $0x94] sm:$0xf]
        %v580 = vld [vmem:[%s395 + $0x98] sm:$0xf]
        %v581 = vld [vmem:[%s395 + $0x9c] sm:$0xf]
        %v582 = vld [vmem:[%s395 + $0xa0] sm:$0xf]
        %v583 = vld [vmem:[%s395 + $0xa4] sm:$0xf]
        %v584 = vld [vmem:[%s395 + $0xa8] sm:$0xf]
        %v585 = vld [vmem:[%s395 + $0xac] sm:$0xf]
        %v586 = vld [vmem:[%s395 + $0xb0] sm:$0xf]
        %v587 = vld [vmem:[%s395 + $0xb4] sm:$0xf]
        %v588 = vld [vmem:[%s395 + $0xb8] sm:$0xf]
        %v589 = vld [vmem:[%s395 + $0xbc] sm:$0xf]
        %v654 = vunpack.c.l.b16 %v478
        %v655 = vunpack.c.h.b16 %v478
        %v656 = vunpack.c.l.b16 %v479
        %v657 = vunpack.c.l.b16 %v480
        %v658 = vunpack.c.h.b16 %v480
        %v659 = vunpack.c.l.b16 %v481
        %v660 = vunpack.c.l.b16 %v482
        %v661 = vunpack.c.h.b16 %v482
        %v662 = vunpack.c.l.b16 %v483
        %v663 = vunpack.c.l.b16 %v484
        %v664 = vunpack.c.h.b16 %v484
        %v665 = vunpack.c.l.b16 %v485
        %v666 = vunpack.c.l.b16 %v486
        %v667 = vunpack.c.h.b16 %v486
        %v668 = vunpack.c.l.b16 %v487
        %v669 = vunpack.c.l.b16 %v488
        %v670 = vunpack.c.h.b16 %v488
        %v671 = vunpack.c.l.b16 %v489
        %v672 = vunpack.c.l.b16 %v490
        %v673 = vunpack.c.h.b16 %v490
        %v674 = vunpack.c.l.b16 %v491
        %v675 = vunpack.c.l.b16 %v492
        %v676 = vunpack.c.h.b16 %v492
        %v677 = vunpack.c.l.b16 %v493
        %v678 = vunpack.c.l.b16 %v494
        %v679 = vunpack.c.h.b16 %v494
        %v680 = vunpack.c.l.b16 %v495
        %v681 = vunpack.c.l.b16 %v496
        %v682 = vunpack.c.h.b16 %v496
        %v683 = vunpack.c.l.b16 %v497
        %v684 = vunpack.c.l.b16 %v498
        %v685 = vunpack.c.h.b16 %v498
        %v686 = vunpack.c.l.b16 %v499
        %v687 = vunpack.c.l.b16 %v500
        %v688 = vunpack.c.h.b16 %v500
        %v689 = vunpack.c.l.b16 %v501
        %v690 = vunpack.c.l.b16 %v502
        %v691 = vunpack.c.h.b16 %v502
        %v692 = vunpack.c.l.b16 %v503
        %v693 = vunpack.c.l.b16 %v504
        %v694 = vunpack.c.h.b16 %v504
        %v695 = vunpack.c.l.b16 %v505
        %v696 = vunpack.c.l.b16 %v506
        %v697 = vunpack.c.h.b16 %v506
        %v698 = vunpack.c.l.b16 %v507
        %v699 = vunpack.c.l.b16 %v508
        %v700 = vunpack.c.h.b16 %v508
        %v701 = vunpack.c.l.b16 %v509
        %v702 = vunpack.c.l.b16 %v510
        %v703 = vunpack.c.h.b16 %v510
        %v704 = vunpack.c.l.b16 %v511
        %v705 = vunpack.c.l.b16 %v512
        %v706 = vunpack.c.h.b16 %v512
        %v707 = vunpack.c.l.b16 %v513
        %v708 = vunpack.c.l.b16 %v514
        %v709 = vunpack.c.h.b16 %v514
        %v710 = vunpack.c.l.b16 %v515
        %v711 = vunpack.c.l.b16 %v516
        %v712 = vunpack.c.h.b16 %v516
        %v713 = vunpack.c.l.b16 %v517
        %v714 = vunpack.c.l.b16 %v518
        %v715 = vunpack.c.h.b16 %v518
        %v716 = vunpack.c.l.b16 %v519
        %v717 = vunpack.c.l.b16 %v520
        %v718 = vunpack.c.h.b16 %v520
        %v719 = vunpack.c.l.b16 %v521
        %v720 = vunpack.c.l.b16 %v522
        %v721 = vunpack.c.h.b16 %v522
        %v722 = vunpack.c.l.b16 %v523
        %v723 = vunpack.c.l.b16 %v524
        %v724 = vunpack.c.h.b16 %v524
        %v725 = vunpack.c.l.b16 %v525
        %v726 = vunpack.c.l.b16 %v526
        %v727 = vunpack.c.h.b16 %v526
        %v728 = vunpack.c.l.b16 %v527
        %v729 = vunpack.c.l.b16 %v528
        %v730 = vunpack.c.h.b16 %v528
        %v731 = vunpack.c.l.b16 %v529
        %v732 = vunpack.c.l.b16 %v530
        %v733 = vunpack.c.h.b16 %v530
        %v734 = vunpack.c.l.b16 %v531
        %v735 = vunpack.c.l.b16 %v532
        %v736 = vunpack.c.h.b16 %v532
        %v737 = vunpack.c.l.b16 %v533
        %v738 = vunpack.c.l.b16 %v534
        %v739 = vunpack.c.h.b16 %v534
        %v740 = vunpack.c.l.b16 %v535
        %v741 = vunpack.c.l.b16 %v536
        %v742 = vunpack.c.h.b16 %v536
        %v743 = vunpack.c.l.b16 %v537
        %v744 = vunpack.c.l.b16 %v538
        %v745 = vunpack.c.h.b16 %v538
        %v746 = vunpack.c.l.b16 %v539
        %v747 = vunpack.c.l.b16 %v540
        %v748 = vunpack.c.h.b16 %v540
        %v749 = vunpack.c.l.b16 %v541
        %v750 = vpack.c.b16 %v657, %v654
        %v751 = vpack.c.b16 %v658, %v655
        %v752 = vpack.c.b16 %v659, %v656
        %v753 = vpack.c.b16 %v663, %v660
        %v754 = vpack.c.b16 %v664, %v661
        %v755 = vpack.c.b16 %v665, %v662
        %v756 = vpack.c.b16 %v669, %v666
        %v757 = vpack.c.b16 %v670, %v667
        %v758 = vpack.c.b16 %v671, %v668
        %v759 = vpack.c.b16 %v675, %v672
        %v760 = vpack.c.b16 %v676, %v673
        %v761 = vpack.c.b16 %v677, %v674
        %v762 = vpack.c.b16 %v681, %v678
        %v763 = vpack.c.b16 %v682, %v679
        %v764 = vpack.c.b16 %v683, %v680
        %v765 = vpack.c.b16 %v687, %v684
        %v766 = vpack.c.b16 %v688, %v685
        %v767 = vpack.c.b16 %v689, %v686
        %v768 = vpack.c.b16 %v693, %v690
        %v769 = vpack.c.b16 %v694, %v691
        %v770 = vpack.c.b16 %v695, %v692
        %v771 = vpack.c.b16 %v699, %v696
        %v772 = vpack.c.b16 %v700, %v697
        %v773 = vpack.c.b16 %v701, %v698
        %v774 = vpack.c.b16 %v705, %v702
        %v775 = vpack.c.b16 %v706, %v703
        %v776 = vpack.c.b16 %v707, %v704
        %v777 = vpack.c.b16 %v711, %v708
        %v778 = vpack.c.b16 %v712, %v709
        %v779 = vpack.c.b16 %v713, %v710
        %v780 = vpack.c.b16 %v717, %v714
        %v781 = vpack.c.b16 %v718, %v715
        %v782 = vpack.c.b16 %v719, %v716
        %v783 = vpack.c.b16 %v723, %v720
        %v784 = vpack.c.b16 %v724, %v721
        %v785 = vpack.c.b16 %v725, %v722
        %v786 = vpack.c.b16 %v729, %v726
        %v787 = vpack.c.b16 %v730, %v727
        %v788 = vpack.c.b16 %v731, %v728
        %v789 = vpack.c.b16 %v735, %v732
        %v790 = vpack.c.b16 %v736, %v733
        %v791 = vpack.c.b16 %v737, %v734
        %v792 = vpack.c.b16 %v741, %v738
        %v793 = vpack.c.b16 %v742, %v739
        %v794 = vpack.c.b16 %v743, %v740
        %v795 = vpack.c.b16 %v747, %v744
        %v796 = vpack.c.b16 %v748, %v745
        %v797 = vpack.c.b16 %v749, %v746
        %v894 = vunpack.c.l.b16 %v542
        %v895 = vunpack.c.l.b16 %v543
        %v896 = vunpack.c.l.b16 %v544
        %v897 = vunpack.c.l.b16 %v545
        %v898 = vunpack.c.l.b16 %v546
        %v899 = vunpack.c.l.b16 %v547
        %v900 = vunpack.c.l.b16 %v548
        %v901 = vunpack.c.l.b16 %v549
        %v902 = vunpack.c.l.b16 %v550
        %v903 = vunpack.c.l.b16 %v551
        %v904 = vunpack.c.l.b16 %v552
        %v905 = vunpack.c.l.b16 %v553
        %v906 = vunpack.c.l.b16 %v554
        %v907 = vunpack.c.l.b16 %v555
        %v908 = vunpack.c.l.b16 %v556
        %v909 = vunpack.c.l.b16 %v557
        %v910 = vunpack.c.l.b16 %v558
        %v911 = vunpack.c.l.b16 %v559
        %v912 = vunpack.c.l.b16 %v560
        %v913 = vunpack.c.l.b16 %v561
        %v914 = vunpack.c.l.b16 %v562
        %v915 = vunpack.c.l.b16 %v563
        %v916 = vunpack.c.l.b16 %v564
        %v917 = vunpack.c.l.b16 %v565
        %v918 = vunpack.c.l.b16 %v566
        %v919 = vunpack.c.l.b16 %v567
        %v920 = vunpack.c.l.b16 %v568
        %v921 = vunpack.c.l.b16 %v569
        %v922 = vunpack.c.l.b16 %v570
        %v923 = vunpack.c.l.b16 %v571
        %v924 = vunpack.c.l.b16 %v572
        %v925 = vunpack.c.l.b16 %v573
        %v926 = vunpack.c.l.b16 %v574
        %v927 = vunpack.c.l.b16 %v575
        %v928 = vunpack.c.l.b16 %v576
        %v929 = vunpack.c.l.b16 %v577
        %v930 = vunpack.c.l.b16 %v578
        %v931 = vunpack.c.l.b16 %v579
        %v932 = vunpack.c.l.b16 %v580
        %v933 = vunpack.c.l.b16 %v581
        %v934 = vunpack.c.l.b16 %v582
        %v935 = vunpack.c.l.b16 %v583
        %v936 = vunpack.c.l.b16 %v584
        %v937 = vunpack.c.l.b16 %v585
        %v938 = vunpack.c.l.b16 %v586
        %v939 = vunpack.c.l.b16 %v587
        %v940 = vunpack.c.l.b16 %v588
        %v941 = vunpack.c.l.b16 %v589
        %v942 = vpack.c.b16 %v895, %v894
        %v943 = vpack.c.b16 %v897, %v896
        %v944 = vpack.c.b16 %v899, %v898
        %v945 = vpack.c.b16 %v901, %v900
        %v946 = vpack.c.b16 %v903, %v902
        %v947 = vpack.c.b16 %v905, %v904
        %v948 = vpack.c.b16 %v907, %v906
        %v949 = vpack.c.b16 %v909, %v908
        %v950 = vpack.c.b16 %v911, %v910
        %v951 = vpack.c.b16 %v913, %v912
        %v952 = vpack.c.b16 %v915, %v914
        %v953 = vpack.c.b16 %v917, %v916
        %v954 = vpack.c.b16 %v919, %v918
        %v955 = vpack.c.b16 %v921, %v920
        %v956 = vpack.c.b16 %v923, %v922
        %v957 = vpack.c.b16 %v925, %v924
        %v958 = vpack.c.b16 %v927, %v926
        %v959 = vpack.c.b16 %v929, %v928
        %v960 = vpack.c.b16 %v931, %v930
        %v961 = vpack.c.b16 %v933, %v932
        %v962 = vpack.c.b16 %v935, %v934
        %v963 = vpack.c.b16 %v937, %v936
        %v964 = vpack.c.b16 %v939, %v938
        %v965 = vpack.c.b16 %v941, %v940
        %990 = vmatprep.subr.bf16.mxu0 0
        %991 = vmatpush1.bf16.msra.mxu0 %v949
        %992 = vmatprep.subr.bf16.mxu0 0
        %993 = vmatpush1.bf16.msra.mxu0 %v948
        %994 = vmatprep.subr.bf16.mxu0 0
        %995 = vmatpush1.bf16.msra.mxu0 %v947
        %996 = vmatprep.subr.bf16.mxu0 0
        %997 = vmatpush1.bf16.msra.mxu0 %v946
        %998 = vmatprep.subr.bf16.mxu0 0
        %999 = vmatpush1.bf16.msra.mxu0 %v945
        %1000 = vmatprep.subr.bf16.mxu0 0
        %1001 = vmatpush1.bf16.msra.mxu0 %v944
        %1002 = vmatprep.subr.bf16.mxu0 0
        %1003 = vmatpush1.bf16.msra.mxu0 %v943
        %1004 = vmatprep.subr.bf16.mxu0 0
        %1005 = vmatpush1.bf16.msra.mxu0 %v942
        %1006 = vmatprep.subr.bf16.mxu0 0
        %1007 = vmatpush2.bf16.msra.mxu0 %v957
        %1008 = vmatprep.subr.bf16.mxu0 0
        %1009 = vmatpush2.bf16.msra.mxu0 %v956
        %1010 = vmatprep.subr.bf16.mxu0 0
        %1011 = vmatpush2.bf16.msra.mxu0 %v955
        %1012 = vmatprep.subr.bf16.mxu0 0
        %1013 = vmatpush2.bf16.msra.mxu0 %v954
        %1014 = vmatprep.subr.bf16.mxu0 0
        %1015 = vmatpush2.bf16.msra.mxu0 %v953
        %1016 = vmatprep.subr.bf16.mxu0 0
        %1017 = vmatpush2.bf16.msra.mxu0 %v952
        %1018 = vmatprep.subr.bf16.mxu0 0
        %1019 = vmatpush2.bf16.msra.mxu0 %v951
        %1020 = vmatprep.subr.bf16.mxu0 0
        %1021 = vmatpush2.bf16.msra.mxu0 %v950
        %1022 = vmatprep.mubr.bf16.mxu0 %v751
        %1023 = vmatmul.mubr.bf16.gmra.mxu0 %v750
        %v1024 = vpop.f32.mrf.mxu0
        %v1025 = vadd.f32 0.0, %v1024
        %v1026 = vpop.f32.mrf.mxu0
        %v1027 = vpop.f32.mrf.mxu0
        %v1028 = vadd.f32 0.0, %v1027
        %v1029 = vpop.f32.mrf.mxu0
        %1030 = vmatprep.mubr.bf16.mxu0 %v754
        %1031 = vmatmul.mubr.bf16.gmra.mxu0 %v753
        %v1032 = vpop.f32.mrf.mxu0
        %v1033 = vadd.f32 0.0, %v1032
        %v1034 = vpop.f32.mrf.mxu0
        %v1035 = vpop.f32.mrf.mxu0
        %v1036 = vadd.f32 0.0, %v1035
        %v1037 = vpop.f32.mrf.mxu0
        %1038 = vmatprep.mubr.bf16.mxu0 %v757
        %1039 = vmatmul.mubr.bf16.gmra.mxu0 %v756
        %v1040 = vpop.f32.mrf.mxu0
        %v1041 = vadd.f32 0.0, %v1040
        %v1042 = vpop.f32.mrf.mxu0
        %v1043 = vpop.f32.mrf.mxu0
        %v1044 = vadd.f32 0.0, %v1043
        %v1045 = vpop.f32.mrf.mxu0
        %1046 = vmatprep.mubr.bf16.mxu0 %v760
        %1047 = vmatmul.mubr.bf16.gmra.mxu0 %v759
        %v1048 = vpop.f32.mrf.mxu0
        %v1049 = vadd.f32 0.0, %v1048
        %v1050 = vpop.f32.mrf.mxu0
        %v1051 = vpop.f32.mrf.mxu0
        %v1052 = vadd.f32 0.0, %v1051
        %v1053 = vpop.f32.mrf.mxu0
        %1054 = vmatprep.mubr.bf16.mxu0 %v763
        %1055 = vmatmul.mubr.bf16.gmra.mxu0 %v762
        %v1056 = vpop.f32.mrf.mxu0
        %v1057 = vadd.f32 0.0, %v1056
        %v1058 = vpop.f32.mrf.mxu0
        %v1059 = vpop.f32.mrf.mxu0
        %v1060 = vadd.f32 0.0, %v1059
        %v1061 = vpop.f32.mrf.mxu0
        %1062 = vmatprep.mubr.bf16.mxu0 %v766
        %1063 = vmatmul.mubr.bf16.gmra.mxu0 %v765
        %v1064 = vpop.f32.mrf.mxu0
        %v1065 = vadd.f32 0.0, %v1064
        %v1066 = vpop.f32.mrf.mxu0
        %v1067 = vpop.f32.mrf.mxu0
        %v1068 = vadd.f32 0.0, %v1067
        %v1069 = vpop.f32.mrf.mxu0
        %1070 = vmatprep.mubr.bf16.mxu0 %v769
        %1071 = vmatmul.mubr.bf16.gmra.mxu0 %v768
        %v1072 = vpop.f32.mrf.mxu0
        %v1073 = vadd.f32 0.0, %v1072
        %v1074 = vpop.f32.mrf.mxu0
        %v1075 = vpop.f32.mrf.mxu0
        %v1076 = vadd.f32 0.0, %v1075
        %v1077 = vpop.f32.mrf.mxu0
        %1078 = vmatprep.mubr.bf16.mxu0 %v772
        %1079 = vmatmul.mubr.bf16.gmra.mxu0 %v771
        %v1080 = vpop.f32.mrf.mxu0
        %v1081 = vadd.f32 0.0, %v1080
        %v1082 = vpop.f32.mrf.mxu0
        %v1083 = vpop.f32.mrf.mxu0
        %v1084 = vadd.f32 0.0, %v1083
        %v1085 = vpop.f32.mrf.mxu0
        %1086 = vmatprep.mubr.bf16.mxu0 %v775
        %1087 = vmatmul.mubr.bf16.gmra.mxu0 %v774
        %v1088 = vpop.f32.mrf.mxu0
        %v1089 = vadd.f32 0.0, %v1088
        %v1090 = vpop.f32.mrf.mxu0
        %v1091 = vpop.f32.mrf.mxu0
        %v1092 = vadd.f32 0.0, %v1091
        %v1093 = vpop.f32.mrf.mxu0
        %1094 = vmatprep.mubr.bf16.mxu0 %v778
        %1095 = vmatmul.mubr.bf16.gmra.mxu0 %v777
        %v1096 = vpop.f32.mrf.mxu0
        %v1097 = vadd.f32 0.0, %v1096
        %v1098 = vpop.f32.mrf.mxu0
        %v1099 = vpop.f32.mrf.mxu0
        %v1100 = vadd.f32 0.0, %v1099
        %v1101 = vpop.f32.mrf.mxu0
        %1102 = vmatprep.mubr.bf16.mxu0 %v781
        %1103 = vmatmul.mubr.bf16.gmra.mxu0 %v780
        %v1104 = vpop.f32.mrf.mxu0
        %v1105 = vadd.f32 0.0, %v1104
        %v1106 = vpop.f32.mrf.mxu0
        %v1107 = vpop.f32.mrf.mxu0
        %v1108 = vadd.f32 0.0, %v1107
        %v1109 = vpop.f32.mrf.mxu0
        %1110 = vmatprep.mubr.bf16.mxu0 %v784
        %1111 = vmatmul.mubr.bf16.gmra.mxu0 %v783
        %v1112 = vpop.f32.mrf.mxu0
        %v1113 = vadd.f32 0.0, %v1112
        %v1114 = vpop.f32.mrf.mxu0
        %v1115 = vpop.f32.mrf.mxu0
        %v1116 = vadd.f32 0.0, %v1115
        %v1117 = vpop.f32.mrf.mxu0
        %1118 = vmatprep.mubr.bf16.mxu0 %v787
        %1119 = vmatmul.mubr.bf16.gmra.mxu0 %v786
        %v1120 = vpop.f32.mrf.mxu0
        %v1121 = vadd.f32 0.0, %v1120
        %v1122 = vpop.f32.mrf.mxu0
        %v1123 = vpop.f32.mrf.mxu0
        %v1124 = vadd.f32 0.0, %v1123
        %v1125 = vpop.f32.mrf.mxu0
        %1126 = vmatprep.mubr.bf16.mxu0 %v790
        %1127 = vmatmul.mubr.bf16.gmra.mxu0 %v789
        %v1128 = vpop.f32.mrf.mxu0
        %v1129 = vadd.f32 0.0, %v1128
        %v1130 = vpop.f32.mrf.mxu0
        %v1131 = vpop.f32.mrf.mxu0
        %v1132 = vadd.f32 0.0, %v1131
        %v1133 = vpop.f32.mrf.mxu0
        %1134 = vmatprep.mubr.bf16.mxu0 %v793
        %1135 = vmatmul.mubr.bf16.gmra.mxu0 %v792
        %v1136 = vpop.f32.mrf.mxu0
        %v1137 = vadd.f32 0.0, %v1136
        %v1138 = vpop.f32.mrf.mxu0
        %v1139 = vpop.f32.mrf.mxu0
        %v1140 = vadd.f32 0.0, %v1139
        %v1141 = vpop.f32.mrf.mxu0
        %1142 = vmatprep.mubr.bf16.mxu0 %v796
        %1143 = vmatmul.mubr.bf16.gmra.mxu0 %v795
        %v1144 = vpop.f32.mrf.mxu0
        %v1145 = vadd.f32 0.0, %v1144
        %v1146 = vpop.f32.mrf.mxu0
        %v1147 = vpop.f32.mrf.mxu0
        %v1148 = vadd.f32 0.0, %v1147
        %v1149 = vpop.f32.mrf.mxu0
        %1150 = vdwg.mxu0
        %1151 = vmatprep.subr.bf16.mxu0 0
        %1152 = vmatpush1.bf16.msra.mxu0 %v965
        %1153 = vmatprep.subr.bf16.mxu0 0
        %1154 = vmatpush1.bf16.msra.mxu0 %v964
        %1155 = vmatprep.subr.bf16.mxu0 0
        %1156 = vmatpush1.bf16.msra.mxu0 %v963
        %1157 = vmatprep.subr.bf16.mxu0 0
        %1158 = vmatpush1.bf16.msra.mxu0 %v962
        %1159 = vmatprep.subr.bf16.mxu0 0
        %1160 = vmatpush1.bf16.msra.mxu0 %v961
        %1161 = vmatprep.subr.bf16.mxu0 0
        %1162 = vmatpush1.bf16.msra.mxu0 %v960
        %1163 = vmatprep.subr.bf16.mxu0 0
        %1164 = vmatpush1.bf16.msra.mxu0 %v959
        %1165 = vmatprep.subr.bf16.mxu0 0
        %1166 = vmatpush1.bf16.msra.mxu0 %v958
        %1167 = vmatprep.subr.bf16.mxu0 0
        %1168 = vmatpush2.bf16.msra.mxu0 0
        %1169 = vmatprep.subr.bf16.mxu0 0
        %1170 = vmatpush2.bf16.msra.mxu0 0
        %1171 = vmatprep.subr.bf16.mxu0 0
        %1172 = vmatpush2.bf16.msra.mxu0 0
        %1173 = vmatprep.subr.bf16.mxu0 0
        %1174 = vmatpush2.bf16.msra.mxu0 0
        %1175 = vmatprep.subr.bf16.mxu0 0
        %1176 = vmatpush2.bf16.msra.mxu0 0
        %1177 = vmatprep.subr.bf16.mxu0 0
        %1178 = vmatpush2.bf16.msra.mxu0 0
        %1179 = vmatprep.subr.bf16.mxu0 0
        %1180 = vmatpush2.bf16.msra.mxu0 0
        %1181 = vmatprep.subr.bf16.mxu0 0
        %1182 = vmatpush2.bf16.msra.mxu0 0
        %1183 = vmatprep.mubr.bf16.mxu0 0
        %1184 = vmatmul.mubr.bf16.gmra.mxu0 %v752
        %v1185 = vpop.f32.mrf.mxu0
        %v1186 = vadd.f32 %v1025, %v1185
        %v1187 = vpop.f32.mrf.mxu0
        %v1188 = vpop.f32.mrf.mxu0
        %v1189 = vadd.f32 %v1028, %v1188
        %v1190 = vpop.f32.mrf.mxu0
        %1191 = vmatprep.mubr.bf16.mxu0 0
        %1192 = vmatmul.mubr.bf16.gmra.mxu0 %v755
        %v1193 = vpop.f32.mrf.mxu0
        %v1194 = vadd.f32 %v1033, %v1193
        %v1195 = vpop.f32.mrf.mxu0
        %v1196 = vpop.f32.mrf.mxu0
        %v1197 = vadd.f32 %v1036, %v1196
        %v1198 = vpop.f32.mrf.mxu0
        %1199 = vmatprep.mubr.bf16.mxu0 0
        %1200 = vmatmul.mubr.bf16.gmra.mxu0 %v758
        %v1201 = vpop.f32.mrf.mxu0
        %v1202 = vadd.f32 %v1041, %v1201
        %v1203 = vpop.f32.mrf.mxu0
        %v1204 = vpop.f32.mrf.mxu0
        %v1205 = vadd.f32 %v1044, %v1204
        %v1206 = vpop.f32.mrf.mxu0
        %1207 = vmatprep.mubr.bf16.mxu0 0
        %1208 = vmatmul.mubr.bf16.gmra.mxu0 %v761
        %v1209 = vpop.f32.mrf.mxu0
        %v1210 = vadd.f32 %v1049, %v1209
        %v1211 = vpop.f32.mrf.mxu0
        %v1212 = vpop.f32.mrf.mxu0
        %v1213 = vadd.f32 %v1052, %v1212
        %v1214 = vpop.f32.mrf.mxu0
        %1215 = vmatprep.mubr.bf16.mxu0 0
        %1216 = vmatmul.mubr.bf16.gmra.mxu0 %v764
        %v1217 = vpop.f32.mrf.mxu0
        %v1218 = vadd.f32 %v1057, %v1217
        %v1219 = vpop.f32.mrf.mxu0
        %v1220 = vpop.f32.mrf.mxu0
        %v1221 = vadd.f32 %v1060, %v1220
        %v1222 = vpop.f32.mrf.mxu0
        %1223 = vmatprep.mubr.bf16.mxu0 0
        %1224 = vmatmul.mubr.bf16.gmra.mxu0 %v767
        %v1225 = vpop.f32.mrf.mxu0
        %v1226 = vadd.f32 %v1065, %v1225
        %v1227 = vpop.f32.mrf.mxu0
        %v1228 = vpop.f32.mrf.mxu0
        %v1229 = vadd.f32 %v1068, %v1228
        %v1230 = vpop.f32.mrf.mxu0
        %1231 = vmatprep.mubr.bf16.mxu0 0
        %1232 = vmatmul.mubr.bf16.gmra.mxu0 %v770
        %v1233 = vpop.f32.mrf.mxu0
        %v1234 = vadd.f32 %v1073, %v1233
        %v1235 = vpop.f32.mrf.mxu0
        %v1236 = vpop.f32.mrf.mxu0
        %v1237 = vadd.f32 %v1076, %v1236
        %v1238 = vpop.f32.mrf.mxu0
        %1239 = vmatprep.mubr.bf16.mxu0 0
        %1240 = vmatmul.mubr.bf16.gmra.mxu0 %v773
        %v1241 = vpop.f32.mrf.mxu0
        %v1242 = vadd.f32 %v1081, %v1241
        %v1243 = vpop.f32.mrf.mxu0
        %v1244 = vpop.f32.mrf.mxu0
        %v1245 = vadd.f32 %v1084, %v1244
        %v1246 = vpop.f32.mrf.mxu0
        %1247 = vmatprep.mubr.bf16.mxu0 0
        %1248 = vmatmul.mubr.bf16.gmra.mxu0 %v776
        %v1249 = vpop.f32.mrf.mxu0
        %v1250 = vadd.f32 %v1089, %v1249
        %v1251 = vpop.f32.mrf.mxu0
        %v1252 = vpop.f32.mrf.mxu0
        %v1253 = vadd.f32 %v1092, %v1252
        %v1254 = vpop.f32.mrf.mxu0
        %1255 = vmatprep.mubr.bf16.mxu0 0
        %1256 = vmatmul.mubr.bf16.gmra.mxu0 %v779
        %v1257 = vpop.f32.mrf.mxu0
        %v1258 = vadd.f32 %v1097, %v1257
        %v1259 = vpop.f32.mrf.mxu0
        %v1260 = vpop.f32.mrf.mxu0
        %v1261 = vadd.f32 %v1100, %v1260
        %v1262 = vpop.f32.mrf.mxu0
        %1263 = vmatprep.mubr.bf16.mxu0 0
        %1264 = vmatmul.mubr.bf16.gmra.mxu0 %v782
        %v1265 = vpop.f32.mrf.mxu0
        %v1266 = vadd.f32 %v1105, %v1265
        %v1267 = vpop.f32.mrf.mxu0
        %v1268 = vpop.f32.mrf.mxu0
        %v1269 = vadd.f32 %v1108, %v1268
        %v1270 = vpop.f32.mrf.mxu0
        %1271 = vmatprep.mubr.bf16.mxu0 0
        %1272 = vmatmul.mubr.bf16.gmra.mxu0 %v785
        %v1273 = vpop.f32.mrf.mxu0
        %v1274 = vadd.f32 %v1113, %v1273
        %v1275 = vpop.f32.mrf.mxu0
        %v1276 = vpop.f32.mrf.mxu0
        %v1277 = vadd.f32 %v1116, %v1276
        %v1278 = vpop.f32.mrf.mxu0
        %1279 = vmatprep.mubr.bf16.mxu0 0
        %1280 = vmatmul.mubr.bf16.gmra.mxu0 %v788
        %v1281 = vpop.f32.mrf.mxu0
        %v1282 = vadd.f32 %v1121, %v1281
        %v1283 = vpop.f32.mrf.mxu0
        %v1284 = vpop.f32.mrf.mxu0
        %v1285 = vadd.f32 %v1124, %v1284
        %v1286 = vpop.f32.mrf.mxu0
        %1287 = vmatprep.mubr.bf16.mxu0 0
        %1288 = vmatmul.mubr.bf16.gmra.mxu0 %v791
        %v1289 = vpop.f32.mrf.mxu0
        %v1290 = vadd.f32 %v1129, %v1289
        %v1291 = vpop.f32.mrf.mxu0
        %v1292 = vpop.f32.mrf.mxu0
        %v1293 = vadd.f32 %v1132, %v1292
        %v1294 = vpop.f32.mrf.mxu0
        %1295 = vmatprep.mubr.bf16.mxu0 0
        %1296 = vmatmul.mubr.bf16.gmra.mxu0 %v794
        %v1297 = vpop.f32.mrf.mxu0
        %v1298 = vadd.f32 %v1137, %v1297
        %v1299 = vpop.f32.mrf.mxu0
        %v1300 = vpop.f32.mrf.mxu0
        %v1301 = vadd.f32 %v1140, %v1300
        %v1302 = vpop.f32.mrf.mxu0
        %1303 = vmatprep.mubr.bf16.mxu0 0
        %1304 = vmatmul.mubr.bf16.gmra.mxu0 %v797
        %v1305 = vpop.f32.mrf.mxu0
        %v1306 = vadd.f32 %v1145, %v1305
        %v1307 = vpop.f32.mrf.mxu0
        %v1308 = vpop.f32.mrf.mxu0
        %v1309 = vadd.f32 %v1148, %v1308
        %v1310 = vpop.f32.mrf.mxu0
        %1311 = vdwg.mxu0
        %v1312 = vadd.f32 %v446, %v1186
        %v1313 = vadd.f32 %v447, %v1189
        %v1314 = vadd.f32 %v448, %v1194
        %v1315 = vadd.f32 %v449, %v1197
        %v1316 = vadd.f32 %v450, %v1202
        %v1317 = vadd.f32 %v451, %v1205
        %v1318 = vadd.f32 %v452, %v1210
        %v1319 = vadd.f32 %v453, %v1213
        %v1320 = vadd.f32 %v454, %v1218
        %v1321 = vadd.f32 %v455, %v1221
        %v1322 = vadd.f32 %v456, %v1226
        %v1323 = vadd.f32 %v457, %v1229
        %v1324 = vadd.f32 %v458, %v1234
        %v1325 = vadd.f32 %v459, %v1237
        %v1326 = vadd.f32 %v460, %v1242
        %v1327 = vadd.f32 %v461, %v1245
        %v1328 = vadd.f32 %v462, %v1250
        %v1329 = vadd.f32 %v463, %v1253
        %v1330 = vadd.f32 %v464, %v1258
        %v1331 = vadd.f32 %v465, %v1261
        %v1332 = vadd.f32 %v466, %v1266
        %v1333 = vadd.f32 %v467, %v1269
        %v1334 = vadd.f32 %v468, %v1274
        %v1335 = vadd.f32 %v469, %v1277
        %v1336 = vadd.f32 %v470, %v1282
        %v1337 = vadd.f32 %v471, %v1285
        %v1338 = vadd.f32 %v472, %v1290
        %v1339 = vadd.f32 %v473, %v1293
        %v1340 = vadd.f32 %v474, %v1298
        %v1341 = vadd.f32 %v475, %v1301
        %v1342 = vadd.f32 %v476, %v1306
        %v1343 = vadd.f32 %v477, %v1309
        %1344 = vst [vmem:[#allocation2] sm:$0xff] %v1312
        %1345 = vst [vmem:[#allocation2 + $0x8] sm:$0xff] %v1313
        %1346 = vst [vmem:[#allocation2 + $0x10] sm:$0xff] %v1314
        %1347 = vst [vmem:[#allocation2 + $0x18] sm:$0xff] %v1315
        %1348 = vst [vmem:[#allocation2 + $0x20] sm:$0xff] %v1316
        %1349 = vst [vmem:[#allocation2 + $0x28] sm:$0xff] %v1317
        %1350 = vst [vmem:[#allocation2 + $0x30] sm:$0xff] %v1318
        %1351 = vst [vmem:[#allocation2 + $0x38] sm:$0xff] %v1319
        %1352 = vst [vmem:[#allocation2 + $0x40] sm:$0xff] %v1320
        %1353 = vst [vmem:[#allocation2 + $0x48] sm:$0xff] %v1321
        %1354 = vst [vmem:[#allocation2 + $0x50] sm:$0xff] %v1322
        %1355 = vst [vmem:[#allocation2 + $0x58] sm:$0xff] %v1323
        %1356 = vst [vmem:[#allocation2 + $0x60] sm:$0xff] %v1324
        %1357 = vst [vmem:[#allocation2 + $0x68] sm:$0xff] %v1325
        %1358 = vst [vmem:[#allocation2 + $0x70] sm:$0xff] %v1326
        %1359 = vst [vmem:[#allocation2 + $0x78] sm:$0xff] %v1327
        %1360 = vst [vmem:[#allocation2 + $0x80] sm:$0xff] %v1328
        %1361 = vst [vmem:[#allocation2 + $0x88] sm:$0xff] %v1329
        %1362 = vst [vmem:[#allocation2 + $0x90] sm:$0xff] %v1330
        %1363 = vst [vmem:[#allocation2 + $0x98] sm:$0xff] %v1331
        %1364 = vst [vmem:[#allocation2 + $0xa0] sm:$0xff] %v1332
        %1365 = vst [vmem:[#allocation2 + $0xa8] sm:$0xff] %v1333
        %1366 = vst [vmem:[#allocation2 + $0xb0] sm:$0xff] %v1334
        %1367 = vst [vmem:[#allocation2 + $0xb8] sm:$0xff] %v1335
        %1368 = vst [vmem:[#allocation2 + $0xc0] sm:$0xff] %v1336
        %1369 = vst [vmem:[#allocation2 + $0xc8] sm:$0xff] %v1337
        %1370 = vst [vmem:[#allocation2 + $0xd0] sm:$0xff] %v1338
        %1371 = vst [vmem:[#allocation2 + $0xd8] sm:$0xff] %v1339
        %1372 = vst [vmem:[#allocation2 + $0xe0] sm:$0xff] %v1340
        %1373 = vst [vmem:[#allocation2 + $0xe8] sm:$0xff] %v1341
        %1374 = vst [vmem:[#allocation2 + $0xf0] sm:$0xff] %v1342
        %1375 = vst [vmem:[#allocation2 + $0xf8] sm:$0xff] %v1343
        %p1376 = scmp.eq.s32.totalorder %s21, 2
        // Predicated region
        $region63: #{generator_forward.52} parent=53 // pred_check
          %p1377 = pneg %p1376
        $region64: #{generator_forward.52} parent=53 // pred_check_branch
          %1379 = sbr.rel (%p1377) target = $region66
        $region65: #{generator_forward.52} parent=53 // pred_region
          %v1380 = vld [vmem:[#allocation2] sm:$0xff]
          %v1381 = vld [vmem:[#allocation2 + $0x8] sm:$0xff]
          %v1382 = vld [vmem:[#allocation2 + $0x10] sm:$0xff]
          %v1383 = vld [vmem:[#allocation2 + $0x18] sm:$0xff]
          %v1384 = vld [vmem:[#allocation2 + $0x20] sm:$0xff]
          %v1385 = vld [vmem:[#allocation2 + $0x28] sm:$0xff]
          %v1386 = vld [vmem:[#allocation2 + $0x30] sm:$0xff]
          %v1387 = vld [vmem:[#allocation2 + $0x38] sm:$0xff]
          %v1388 = vld [vmem:[#allocation2 + $0x40] sm:$0xff]
          %v1389 = vld [vmem:[#allocation2 + $0x48] sm:$0xff]
          %v1390 = vld [vmem:[#allocation2 + $0x50] sm:$0xff]
          %v1391 = vld [vmem:[#allocation2 + $0x58] sm:$0xff]
          %v1392 = vld [vmem:[#allocation2 + $0x60] sm:$0xff]
          %v1393 = vld [vmem:[#allocation2 + $0x68] sm:$0xff]
          %v1394 = vld [vmem:[#allocation2 + $0x70] sm:$0xff]
          %v1395 = vld [vmem:[#allocation2 + $0x78] sm:$0xff]
          %v1396 = vld [vmem:[#allocation2 + $0x80] sm:$0xff]
          %v1397 = vld [vmem:[#allocation2 + $0x88] sm:$0xff]
          %v1398 = vld [vmem:[#allocation2 + $0x90] sm:$0xff]
          %v1399 = vld [vmem:[#allocation2 + $0x98] sm:$0xff]
          %v1400 = vld [vmem:[#allocation2 + $0xa0] sm:$0xff]
          %v1401 = vld [vmem:[#allocation2 + $0xa8] sm:$0xff]
          %v1402 = vld [vmem:[#allocation2 + $0xb0] sm:$0xff]
          %v1403 = vld [vmem:[#allocation2 + $0xb8] sm:$0xff]
          %v1404 = vld [vmem:[#allocation2 + $0xc0] sm:$0xff]
          %v1405 = vld [vmem:[#allocation2 + $0xc8] sm:$0xff]
          %v1406 = vld [vmem:[#allocation2 + $0xd0] sm:$0xff]
          %v1407 = vld [vmem:[#allocation2 + $0xd8] sm:$0xff]
          %v1408 = vld [vmem:[#allocation2 + $0xe0] sm:$0xff]
          %v1409 = vld [vmem:[#allocation2 + $0xe8] sm:$0xff]
          %v1410 = vld [vmem:[#allocation2 + $0xf0] sm:$0xff]
          %v1411 = vld [vmem:[#allocation2 + $0xf8] sm:$0xff]
          %v1412 = vld [vmem:[%s399] sm:$0x1]
          %v1414 = vlaneseq
          %v1415 = vshrl.u32 %v1414, 7
          %v1416 = vsub.s32 0, %v1415
          %v1417 = vrot.slane %v1412, %v1416
          %v1419 = vadd.f32 %v1380, %v1417
          %v1420 = vadd.f32 %v1381, %v1417
          %v1421 = vadd.f32 %v1382, %v1417
          %v1422 = vadd.f32 %v1383, %v1417
          %v1423 = vadd.f32 %v1384, %v1417
          %v1424 = vadd.f32 %v1385, %v1417
          %v1425 = vadd.f32 %v1386, %v1417
          %v1426 = vadd.f32 %v1387, %v1417
          %v1427 = vadd.f32 %v1388, %v1417
          %v1428 = vadd.f32 %v1389, %v1417
          %v1429 = vadd.f32 %v1390, %v1417
          %v1430 = vadd.f32 %v1391, %v1417
          %v1431 = vadd.f32 %v1392, %v1417
          %v1432 = vadd.f32 %v1393, %v1417
          %v1433 = vadd.f32 %v1394, %v1417
          %v1434 = vadd.f32 %v1395, %v1417
          %v1435 = vadd.f32 %v1396, %v1417
          %v1436 = vadd.f32 %v1397, %v1417
          %v1437 = vadd.f32 %v1398, %v1417
          %v1438 = vadd.f32 %v1399, %v1417
          %v1439 = vadd.f32 %v1400, %v1417
          %v1440 = vadd.f32 %v1401, %v1417
          %v1441 = vadd.f32 %v1402, %v1417
          %v1442 = vadd.f32 %v1403, %v1417
          %v1443 = vadd.f32 %v1404, %v1417
          %v1444 = vadd.f32 %v1405, %v1417
          %v1445 = vadd.f32 %v1406, %v1417
          %v1446 = vadd.f32 %v1407, %v1417
          %v1447 = vadd.f32 %v1408, %v1417
          %v1448 = vadd.f32 %v1409, %v1417
          %v1449 = vadd.f32 %v1410, %v1417
          %v1450 = vadd.f32 %v1411, %v1417
          %v1451 = vpack.c.bf16 %v1420, %v1419
          %v1452 = vpack.c.bf16 %v1422, %v1421
          %v1453 = vpack.c.bf16 %v1424, %v1423
          %v1454 = vpack.c.bf16 %v1426, %v1425
          %v1455 = vpack.c.bf16 %v1428, %v1427
          %v1456 = vpack.c.bf16 %v1430, %v1429
          %v1457 = vpack.c.bf16 %v1432, %v1431
          %v1458 = vpack.c.bf16 %v1434, %v1433
          %v1459 = vpack.c.bf16 %v1436, %v1435
          %v1460 = vpack.c.bf16 %v1438, %v1437
          %v1461 = vpack.c.bf16 %v1440, %v1439
          %v1462 = vpack.c.bf16 %v1442, %v1441
          %v1463 = vpack.c.bf16 %v1444, %v1443
          %v1464 = vpack.c.bf16 %v1446, %v1445
          %v1465 = vpack.c.bf16 %v1448, %v1447
          %v1466 = vpack.c.bf16 %v1450, %v1449
          %v1483 = vunpack.c.l.b16 %v1451
          %v1484 = vunpack.c.h.b16 %v1451
          %v1485 = vunpack.c.l.b16 %v1452
          %v1486 = vunpack.c.h.b16 %v1452
          %v1487 = vunpack.c.l.b16 %v1453
          %v1488 = vunpack.c.h.b16 %v1453
          %v1489 = vunpack.c.l.b16 %v1454
          %v1490 = vunpack.c.h.b16 %v1454
          %v1491 = vunpack.c.l.b16 %v1455
          %v1492 = vunpack.c.h.b16 %v1455
          %v1493 = vunpack.c.l.b16 %v1456
          %v1494 = vunpack.c.h.b16 %v1456
          %v1495 = vunpack.c.l.b16 %v1457
          %v1496 = vunpack.c.h.b16 %v1457
          %v1497 = vunpack.c.l.b16 %v1458
          %v1498 = vunpack.c.h.b16 %v1458
          %v1499 = vunpack.c.l.b16 %v1459
          %v1500 = vunpack.c.h.b16 %v1459
          %v1501 = vunpack.c.l.b16 %v1460
          %v1502 = vunpack.c.h.b16 %v1460
          %v1503 = vunpack.c.l.b16 %v1461
          %v1504 = vunpack.c.h.b16 %v1461
          %v1505 = vunpack.c.l.b16 %v1462
          %v1506 = vunpack.c.h.b16 %v1462
          %v1507 = vunpack.c.l.b16 %v1463
          %v1508 = vunpack.c.h.b16 %v1463
          %v1509 = vunpack.c.l.b16 %v1464
          %v1510 = vunpack.c.h.b16 %v1464
          %v1511 = vunpack.c.l.b16 %v1465
          %v1512 = vunpack.c.h.b16 %v1465
          %v1513 = vunpack.c.l.b16 %v1466
          %v1514 = vunpack.c.h.b16 %v1466
          %v1515 = vpack.c.b16 %v1483, %v1483
          %v1516 = vpack.c.b16 %v1484, %v1484
          %v1517 = vpack.c.b16 %v1485, %v1485
          %v1518 = vpack.c.b16 %v1486, %v1486
          %v1519 = vpack.c.b16 %v1487, %v1487
          %v1520 = vpack.c.b16 %v1488, %v1488
          %v1521 = vpack.c.b16 %v1489, %v1489
          %v1522 = vpack.c.b16 %v1490, %v1490
          %v1523 = vpack.c.b16 %v1491, %v1491
          %v1524 = vpack.c.b16 %v1492, %v1492
          %v1525 = vpack.c.b16 %v1493, %v1493
          %v1526 = vpack.c.b16 %v1494, %v1494
          %v1527 = vpack.c.b16 %v1495, %v1495
          %v1528 = vpack.c.b16 %v1496, %v1496
          %v1529 = vpack.c.b16 %v1497, %v1497
          %v1530 = vpack.c.b16 %v1498, %v1498
          %v1531 = vpack.c.b16 %v1499, %v1499
          %v1532 = vpack.c.b16 %v1500, %v1500
          %v1533 = vpack.c.b16 %v1501, %v1501
          %v1534 = vpack.c.b16 %v1502, %v1502
          %v1535 = vpack.c.b16 %v1503, %v1503
          %v1536 = vpack.c.b16 %v1504, %v1504
          %v1537 = vpack.c.b16 %v1505, %v1505
          %v1538 = vpack.c.b16 %v1506, %v1506
          %v1539 = vpack.c.b16 %v1507, %v1507
          %v1540 = vpack.c.b16 %v1508, %v1508
          %v1541 = vpack.c.b16 %v1509, %v1509
          %v1542 = vpack.c.b16 %v1510, %v1510
          %v1543 = vpack.c.b16 %v1511, %v1511
          %v1544 = vpack.c.b16 %v1512, %v1512
          %v1545 = vpack.c.b16 %v1513, %v1513
          %v1546 = vpack.c.b16 %v1514, %v1514
          %1579 = vst [vmem:[%s407] sm:$0xf] %v1515
          %1580 = vst [vmem:[%s407 + $0x4] sm:$0xf] %v1516
          %1581 = vst [vmem:[%s407 + $0x8] sm:$0xf] %v1517
          %1582 = vst [vmem:[%s407 + $0xc] sm:$0xf] %v1518
          %1583 = vst [vmem:[%s407 + $0x10] sm:$0xf] %v1519
          %1584 = vst [vmem:[%s407 + $0x14] sm:$0xf] %v1520
          %1585 = vst [vmem:[%s407 + $0x18] sm:$0xf] %v1521
          %1586 = vst [vmem:[%s407 + $0x1c] sm:$0xf] %v1522
          %1587 = vst [vmem:[%s407 + $0x20] sm:$0xf] %v1523
          %1588 = vst [vmem:[%s407 + $0x24] sm:$0xf] %v1524
          %1589 = vst [vmem:[%s407 + $0x28] sm:$0xf] %v1525
          %1590 = vst [vmem:[%s407 + $0x2c] sm:$0xf] %v1526
          %1591 = vst [vmem:[%s407 + $0x30] sm:$0xf] %v1527
          %1592 = vst [vmem:[%s407 + $0x34] sm:$0xf] %v1528
          %1593 = vst [vmem:[%s407 + $0x38] sm:$0xf] %v1529
          %1594 = vst [vmem:[%s407 + $0x3c] sm:$0xf] %v1530
          %1595 = vst [vmem:[%s407 + $0x40] sm:$0xf] %v1531
          %1596 = vst [vmem:[%s407 + $0x44] sm:$0xf] %v1532
          %1597 = vst [vmem:[%s407 + $0x48] sm:$0xf] %v1533
          %1598 = vst [vmem:[%s407 + $0x4c] sm:$0xf] %v1534
          %1599 = vst [vmem:[%s407 + $0x50] sm:$0xf] %v1535
          %1600 = vst [vmem:[%s407 + $0x54] sm:$0xf] %v1536
          %1601 = vst [vmem:[%s407 + $0x58] sm:$0xf] %v1537
          %1602 = vst [vmem:[%s407 + $0x5c] sm:$0xf] %v1538
          %1603 = vst [vmem:[%s407 + $0x60] sm:$0xf] %v1539
          %1604 = vst [vmem:[%s407 + $0x64] sm:$0xf] %v1540
          %1605 = vst [vmem:[%s407 + $0x68] sm:$0xf] %v1541
          %1606 = vst [vmem:[%s407 + $0x6c] sm:$0xf] %v1542
          %1607 = vst [vmem:[%s407 + $0x70] sm:$0xf] %v1543
          %1608 = vst [vmem:[%s407 + $0x74] sm:$0xf] %v1544
          %1609 = vst [vmem:[%s407 + $0x78] sm:$0xf] %v1545
          %1610 = vst [vmem:[%s407 + $0x7c] sm:$0xf] %v1546
        $region66: #{generator_forward.52} parent=53 // pred_fallthru
          _
        %s1611 = smul.u32 32, %s19
        %p1612 = scmp.lt.s32.totalorder %s1611, 63
        %s1613 = scalar_select %p1612, %s1611, 63
        %p1614 = scmp.lt.s32.totalorder %s20, 0
        %s1615 = scalar_select %p1614, %s20, 0
        %s1616 = sadd.s32 %s1615, %s1613
        %s1617 = smul.addr %s1616, 4
        %s1618 = scalar_lea.vmem %s3, %s1617
        // Predicated region
        $region67: #{generator_forward.52} parent=53 // pred_check
          %p1619 = pneg %p135
        $region68: #{generator_forward.52} parent=53 // pred_check_branch
          %1621 = sbr.rel (%p1619) target = $region70
        $region69: #{generator_forward.52} parent=53 // pred_region
          %s1622 = smul.u32 32, %s19
        $region70: #{generator_forward.52} parent=53 // pred_fallthru
          _
      $region54: #{generator_forward.52} parent=5 // pred_fallthru
        _
      %p1623 = scmp.le.s32.totalorder 2, %s9
      // Predicated region
      $region71: #{generator_forward.52} parent=5 // pred_check
        %p1624 = pneg %p1623
      $region72: #{generator_forward.52} parent=5 // pred_check_branch
        %1626 = sbr.rel (%p1624) target = $region74
      $region73: #{generator_forward.52} parent=5 // pred_region
        %s1627 = ssub.s32 %s9, 2
        // Predicated region
        $region75: #{generator_forward.52} parent=73 // pred_check
          %p1628 = pneg %p141
        $region76: #{generator_forward.52} parent=73 // pred_check_branch
          %1630 = sbr.rel (%p1628) target = $region78
        $region77: #{generator_forward.52} parent=73 // pred_region
          %s1631 = smul.u32 32, %s22
          %p1632 = scmp.lt.s32.totalorder %s1631, 63
          %s1633 = scalar_select %p1632, %s1631, 63
          %p1634 = scmp.lt.s32.totalorder %s23, 0
          %s1635 = scalar_select %p1634, %s23, 0
          %s1636 = sadd.s32 %s1635, %s1633
          %s1637 = smul.addr %s1636, 4
          %s1638 = scalar_lea.vmem %s3, %s1637
        $region78: #{generator_forward.52} parent=73 // pred_fallthru
          _
      $region74: #{generator_forward.52} parent=5 // pred_fallthru
        _
    $region6: #{generator_forward.52} parent=1 // loop_footer
      %s13 = sadd.s32 1, %s9
    $region7: #{generator_forward.52} parent=1 // loop_footer_branch
      %8 = sbr.rel target = $region3
    $region8: #{generator_forward.52} parent=1 // loop_exit
      _

// kernel: generator_forward.55
$region0: #{generator_forward.55}
  #allocation0 [shape = 'u32[]', space=smem, size = 0x4, offset = 0x4, fixed_abs, tag = 'smem constant byte address 0x4 - core index']
  #allocation1 [shape = 'u32[144,128]{1,0:T(1,128)}', space=vmem, size = 0x12000, scoped, tag = 'internal scratch']
  #allocation2 [shape = 'f32[256,128]{1,0:T(8,128)}', space=vmem, size = 0x20000, scoped, tag = 'scratch operand']
  %s0 = inlined_call_operand.vmem [shape: bf16[512,6272], index: 0, kind: input, shape index: {}]
  %s1 = inlined_call_operand.vmem [shape: bf16[6272,128], index: 1, kind: input, shape index: {}]
  %s2 = inlined_call_operand.vmem [shape: f32[1,128], index: 2, kind: input, shape index: {}]
  %s3 = inlined_call_operand.vmem [shape: bf16[512,128], index: 3, kind: output, shape index: {}]
  %s4 = sld [smem:[#allocation0]]
  $region94: #{generator_forward.55} parent=0
    _
  %s6 = ssub.s32 1, %s4
  %s7 = scalar_select 0, %s6, %s4
  $region1: #{generator_forward.55} parent=0
    #allocation3 [shape = 'u8[131072]{0}', space=vmem, size = 0x20000, scoped, tag = 'input window, operand 0']
    loop: start=0, step=1, limit=100
    $region2: #{generator_forward.55} parent=1 // loop_pre_header
      _
    $region3: #{generator_forward.55} parent=1 // loop_header
      %s9 = sphi 0, %s13
      %p10 = scmp.ge.s32.totalorder %s9, 100
      %s16 = sphi 0, %s35
      %s17 = sphi 0, %s31
      %s18 = sphi 0, %s27
      %s19 = sphi 0, %s16
      %s20 = sphi 0, %s17
      %s21 = sphi 0, %s18
      %s22 = sphi 0, %s19
      %s23 = sphi 0, %s20
      %s24 = sphi 0, %s21
      %s40 = sphi 0, %s42
      %s43 = sphi 0, %s40
      %s44 = sphi 0, %s43
      %s60 = sphi 0, %s44
      %s68 = sphi 0, %s70
      %s71 = sphi 0, %s68
      %s72 = sphi 0, %s71
      %s88 = sphi 0, %s72
      %s94 = sphi 0, %s96
      %s97 = sphi 0, %s94
      %s98 = sphi 0, %s97
      %s114 = sphi 0, %s98
      %s122 = sphi 0, %s124
      %s125 = sphi 0, %s122
      %s126 = sphi 0, %s125
      %s142 = sphi 0, %s126
    $region4: #{generator_forward.55} parent=1 // loop_header_branch
      %12 = sbr.rel (%p10) target = $region8
    $region5: #{generator_forward.55} parent=1 // loop_body
      %s14 = ssub.s32 %s9, 1
      %s15 = ssub.s32 %s9, 2
      %s25 = sadd.s32 1, %s18
      %p26 = scmp.ge.s32.totalorder %s25, 49
      %s27 = scalar_select %p26, 0, %s25
      %s28 = sadd.s32 1, %s17
      %s29 = scalar_select %p26, %s28, %s17
      %p30 = scmp.ge.s32.totalorder %s29, 1
      %s31 = scalar_select %p30, 0, %s29
      %s32 = sadd.s32 1, %s16
      %s33 = scalar_select %p30, %s32, %s16
      %p34 = scmp.ge.s32.totalorder %s33, 2
      %s35 = scalar_select %p34, 0, %s33
      %s36 = ssub.s32 %s16, %s35
      %s37 = ssub.s32 %s18, %s27
      %s38 = sor.u32 %s36, %s37
      %p39 = scmp.eq.s32.totalorder %s38, 0
      %s41 = sadd.s32 %s40, 1
      %s42 = scalar_select %p39, %s40, %s41
      %p45 = pneg %p39
      %p46 = scmp.eq.s32.totalorder %s9, 97
      %p47 = por %p45, %p46
      %p48 = scmp.ne.s32.totalorder %s40, %s43
      %p49 = scmp.eq.s32.totalorder %s9, 0
      %p50 = por %p48, %p49
      %p51 = scmp.ne.s32.totalorder %s40, %s43
      %p52 = scmp.eq.s32.totalorder %s14, 97
      %p53 = por %p51, %p52
      %p54 = scmp.ne.s32.totalorder %s43, %s44
      %p55 = scmp.eq.s32.totalorder %s14, 0
      %p56 = por %p54, %p55
      %p57 = scmp.ne.s32.totalorder %s43, %s44
      %p58 = scmp.eq.s32.totalorder %s15, 97
      %p59 = por %p57, %p58
      %p61 = scmp.ne.s32.totalorder %s44, %s60
      %p62 = scmp.eq.s32.totalorder %s15, 0
      %p63 = por %p61, %p62
      %s64 = ssub.s32 %s18, %s27
      %s65 = ssub.s32 %s17, %s31
      %s66 = sor.u32 %s64, %s65
      %p67 = scmp.eq.s32.totalorder %s66, 0
      %s69 = sadd.s32 %s68, 1
      %s70 = scalar_select %p67, %s68, %s69
      %p73 = pneg %p67
      %p74 = scmp.eq.s32.totalorder %s9, 97
      %p75 = por %p73, %p74
      %p76 = scmp.ne.s32.totalorder %s68, %s71
      %p77 = scmp.eq.s32.totalorder %s9, 0
      %p78 = por %p76, %p77
      %p79 = scmp.ne.s32.totalorder %s68, %s71
      %p80 = scmp.eq.s32.totalorder %s14, 97
      %p81 = por %p79, %p80
      %p82 = scmp.ne.s32.totalorder %s71, %s72
      %p83 = scmp.eq.s32.totalorder %s14, 0
      %p84 = por %p82, %p83
      %p85 = scmp.ne.s32.totalorder %s71, %s72
      %p86 = scmp.eq.s32.totalorder %s15, 97
      %p87 = por %p85, %p86
      %p89 = scmp.ne.s32.totalorder %s72, %s88
      %p90 = scmp.eq.s32.totalorder %s15, 0
      %p91 = por %p89, %p90
      %s92 = ssub.s32 %s17, %s31
      %p93 = scmp.eq.s32.totalorder %s92, 0
      %s95 = sadd.s32 %s94, 1
      %s96 = scalar_select %p93, %s94, %s95
      %p99 = pneg %p93
      %p100 = scmp.eq.s32.totalorder %s9, 97
      %p101 = por %p99, %p100
      %p102 = scmp.ne.s32.totalorder %s94, %s97
      %p103 = scmp.eq.s32.totalorder %s9, 0
      %p104 = por %p102, %p103
      %p105 = scmp.ne.s32.totalorder %s94, %s97
      %p106 = scmp.eq.s32.totalorder %s14, 97
      %p107 = por %p105, %p106
      %p108 = scmp.ne.s32.totalorder %s97, %s98
      %p109 = scmp.eq.s32.totalorder %s14, 0
      %p110 = por %p108, %p109
      %p111 = scmp.ne.s32.totalorder %s97, %s98
      %p112 = scmp.eq.s32.totalorder %s15, 97
      %p113 = por %p111, %p112
      %p115 = scmp.ne.s32.totalorder %s98, %s114
      %p116 = scmp.eq.s32.totalorder %s15, 0
      %p117 = por %p115, %p116
      %s118 = ssub.s32 %s16, %s35
      %s119 = ssub.s32 %s17, %s31
      %s120 = sor.u32 %s118, %s119
      %p121 = scmp.eq.s32.totalorder %s120, 0
      %s123 = sadd.s32 %s122, 1
      %s124 = scalar_select %p121, %s122, %s123
      %p127 = pneg %p121
      %p128 = scmp.eq.s32.totalorder %s9, 97
      %p129 = por %p127, %p128
      %p130 = scmp.ne.s32.totalorder %s122, %s125
      %p131 = scmp.eq.s32.totalorder %s9, 0
      %p132 = por %p130, %p131
      %p133 = scmp.ne.s32.totalorder %s122, %s125
      %p134 = scmp.eq.s32.totalorder %s14, 97
      %p135 = por %p133, %p134
      %p136 = scmp.ne.s32.totalorder %s125, %s126
      %p137 = scmp.eq.s32.totalorder %s14, 0
      %p138 = por %p136, %p137
      %p139 = scmp.ne.s32.totalorder %s125, %s126
      %p140 = scmp.eq.s32.totalorder %s15, 97
      %p141 = por %p139, %p140
      %p143 = scmp.ne.s32.totalorder %s126, %s142
      %p144 = scmp.eq.s32.totalorder %s15, 0
      %p145 = por %p143, %p144
      %p146 = scmp.le.s32.totalorder 1, %s9
      %p147 = scmp.lt.s32.totalorder %s9, 99
      %p148 = pnand %p146, %p147
      %p149 = pneg %p148
      // Predicated region
      $region9: #{generator_forward.55} parent=5 // pred_check
        _
      $region10: #{generator_forward.55} parent=5 // pred_check_branch
        %151 = sbr.rel (%p148) target = $region12
      $region11: #{generator_forward.55} parent=5 // pred_region
        %s152 = ssub.s32 %s9, 1
        // Predicated region
        $region13: #{generator_forward.55} parent=11 // pred_check
          %p153 = pneg %p110
        $region14: #{generator_forward.55} parent=11 // pred_check_branch
          %155 = sbr.rel (%p153) target = $region16
        $region15: #{generator_forward.55} parent=11 // pred_region
          %p156 = scmp.lt.s32.totalorder %s20, 0
          %s157 = scalar_select %p156, %s20, 0
          %s158 = scalar_lea.vmem %s2, %s157
        $region16: #{generator_forward.55} parent=11 // pred_fallthru
          _
      $region12: #{generator_forward.55} parent=5 // pred_fallthru
        _
      %p159 = scmp.lt.s32.totalorder %s9, 98
      // Predicated region
      $region17: #{generator_forward.55} parent=5 // pred_check
        %p160 = pneg %p159
      $region18: #{generator_forward.55} parent=5 // pred_check_branch
        %162 = sbr.rel (%p160) target = $region20
      $region19: #{generator_forward.55} parent=5 // pred_region
        // Predicated region
        $region21: #{generator_forward.55} parent=19 // pred_check
          %p163 = pneg %p50
        $region22: #{generator_forward.55} parent=19 // pred_check_branch
          %165 = sbr.rel (%p163) target = $region24
        $region23: #{generator_forward.55} parent=19 // pred_region
          %s166 = sand.u32 %s40, 1
          %s167 = sand.u32 %s40, 1
          %s168 = smul.addr %s167, 128
          %s169 = scalar_lea.vmem [#allocation3], %s168
          %s170 = smul.u32 32, %s16
          %s171 = smul.addr %s170, 49
          %s172 = sadd.s32 %s18, %s171
          %s173 = smul.addr %s172, 4
          %s174 = scalar_lea.vmem %s0, %s173
          // Predicated region
          $region25: #{generator_forward.55} parent=23 // pred_check
            _
          $region26: #{generator_forward.55} parent=23 // pred_check_branch
            %176 = sbr.rel (0) target = $region28
          $region27: #{generator_forward.55} parent=23 // pred_region
            // Predicated region
            $region29: #{generator_forward.55} parent=27 // pred_check
              _
            $region30: #{generator_forward.55} parent=27 // pred_check_branch
              %178 = sbr.rel target = $region32
            $region31: #{generator_forward.55} parent=27 // pred_region
              // Predicated region
              $region44: #{generator_forward.55} parent=31 // pred_check
                _
              $region45: #{generator_forward.55} parent=31 // pred_check_branch
                %256 = sbr.rel (0) target = $region47
              $region46: #{generator_forward.55} parent=31 // pred_region
                loop: start=0, step=1, limit=1
                $region48: #{generator_forward.55} parent=46 // loop_pre_header
                  _
                $region49: #{generator_forward.55} parent=46 // loop_header
                  %s258 = sphi 0, %s262
                  %p259 = scmp.ge.s32.totalorder %s258, 1
                  %s263 = sphi %s174, %s174
                  %s264 = sphi %s169, %s169
                $region50: #{generator_forward.55} parent=46 // loop_header_branch
                  %261 = sbr.rel (%p259) target = $region54
                $region51: #{generator_forward.55} parent=46 // loop_body
                  _
                $region52: #{generator_forward.55} parent=46 // loop_footer
                  %s262 = sadd.s32 1, %s258
                $region53: #{generator_forward.55} parent=46 // loop_footer_branch
                  %257 = sbr.rel target = $region49
                $region54: #{generator_forward.55} parent=46 // loop_exit
                  _
                %s266 = ssub.s32 16, 1
                loop: start=0, step=1, limit=1
                $region55: #{generator_forward.55} parent=46 // loop_pre_header
                  _
                $region56: #{generator_forward.55} parent=46 // loop_header
                  %s268 = sphi 0, %s272
                  %p269 = scmp.ge.s32.totalorder %s268, 1
                  %s273 = sphi %s174, %s174
                  %s274 = sphi %s169, %s169
                $region57: #{generator_forward.55} parent=46 // loop_header_branch
                  %271 = sbr.rel (%p269) target = $region61
                $region58: #{generator_forward.55} parent=46 // loop_body
                  %v275 = vld [vmem:[%s273] sm:%s266]
                  %276 = vst [vmem:[%s274] sm:%s266] %v275
                  %v277 = vld [vmem:[%s273 + $0xc4] sm:%s266]
                  %278 = vst [vmem:[%s274 + $0x4] sm:%s266] %v277
                  %v279 = vld [vmem:[%s273 + $0x188] sm:%s266]
                  %280 = vst [vmem:[%s274 + $0x8] sm:%s266] %v279
                  %v281 = vld [vmem:[%s273 + $0x24c] sm:%s266]
                  %282 = vst [vmem:[%s274 + $0xc] sm:%s266] %v281
                  %v283 = vld [vmem:[%s273 + $0x310] sm:%s266]
                  %284 = vst [vmem:[%s274 + $0x10] sm:%s266] %v283
                  %v285 = vld [vmem:[%s273 + $0x3d4] sm:%s266]
                  %286 = vst [vmem:[%s274 + $0x14] sm:%s266] %v285
                  %v287 = vld [vmem:[%s273 + $0x498] sm:%s266]
                  %288 = vst [vmem:[%s274 + $0x18] sm:%s266] %v287
                  %v289 = vld [vmem:[%s273 + $0x55c] sm:%s266]
                  %290 = vst [vmem:[%s274 + $0x1c] sm:%s266] %v289
                  %v291 = vld [vmem:[%s273 + $0x620] sm:%s266]
                  %292 = vst [vmem:[%s274 + $0x20] sm:%s266] %v291
                  %v293 = vld [vmem:[%s273 + $0x6e4] sm:%s266]
                  %294 = vst [vmem:[%s274 + $0x24] sm:%s266] %v293
                  %v295 = vld [vmem:[%s273 + $0x7a8] sm:%s266]
                  %296 = vst [vmem:[%s274 + $0x28] sm:%s266] %v295
                  %v297 = vld [vmem:[%s273 + $0x86c] sm:%s266]
                  %298 = vst [vmem:[%s274 + $0x2c] sm:%s266] %v297
                  %v299 = vld [vmem:[%s273 + $0x930] sm:%s266]
                  %300 = vst [vmem:[%s274 + $0x30] sm:%s266] %v299
                  %v301 = vld [vmem:[%s273 + $0x9f4] sm:%s266]
                  %302 = vst [vmem:[%s274 + $0x34] sm:%s266] %v301
                  %v303 = vld [vmem:[%s273 + $0xab8] sm:%s266]
                  %304 = vst [vmem:[%s274 + $0x38] sm:%s266] %v303
                  %v305 = vld [vmem:[%s273 + $0xb7c] sm:%s266]
                  %306 = vst [vmem:[%s274 + $0x3c] sm:%s266] %v305
                  %v307 = vld [vmem:[%s273 + $0xc40] sm:%s266]
                  %308 = vst [vmem:[%s274 + $0x40] sm:%s266] %v307
                  %v309 = vld [vmem:[%s273 + $0xd04] sm:%s266]
                  %310 = vst [vmem:[%s274 + $0x44] sm:%s266] %v309
                  %v311 = vld [vmem:[%s273 + $0xdc8] sm:%s266]
                  %312 = vst [vmem:[%s274 + $0x48] sm:%s266] %v311
                  %v313 = vld [vmem:[%s273 + $0xe8c] sm:%s266]
                  %314 = vst [vmem:[%s274 + $0x4c] sm:%s266] %v313
                  %v315 = vld [vmem:[%s273 + $0xf50] sm:%s266]
                  %316 = vst [vmem:[%s274 + $0x50] sm:%s266] %v315
                  %v317 = vld [vmem:[%s273 + $0x1014] sm:%s266]
                  %318 = vst [vmem:[%s274 + $0x54] sm:%s266] %v317
                  %v319 = vld [vmem:[%s273 + $0x10d8] sm:%s266]
                  %320 = vst [vmem:[%s274 + $0x58] sm:%s266] %v319
                  %v321 = vld [vmem:[%s273 + $0x119c] sm:%s266]
                  %322 = vst [vmem:[%s274 + $0x5c] sm:%s266] %v321
                  %v323 = vld [vmem:[%s273 + $0x1260] sm:%s266]
                  %324 = vst [vmem:[%s274 + $0x60] sm:%s266] %v323
                  %v325 = vld [vmem:[%s273 + $0x1324] sm:%s266]
                  %326 = vst [vmem:[%s274 + $0x64] sm:%s266] %v325
                  %v327 = vld [vmem:[%s273 + $0x13e8] sm:%s266]
                  %328 = vst [vmem:[%s274 + $0x68] sm:%s266] %v327
                  %v329 = vld [vmem:[%s273 + $0x14ac] sm:%s266]
                  %330 = vst [vmem:[%s274 + $0x6c] sm:%s266] %v329
                  %v331 = vld [vmem:[%s273 + $0x1570] sm:%s266]
                  %332 = vst [vmem:[%s274 + $0x70] sm:%s266] %v331
                  %v333 = vld [vmem:[%s273 + $0x1634] sm:%s266]
                  %334 = vst [vmem:[%s274 + $0x74] sm:%s266] %v333
                  %v335 = vld [vmem:[%s273 + $0x16f8] sm:%s266]
                  %336 = vst [vmem:[%s274 + $0x78] sm:%s266] %v335
                  %v337 = vld [vmem:[%s273 + $0x17bc] sm:%s266]
                  %338 = vst [vmem:[%s274 + $0x7c] sm:%s266] %v337
                $region59: #{generator_forward.55} parent=46 // loop_footer
                  %s272 = sadd.s32 1, %s268
                $region60: #{generator_forward.55} parent=46 // loop_footer_branch
                  %267 = sbr.rel target = $region56
                $region61: #{generator_forward.55} parent=46 // loop_exit
                  _
              $region47: #{generator_forward.55} parent=31 // pred_fallthru
                _
            $region32: #{generator_forward.55} parent=27 // pred_fallthru
              _
            // Predicated region
            $region33: #{generator_forward.55} parent=27 // pred_check
              _
            $region34: #{generator_forward.55} parent=27 // pred_check_branch
              %180 = sbr.rel (0) target = $region36
            $region35: #{generator_forward.55} parent=27 // pred_region
              %s182 = ssub.s32 16, 1
              loop: start=0, step=1, limit=1
              $region37: #{generator_forward.55} parent=35 // loop_pre_header
                _
              $region38: #{generator_forward.55} parent=35 // loop_header
                %s184 = sphi 0, %s188
                %p185 = scmp.ge.s32.totalorder %s184, 1
                %s189 = sphi %s174, %s174
                %s190 = sphi %s169, %s169
              $region39: #{generator_forward.55} parent=35 // loop_header_branch
                %187 = sbr.rel (%p185) target = $region43
              $region40: #{generator_forward.55} parent=35 // loop_body
                %v191 = vld [vmem:[%s189] sm:%s182]
                %192 = vst [vmem:[%s190] sm:%s182] %v191
                %v193 = vld [vmem:[%s189 + $0xc4] sm:%s182]
                %194 = vst [vmem:[%s190 + $0x4] sm:%s182] %v193
                %v195 = vld [vmem:[%s189 + $0x188] sm:%s182]
                %196 = vst [vmem:[%s190 + $0x8] sm:%s182] %v195
                %v197 = vld [vmem:[%s189 + $0x24c] sm:%s182]
                %198 = vst [vmem:[%s190 + $0xc] sm:%s182] %v197
                %v199 = vld [vmem:[%s189 + $0x310] sm:%s182]
                %200 = vst [vmem:[%s190 + $0x10] sm:%s182] %v199
                %v201 = vld [vmem:[%s189 + $0x3d4] sm:%s182]
                %202 = vst [vmem:[%s190 + $0x14] sm:%s182] %v201
                %v203 = vld [vmem:[%s189 + $0x498] sm:%s182]
                %204 = vst [vmem:[%s190 + $0x18] sm:%s182] %v203
                %v205 = vld [vmem:[%s189 + $0x55c] sm:%s182]
                %206 = vst [vmem:[%s190 + $0x1c] sm:%s182] %v205
                %v207 = vld [vmem:[%s189 + $0x620] sm:%s182]
                %208 = vst [vmem:[%s190 + $0x20] sm:%s182] %v207
                %v209 = vld [vmem:[%s189 + $0x6e4] sm:%s182]
                %210 = vst [vmem:[%s190 + $0x24] sm:%s182] %v209
                %v211 = vld [vmem:[%s189 + $0x7a8] sm:%s182]
                %212 = vst [vmem:[%s190 + $0x28] sm:%s182] %v211
                %v213 = vld [vmem:[%s189 + $0x86c] sm:%s182]
                %214 = vst [vmem:[%s190 + $0x2c] sm:%s182] %v213
                %v215 = vld [vmem:[%s189 + $0x930] sm:%s182]
                %216 = vst [vmem:[%s190 + $0x30] sm:%s182] %v215
                %v217 = vld [vmem:[%s189 + $0x9f4] sm:%s182]
                %218 = vst [vmem:[%s190 + $0x34] sm:%s182] %v217
                %v219 = vld [vmem:[%s189 + $0xab8] sm:%s182]
                %220 = vst [vmem:[%s190 + $0x38] sm:%s182] %v219
                %v221 = vld [vmem:[%s189 + $0xb7c] sm:%s182]
                %222 = vst [vmem:[%s190 + $0x3c] sm:%s182] %v221
                %v223 = vld [vmem:[%s189 + $0xc40] sm:%s182]
                %224 = vst [vmem:[%s190 + $0x40] sm:%s182] %v223
                %v225 = vld [vmem:[%s189 + $0xd04] sm:%s182]
                %226 = vst [vmem:[%s190 + $0x44] sm:%s182] %v225
                %v227 = vld [vmem:[%s189 + $0xdc8] sm:%s182]
                %228 = vst [vmem:[%s190 + $0x48] sm:%s182] %v227
                %v229 = vld [vmem:[%s189 + $0xe8c] sm:%s182]
                %230 = vst [vmem:[%s190 + $0x4c] sm:%s182] %v229
                %v231 = vld [vmem:[%s189 + $0xf50] sm:%s182]
                %232 = vst [vmem:[%s190 + $0x50] sm:%s182] %v231
                %v233 = vld [vmem:[%s189 + $0x1014] sm:%s182]
                %234 = vst [vmem:[%s190 + $0x54] sm:%s182] %v233
                %v235 = vld [vmem:[%s189 + $0x10d8] sm:%s182]
                %236 = vst [vmem:[%s190 + $0x58] sm:%s182] %v235
                %v237 = vld [vmem:[%s189 + $0x119c] sm:%s182]
                %238 = vst [vmem:[%s190 + $0x5c] sm:%s182] %v237
                %v239 = vld [vmem:[%s189 + $0x1260] sm:%s182]
                %240 = vst [vmem:[%s190 + $0x60] sm:%s182] %v239
                %v241 = vld [vmem:[%s189 + $0x1324] sm:%s182]
                %242 = vst [vmem:[%s190 + $0x64] sm:%s182] %v241
                %v243 = vld [vmem:[%s189 + $0x13e8] sm:%s182]
                %244 = vst [vmem:[%s190 + $0x68] sm:%s182] %v243
                %v245 = vld [vmem:[%s189 + $0x14ac] sm:%s182]
                %246 = vst [vmem:[%s190 + $0x6c] sm:%s182] %v245
                %v247 = vld [vmem:[%s189 + $0x1570] sm:%s182]
                %248 = vst [vmem:[%s190 + $0x70] sm:%s182] %v247
                %v249 = vld [vmem:[%s189 + $0x1634] sm:%s182]
                %250 = vst [vmem:[%s190 + $0x74] sm:%s182] %v249
                %v251 = vld [vmem:[%s189 + $0x16f8] sm:%s182]
                %252 = vst [vmem:[%s190 + $0x78] sm:%s182] %v251
                %v253 = vld [vmem:[%s189 + $0x17bc] sm:%s182]
                %254 = vst [vmem:[%s190 + $0x7c] sm:%s182] %v253
              $region41: #{generator_forward.55} parent=35 // loop_footer
                %s188 = sadd.s32 1, %s184
              $region42: #{generator_forward.55} parent=35 // loop_footer_branch
                %183 = sbr.rel target = $region38
              $region43: #{generator_forward.55} parent=35 // loop_exit
                _
            $region36: #{generator_forward.55} parent=27 // pred_fallthru
              _
          $region28: #{generator_forward.55} parent=23 // pred_fallthru
            _
          %339 = vnop
        $region24: #{generator_forward.55} parent=19 // pred_fallthru
          _
        // Predicated region
        $region62: #{generator_forward.55} parent=19 // pred_check
          %p340 = pneg %p78
        $region63: #{generator_forward.55} parent=19 // pred_check_branch
          %342 = sbr.rel (%p340) target = $region65
        $region64: #{generator_forward.55} parent=19 // pred_region
          %s343 = smul.u32 16, %s18
          %p344 = scmp.lt.s32.totalorder %s343, 783
          %s345 = scalar_select %p344, %s343, 783
          %p346 = scmp.lt.s32.totalorder %s17, 0
          %s347 = scalar_select %p346, %s17, 0
          %s348 = sadd.s32 %s347, %s345
          %s349 = smul.addr %s348, 4
          %s350 = scalar_lea.vmem %s1, %s349
          %s351 = smul.u32 16, %s18
        $region65: #{generator_forward.55} parent=19 // pred_fallthru
          _
      $region20: #{generator_forward.55} parent=5 // pred_fallthru
        _
      %p352 = scmp.le.s32.totalorder 1, %s9
      %p353 = scmp.lt.s32.totalorder %s9, 99
      %p354 = pnand %p352, %p353
      %p355 = pneg %p354
      // Predicated region
      $region66: #{generator_forward.55} parent=5 // pred_check
        _
      $region67: #{generator_forward.55} parent=5 // pred_check_branch
        %357 = sbr.rel (%p354) target = $region69
      $region68: #{generator_forward.55} parent=5 // pred_region
        %s358 = ssub.s32 %s9, 1
        %s359 = sand.u32 %s43, 1
        %s360 = sand.u32 %s43, 1
        %s361 = smul.addr %s360, 128
        %s362 = scalar_lea.vmem [#allocation3], %s361
        // Predicated region
        $region70: #{generator_forward.55} parent=68 // pred_check
          %p363 = pneg %p56
        $region71: #{generator_forward.55} parent=68 // pred_check_branch
          %365 = sbr.rel (%p363) target = $region73
        $region72: #{generator_forward.55} parent=68 // pred_region
          _
        $region73: #{generator_forward.55} parent=68 // pred_fallthru
          _
        %s366 = sand.u32 %s43, 1
        %s367 = sand.u32 %s43, 1
        %s368 = smul.addr %s367, 128
        %s369 = scalar_lea.vmem [#allocation3], %s368
        %p370 = pneg %p56
        %p371 = pneg %p53
        %s372 = smul.u32 16, %s21
        %p373 = scmp.lt.s32.totalorder %s372, 783
        %s374 = scalar_select %p373, %s372, 783
        %p375 = scmp.lt.s32.totalorder %s20, 0
        %s376 = scalar_select %p375, %s20, 0
        %s377 = sadd.s32 %s376, %s374
        %s378 = smul.addr %s377, 4
        %s379 = scalar_lea.vmem %s1, %s378
        %p380 = pneg %p84
        %p381 = pneg %p81
        %p382 = scmp.lt.s32.totalorder %s20, 0
        %s383 = scalar_select %p382, %s20, 0
        %s384 = scalar_lea.vmem %s2, %s383
        %p385 = pneg %p110
        %p386 = pneg %p107
        %p387 = pneg %p138
        %p388 = pneg %p135
        %s389 = smul.u32 32, %s19
        %p390 = scmp.lt.s32.totalorder %s389, 63
        %s391 = scalar_select %p390, %s389, 63
        %p392 = scmp.lt.s32.totalorder %s20, 0
        %s393 = scalar_select %p392, %s20, 0
        %s394 = sadd.s32 %s393, %s391
        %s395 = smul.addr %s394, 4
        %s396 = scalar_lea.vmem %s3, %s395
        %s397 = smul.u32 32, %s19
        %s398 = smul.u32 16, %s21
        %p399 = scmp.lt.s32.totalorder %s398, 783
        %s400 = scalar_select %p399, %s398, 783
        %p401 = scmp.lt.s32.totalorder %s20, 0
        %s402 = scalar_select %p401, %s20, 0
        %s403 = sadd.s32 %s402, %s400
        %s404 = smul.addr %s403, 4
        %s405 = scalar_lea.vmem %s1, %s404
        %s406 = smul.u32 16, %s21
        %p407 = scmp.lt.s32.totalorder %s20, 0
        %s408 = scalar_select %p407, %s20, 0
        %s409 = scalar_lea.vmem %s2, %s408
        %s410 = smul.u32 32, %s19
        %p411 = scmp.lt.s32.totalorder %s410, 63
        %s412 = scalar_select %p411, %s410, 63
        %p413 = scmp.lt.s32.totalorder %s20, 0
        %s414 = scalar_select %p413, %s20, 0
        %s415 = sadd.s32 %s414, %s412
        %s416 = smul.addr %s415, 4
        %s417 = scalar_lea.vmem %s3, %s416
        %s418 = smul.u32 32, %s19
        %p420 = scmp.eq.s32.totalorder %s21, 0
        // Predicated region
        $region74: #{generator_forward.55} parent=68 // pred_check
          %p421 = pneg %p420
        $region75: #{generator_forward.55} parent=68 // pred_check_branch
          %423 = sbr.rel (%p421) target = $region77
        $region76: #{generator_forward.55} parent=68 // pred_region
          %424 = vst [vmem:[#allocation2] sm:$0xff] 0.0
          %425 = vst [vmem:[#allocation2 + $0x8] sm:$0xff] 0.0
          %426 = vst [vmem:[#allocation2 + $0x10] sm:$0xff] 0.0
          %427 = vst [vmem:[#allocation2 + $0x18] sm:$0xff] 0.0
          %428 = vst [vmem:[#allocation2 + $0x20] sm:$0xff] 0.0
          %429 = vst [vmem:[#allocation2 + $0x28] sm:$0xff] 0.0
          %430 = vst [vmem:[#allocation2 + $0x30] sm:$0xff] 0.0
          %431 = vst [vmem:[#allocation2 + $0x38] sm:$0xff] 0.0
          %432 = vst [vmem:[#allocation2 + $0x40] sm:$0xff] 0.0
          %433 = vst [vmem:[#allocation2 + $0x48] sm:$0xff] 0.0
          %434 = vst [vmem:[#allocation2 + $0x50] sm:$0xff] 0.0
          %435 = vst [vmem:[#allocation2 + $0x58] sm:$0xff] 0.0
          %436 = vst [vmem:[#allocation2 + $0x60] sm:$0xff] 0.0
          %437 = vst [vmem:[#allocation2 + $0x68] sm:$0xff] 0.0
          %438 = vst [vmem:[#allocation2 + $0x70] sm:$0xff] 0.0
          %439 = vst [vmem:[#allocation2 + $0x78] sm:$0xff] 0.0
          %440 = vst [vmem:[#allocation2 + $0x80] sm:$0xff] 0.0
          %441 = vst [vmem:[#allocation2 + $0x88] sm:$0xff] 0.0
          %442 = vst [vmem:[#allocation2 + $0x90] sm:$0xff] 0.0
          %443 = vst [vmem:[#allocation2 + $0x98] sm:$0xff] 0.0
          %444 = vst [vmem:[#allocation2 + $0xa0] sm:$0xff] 0.0
          %445 = vst [vmem:[#allocation2 + $0xa8] sm:$0xff] 0.0
          %446 = vst [vmem:[#allocation2 + $0xb0] sm:$0xff] 0.0
          %447 = vst [vmem:[#allocation2 + $0xb8] sm:$0xff] 0.0
          %448 = vst [vmem:[#allocation2 + $0xc0] sm:$0xff] 0.0
          %449 = vst [vmem:[#allocation2 + $0xc8] sm:$0xff] 0.0
          %450 = vst [vmem:[#allocation2 + $0xd0] sm:$0xff] 0.0
          %451 = vst [vmem:[#allocation2 + $0xd8] sm:$0xff] 0.0
          %452 = vst [vmem:[#allocation2 + $0xe0] sm:$0xff] 0.0
          %453 = vst [vmem:[#allocation2 + $0xe8] sm:$0xff] 0.0
          %454 = vst [vmem:[#allocation2 + $0xf0] sm:$0xff] 0.0
          %455 = vst [vmem:[#allocation2 + $0xf8] sm:$0xff] 0.0
        $region77: #{generator_forward.55} parent=68 // pred_fallthru
          _
        %v456 = vld [vmem:[#allocation2] sm:$0xff]
        %v457 = vld [vmem:[#allocation2 + $0x8] sm:$0xff]
        %v458 = vld [vmem:[#allocation2 + $0x10] sm:$0xff]
        %v459 = vld [vmem:[#allocation2 + $0x18] sm:$0xff]
        %v460 = vld [vmem:[#allocation2 + $0x20] sm:$0xff]
        %v461 = vld [vmem:[#allocation2 + $0x28] sm:$0xff]
        %v462 = vld [vmem:[#allocation2 + $0x30] sm:$0xff]
        %v463 = vld [vmem:[#allocation2 + $0x38] sm:$0xff]
        %v464 = vld [vmem:[#allocation2 + $0x40] sm:$0xff]
        %v465 = vld [vmem:[#allocation2 + $0x48] sm:$0xff]
        %v466 = vld [vmem:[#allocation2 + $0x50] sm:$0xff]
        %v467 = vld [vmem:[#allocation2 + $0x58] sm:$0xff]
        %v468 = vld [vmem:[#allocation2 + $0x60] sm:$0xff]
        %v469 = vld [vmem:[#allocation2 + $0x68] sm:$0xff]
        %v470 = vld [vmem:[#allocation2 + $0x70] sm:$0xff]
        %v471 = vld [vmem:[#allocation2 + $0x78] sm:$0xff]
        %v472 = vld [vmem:[#allocation2 + $0x80] sm:$0xff]
        %v473 = vld [vmem:[#allocation2 + $0x88] sm:$0xff]
        %v474 = vld [vmem:[#allocation2 + $0x90] sm:$0xff]
        %v475 = vld [vmem:[#allocation2 + $0x98] sm:$0xff]
        %v476 = vld [vmem:[#allocation2 + $0xa0] sm:$0xff]
        %v477 = vld [vmem:[#allocation2 + $0xa8] sm:$0xff]
        %v478 = vld [vmem:[#allocation2 + $0xb0] sm:$0xff]
        %v479 = vld [vmem:[#allocation2 + $0xb8] sm:$0xff]
        %v480 = vld [vmem:[#allocation2 + $0xc0] sm:$0xff]
        %v481 = vld [vmem:[#allocation2 + $0xc8] sm:$0xff]
        %v482 = vld [vmem:[#allocation2 + $0xd0] sm:$0xff]
        %v483 = vld [vmem:[#allocation2 + $0xd8] sm:$0xff]
        %v484 = vld [vmem:[#allocation2 + $0xe0] sm:$0xff]
        %v485 = vld [vmem:[#allocation2 + $0xe8] sm:$0xff]
        %v486 = vld [vmem:[#allocation2 + $0xf0] sm:$0xff]
        %v487 = vld [vmem:[#allocation2 + $0xf8] sm:$0xff]
        %v488 = vld [vmem:[%s362] sm:$0xf]
        %v489 = vld [vmem:[%s362 + $0x4] sm:$0xf]
        %v490 = vld [vmem:[%s362 + $0x8] sm:$0xf]
        %v491 = vld [vmem:[%s362 + $0xc] sm:$0xf]
        %v492 = vld [vmem:[%s362 + $0x10] sm:$0xf]
        %v493 = vld [vmem:[%s362 + $0x14] sm:$0xf]
        %v494 = vld [vmem:[%s362 + $0x18] sm:$0xf]
        %v495 = vld [vmem:[%s362 + $0x1c] sm:$0xf]
        %v496 = vld [vmem:[%s362 + $0x20] sm:$0xf]
        %v497 = vld [vmem:[%s362 + $0x24] sm:$0xf]
        %v498 = vld [vmem:[%s362 + $0x28] sm:$0xf]
        %v499 = vld [vmem:[%s362 + $0x2c] sm:$0xf]
        %v500 = vld [vmem:[%s362 + $0x30] sm:$0xf]
        %v501 = vld [vmem:[%s362 + $0x34] sm:$0xf]
        %v502 = vld [vmem:[%s362 + $0x38] sm:$0xf]
        %v503 = vld [vmem:[%s362 + $0x3c] sm:$0xf]
        %v504 = vld [vmem:[%s362 + $0x40] sm:$0xf]
        %v505 = vld [vmem:[%s362 + $0x44] sm:$0xf]
        %v506 = vld [vmem:[%s362 + $0x48] sm:$0xf]
        %v507 = vld [vmem:[%s362 + $0x4c] sm:$0xf]
        %v508 = vld [vmem:[%s362 + $0x50] sm:$0xf]
        %v509 = vld [vmem:[%s362 + $0x54] sm:$0xf]
        %v510 = vld [vmem:[%s362 + $0x58] sm:$0xf]
        %v511 = vld [vmem:[%s362 + $0x5c] sm:$0xf]
        %v512 = vld [vmem:[%s362 + $0x60] sm:$0xf]
        %v513 = vld [vmem:[%s362 + $0x64] sm:$0xf]
        %v514 = vld [vmem:[%s362 + $0x68] sm:$0xf]
        %v515 = vld [vmem:[%s362 + $0x6c] sm:$0xf]
        %v516 = vld [vmem:[%s362 + $0x70] sm:$0xf]
        %v517 = vld [vmem:[%s362 + $0x74] sm:$0xf]
        %v518 = vld [vmem:[%s362 + $0x78] sm:$0xf]
        %v519 = vld [vmem:[%s362 + $0x7c] sm:$0xf]
        %v520 = vld [vmem:[%s405] sm:$0xf]
        %v521 = vld [vmem:[%s405 + $0x4] sm:$0xf]
        %v522 = vld [vmem:[%s405 + $0x8] sm:$0xf]
        %v523 = vld [vmem:[%s405 + $0xc] sm:$0xf]
        %v524 = vld [vmem:[%s405 + $0x10] sm:$0xf]
        %v525 = vld [vmem:[%s405 + $0x14] sm:$0xf]
        %v526 = vld [vmem:[%s405 + $0x18] sm:$0xf]
        %v527 = vld [vmem:[%s405 + $0x1c] sm:$0xf]
        %v528 = vld [vmem:[%s405 + $0x20] sm:$0xf]
        %v529 = vld [vmem:[%s405 + $0x24] sm:$0xf]
        %v530 = vld [vmem:[%s405 + $0x28] sm:$0xf]
        %v531 = vld [vmem:[%s405 + $0x2c] sm:$0xf]
        %v532 = vld [vmem:[%s405 + $0x30] sm:$0xf]
        %v533 = vld [vmem:[%s405 + $0x34] sm:$0xf]
        %v534 = vld [vmem:[%s405 + $0x38] sm:$0xf]
        %v535 = vld [vmem:[%s405 + $0x3c] sm:$0xf]
        %v568 = vunpack.c.l.b16 %v488
        %v569 = vunpack.c.l.b16 %v489
        %v570 = vunpack.c.l.b16 %v490
        %v571 = vunpack.c.l.b16 %v491
        %v572 = vunpack.c.l.b16 %v492
        %v573 = vunpack.c.l.b16 %v493
        %v574 = vunpack.c.l.b16 %v494
        %v575 = vunpack.c.l.b16 %v495
        %v576 = vunpack.c.l.b16 %v496
        %v577 = vunpack.c.l.b16 %v497
        %v578 = vunpack.c.l.b16 %v498
        %v579 = vunpack.c.l.b16 %v499
        %v580 = vunpack.c.l.b16 %v500
        %v581 = vunpack.c.l.b16 %v501
        %v582 = vunpack.c.l.b16 %v502
        %v583 = vunpack.c.l.b16 %v503
        %v584 = vunpack.c.l.b16 %v504
        %v585 = vunpack.c.l.b16 %v505
        %v586 = vunpack.c.l.b16 %v506
        %v587 = vunpack.c.l.b16 %v507
        %v588 = vunpack.c.l.b16 %v508
        %v589 = vunpack.c.l.b16 %v509
        %v590 = vunpack.c.l.b16 %v510
        %v591 = vunpack.c.l.b16 %v511
        %v592 = vunpack.c.l.b16 %v512
        %v593 = vunpack.c.l.b16 %v513
        %v594 = vunpack.c.l.b16 %v514
        %v595 = vunpack.c.l.b16 %v515
        %v596 = vunpack.c.l.b16 %v516
        %v597 = vunpack.c.l.b16 %v517
        %v598 = vunpack.c.l.b16 %v518
        %v599 = vunpack.c.l.b16 %v519
        %v600 = vpack.c.b16 %v569, %v568
        %v601 = vpack.c.b16 %v571, %v570
        %v602 = vpack.c.b16 %v573, %v572
        %v603 = vpack.c.b16 %v575, %v574
        %v604 = vpack.c.b16 %v577, %v576
        %v605 = vpack.c.b16 %v579, %v578
        %v606 = vpack.c.b16 %v581, %v580
        %v607 = vpack.c.b16 %v583, %v582
        %v608 = vpack.c.b16 %v585, %v584
        %v609 = vpack.c.b16 %v587, %v586
        %v610 = vpack.c.b16 %v589, %v588
        %v611 = vpack.c.b16 %v591, %v590
        %v612 = vpack.c.b16 %v593, %v592
        %v613 = vpack.c.b16 %v595, %v594
        %v614 = vpack.c.b16 %v597, %v596
        %v615 = vpack.c.b16 %v599, %v598
        %v648 = vunpack.c.l.b16 %v520
        %v649 = vunpack.c.l.b16 %v521
        %v650 = vunpack.c.l.b16 %v522
        %v651 = vunpack.c.l.b16 %v523
        %v652 = vunpack.c.l.b16 %v524
        %v653 = vunpack.c.l.b16 %v525
        %v654 = vunpack.c.l.b16 %v526
        %v655 = vunpack.c.l.b16 %v527
        %v656 = vunpack.c.l.b16 %v528
        %v657 = vunpack.c.l.b16 %v529
        %v658 = vunpack.c.l.b16 %v530
        %v659 = vunpack.c.l.b16 %v531
        %v660 = vunpack.c.l.b16 %v532
        %v661 = vunpack.c.l.b16 %v533
        %v662 = vunpack.c.l.b16 %v534
        %v663 = vunpack.c.l.b16 %v535
        %v664 = vpack.c.b16 %v649, %v648
        %v665 = vpack.c.b16 %v651, %v650
        %v666 = vpack.c.b16 %v653, %v652
        %v667 = vpack.c.b16 %v655, %v654
        %v668 = vpack.c.b16 %v657, %v656
        %v669 = vpack.c.b16 %v659, %v658
        %v670 = vpack.c.b16 %v661, %v660
        %v671 = vpack.c.b16 %v663, %v662
        %680 = vmatprep.subr.bf16.mxu0 0
        %681 = vmatpush1.bf16.msra.mxu0 %v671
        %682 = vmatprep.subr.bf16.mxu0 0
        %683 = vmatpush1.bf16.msra.mxu0 %v670
        %684 = vmatprep.subr.bf16.mxu0 0
        %685 = vmatpush1.bf16.msra.mxu0 %v669
        %686 = vmatprep.subr.bf16.mxu0 0
        %687 = vmatpush1.bf16.msra.mxu0 %v668
        %688 = vmatprep.subr.bf16.mxu0 0
        %689 = vmatpush1.bf16.msra.mxu0 %v667
        %690 = vmatprep.subr.bf16.mxu0 0
        %691 = vmatpush1.bf16.msra.mxu0 %v666
        %692 = vmatprep.subr.bf16.mxu0 0
        %693 = vmatpush1.bf16.msra.mxu0 %v665
        %694 = vmatprep.subr.bf16.mxu0 0
        %695 = vmatpush1.bf16.msra.mxu0 %v664
        %696 = vmatprep.subr.bf16.mxu0 0
        %697 = vmatpush2.bf16.msra.mxu0 0
        %698 = vmatprep.subr.bf16.mxu0 0
        %699 = vmatpush2.bf16.msra.mxu0 0
        %700 = vmatprep.subr.bf16.mxu0 0
        %701 = vmatpush2.bf16.msra.mxu0 0
        %702 = vmatprep.subr.bf16.mxu0 0
        %703 = vmatpush2.bf16.msra.mxu0 0
        %704 = vmatprep.subr.bf16.mxu0 0
        %705 = vmatpush2.bf16.msra.mxu0 0
        %706 = vmatprep.subr.bf16.mxu0 0
        %707 = vmatpush2.bf16.msra.mxu0 0
        %708 = vmatprep.subr.bf16.mxu0 0
        %709 = vmatpush2.bf16.msra.mxu0 0
        %710 = vmatprep.subr.bf16.mxu0 0
        %711 = vmatpush2.bf16.msra.mxu0 0
        %712 = vmatprep.mubr.bf16.mxu0 0
        %713 = vmatmul.mubr.bf16.gmra.mxu0 %v600
        %v714 = vpop.f32.mrf.mxu0
        %v715 = vadd.f32 0.0, %v714
        %v716 = vpop.f32.mrf.mxu0
        %v717 = vpop.f32.mrf.mxu0
        %v718 = vadd.f32 0.0, %v717
        %v719 = vpop.f32.mrf.mxu0
        %720 = vmatprep.mubr.bf16.mxu0 0
        %721 = vmatmul.mubr.bf16.gmra.mxu0 %v601
        %v722 = vpop.f32.mrf.mxu0
        %v723 = vadd.f32 0.0, %v722
        %v724 = vpop.f32.mrf.mxu0
        %v725 = vpop.f32.mrf.mxu0
        %v726 = vadd.f32 0.0, %v725
        %v727 = vpop.f32.mrf.mxu0
        %728 = vmatprep.mubr.bf16.mxu0 0
        %729 = vmatmul.mubr.bf16.gmra.mxu0 %v602
        %v730 = vpop.f32.mrf.mxu0
        %v731 = vadd.f32 0.0, %v730
        %v732 = vpop.f32.mrf.mxu0
        %v733 = vpop.f32.mrf.mxu0
        %v734 = vadd.f32 0.0, %v733
        %v735 = vpop.f32.mrf.mxu0
        %736 = vmatprep.mubr.bf16.mxu0 0
        %737 = vmatmul.mubr.bf16.gmra.mxu0 %v603
        %v738 = vpop.f32.mrf.mxu0
        %v739 = vadd.f32 0.0, %v738
        %v740 = vpop.f32.mrf.mxu0
        %v741 = vpop.f32.mrf.mxu0
        %v742 = vadd.f32 0.0, %v741
        %v743 = vpop.f32.mrf.mxu0
        %744 = vmatprep.mubr.bf16.mxu0 0
        %745 = vmatmul.mubr.bf16.gmra.mxu0 %v604
        %v746 = vpop.f32.mrf.mxu0
        %v747 = vadd.f32 0.0, %v746
        %v748 = vpop.f32.mrf.mxu0
        %v749 = vpop.f32.mrf.mxu0
        %v750 = vadd.f32 0.0, %v749
        %v751 = vpop.f32.mrf.mxu0
        %752 = vmatprep.mubr.bf16.mxu0 0
        %753 = vmatmul.mubr.bf16.gmra.mxu0 %v605
        %v754 = vpop.f32.mrf.mxu0
        %v755 = vadd.f32 0.0, %v754
        %v756 = vpop.f32.mrf.mxu0
        %v757 = vpop.f32.mrf.mxu0
        %v758 = vadd.f32 0.0, %v757
        %v759 = vpop.f32.mrf.mxu0
        %760 = vmatprep.mubr.bf16.mxu0 0
        %761 = vmatmul.mubr.bf16.gmra.mxu0 %v606
        %v762 = vpop.f32.mrf.mxu0
        %v763 = vadd.f32 0.0, %v762
        %v764 = vpop.f32.mrf.mxu0
        %v765 = vpop.f32.mrf.mxu0
        %v766 = vadd.f32 0.0, %v765
        %v767 = vpop.f32.mrf.mxu0
        %768 = vmatprep.mubr.bf16.mxu0 0
        %769 = vmatmul.mubr.bf16.gmra.mxu0 %v607
        %v770 = vpop.f32.mrf.mxu0
        %v771 = vadd.f32 0.0, %v770
        %v772 = vpop.f32.mrf.mxu0
        %v773 = vpop.f32.mrf.mxu0
        %v774 = vadd.f32 0.0, %v773
        %v775 = vpop.f32.mrf.mxu0
        %776 = vmatprep.mubr.bf16.mxu0 0
        %777 = vmatmul.mubr.bf16.gmra.mxu0 %v608
        %v778 = vpop.f32.mrf.mxu0
        %v779 = vadd.f32 0.0, %v778
        %v780 = vpop.f32.mrf.mxu0
        %v781 = vpop.f32.mrf.mxu0
        %v782 = vadd.f32 0.0, %v781
        %v783 = vpop.f32.mrf.mxu0
        %784 = vmatprep.mubr.bf16.mxu0 0
        %785 = vmatmul.mubr.bf16.gmra.mxu0 %v609
        %v786 = vpop.f32.mrf.mxu0
        %v787 = vadd.f32 0.0, %v786
        %v788 = vpop.f32.mrf.mxu0
        %v789 = vpop.f32.mrf.mxu0
        %v790 = vadd.f32 0.0, %v789
        %v791 = vpop.f32.mrf.mxu0
        %792 = vmatprep.mubr.bf16.mxu0 0
        %793 = vmatmul.mubr.bf16.gmra.mxu0 %v610
        %v794 = vpop.f32.mrf.mxu0
        %v795 = vadd.f32 0.0, %v794
        %v796 = vpop.f32.mrf.mxu0
        %v797 = vpop.f32.mrf.mxu0
        %v798 = vadd.f32 0.0, %v797
        %v799 = vpop.f32.mrf.mxu0
        %800 = vmatprep.mubr.bf16.mxu0 0
        %801 = vmatmul.mubr.bf16.gmra.mxu0 %v611
        %v802 = vpop.f32.mrf.mxu0
        %v803 = vadd.f32 0.0, %v802
        %v804 = vpop.f32.mrf.mxu0
        %v805 = vpop.f32.mrf.mxu0
        %v806 = vadd.f32 0.0, %v805
        %v807 = vpop.f32.mrf.mxu0
        %808 = vmatprep.mubr.bf16.mxu0 0
        %809 = vmatmul.mubr.bf16.gmra.mxu0 %v612
        %v810 = vpop.f32.mrf.mxu0
        %v811 = vadd.f32 0.0, %v810
        %v812 = vpop.f32.mrf.mxu0
        %v813 = vpop.f32.mrf.mxu0
        %v814 = vadd.f32 0.0, %v813
        %v815 = vpop.f32.mrf.mxu0
        %816 = vmatprep.mubr.bf16.mxu0 0
        %817 = vmatmul.mubr.bf16.gmra.mxu0 %v613
        %v818 = vpop.f32.mrf.mxu0
        %v819 = vadd.f32 0.0, %v818
        %v820 = vpop.f32.mrf.mxu0
        %v821 = vpop.f32.mrf.mxu0
        %v822 = vadd.f32 0.0, %v821
        %v823 = vpop.f32.mrf.mxu0
        %824 = vmatprep.mubr.bf16.mxu0 0
        %825 = vmatmul.mubr.bf16.gmra.mxu0 %v614
        %v826 = vpop.f32.mrf.mxu0
        %v827 = vadd.f32 0.0, %v826
        %v828 = vpop.f32.mrf.mxu0
        %v829 = vpop.f32.mrf.mxu0
        %v830 = vadd.f32 0.0, %v829
        %v831 = vpop.f32.mrf.mxu0
        %832 = vmatprep.mubr.bf16.mxu0 0
        %833 = vmatmul.mubr.bf16.gmra.mxu0 %v615
        %v834 = vpop.f32.mrf.mxu0
        %v835 = vadd.f32 0.0, %v834
        %v836 = vpop.f32.mrf.mxu0
        %v837 = vpop.f32.mrf.mxu0
        %v838 = vadd.f32 0.0, %v837
        %v839 = vpop.f32.mrf.mxu0
        %840 = vdwg.mxu0
        %v841 = vadd.f32 %v456, %v715
        %v842 = vadd.f32 %v457, %v718
        %v843 = vadd.f32 %v458, %v723
        %v844 = vadd.f32 %v459, %v726
        %v845 = vadd.f32 %v460, %v731
        %v846 = vadd.f32 %v461, %v734
        %v847 = vadd.f32 %v462, %v739
        %v848 = vadd.f32 %v463, %v742
        %v849 = vadd.f32 %v464, %v747
        %v850 = vadd.f32 %v465, %v750
        %v851 = vadd.f32 %v466, %v755
        %v852 = vadd.f32 %v467, %v758
        %v853 = vadd.f32 %v468, %v763
        %v854 = vadd.f32 %v469, %v766
        %v855 = vadd.f32 %v470, %v771
        %v856 = vadd.f32 %v471, %v774
        %v857 = vadd.f32 %v472, %v779
        %v858 = vadd.f32 %v473, %v782
        %v859 = vadd.f32 %v474, %v787
        %v860 = vadd.f32 %v475, %v790
        %v861 = vadd.f32 %v476, %v795
        %v862 = vadd.f32 %v477, %v798
        %v863 = vadd.f32 %v478, %v803
        %v864 = vadd.f32 %v479, %v806
        %v865 = vadd.f32 %v480, %v811
        %v866 = vadd.f32 %v481, %v814
        %v867 = vadd.f32 %v482, %v819
        %v868 = vadd.f32 %v483, %v822
        %v869 = vadd.f32 %v484, %v827
        %v870 = vadd.f32 %v485, %v830
        %v871 = vadd.f32 %v486, %v835
        %v872 = vadd.f32 %v487, %v838
        %873 = vst [vmem:[#allocation2] sm:$0xff] %v841
        %874 = vst [vmem:[#allocation2 + $0x8] sm:$0xff] %v842
        %875 = vst [vmem:[#allocation2 + $0x10] sm:$0xff] %v843
        %876 = vst [vmem:[#allocation2 + $0x18] sm:$0xff] %v844
        %877 = vst [vmem:[#allocation2 + $0x20] sm:$0xff] %v845
        %878 = vst [vmem:[#allocation2 + $0x28] sm:$0xff] %v846
        %879 = vst [vmem:[#allocation2 + $0x30] sm:$0xff] %v847
        %880 = vst [vmem:[#allocation2 + $0x38] sm:$0xff] %v848
        %881 = vst [vmem:[#allocation2 + $0x40] sm:$0xff] %v849
        %882 = vst [vmem:[#allocation2 + $0x48] sm:$0xff] %v850
        %883 = vst [vmem:[#allocation2 + $0x50] sm:$0xff] %v851
        %884 = vst [vmem:[#allocation2 + $0x58] sm:$0xff] %v852
        %885 = vst [vmem:[#allocation2 + $0x60] sm:$0xff] %v853
        %886 = vst [vmem:[#allocation2 + $0x68] sm:$0xff] %v854
        %887 = vst [vmem:[#allocation2 + $0x70] sm:$0xff] %v855
        %888 = vst [vmem:[#allocation2 + $0x78] sm:$0xff] %v856
        %889 = vst [vmem:[#allocation2 + $0x80] sm:$0xff] %v857
        %890 = vst [vmem:[#allocation2 + $0x88] sm:$0xff] %v858
        %891 = vst [vmem:[#allocation2 + $0x90] sm:$0xff] %v859
        %892 = vst [vmem:[#allocation2 + $0x98] sm:$0xff] %v860
        %893 = vst [vmem:[#allocation2 + $0xa0] sm:$0xff] %v861
        %894 = vst [vmem:[#allocation2 + $0xa8] sm:$0xff] %v862
        %895 = vst [vmem:[#allocation2 + $0xb0] sm:$0xff] %v863
        %896 = vst [vmem:[#allocation2 + $0xb8] sm:$0xff] %v864
        %897 = vst [vmem:[#allocation2 + $0xc0] sm:$0xff] %v865
        %898 = vst [vmem:[#allocation2 + $0xc8] sm:$0xff] %v866
        %899 = vst [vmem:[#allocation2 + $0xd0] sm:$0xff] %v867
        %900 = vst [vmem:[#allocation2 + $0xd8] sm:$0xff] %v868
        %901 = vst [vmem:[#allocation2 + $0xe0] sm:$0xff] %v869
        %902 = vst [vmem:[#allocation2 + $0xe8] sm:$0xff] %v870
        %903 = vst [vmem:[#allocation2 + $0xf0] sm:$0xff] %v871
        %904 = vst [vmem:[#allocation2 + $0xf8] sm:$0xff] %v872
        %p905 = scmp.eq.s32.totalorder %s21, 48
        // Predicated region
        $region78: #{generator_forward.55} parent=68 // pred_check
          %p906 = pneg %p905
        $region79: #{generator_forward.55} parent=68 // pred_check_branch
          %908 = sbr.rel (%p906) target = $region81
        $region80: #{generator_forward.55} parent=68 // pred_region
          %v909 = vld [vmem:[#allocation2] sm:$0xff]
          %v910 = vld [vmem:[#allocation2 + $0x8] sm:$0xff]
          %v911 = vld [vmem:[#allocation2 + $0x10] sm:$0xff]
          %v912 = vld [vmem:[#allocation2 + $0x18] sm:$0xff]
          %v913 = vld [vmem:[#allocation2 + $0x20] sm:$0xff]
          %v914 = vld [vmem:[#allocation2 + $0x28] sm:$0xff]
          %v915 = vld [vmem:[#allocation2 + $0x30] sm:$0xff]
          %v916 = vld [vmem:[#allocation2 + $0x38] sm:$0xff]
          %v917 = vld [vmem:[#allocation2 + $0x40] sm:$0xff]
          %v918 = vld [vmem:[#allocation2 + $0x48] sm:$0xff]
          %v919 = vld [vmem:[#allocation2 + $0x50] sm:$0xff]
          %v920 = vld [vmem:[#allocation2 + $0x58] sm:$0xff]
          %v921 = vld [vmem:[#allocation2 + $0x60] sm:$0xff]
          %v922 = vld [vmem:[#allocation2 + $0x68] sm:$0xff]
          %v923 = vld [vmem:[#allocation2 + $0x70] sm:$0xff]
          %v924 = vld [vmem:[#allocation2 + $0x78] sm:$0xff]
          %v925 = vld [vmem:[#allocation2 + $0x80] sm:$0xff]
          %v926 = vld [vmem:[#allocation2 + $0x88] sm:$0xff]
          %v927 = vld [vmem:[#allocation2 + $0x90] sm:$0xff]
          %v928 = vld [vmem:[#allocation2 + $0x98] sm:$0xff]
          %v929 = vld [vmem:[#allocation2 + $0xa0] sm:$0xff]
          %v930 = vld [vmem:[#allocation2 + $0xa8] sm:$0xff]
          %v931 = vld [vmem:[#allocation2 + $0xb0] sm:$0xff]
          %v932 = vld [vmem:[#allocation2 + $0xb8] sm:$0xff]
          %v933 = vld [vmem:[#allocation2 + $0xc0] sm:$0xff]
          %v934 = vld [vmem:[#allocation2 + $0xc8] sm:$0xff]
          %v935 = vld [vmem:[#allocation2 + $0xd0] sm:$0xff]
          %v936 = vld [vmem:[#allocation2 + $0xd8] sm:$0xff]
          %v937 = vld [vmem:[#allocation2 + $0xe0] sm:$0xff]
          %v938 = vld [vmem:[#allocation2 + $0xe8] sm:$0xff]
          %v939 = vld [vmem:[#allocation2 + $0xf0] sm:$0xff]
          %v940 = vld [vmem:[#allocation2 + $0xf8] sm:$0xff]
          %v941 = vld [vmem:[%s409] sm:$0x1]
          %v943 = vlaneseq
          %v944 = vshrl.u32 %v943, 7
          %v945 = vsub.s32 0, %v944
          %v946 = vrot.slane %v941, %v945
          %v948 = vadd.f32 %v909, %v946
          %v949 = vadd.f32 %v910, %v946
          %v950 = vadd.f32 %v911, %v946
          %v951 = vadd.f32 %v912, %v946
          %v952 = vadd.f32 %v913, %v946
          %v953 = vadd.f32 %v914, %v946
          %v954 = vadd.f32 %v915, %v946
          %v955 = vadd.f32 %v916, %v946
          %v956 = vadd.f32 %v917, %v946
          %v957 = vadd.f32 %v918, %v946
          %v958 = vadd.f32 %v919, %v946
          %v959 = vadd.f32 %v920, %v946
          %v960 = vadd.f32 %v921, %v946
          %v961 = vadd.f32 %v922, %v946
          %v962 = vadd.f32 %v923, %v946
          %v963 = vadd.f32 %v924, %v946
          %v964 = vadd.f32 %v925, %v946
          %v965 = vadd.f32 %v926, %v946
          %v966 = vadd.f32 %v927, %v946
          %v967 = vadd.f32 %v928, %v946
          %v968 = vadd.f32 %v929, %v946
          %v969 = vadd.f32 %v930, %v946
          %v970 = vadd.f32 %v931, %v946
          %v971 = vadd.f32 %v932, %v946
          %v972 = vadd.f32 %v933, %v946
          %v973 = vadd.f32 %v934, %v946
          %v974 = vadd.f32 %v935, %v946
          %v975 = vadd.f32 %v936, %v946
          %v976 = vadd.f32 %v937, %v946
          %v977 = vadd.f32 %v938, %v946
          %v978 = vadd.f32 %v939, %v946
          %v979 = vadd.f32 %v940, %v946
          %v980 = vtanh.pop %v948
          %v981 = vtanh.pop %v949
          %v982 = vtanh.pop %v950
          %v983 = vtanh.pop %v951
          %v984 = vtanh.pop %v952
          %v985 = vtanh.pop %v953
          %v986 = vtanh.pop %v954
          %v987 = vtanh.pop %v955
          %v988 = vtanh.pop %v956
          %v989 = vtanh.pop %v957
          %v990 = vtanh.pop %v958
          %v991 = vtanh.pop %v959
          %v992 = vtanh.pop %v960
          %v993 = vtanh.pop %v961
          %v994 = vtanh.pop %v962
          %v995 = vtanh.pop %v963
          %v996 = vtanh.pop %v964
          %v997 = vtanh.pop %v965
          %v998 = vtanh.pop %v966
          %v999 = vtanh.pop %v967
          %v1000 = vtanh.pop %v968
          %v1001 = vtanh.pop %v969
          %v1002 = vtanh.pop %v970
          %v1003 = vtanh.pop %v971
          %v1004 = vtanh.pop %v972
          %v1005 = vtanh.pop %v973
          %v1006 = vtanh.pop %v974
          %v1007 = vtanh.pop %v975
          %v1008 = vtanh.pop %v976
          %v1009 = vtanh.pop %v977
          %v1010 = vtanh.pop %v978
          %v1011 = vtanh.pop %v979
          %v1012 = vpack.c.bf16 %v981, %v980
          %v1013 = vpack.c.bf16 %v983, %v982
          %v1014 = vpack.c.bf16 %v985, %v984
          %v1015 = vpack.c.bf16 %v987, %v986
          %v1016 = vpack.c.bf16 %v989, %v988
          %v1017 = vpack.c.bf16 %v991, %v990
          %v1018 = vpack.c.bf16 %v993, %v992
          %v1019 = vpack.c.bf16 %v995, %v994
          %v1020 = vpack.c.bf16 %v997, %v996
          %v1021 = vpack.c.bf16 %v999, %v998
          %v1022 = vpack.c.bf16 %v1001, %v1000
          %v1023 = vpack.c.bf16 %v1003, %v1002
          %v1024 = vpack.c.bf16 %v1005, %v1004
          %v1025 = vpack.c.bf16 %v1007, %v1006
          %v1026 = vpack.c.bf16 %v1009, %v1008
          %v1027 = vpack.c.bf16 %v1011, %v1010
          %v1044 = vunpack.c.l.b16 %v1012
          %v1045 = vunpack.c.h.b16 %v1012
          %v1046 = vunpack.c.l.b16 %v1013
          %v1047 = vunpack.c.h.b16 %v1013
          %v1048 = vunpack.c.l.b16 %v1014
          %v1049 = vunpack.c.h.b16 %v1014
          %v1050 = vunpack.c.l.b16 %v1015
          %v1051 = vunpack.c.h.b16 %v1015
          %v1052 = vunpack.c.l.b16 %v1016
          %v1053 = vunpack.c.h.b16 %v1016
          %v1054 = vunpack.c.l.b16 %v1017
          %v1055 = vunpack.c.h.b16 %v1017
          %v1056 = vunpack.c.l.b16 %v1018
          %v1057 = vunpack.c.h.b16 %v1018
          %v1058 = vunpack.c.l.b16 %v1019
          %v1059 = vunpack.c.h.b16 %v1019
          %v1060 = vunpack.c.l.b16 %v1020
          %v1061 = vunpack.c.h.b16 %v1020
          %v1062 = vunpack.c.l.b16 %v1021
          %v1063 = vunpack.c.h.b16 %v1021
          %v1064 = vunpack.c.l.b16 %v1022
          %v1065 = vunpack.c.h.b16 %v1022
          %v1066 = vunpack.c.l.b16 %v1023
          %v1067 = vunpack.c.h.b16 %v1023
          %v1068 = vunpack.c.l.b16 %v1024
          %v1069 = vunpack.c.h.b16 %v1024
          %v1070 = vunpack.c.l.b16 %v1025
          %v1071 = vunpack.c.h.b16 %v1025
          %v1072 = vunpack.c.l.b16 %v1026
          %v1073 = vunpack.c.h.b16 %v1026
          %v1074 = vunpack.c.l.b16 %v1027
          %v1075 = vunpack.c.h.b16 %v1027
          %v1076 = vpack.c.b16 %v1044, %v1044
          %v1077 = vpack.c.b16 %v1045, %v1045
          %v1078 = vpack.c.b16 %v1046, %v1046
          %v1079 = vpack.c.b16 %v1047, %v1047
          %v1080 = vpack.c.b16 %v1048, %v1048
          %v1081 = vpack.c.b16 %v1049, %v1049
          %v1082 = vpack.c.b16 %v1050, %v1050
          %v1083 = vpack.c.b16 %v1051, %v1051
          %v1084 = vpack.c.b16 %v1052, %v1052
          %v1085 = vpack.c.b16 %v1053, %v1053
          %v1086 = vpack.c.b16 %v1054, %v1054
          %v1087 = vpack.c.b16 %v1055, %v1055
          %v1088 = vpack.c.b16 %v1056, %v1056
          %v1089 = vpack.c.b16 %v1057, %v1057
          %v1090 = vpack.c.b16 %v1058, %v1058
          %v1091 = vpack.c.b16 %v1059, %v1059
          %v1092 = vpack.c.b16 %v1060, %v1060
          %v1093 = vpack.c.b16 %v1061, %v1061
          %v1094 = vpack.c.b16 %v1062, %v1062
          %v1095 = vpack.c.b16 %v1063, %v1063
          %v1096 = vpack.c.b16 %v1064, %v1064
          %v1097 = vpack.c.b16 %v1065, %v1065
          %v1098 = vpack.c.b16 %v1066, %v1066
          %v1099 = vpack.c.b16 %v1067, %v1067
          %v1100 = vpack.c.b16 %v1068, %v1068
          %v1101 = vpack.c.b16 %v1069, %v1069
          %v1102 = vpack.c.b16 %v1070, %v1070
          %v1103 = vpack.c.b16 %v1071, %v1071
          %v1104 = vpack.c.b16 %v1072, %v1072
          %v1105 = vpack.c.b16 %v1073, %v1073
          %v1106 = vpack.c.b16 %v1074, %v1074
          %v1107 = vpack.c.b16 %v1075, %v1075
          %1140 = vst [vmem:[%s417] sm:$0xf] %v1076
          %1141 = vst [vmem:[%s417 + $0x4] sm:$0xf] %v1077
          %1142 = vst [vmem:[%s417 + $0x8] sm:$0xf] %v1078
          %1143 = vst [vmem:[%s417 + $0xc] sm:$0xf] %v1079
          %1144 = vst [vmem:[%s417 + $0x10] sm:$0xf] %v1080
          %1145 = vst [vmem:[%s417 + $0x14] sm:$0xf] %v1081
          %1146 = vst [vmem:[%s417 + $0x18] sm:$0xf] %v1082
          %1147 = vst [vmem:[%s417 + $0x1c] sm:$0xf] %v1083
          %1148 = vst [vmem:[%s417 + $0x20] sm:$0xf] %v1084
          %1149 = vst [vmem:[%s417 + $0x24] sm:$0xf] %v1085
          %1150 = vst [vmem:[%s417 + $0x28] sm:$0xf] %v1086
          %1151 = vst [vmem:[%s417 + $0x2c] sm:$0xf] %v1087
          %1152 = vst [vmem:[%s417 + $0x30] sm:$0xf] %v1088
          %1153 = vst [vmem:[%s417 + $0x34] sm:$0xf] %v1089
          %1154 = vst [vmem:[%s417 + $0x38] sm:$0xf] %v1090
          %1155 = vst [vmem:[%s417 + $0x3c] sm:$0xf] %v1091
          %1156 = vst [vmem:[%s417 + $0x40] sm:$0xf] %v1092
          %1157 = vst [vmem:[%s417 + $0x44] sm:$0xf] %v1093
          %1158 = vst [vmem:[%s417 + $0x48] sm:$0xf] %v1094
          %1159 = vst [vmem:[%s417 + $0x4c] sm:$0xf] %v1095
          %1160 = vst [vmem:[%s417 + $0x50] sm:$0xf] %v1096
          %1161 = vst [vmem:[%s417 + $0x54] sm:$0xf] %v1097
          %1162 = vst [vmem:[%s417 + $0x58] sm:$0xf] %v1098
          %1163 = vst [vmem:[%s417 + $0x5c] sm:$0xf] %v1099
          %1164 = vst [vmem:[%s417 + $0x60] sm:$0xf] %v1100
          %1165 = vst [vmem:[%s417 + $0x64] sm:$0xf] %v1101
          %1166 = vst [vmem:[%s417 + $0x68] sm:$0xf] %v1102
          %1167 = vst [vmem:[%s417 + $0x6c] sm:$0xf] %v1103
          %1168 = vst [vmem:[%s417 + $0x70] sm:$0xf] %v1104
          %1169 = vst [vmem:[%s417 + $0x74] sm:$0xf] %v1105
          %1170 = vst [vmem:[%s417 + $0x78] sm:$0xf] %v1106
          %1171 = vst [vmem:[%s417 + $0x7c] sm:$0xf] %v1107
        $region81: #{generator_forward.55} parent=68 // pred_fallthru
          _
        %s1172 = smul.u32 32, %s19
        %p1173 = scmp.lt.s32.totalorder %s1172, 63
        %s1174 = scalar_select %p1173, %s1172, 63
        %p1175 = scmp.lt.s32.totalorder %s20, 0
        %s1176 = scalar_select %p1175, %s20, 0
        %s1177 = sadd.s32 %s1176, %s1174
        %s1178 = smul.addr %s1177, 4
        %s1179 = scalar_lea.vmem %s3, %s1178
        // Predicated region
        $region82: #{generator_forward.55} parent=68 // pred_check
          %p1180 = pneg %p135
        $region83: #{generator_forward.55} parent=68 // pred_check_branch
          %1182 = sbr.rel (%p1180) target = $region85
        $region84: #{generator_forward.55} parent=68 // pred_region
          %s1183 = smul.u32 32, %s19
        $region85: #{generator_forward.55} parent=68 // pred_fallthru
          _
      $region69: #{generator_forward.55} parent=5 // pred_fallthru
        _
      %p1184 = scmp.le.s32.totalorder 2, %s9
      // Predicated region
      $region86: #{generator_forward.55} parent=5 // pred_check
        %p1185 = pneg %p1184
      $region87: #{generator_forward.55} parent=5 // pred_check_branch
        %1187 = sbr.rel (%p1185) target = $region89
      $region88: #{generator_forward.55} parent=5 // pred_region
        %s1188 = ssub.s32 %s9, 2
        // Predicated region
        $region90: #{generator_forward.55} parent=88 // pred_check
          %p1189 = pneg %p141
        $region91: #{generator_forward.55} parent=88 // pred_check_branch
          %1191 = sbr.rel (%p1189) target = $region93
        $region92: #{generator_forward.55} parent=88 // pred_region
          %s1192 = smul.u32 32, %s22
          %p1193 = scmp.lt.s32.totalorder %s1192, 63
          %s1194 = scalar_select %p1193, %s1192, 63
          %p1195 = scmp.lt.s32.totalorder %s23, 0
          %s1196 = scalar_select %p1195, %s23, 0
          %s1197 = sadd.s32 %s1196, %s1194
          %s1198 = smul.addr %s1197, 4
          %s1199 = scalar_lea.vmem %s3, %s1198
        $region93: #{generator_forward.55} parent=88 // pred_fallthru
          _
      $region89: #{generator_forward.55} parent=5 // pred_fallthru
        _
    $region6: #{generator_forward.55} parent=1 // loop_footer
      %s13 = sadd.s32 1, %s9
    $region7: #{generator_forward.55} parent=1 // loop_footer_branch
      %8 = sbr.rel target = $region3
    $region8: #{generator_forward.55} parent=1 // loop_exit
      _

</llo_original>
